<compile_context>
chip_gen: v5e
topology: v5e:2x2
jax: 0.10.0
libtpu: 0.0.40
codegen_flags: <defaults>
</compile_context>

<pallas_src>
import numpy as np
import jax
import jax.numpy as jnp
from jax.experimental import pallas as pl
from jax.experimental.pallas import tpu as pltpu


# ---------------------------------------------------------------------------
# Kernel 1: fused conv1(1->16,k5) + ReLU + conv2(16->32,k5) + ReLU.
# One batch element per grid step.  Channel-major layout, spatial in lanes.
# ---------------------------------------------------------------------------
def conv12_fused_kernel(x_ref, w1_ref, b1_ref, w2_ref, b2_ref, o_ref,
                        im1_ref, h1_ref, im2_ref, acc2_ref):
    # x_ref : (1, 1, 1184) f32   flattened 32x32 image (+160 zero pad for shifts)
    # w1_ref: (16, 32)     f32   conv1 weights [c, kh*5+kw], taps 25..31 zero
    # b1_ref: (16, 1)      f32
    # w2_ref: (5, 32, 80)  bf16  conv2 weights [kh, co, kw*16+ci]
    # b2_ref: (32, 1)      f32
    # o_ref : (1, 32, 1024) f32  conv2 output, [co, h*32+w] (h,w < 24 valid)
    # im1_ref: (32, 1024) f32    conv1 im2col scratch (rows = taps, 25..31 zero)
    # h1_ref : (16, 1184) bf16   ReLU(conv1) + zeroed shift-pad tail
    # im2_ref: (80, 1024) bf16   per-kh conv2 im2col scratch
    # acc2_ref:(32, 1024) f32    conv2 accumulator
    xrow = x_ref[0]                                        # (1, 1184)

    # ---- conv1 on the MXU: build 25-tap im2col, one (16,32)@(32,1024) dot ----
    # im1[tap, h*32+w] = x[h+kh, w+kw],  tap = kh*5+kw
    im1_ref[24:32, :] = jnp.zeros((8, 1024), jnp.float32)  # pad rows (24 rewritten)
    for kh in range(5):
        for kw in range(5):
            s = 32 * kh + kw
            tap = kh * 5 + kw
            im1_ref[tap:tap + 1, :] = xrow[:, s:s + 1024]  # (1, 1024)
    a1 = jnp.dot(w1_ref[...], im1_ref[...],
                 preferred_element_type=jnp.float32)       # (16, 1024)
    h1 = jnp.maximum(a1 + b1_ref[...], 0.0)                # bias + ReLU (VPU)
    h1_ref[:, 0:1024] = h1.astype(jnp.bfloat16)
    h1_ref[:, 1024:1184] = jnp.zeros((16, 160), jnp.bfloat16)   # zero shift tail

    # ---- conv2: per-kh (80,1024) im2col + one (32,80)@(80,1024) bf16 dot ----
    # acc2[co, h*32+w] = sum_{kh,kw,ci} w2[co,ci,kh,kw] * h1[ci, h+kh, w+kw]
    acc2_ref[...] = jnp.zeros_like(acc2_ref)
    for kh in range(5):
        for kw in range(5):
            s = 32 * kh + kw
            im2_ref[16 * kw:16 * (kw + 1), :] = h1_ref[:, s:s + 1024]
        acc2_ref[...] += jnp.dot(w2_ref[kh], im2_ref[...],
                                 preferred_element_type=jnp.float32)

    # columns with h >= 24 or w >= 24 are (finite) garbage; the wrapper slices
    # them away before fc1.
    o_ref[0] = jnp.maximum(acc2_ref[...] + b2_ref[...], 0.0)


def conv12_fused(xpad, w1p, b1, w2r, b2):
    """xpad: (B,1,1184) f32.  Returns (B,32,1024): conv2 output, stride-32 spatial."""
    B = xpad.shape[0]
    return pl.pallas_call(
        conv12_fused_kernel,
        out_shape=jax.ShapeDtypeStruct((B, 32, 1024), jnp.float32),
        grid_spec=pltpu.PrefetchScalarGridSpec(
            num_scalar_prefetch=0,
            grid=(B,),
            in_specs=[
                pl.BlockSpec((1, 1, 1184), lambda b: (b, 0, 0)),
                pl.BlockSpec((16, 32), lambda b: (0, 0)),
                pl.BlockSpec((16, 1), lambda b: (0, 0)),
                pl.BlockSpec((5, 32, 80), lambda b: (0, 0, 0)),
                pl.BlockSpec((32, 1), lambda b: (0, 0)),
            ],
            out_specs=pl.BlockSpec((1, 32, 1024), lambda b: (b, 0, 0)),
            scratch_shapes=[
                pltpu.VMEM((32, 1024), jnp.float32),    # im1 (conv1 im2col)
                pltpu.VMEM((16, 1184), jnp.bfloat16),   # h1  (+ shift pad)
                pltpu.VMEM((80, 1024), jnp.bfloat16),   # im2 (conv2 per-kh im2col)
                pltpu.VMEM((32, 1024), jnp.float32),    # acc2
            ],
        ),
        compiler_params=pltpu.CompilerParams(
            dimension_semantics=("parallel",)),   # batch axis
    )(xpad, w1p, b1, w2r, b2)


# ---------------------------------------------------------------------------
# Kernel 2: fused fc1 (K-tiled bf16 matmul, f32 accumulate) + ReLU + fc2 +
# sigmoid.  Returns both the pre-ReLU fc1 activations ("fc") and the output.
# ---------------------------------------------------------------------------
def fc_head_kernel(x_ref, w1_ref, b1_ref, w2_ref, b2_ref,
                   fc_ref, out_ref, acc_ref):
    k = pl.program_id(0)

    @pl.when(k == 0)
    def _():
        acc_ref[...] = jnp.zeros_like(acc_ref)

    # bf16 x bf16 -> f32 accumulate (MXU native input width).
    acc_ref[...] += jnp.dot(x_ref[...], w1_ref[...],
                            preferred_element_type=jnp.float32)

    @pl.when(k == pl.num_programs(0) - 1)
    def _():
        fc = acc_ref[...] + b1_ref[...]            # (B, 84) pre-ReLU fc1
        fc_ref[...] = fc
        h = jnp.maximum(fc, 0.0)
        z = jnp.sum(h * w2_ref[...], axis=1, keepdims=True) + b2_ref[...]
        out_ref[...] = 1.0 / (1.0 + jnp.exp(-z))   # sigmoid


def fc_head(x, w1, b1, w2, b2, tk=9216):
    """x: (B,K) bf16, w1: (K,84) bf16, b1: (1,84), w2: (1,84), b2: (1,1) f32."""
    B, K = x.shape
    N1 = w1.shape[1]
    assert K % tk == 0
    nk = K // tk
    return pl.pallas_call(
        fc_head_kernel,
        out_shape=(jax.ShapeDtypeStruct((B, N1), jnp.float32),
                   jax.ShapeDtypeStruct((B, 1), jnp.float32)),
        grid_spec=pltpu.PrefetchScalarGridSpec(
            num_scalar_prefetch=0,
            grid=(nk,),
            in_specs=[
                pl.BlockSpec((B, tk), lambda k: (0, k)),
                pl.BlockSpec((tk, N1), lambda k: (k, 0)),
                pl.BlockSpec((1, N1), lambda k: (0, 0)),
                pl.BlockSpec((1, N1), lambda k: (0, 0)),
                pl.BlockSpec((1, 1), lambda k: (0, 0)),
            ],
            out_specs=(pl.BlockSpec((B, N1), lambda k: (0, 0)),
                       pl.BlockSpec((B, 1), lambda k: (0, 0))),
            scratch_shapes=[pltpu.VMEM((B, N1), jnp.float32)],
        ),
        compiler_params=pltpu.CompilerParams(
            dimension_semantics=("arbitrary",)),
        # TODO(synk): on v7x the fc1 K-reduction could additionally be split
        # across the two TensorCores (CORE_PARALLEL + partial combine).
    )(x, w1, b1, w2, b2)


# ---------------------------------------------------------------------------
# Parameter handling: PyTorch layouts -> kernel layouts (done once, off the
# hot path) and the full forward.
# ---------------------------------------------------------------------------
def init_params(key):
    """Parameters in PyTorch layouts (OIHW convs, (out,in) linears)."""
    ks = jax.random.split(key, 8)
    return {
        "conv1_w": jax.random.normal(ks[0], (16, 1, 5, 5), jnp.float32) * 0.10,
        "conv1_b": jax.random.normal(ks[1], (16,), jnp.float32) * 0.10,
        "conv2_w": jax.random.normal(ks[2], (32, 16, 5, 5), jnp.float32) * 0.05,
        "conv2_b": jax.random.normal(ks[3], (32,), jnp.float32) * 0.10,
        "fc1_w": jax.random.normal(ks[4], (84, 18432), jnp.float32) * 0.01,
        "fc1_b": jax.random.normal(ks[5], (84,), jnp.float32) * 0.10,
        "fc2_w": jax.random.normal(ks[6], (1, 84), jnp.float32) * 0.10,
        "fc2_b": jax.random.normal(ks[7], (1,), jnp.float32) * 0.10,
    }


def prepare_params(p):
    """One-time repack into kernel layouts (no per-call permutation of fc1_w
    is needed: the conv kernel already emits PyTorch (C,H,W) flatten order)."""
    w1cm = p["conv1_w"].reshape(16, 25)                              # [c, kh*5+kw]
    return {
        "w1p": jnp.pad(w1cm, ((0, 0), (0, 7))),                      # (16,32) pad taps
        "b1": p["conv1_b"].reshape(16, 1),
        # conv2 OIHW -> [kh, co, kw*16+ci], bf16 for the MXU.
        "w2r": jnp.transpose(p["conv2_w"], (2, 0, 3, 1))
                  .reshape(5, 32, 80).astype(jnp.bfloat16),
        "b2": p["conv2_b"].reshape(32, 1),
        "fw1": jnp.transpose(p["fc1_w"]).astype(jnp.bfloat16),       # (18432, 84) bf16
        "fb1": p["fc1_b"].reshape(1, 84),
        "fw2": p["fc2_w"],                                           # (1, 84)
        "fb2": p["fc2_b"].reshape(1, 1),
    }


@jax.jit
def baseline_net_forward(x_nchw, kp):
    B = x_nchw.shape[0]
    # Flat, lane-dense image row + 160 zero pad so every (kh,kw) shift is a
    # plain static lane-offset slice inside the kernel.
    xflat = x_nchw.reshape(B, 1, 32 * 32)
    xpad = jnp.pad(xflat, ((0, 0), (0, 0), (0, 160)))
    conv_out = conv12_fused(xpad, kp["w1p"], kp["b1"], kp["w2r"], kp["b2"])
    # conv_out[b, c, h*32+w]; keep h,w < 24 -> PyTorch (C,H,W) flatten order.
    # bf16 activations for the HBM-bound fc1 weight-stream matmul.
    flat = (conv_out.reshape(B, 32, 32, 32)[:, :, :24, :24]
            .reshape(B, 18432).astype(jnp.bfloat16))
    fc, out = fc_head(flat, kp["fw1"], kp["fb1"], kp["fw2"], kp["fb2"])
    # TODO(synk): PyTorch does fc.cpu().detach().numpy(); we return the
    # pre-ReLU fc1 activations as a device array instead.
    return out, fc


# ---------------------------------------------------------------------------
# NumPy float64 reference (exactly the PyTorch forward) for correctness.
# ---------------------------------------------------------------------------
def np_reference(x_nchw, p):
    x = np.asarray(x_nchw, np.float64)
    p = {k: np.asarray(v, np.float64) for k, v in p.items()}

    def conv(xin, w, b):  # valid cross-correlation, NCHW / OIHW
        Bn, Cin, H, W = xin.shape
        Cout, _, KH, KW = w.shape
        Ho, Wo = H - KH + 1, W - KW + 1
        out = np.zeros((Bn, Cout, Ho, Wo), np.float64)
        for kh in range(KH):
            for kw in range(KW):
                patch = xin[:, :, kh:kh + Ho, kw:kw + Wo]
                out += np.einsum('bchw,oc->bohw', patch, w[:, :, kh, kw])
        return out + b.reshape(1, Cout, 1, 1)

    h1 = np.maximum(conv(x, p["conv1_w"], p["conv1_b"]), 0.0)
    h2 = np.maximum(conv(h1, p["conv2_w"], p["conv2_b"]), 0.0)
    flat = h2.reshape(x.shape[0], -1)
    fc = flat @ p["fc1_w"].T + p["fc1_b"]
    z = np.maximum(fc, 0.0) @ p["fc2_w"].T + p["fc2_b"]
    out = 1.0 / (1.0 + np.exp(-z))
    return out, fc


if __name__ == "__main__":
    key = jax.random.PRNGKey(0)
    k_x, k_p = jax.random.split(key)
    B = 2
    # Input exactly as the PyTorch module expects: NCHW, 1 channel, 32x32
    # (fc1.in_features = 18432 = 32*24*24 forces this spatial size).
    x = jax.random.normal(k_x, (B, 1, 32, 32), jnp.float32)
    params = init_params(k_p)
    kparams = prepare_params(params)

    out, fc = baseline_net_forward(x, kparams)
    out, fc = jax.block_until_ready((out, fc))

    out_ref, fc_ref = np_reference(np.asarray(x),
                                   {k: np.asarray(v) for k, v in params.items()})
    assert out.shape == (B, 1) and fc.shape == (B, 84)
    fc_err = np.max(np.abs(np.asarray(fc, np.float64) - fc_ref))
    out_err = np.max(np.abs(np.asarray(out, np.float64) - out_ref))
    assert fc_err < 1e-1, f"fc mismatch: {fc_err}"
    assert out_err < 3e-2, f"out mismatch: {out_err}"

    print("KERNEL_OK")
</pallas_src>

<mosaic_0001>
module attributes {stable_mosaic.version = 11 : i64} {
  func.func @conv12_fused_kernel(%arg0: i32, %arg1: memref<1x1x1184xf32, #tpu.memory_space<vmem>>, %arg2: memref<16x32xf32, #tpu.memory_space<vmem>>, %arg3: memref<16x1xf32, #tpu.memory_space<vmem>>, %arg4: memref<5x32x80xbf16, #tpu.memory_space<vmem>>, %arg5: memref<32x1xf32, #tpu.memory_space<vmem>>, %arg6: memref<1x32x1024xf32, #tpu.memory_space<vmem>>, %arg7: memref<32x1024xf32, #tpu.memory_space<vmem>>, %arg8: memref<16x1184xbf16, #tpu.memory_space<vmem>>, %arg9: memref<80x1024xbf16, #tpu.memory_space<vmem>>, %arg10: memref<32x1024xf32, #tpu.memory_space<vmem>>) attributes {dimension_semantics = [#tpu.dimension_semantics<parallel>], iteration_bounds = array<i64: 2>, scalar_prefetch = 0 : i64, scratch_operands = 4 : i64, tpu.core_type = #tpu.core_type<tc>, window_params = [{transform_indices = @transform_0, window_bounds = array<i64: 1, 1, 1184>}, {pipeline_mode = #tpu.pipeline_mode<synchronous>, transform_indices = @transform_1, window_bounds = array<i64: 16, 32>}, {pipeline_mode = #tpu.pipeline_mode<synchronous>, transform_indices = @transform_2, window_bounds = array<i64: 16, 1>}, {pipeline_mode = #tpu.pipeline_mode<synchronous>, transform_indices = @transform_3, window_bounds = array<i64: 5, 32, 80>}, {pipeline_mode = #tpu.pipeline_mode<synchronous>, transform_indices = @transform_4, window_bounds = array<i64: 32, 1>}, {transform_indices = @transform_5, window_bounds = array<i64: 1, 32, 1024>}]} {
    %c0 = arith.constant 0 : index
    %c0_0 = arith.constant 0 : index
    %c0_1 = arith.constant 0 : index
    %0 = vector.load %arg1[%c0, %c0_0, %c0_1] : memref<1x1x1184xf32, #tpu.memory_space<vmem>>, vector<1x1x1184xf32>
    %1 = vector.shape_cast %0 : vector<1x1x1184xf32> to vector<1x1184xf32>
    %cst = arith.constant 0.000000e+00 : f32
    %2 = vector.broadcast %cst : f32 to vector<8x1024xf32>
    %c24 = arith.constant 24 : index
    %c0_2 = arith.constant 0 : index
    %3 = vector.load %arg7[%c24, %c0_2] : memref<32x1024xf32, #tpu.memory_space<vmem>>, vector<8x1024xf32>
    tpu.vector_store %arg7[%c24, %c0_2], %2 {strides = array<i32>} : memref<32x1024xf32, #tpu.memory_space<vmem>>, vector<8x1024xf32>,
    %4 = vector.extract_strided_slice %1 {offsets = [0, 0], sizes = [1, 1024], strides = [1, 1]} : vector<1x1184xf32> to vector<1x1024xf32>
    %c0_3 = arith.constant 0 : index
    %c0_4 = arith.constant 0 : index
    %5 = vector.load %arg7[%c0_3, %c0_4] : memref<32x1024xf32, #tpu.memory_space<vmem>>, vector<1x1024xf32>
    tpu.vector_store %arg7[%c0_3, %c0_4], %4 {strides = array<i32>} : memref<32x1024xf32, #tpu.memory_space<vmem>>, vector<1x1024xf32>,
    %6 = vector.extract_strided_slice %1 {offsets = [0, 1], sizes = [1, 1024], strides = [1, 1]} : vector<1x1184xf32> to vector<1x1024xf32>
    %c1 = arith.constant 1 : index
    %c0_5 = arith.constant 0 : index
    %7 = vector.load %arg7[%c1, %c0_5] : memref<32x1024xf32, #tpu.memory_space<vmem>>, vector<1x1024xf32>
    tpu.vector_store %arg7[%c1, %c0_5], %6 {strides = array<i32>} : memref<32x1024xf32, #tpu.memory_space<vmem>>, vector<1x1024xf32>,
    %8 = vector.extract_strided_slice %1 {offsets = [0, 2], sizes = [1, 1024], strides = [1, 1]} : vector<1x1184xf32> to vector<1x1024xf32>
    %c2 = arith.constant 2 : index
    %c0_6 = arith.constant 0 : index
    %9 = vector.load %arg7[%c2, %c0_6] : memref<32x1024xf32, #tpu.memory_space<vmem>>, vector<1x1024xf32>
    tpu.vector_store %arg7[%c2, %c0_6], %8 {strides = array<i32>} : memref<32x1024xf32, #tpu.memory_space<vmem>>, vector<1x1024xf32>,
    %10 = vector.extract_strided_slice %1 {offsets = [0, 3], sizes = [1, 1024], strides = [1, 1]} : vector<1x1184xf32> to vector<1x1024xf32>
    %c3 = arith.constant 3 : index
    %c0_7 = arith.constant 0 : index
    %11 = vector.load %arg7[%c3, %c0_7] : memref<32x1024xf32, #tpu.memory_space<vmem>>, vector<1x1024xf32>
    tpu.vector_store %arg7[%c3, %c0_7], %10 {strides = array<i32>} : memref<32x1024xf32, #tpu.memory_space<vmem>>, vector<1x1024xf32>,
    %12 = vector.extract_strided_slice %1 {offsets = [0, 4], sizes = [1, 1024], strides = [1, 1]} : vector<1x1184xf32> to vector<1x1024xf32>
    %c4 = arith.constant 4 : index
    %c0_8 = arith.constant 0 : index
    %13 = vector.load %arg7[%c4, %c0_8] : memref<32x1024xf32, #tpu.memory_space<vmem>>, vector<1x1024xf32>
    tpu.vector_store %arg7[%c4, %c0_8], %12 {strides = array<i32>} : memref<32x1024xf32, #tpu.memory_space<vmem>>, vector<1x1024xf32>,
    %14 = vector.extract_strided_slice %1 {offsets = [0, 32], sizes = [1, 1024], strides = [1, 1]} : vector<1x1184xf32> to vector<1x1024xf32>
    %c5 = arith.constant 5 : index
    %c0_9 = arith.constant 0 : index
    %15 = vector.load %arg7[%c5, %c0_9] : memref<32x1024xf32, #tpu.memory_space<vmem>>, vector<1x1024xf32>
    tpu.vector_store %arg7[%c5, %c0_9], %14 {strides = array<i32>} : memref<32x1024xf32, #tpu.memory_space<vmem>>, vector<1x1024xf32>,
    %16 = vector.extract_strided_slice %1 {offsets = [0, 33], sizes = [1, 1024], strides = [1, 1]} : vector<1x1184xf32> to vector<1x1024xf32>
    %c6 = arith.constant 6 : index
    %c0_10 = arith.constant 0 : index
    %17 = vector.load %arg7[%c6, %c0_10] : memref<32x1024xf32, #tpu.memory_space<vmem>>, vector<1x1024xf32>
    tpu.vector_store %arg7[%c6, %c0_10], %16 {strides = array<i32>} : memref<32x1024xf32, #tpu.memory_space<vmem>>, vector<1x1024xf32>,
    %18 = vector.extract_strided_slice %1 {offsets = [0, 34], sizes = [1, 1024], strides = [1, 1]} : vector<1x1184xf32> to vector<1x1024xf32>
    %c7 = arith.constant 7 : index
    %c0_11 = arith.constant 0 : index
    %19 = vector.load %arg7[%c7, %c0_11] : memref<32x1024xf32, #tpu.memory_space<vmem>>, vector<1x1024xf32>
    tpu.vector_store %arg7[%c7, %c0_11], %18 {strides = array<i32>} : memref<32x1024xf32, #tpu.memory_space<vmem>>, vector<1x1024xf32>,
    %20 = vector.extract_strided_slice %1 {offsets = [0, 35], sizes = [1, 1024], strides = [1, 1]} : vector<1x1184xf32> to vector<1x1024xf32>
    %c8 = arith.constant 8 : index
    %c0_12 = arith.constant 0 : index
    %21 = vector.load %arg7[%c8, %c0_12] : memref<32x1024xf32, #tpu.memory_space<vmem>>, vector<1x1024xf32>
    tpu.vector_store %arg7[%c8, %c0_12], %20 {strides = array<i32>} : memref<32x1024xf32, #tpu.memory_space<vmem>>, vector<1x1024xf32>,
    %22 = vector.extract_strided_slice %1 {offsets = [0, 36], sizes = [1, 1024], strides = [1, 1]} : vector<1x1184xf32> to vector<1x1024xf32>
    %c9 = arith.constant 9 : index
    %c0_13 = arith.constant 0 : index
    %23 = vector.load %arg7[%c9, %c0_13] : memref<32x1024xf32, #tpu.memory_space<vmem>>, vector<1x1024xf32>
    tpu.vector_store %arg7[%c9, %c0_13], %22 {strides = array<i32>} : memref<32x1024xf32, #tpu.memory_space<vmem>>, vector<1x1024xf32>,
    %24 = vector.extract_strided_slice %1 {offsets = [0, 64], sizes = [1, 1024], strides = [1, 1]} : vector<1x1184xf32> to vector<1x1024xf32>
    %c10 = arith.constant 10 : index
    %c0_14 = arith.constant 0 : index
    %25 = vector.load %arg7[%c10, %c0_14] : memref<32x1024xf32, #tpu.memory_space<vmem>>, vector<1x1024xf32>
    tpu.vector_store %arg7[%c10, %c0_14], %24 {strides = array<i32>} : memref<32x1024xf32, #tpu.memory_space<vmem>>, vector<1x1024xf32>,
    %26 = vector.extract_strided_slice %1 {offsets = [0, 65], sizes = [1, 1024], strides = [1, 1]} : vector<1x1184xf32> to vector<1x1024xf32>
    %c11 = arith.constant 11 : index
    %c0_15 = arith.constant 0 : index
    %27 = vector.load %arg7[%c11, %c0_15] : memref<32x1024xf32, #tpu.memory_space<vmem>>, vector<1x1024xf32>
    tpu.vector_store %arg7[%c11, %c0_15], %26 {strides = array<i32>} : memref<32x1024xf32, #tpu.memory_space<vmem>>, vector<1x1024xf32>,
    %28 = vector.extract_strided_slice %1 {offsets = [0, 66], sizes = [1, 1024], strides = [1, 1]} : vector<1x1184xf32> to vector<1x1024xf32>
    %c12 = arith.constant 12 : index
    %c0_16 = arith.constant 0 : index
    %29 = vector.load %arg7[%c12, %c0_16] : memref<32x1024xf32, #tpu.memory_space<vmem>>, vector<1x1024xf32>
    tpu.vector_store %arg7[%c12, %c0_16], %28 {strides = array<i32>} : memref<32x1024xf32, #tpu.memory_space<vmem>>, vector<1x1024xf32>,
    %30 = vector.extract_strided_slice %1 {offsets = [0, 67], sizes = [1, 1024], strides = [1, 1]} : vector<1x1184xf32> to vector<1x1024xf32>
    %c13 = arith.constant 13 : index
    %c0_17 = arith.constant 0 : index
    %31 = vector.load %arg7[%c13, %c0_17] : memref<32x1024xf32, #tpu.memory_space<vmem>>, vector<1x1024xf32>
    tpu.vector_store %arg7[%c13, %c0_17], %30 {strides = array<i32>} : memref<32x1024xf32, #tpu.memory_space<vmem>>, vector<1x1024xf32>,
    %32 = vector.extract_strided_slice %1 {offsets = [0, 68], sizes = [1, 1024], strides = [1, 1]} : vector<1x1184xf32> to vector<1x1024xf32>
    %c14 = arith.constant 14 : index
    %c0_18 = arith.constant 0 : index
    %33 = vector.load %arg7[%c14, %c0_18] : memref<32x1024xf32, #tpu.memory_space<vmem>>, vector<1x1024xf32>
    tpu.vector_store %arg7[%c14, %c0_18], %32 {strides = array<i32>} : memref<32x1024xf32, #tpu.memory_space<vmem>>, vector<1x1024xf32>,
    %34 = vector.extract_strided_slice %1 {offsets = [0, 96], sizes = [1, 1024], strides = [1, 1]} : vector<1x1184xf32> to vector<1x1024xf32>
    %c15 = arith.constant 15 : index
    %c0_19 = arith.constant 0 : index
    %35 = vector.load %arg7[%c15, %c0_19] : memref<32x1024xf32, #tpu.memory_space<vmem>>, vector<1x1024xf32>
    tpu.vector_store %arg7[%c15, %c0_19], %34 {strides = array<i32>} : memref<32x1024xf32, #tpu.memory_space<vmem>>, vector<1x1024xf32>,
    %36 = vector.extract_strided_slice %1 {offsets = [0, 97], sizes = [1, 1024], strides = [1, 1]} : vector<1x1184xf32> to vector<1x1024xf32>
    %c16 = arith.constant 16 : index
    %c0_20 = arith.constant 0 : index
    %37 = vector.load %arg7[%c16, %c0_20] : memref<32x1024xf32, #tpu.memory_space<vmem>>, vector<1x1024xf32>
    tpu.vector_store %arg7[%c16, %c0_20], %36 {strides = array<i32>} : memref<32x1024xf32, #tpu.memory_space<vmem>>, vector<1x1024xf32>,
    %38 = vector.extract_strided_slice %1 {offsets = [0, 98], sizes = [1, 1024], strides = [1, 1]} : vector<1x1184xf32> to vector<1x1024xf32>
    %c17 = arith.constant 17 : index
    %c0_21 = arith.constant 0 : index
    %39 = vector.load %arg7[%c17, %c0_21] : memref<32x1024xf32, #tpu.memory_space<vmem>>, vector<1x1024xf32>
    tpu.vector_store %arg7[%c17, %c0_21], %38 {strides = array<i32>} : memref<32x1024xf32, #tpu.memory_space<vmem>>, vector<1x1024xf32>,
    %40 = vector.extract_strided_slice %1 {offsets = [0, 99], sizes = [1, 1024], strides = [1, 1]} : vector<1x1184xf32> to vector<1x1024xf32>
    %c18 = arith.constant 18 : index
    %c0_22 = arith.constant 0 : index
    %41 = vector.load %arg7[%c18, %c0_22] : memref<32x1024xf32, #tpu.memory_space<vmem>>, vector<1x1024xf32>
    tpu.vector_store %arg7[%c18, %c0_22], %40 {strides = array<i32>} : memref<32x1024xf32, #tpu.memory_space<vmem>>, vector<1x1024xf32>,
    %42 = vector.extract_strided_slice %1 {offsets = [0, 100], sizes = [1, 1024], strides = [1, 1]} : vector<1x1184xf32> to vector<1x1024xf32>
    %c19 = arith.constant 19 : index
    %c0_23 = arith.constant 0 : index
    %43 = vector.load %arg7[%c19, %c0_23] : memref<32x1024xf32, #tpu.memory_space<vmem>>, vector<1x1024xf32>
    tpu.vector_store %arg7[%c19, %c0_23], %42 {strides = array<i32>} : memref<32x1024xf32, #tpu.memory_space<vmem>>, vector<1x1024xf32>,
    %44 = vector.extract_strided_slice %1 {offsets = [0, 128], sizes = [1, 1024], strides = [1, 1]} : vector<1x1184xf32> to vector<1x1024xf32>
    %c20 = arith.constant 20 : index
    %c0_24 = arith.constant 0 : index
    %45 = vector.load %arg7[%c20, %c0_24] : memref<32x1024xf32, #tpu.memory_space<vmem>>, vector<1x1024xf32>
    tpu.vector_store %arg7[%c20, %c0_24], %44 {strides = array<i32>} : memref<32x1024xf32, #tpu.memory_space<vmem>>, vector<1x1024xf32>,
    %46 = vector.extract_strided_slice %1 {offsets = [0, 129], sizes = [1, 1024], strides = [1, 1]} : vector<1x1184xf32> to vector<1x1024xf32>
    %c21 = arith.constant 21 : index
    %c0_25 = arith.constant 0 : index
    %47 = vector.load %arg7[%c21, %c0_25] : memref<32x1024xf32, #tpu.memory_space<vmem>>, vector<1x1024xf32>
    tpu.vector_store %arg7[%c21, %c0_25], %46 {strides = array<i32>} : memref<32x1024xf32, #tpu.memory_space<vmem>>, vector<1x1024xf32>,
    %48 = vector.extract_strided_slice %1 {offsets = [0, 130], sizes = [1, 1024], strides = [1, 1]} : vector<1x1184xf32> to vector<1x1024xf32>
    %c22 = arith.constant 22 : index
    %c0_26 = arith.constant 0 : index
    %49 = vector.load %arg7[%c22, %c0_26] : memref<32x1024xf32, #tpu.memory_space<vmem>>, vector<1x1024xf32>
    tpu.vector_store %arg7[%c22, %c0_26], %48 {strides = array<i32>} : memref<32x1024xf32, #tpu.memory_space<vmem>>, vector<1x1024xf32>,
    %50 = vector.extract_strided_slice %1 {offsets = [0, 131], sizes = [1, 1024], strides = [1, 1]} : vector<1x1184xf32> to vector<1x1024xf32>
    %c23 = arith.constant 23 : index
    %c0_27 = arith.constant 0 : index
    %51 = vector.load %arg7[%c23, %c0_27] : memref<32x1024xf32, #tpu.memory_space<vmem>>, vector<1x1024xf32>
    tpu.vector_store %arg7[%c23, %c0_27], %50 {strides = array<i32>} : memref<32x1024xf32, #tpu.memory_space<vmem>>, vector<1x1024xf32>,
    %52 = vector.extract_strided_slice %1 {offsets = [0, 132], sizes = [1, 1024], strides = [1, 1]} : vector<1x1184xf32> to vector<1x1024xf32>
    %c24_28 = arith.constant 24 : index
    %c0_29 = arith.constant 0 : index
    %53 = vector.load %arg7[%c24_28, %c0_29] : memref<32x1024xf32, #tpu.memory_space<vmem>>, vector<1x1024xf32>
    tpu.vector_store %arg7[%c24_28, %c0_29], %52 {strides = array<i32>} : memref<32x1024xf32, #tpu.memory_space<vmem>>, vector<1x1024xf32>,
    %c0_30 = arith.constant 0 : index
    %c0_31 = arith.constant 0 : index
    %54 = vector.load %arg2[%c0_30, %c0_31] : memref<16x32xf32, #tpu.memory_space<vmem>>, vector<16x32xf32>
    %c0_32 = arith.constant 0 : index
    %c0_33 = arith.constant 0 : index
    %55 = vector.load %arg7[%c0_32, %c0_33] : memref<32x1024xf32, #tpu.memory_space<vmem>>, vector<32x1024xf32>
    %cst_34 = arith.constant dense<0.000000e+00> : vector<16x1024xf32>
    %56 = tpu.matmul %54, %55, %cst_34 {dimension_numbers = #tpu.dot_dimension_numbers<[1], [0], [0], [1], [0, 0, 1, 1], [], []>} : vector<16x32xf32>, vector<32x1024xf32>, vector<16x1024xf32> -> vector<16x1024xf32>
    %c0_35 = arith.constant 0 : index
    %c0_36 = arith.constant 0 : index
    %57 = vector.load %arg3[%c0_35, %c0_36] : memref<16x1xf32, #tpu.memory_space<vmem>>, vector<16x1xf32>
    %58 = vector.broadcast %57 : vector<16x1xf32> to vector<16x1024xf32>
    %59 = arith.addf %56, %58 : vector<16x1024xf32>
    %cst_37 = arith.constant 0.000000e+00 : f32
    %60 = vector.broadcast %cst_37 : f32 to vector<16x1024xf32>
    %61 = arith.maximumf %59, %60 : vector<16x1024xf32>
    %62 = arith.truncf %61 : vector<16x1024xf32> to vector<16x1024xbf16>
    %c0_38 = arith.constant 0 : index
    %c0_39 = arith.constant 0 : index
    %63 = vector.load %arg8[%c0_38, %c0_39] : memref<16x1184xbf16, #tpu.memory_space<vmem>>, vector<16x1024xbf16>
    tpu.vector_store %arg8[%c0_38, %c0_39], %62 {strides = array<i32>} : memref<16x1184xbf16, #tpu.memory_space<vmem>>, vector<16x1024xbf16>,
    %cst_40 = arith.constant 0.000000e+00 : bf16
    %64 = vector.broadcast %cst_40 : bf16 to vector<16x160xbf16>
    %c0_41 = arith.constant 0 : index
    %c1024 = arith.constant 1024 : index
    %65 = vector.load %arg8[%c0_41, %c1024] : memref<16x1184xbf16, #tpu.memory_space<vmem>>, vector<16x160xbf16>
    tpu.vector_store %arg8[%c0_41, %c1024], %64 {strides = array<i32>} : memref<16x1184xbf16, #tpu.memory_space<vmem>>, vector<16x160xbf16>,
    %cst_42 = arith.constant 0.000000e+00 : f32
    %66 = vector.broadcast %cst_42 : f32 to vector<32x1024xf32>
    %c0_43 = arith.constant 0 : index
    %c0_44 = arith.constant 0 : index
    %67 = vector.load %arg10[%c0_43, %c0_44] : memref<32x1024xf32, #tpu.memory_space<vmem>>, vector<32x1024xf32>
    tpu.vector_store %arg10[%c0_43, %c0_44], %66 {strides = array<i32>} : memref<32x1024xf32, #tpu.memory_space<vmem>>, vector<32x1024xf32>,
    %c0_45 = arith.constant 0 : index
    %c0_46 = arith.constant 0 : index
    %68 = vector.load %arg8[%c0_45, %c0_46] : memref<16x1184xbf16, #tpu.memory_space<vmem>>, vector<16x1024xbf16>
    %c0_47 = arith.constant 0 : index
    %c0_48 = arith.constant 0 : index
    %69 = vector.load %arg9[%c0_47, %c0_48] : memref<80x1024xbf16, #tpu.memory_space<vmem>>, vector<16x1024xbf16>
    tpu.vector_store %arg9[%c0_47, %c0_48], %68 {strides = array<i32>} : memref<80x1024xbf16, #tpu.memory_space<vmem>>, vector<16x1024xbf16>,
    %c0_49 = arith.constant 0 : index
    %c1_50 = arith.constant 1 : index
    %70 = vector.load %arg8[%c0_49, %c1_50] : memref<16x1184xbf16, #tpu.memory_space<vmem>>, vector<16x1024xbf16>
    %c16_51 = arith.constant 16 : index
    %c0_52 = arith.constant 0 : index
    %71 = vector.load %arg9[%c16_51, %c0_52] : memref<80x1024xbf16, #tpu.memory_space<vmem>>, vector<16x1024xbf16>
    tpu.vector_store %arg9[%c16_51, %c0_52], %70 {strides = array<i32>} : memref<80x1024xbf16, #tpu.memory_space<vmem>>, vector<16x1024xbf16>,
    %c0_53 = arith.constant 0 : index
    %c2_54 = arith.constant 2 : index
    %72 = vector.load %arg8[%c0_53, %c2_54] : memref<16x1184xbf16, #tpu.memory_space<vmem>>, vector<16x1024xbf16>
    %c32 = arith.constant 32 : index
    %c0_55 = arith.constant 0 : index
    %73 = vector.load %arg9[%c32, %c0_55] : memref<80x1024xbf16, #tpu.memory_space<vmem>>, vector<16x1024xbf16>
    tpu.vector_store %arg9[%c32, %c0_55], %72 {strides = array<i32>} : memref<80x1024xbf16, #tpu.memory_space<vmem>>, vector<16x1024xbf16>,
    %c0_56 = arith.constant 0 : index
    %c3_57 = arith.constant 3 : index
    %74 = vector.load %arg8[%c0_56, %c3_57] : memref<16x1184xbf16, #tpu.memory_space<vmem>>, vector<16x1024xbf16>
    %c48 = arith.constant 48 : index
    %c0_58 = arith.constant 0 : index
    %75 = vector.load %arg9[%c48, %c0_58] : memref<80x1024xbf16, #tpu.memory_space<vmem>>, vector<16x1024xbf16>
    tpu.vector_store %arg9[%c48, %c0_58], %74 {strides = array<i32>} : memref<80x1024xbf16, #tpu.memory_space<vmem>>, vector<16x1024xbf16>,
    %c0_59 = arith.constant 0 : index
    %c4_60 = arith.constant 4 : index
    %76 = vector.load %arg8[%c0_59, %c4_60] : memref<16x1184xbf16, #tpu.memory_space<vmem>>, vector<16x1024xbf16>
    %c64 = arith.constant 64 : index
    %c0_61 = arith.constant 0 : index
    %77 = vector.load %arg9[%c64, %c0_61] : memref<80x1024xbf16, #tpu.memory_space<vmem>>, vector<16x1024xbf16>
    tpu.vector_store %arg9[%c64, %c0_61], %76 {strides = array<i32>} : memref<80x1024xbf16, #tpu.memory_space<vmem>>, vector<16x1024xbf16>,
    %c0_62 = arith.constant 0 : index
    %c0_63 = arith.constant 0 : index
    %78 = vector.load %arg10[%c0_62, %c0_63] : memref<32x1024xf32, #tpu.memory_space<vmem>>, vector<32x1024xf32>
    %c0_64 = arith.constant 0 : index
    %c0_65 = arith.constant 0 : index
    %c0_66 = arith.constant 0 : index
    %79 = vector.load %arg4[%c0_64, %c0_65, %c0_66] : memref<5x32x80xbf16, #tpu.memory_space<vmem>>, vector<1x32x80xbf16>
    %80 = vector.shape_cast %79 : vector<1x32x80xbf16> to vector<32x80xbf16>
    %c0_67 = arith.constant 0 : index
    %c0_68 = arith.constant 0 : index
    %81 = vector.load %arg9[%c0_67, %c0_68] : memref<80x1024xbf16, #tpu.memory_space<vmem>>, vector<80x1024xbf16>
    %cst_69 = arith.constant dense<0.000000e+00> : vector<32x1024xf32>
    %82 = tpu.matmul %80, %81, %cst_69 {dimension_numbers = #tpu.dot_dimension_numbers<[1], [0], [0], [1], [0, 0, 1, 1], [], []>} : vector<32x80xbf16>, vector<80x1024xbf16>, vector<32x1024xf32> -> vector<32x1024xf32>
    %83 = arith.addf %78, %82 : vector<32x1024xf32>
    %c0_70 = arith.constant 0 : index
    %c0_71 = arith.constant 0 : index
    %84 = vector.load %arg10[%c0_70, %c0_71] : memref<32x1024xf32, #tpu.memory_space<vmem>>, vector<32x1024xf32>
    tpu.vector_store %arg10[%c0_70, %c0_71], %83 {strides = array<i32>} : memref<32x1024xf32, #tpu.memory_space<vmem>>, vector<32x1024xf32>,
    %c0_72 = arith.constant 0 : index
    %c32_73 = arith.constant 32 : index
    %85 = vector.load %arg8[%c0_72, %c32_73] : memref<16x1184xbf16, #tpu.memory_space<vmem>>, vector<16x1024xbf16>
    %c0_74 = arith.constant 0 : index
    %c0_75 = arith.constant 0 : index
    %86 = vector.load %arg9[%c0_74, %c0_75] : memref<80x1024xbf16, #tpu.memory_space<vmem>>, vector<16x1024xbf16>
    tpu.vector_store %arg9[%c0_74, %c0_75], %85 {strides = array<i32>} : memref<80x1024xbf16, #tpu.memory_space<vmem>>, vector<16x1024xbf16>,
    %c0_76 = arith.constant 0 : index
    %c33 = arith.constant 33 : index
    %87 = vector.load %arg8[%c0_76, %c33] : memref<16x1184xbf16, #tpu.memory_space<vmem>>, vector<16x1024xbf16>
    %c16_77 = arith.constant 16 : index
    %c0_78 = arith.constant 0 : index
    %88 = vector.load %arg9[%c16_77, %c0_78] : memref<80x1024xbf16, #tpu.memory_space<vmem>>, vector<16x1024xbf16>
    tpu.vector_store %arg9[%c16_77, %c0_78], %87 {strides = array<i32>} : memref<80x1024xbf16, #tpu.memory_space<vmem>>, vector<16x1024xbf16>,
    %c0_79 = arith.constant 0 : index
    %c34 = arith.constant 34 : index
    %89 = vector.load %arg8[%c0_79, %c34] : memref<16x1184xbf16, #tpu.memory_space<vmem>>, vector<16x1024xbf16>
    %c32_80 = arith.constant 32 : index
    %c0_81 = arith.constant 0 : index
    %90 = vector.load %arg9[%c32_80, %c0_81] : memref<80x1024xbf16, #tpu.memory_space<vmem>>, vector<16x1024xbf16>
    tpu.vector_store %arg9[%c32_80, %c0_81], %89 {strides = array<i32>} : memref<80x1024xbf16, #tpu.memory_space<vmem>>, vector<16x1024xbf16>,
    %c0_82 = arith.constant 0 : index
    %c35 = arith.constant 35 : index
    %91 = vector.load %arg8[%c0_82, %c35] : memref<16x1184xbf16, #tpu.memory_space<vmem>>, vector<16x1024xbf16>
    %c48_83 = arith.constant 48 : index
    %c0_84 = arith.constant 0 : index
    %92 = vector.load %arg9[%c48_83, %c0_84] : memref<80x1024xbf16, #tpu.memory_space<vmem>>, vector<16x1024xbf16>
    tpu.vector_store %arg9[%c48_83, %c0_84], %91 {strides = array<i32>} : memref<80x1024xbf16, #tpu.memory_space<vmem>>, vector<16x1024xbf16>,
    %c0_85 = arith.constant 0 : index
    %c36 = arith.constant 36 : index
    %93 = vector.load %arg8[%c0_85, %c36] : memref<16x1184xbf16, #tpu.memory_space<vmem>>, vector<16x1024xbf16>
    %c64_86 = arith.constant 64 : index
    %c0_87 = arith.constant 0 : index
    %94 = vector.load %arg9[%c64_86, %c0_87] : memref<80x1024xbf16, #tpu.memory_space<vmem>>, vector<16x1024xbf16>
    tpu.vector_store %arg9[%c64_86, %c0_87], %93 {strides = array<i32>} : memref<80x1024xbf16, #tpu.memory_space<vmem>>, vector<16x1024xbf16>,
    %c0_88 = arith.constant 0 : index
    %c0_89 = arith.constant 0 : index
    %95 = vector.load %arg10[%c0_88, %c0_89] : memref<32x1024xf32, #tpu.memory_space<vmem>>, vector<32x1024xf32>
    %c1_90 = arith.constant 1 : index
    %c0_91 = arith.constant 0 : index
    %c0_92 = arith.constant 0 : index
    %96 = vector.load %arg4[%c1_90, %c0_91, %c0_92] : memref<5x32x80xbf16, #tpu.memory_space<vmem>>, vector<1x32x80xbf16>
    %97 = vector.shape_cast %96 : vector<1x32x80xbf16> to vector<32x80xbf16>
    %c0_93 = arith.constant 0 : index
    %c0_94 = arith.constant 0 : index
    %98 = vector.load %arg9[%c0_93, %c0_94] : memref<80x1024xbf16, #tpu.memory_space<vmem>>, vector<80x1024xbf16>
    %cst_95 = arith.constant dense<0.000000e+00> : vector<32x1024xf32>
    %99 = tpu.matmul %97, %98, %cst_95 {dimension_numbers = #tpu.dot_dimension_numbers<[1], [0], [0], [1], [0, 0, 1, 1], [], []>} : vector<32x80xbf16>, vector<80x1024xbf16>, vector<32x1024xf32> -> vector<32x1024xf32>
    %100 = arith.addf %95, %99 : vector<32x1024xf32>
    %c0_96 = arith.constant 0 : index
    %c0_97 = arith.constant 0 : index
    %101 = vector.load %arg10[%c0_96, %c0_97] : memref<32x1024xf32, #tpu.memory_space<vmem>>, vector<32x1024xf32>
    tpu.vector_store %arg10[%c0_96, %c0_97], %100 {strides = array<i32>} : memref<32x1024xf32, #tpu.memory_space<vmem>>, vector<32x1024xf32>,
    %c0_98 = arith.constant 0 : index
    %c64_99 = arith.constant 64 : index
    %102 = vector.load %arg8[%c0_98, %c64_99] : memref<16x1184xbf16, #tpu.memory_space<vmem>>, vector<16x1024xbf16>
    %c0_100 = arith.constant 0 : index
    %c0_101 = arith.constant 0 : index
    %103 = vector.load %arg9[%c0_100, %c0_101] : memref<80x1024xbf16, #tpu.memory_space<vmem>>, vector<16x1024xbf16>
    tpu.vector_store %arg9[%c0_100, %c0_101], %102 {strides = array<i32>} : memref<80x1024xbf16, #tpu.memory_space<vmem>>, vector<16x1024xbf16>,
    %c0_102 = arith.constant 0 : index
    %c65 = arith.constant 65 : index
    %104 = vector.load %arg8[%c0_102, %c65] : memref<16x1184xbf16, #tpu.memory_space<vmem>>, vector<16x1024xbf16>
    %c16_103 = arith.constant 16 : index
    %c0_104 = arith.constant 0 : index
    %105 = vector.load %arg9[%c16_103, %c0_104] : memref<80x1024xbf16, #tpu.memory_space<vmem>>, vector<16x1024xbf16>
    tpu.vector_store %arg9[%c16_103, %c0_104], %104 {strides = array<i32>} : memref<80x1024xbf16, #tpu.memory_space<vmem>>, vector<16x1024xbf16>,
    %c0_105 = arith.constant 0 : index
    %c66 = arith.constant 66 : index
    %106 = vector.load %arg8[%c0_105, %c66] : memref<16x1184xbf16, #tpu.memory_space<vmem>>, vector<16x1024xbf16>
    %c32_106 = arith.constant 32 : index
    %c0_107 = arith.constant 0 : index
    %107 = vector.load %arg9[%c32_106, %c0_107] : memref<80x1024xbf16, #tpu.memory_space<vmem>>, vector<16x1024xbf16>
    tpu.vector_store %arg9[%c32_106, %c0_107], %106 {strides = array<i32>} : memref<80x1024xbf16, #tpu.memory_space<vmem>>, vector<16x1024xbf16>,
    %c0_108 = arith.constant 0 : index
    %c67 = arith.constant 67 : index
    %108 = vector.load %arg8[%c0_108, %c67] : memref<16x1184xbf16, #tpu.memory_space<vmem>>, vector<16x1024xbf16>
    %c48_109 = arith.constant 48 : index
    %c0_110 = arith.constant 0 : index
    %109 = vector.load %arg9[%c48_109, %c0_110] : memref<80x1024xbf16, #tpu.memory_space<vmem>>, vector<16x1024xbf16>
    tpu.vector_store %arg9[%c48_109, %c0_110], %108 {strides = array<i32>} : memref<80x1024xbf16, #tpu.memory_space<vmem>>, vector<16x1024xbf16>,
    %c0_111 = arith.constant 0 : index
    %c68 = arith.constant 68 : index
    %110 = vector.load %arg8[%c0_111, %c68] : memref<16x1184xbf16, #tpu.memory_space<vmem>>, vector<16x1024xbf16>
    %c64_112 = arith.constant 64 : index
    %c0_113 = arith.constant 0 : index
    %111 = vector.load %arg9[%c64_112, %c0_113] : memref<80x1024xbf16, #tpu.memory_space<vmem>>, vector<16x1024xbf16>
    tpu.vector_store %arg9[%c64_112, %c0_113], %110 {strides = array<i32>} : memref<80x1024xbf16, #tpu.memory_space<vmem>>, vector<16x1024xbf16>,
    %c0_114 = arith.constant 0 : index
    %c0_115 = arith.constant 0 : index
    %112 = vector.load %arg10[%c0_114, %c0_115] : memref<32x1024xf32, #tpu.memory_space<vmem>>, vector<32x1024xf32>
    %c2_116 = arith.constant 2 : index
    %c0_117 = arith.constant 0 : index
    %c0_118 = arith.constant 0 : index
    %113 = vector.load %arg4[%c2_116, %c0_117, %c0_118] : memref<5x32x80xbf16, #tpu.memory_space<vmem>>, vector<1x32x80xbf16>
    %114 = vector.shape_cast %113 : vector<1x32x80xbf16> to vector<32x80xbf16>
    %c0_119 = arith.constant 0 : index
    %c0_120 = arith.constant 0 : index
    %115 = vector.load %arg9[%c0_119, %c0_120] : memref<80x1024xbf16, #tpu.memory_space<vmem>>, vector<80x1024xbf16>
    %cst_121 = arith.constant dense<0.000000e+00> : vector<32x1024xf32>
    %116 = tpu.matmul %114, %115, %cst_121 {dimension_numbers = #tpu.dot_dimension_numbers<[1], [0], [0], [1], [0, 0, 1, 1], [], []>} : vector<32x80xbf16>, vector<80x1024xbf16>, vector<32x1024xf32> -> vector<32x1024xf32>
    %117 = arith.addf %112, %116 : vector<32x1024xf32>
    %c0_122 = arith.constant 0 : index
    %c0_123 = arith.constant 0 : index
    %118 = vector.load %arg10[%c0_122, %c0_123] : memref<32x1024xf32, #tpu.memory_space<vmem>>, vector<32x1024xf32>
    tpu.vector_store %arg10[%c0_122, %c0_123], %117 {strides = array<i32>} : memref<32x1024xf32, #tpu.memory_space<vmem>>, vector<32x1024xf32>,
    %c0_124 = arith.constant 0 : index
    %c96 = arith.constant 96 : index
    %119 = vector.load %arg8[%c0_124, %c96] : memref<16x1184xbf16, #tpu.memory_space<vmem>>, vector<16x1024xbf16>
    %c0_125 = arith.constant 0 : index
    %c0_126 = arith.constant 0 : index
    %120 = vector.load %arg9[%c0_125, %c0_126] : memref<80x1024xbf16, #tpu.memory_space<vmem>>, vector<16x1024xbf16>
    tpu.vector_store %arg9[%c0_125, %c0_126], %119 {strides = array<i32>} : memref<80x1024xbf16, #tpu.memory_space<vmem>>, vector<16x1024xbf16>,
    %c0_127 = arith.constant 0 : index
    %c97 = arith.constant 97 : index
    %121 = vector.load %arg8[%c0_127, %c97] : memref<16x1184xbf16, #tpu.memory_space<vmem>>, vector<16x1024xbf16>
    %c16_128 = arith.constant 16 : index
    %c0_129 = arith.constant 0 : index
    %122 = vector.load %arg9[%c16_128, %c0_129] : memref<80x1024xbf16, #tpu.memory_space<vmem>>, vector<16x1024xbf16>
    tpu.vector_store %arg9[%c16_128, %c0_129], %121 {strides = array<i32>} : memref<80x1024xbf16, #tpu.memory_space<vmem>>, vector<16x1024xbf16>,
    %c0_130 = arith.constant 0 : index
    %c98 = arith.constant 98 : index
    %123 = vector.load %arg8[%c0_130, %c98] : memref<16x1184xbf16, #tpu.memory_space<vmem>>, vector<16x1024xbf16>
    %c32_131 = arith.constant 32 : index
    %c0_132 = arith.constant 0 : index
    %124 = vector.load %arg9[%c32_131, %c0_132] : memref<80x1024xbf16, #tpu.memory_space<vmem>>, vector<16x1024xbf16>
    tpu.vector_store %arg9[%c32_131, %c0_132], %123 {strides = array<i32>} : memref<80x1024xbf16, #tpu.memory_space<vmem>>, vector<16x1024xbf16>,
    %c0_133 = arith.constant 0 : index
    %c99 = arith.constant 99 : index
    %125 = vector.load %arg8[%c0_133, %c99] : memref<16x1184xbf16, #tpu.memory_space<vmem>>, vector<16x1024xbf16>
    %c48_134 = arith.constant 48 : index
    %c0_135 = arith.constant 0 : index
    %126 = vector.load %arg9[%c48_134, %c0_135] : memref<80x1024xbf16, #tpu.memory_space<vmem>>, vector<16x1024xbf16>
    tpu.vector_store %arg9[%c48_134, %c0_135], %125 {strides = array<i32>} : memref<80x1024xbf16, #tpu.memory_space<vmem>>, vector<16x1024xbf16>,
    %c0_136 = arith.constant 0 : index
    %c100 = arith.constant 100 : index
    %127 = vector.load %arg8[%c0_136, %c100] : memref<16x1184xbf16, #tpu.memory_space<vmem>>, vector<16x1024xbf16>
    %c64_137 = arith.constant 64 : index
    %c0_138 = arith.constant 0 : index
    %128 = vector.load %arg9[%c64_137, %c0_138] : memref<80x1024xbf16, #tpu.memory_space<vmem>>, vector<16x1024xbf16>
    tpu.vector_store %arg9[%c64_137, %c0_138], %127 {strides = array<i32>} : memref<80x1024xbf16, #tpu.memory_space<vmem>>, vector<16x1024xbf16>,
    %c0_139 = arith.constant 0 : index
    %c0_140 = arith.constant 0 : index
    %129 = vector.load %arg10[%c0_139, %c0_140] : memref<32x1024xf32, #tpu.memory_space<vmem>>, vector<32x1024xf32>
    %c3_141 = arith.constant 3 : index
    %c0_142 = arith.constant 0 : index
    %c0_143 = arith.constant 0 : index
    %130 = vector.load %arg4[%c3_141, %c0_142, %c0_143] : memref<5x32x80xbf16, #tpu.memory_space<vmem>>, vector<1x32x80xbf16>
    %131 = vector.shape_cast %130 : vector<1x32x80xbf16> to vector<32x80xbf16>
    %c0_144 = arith.constant 0 : index
    %c0_145 = arith.constant 0 : index
    %132 = vector.load %arg9[%c0_144, %c0_145] : memref<80x1024xbf16, #tpu.memory_space<vmem>>, vector<80x1024xbf16>
    %cst_146 = arith.constant dense<0.000000e+00> : vector<32x1024xf32>
    %133 = tpu.matmul %131, %132, %cst_146 {dimension_numbers = #tpu.dot_dimension_numbers<[1], [0], [0], [1], [0, 0, 1, 1], [], []>} : vector<32x80xbf16>, vector<80x1024xbf16>, vector<32x1024xf32> -> vector<32x1024xf32>
    %134 = arith.addf %129, %133 : vector<32x1024xf32>
    %c0_147 = arith.constant 0 : index
    %c0_148 = arith.constant 0 : index
    %135 = vector.load %arg10[%c0_147, %c0_148] : memref<32x1024xf32, #tpu.memory_space<vmem>>, vector<32x1024xf32>
    tpu.vector_store %arg10[%c0_147, %c0_148], %134 {strides = array<i32>} : memref<32x1024xf32, #tpu.memory_space<vmem>>, vector<32x1024xf32>,
    %c0_149 = arith.constant 0 : index
    %c128 = arith.constant 128 : index
    %136 = vector.load %arg8[%c0_149, %c128] : memref<16x1184xbf16, #tpu.memory_space<vmem>>, vector<16x1024xbf16>
    %c0_150 = arith.constant 0 : index
    %c0_151 = arith.constant 0 : index
    %137 = vector.load %arg9[%c0_150, %c0_151] : memref<80x1024xbf16, #tpu.memory_space<vmem>>, vector<16x1024xbf16>
    tpu.vector_store %arg9[%c0_150, %c0_151], %136 {strides = array<i32>} : memref<80x1024xbf16, #tpu.memory_space<vmem>>, vector<16x1024xbf16>,
    %c0_152 = arith.constant 0 : index
    %c129 = arith.constant 129 : index
    %138 = vector.load %arg8[%c0_152, %c129] : memref<16x1184xbf16, #tpu.memory_space<vmem>>, vector<16x1024xbf16>
    %c16_153 = arith.constant 16 : index
    %c0_154 = arith.constant 0 : index
    %139 = vector.load %arg9[%c16_153, %c0_154] : memref<80x1024xbf16, #tpu.memory_space<vmem>>, vector<16x1024xbf16>
    tpu.vector_store %arg9[%c16_153, %c0_154], %138 {strides = array<i32>} : memref<80x1024xbf16, #tpu.memory_space<vmem>>, vector<16x1024xbf16>,
    %c0_155 = arith.constant 0 : index
    %c130 = arith.constant 130 : index
    %140 = vector.load %arg8[%c0_155, %c130] : memref<16x1184xbf16, #tpu.memory_space<vmem>>, vector<16x1024xbf16>
    %c32_156 = arith.constant 32 : index
    %c0_157 = arith.constant 0 : index
    %141 = vector.load %arg9[%c32_156, %c0_157] : memref<80x1024xbf16, #tpu.memory_space<vmem>>, vector<16x1024xbf16>
    tpu.vector_store %arg9[%c32_156, %c0_157], %140 {strides = array<i32>} : memref<80x1024xbf16, #tpu.memory_space<vmem>>, vector<16x1024xbf16>,
    %c0_158 = arith.constant 0 : index
    %c131 = arith.constant 131 : index
    %142 = vector.load %arg8[%c0_158, %c131] : memref<16x1184xbf16, #tpu.memory_space<vmem>>, vector<16x1024xbf16>
    %c48_159 = arith.constant 48 : index
    %c0_160 = arith.constant 0 : index
    %143 = vector.load %arg9[%c48_159, %c0_160] : memref<80x1024xbf16, #tpu.memory_space<vmem>>, vector<16x1024xbf16>
    tpu.vector_store %arg9[%c48_159, %c0_160], %142 {strides = array<i32>} : memref<80x1024xbf16, #tpu.memory_space<vmem>>, vector<16x1024xbf16>,
    %c0_161 = arith.constant 0 : index
    %c132 = arith.constant 132 : index
    %144 = vector.load %arg8[%c0_161, %c132] : memref<16x1184xbf16, #tpu.memory_space<vmem>>, vector<16x1024xbf16>
    %c64_162 = arith.constant 64 : index
    %c0_163 = arith.constant 0 : index
    %145 = vector.load %arg9[%c64_162, %c0_163] : memref<80x1024xbf16, #tpu.memory_space<vmem>>, vector<16x1024xbf16>
    tpu.vector_store %arg9[%c64_162, %c0_163], %144 {strides = array<i32>} : memref<80x1024xbf16, #tpu.memory_space<vmem>>, vector<16x1024xbf16>,
    %c0_164 = arith.constant 0 : index
    %c0_165 = arith.constant 0 : index
    %146 = vector.load %arg10[%c0_164, %c0_165] : memref<32x1024xf32, #tpu.memory_space<vmem>>, vector<32x1024xf32>
    %c4_166 = arith.constant 4 : index
    %c0_167 = arith.constant 0 : index
    %c0_168 = arith.constant 0 : index
    %147 = vector.load %arg4[%c4_166, %c0_167, %c0_168] : memref<5x32x80xbf16, #tpu.memory_space<vmem>>, vector<1x32x80xbf16>
    %148 = vector.shape_cast %147 : vector<1x32x80xbf16> to vector<32x80xbf16>
    %c0_169 = arith.constant 0 : index
    %c0_170 = arith.constant 0 : index
    %149 = vector.load %arg9[%c0_169, %c0_170] : memref<80x1024xbf16, #tpu.memory_space<vmem>>, vector<80x1024xbf16>
    %cst_171 = arith.constant dense<0.000000e+00> : vector<32x1024xf32>
    %150 = tpu.matmul %148, %149, %cst_171 {dimension_numbers = #tpu.dot_dimension_numbers<[1], [0], [0], [1], [0, 0, 1, 1], [], []>} : vector<32x80xbf16>, vector<80x1024xbf16>, vector<32x1024xf32> -> vector<32x1024xf32>
    %151 = arith.addf %146, %150 : vector<32x1024xf32>
    %c0_172 = arith.constant 0 : index
    %c0_173 = arith.constant 0 : index
    %152 = vector.load %arg10[%c0_172, %c0_173] : memref<32x1024xf32, #tpu.memory_space<vmem>>, vector<32x1024xf32>
    tpu.vector_store %arg10[%c0_172, %c0_173], %151 {strides = array<i32>} : memref<32x1024xf32, #tpu.memory_space<vmem>>, vector<32x1024xf32>,
    %c0_174 = arith.constant 0 : index
    %c0_175 = arith.constant 0 : index
    %153 = vector.load %arg10[%c0_174, %c0_175] : memref<32x1024xf32, #tpu.memory_space<vmem>>, vector<32x1024xf32>
    %c0_176 = arith.constant 0 : index
    %c0_177 = arith.constant 0 : index
    %154 = vector.load %arg5[%c0_176, %c0_177] : memref<32x1xf32, #tpu.memory_space<vmem>>, vector<32x1xf32>
    %155 = vector.broadcast %154 : vector<32x1xf32> to vector<32x1024xf32>
    %156 = arith.addf %153, %155 : vector<32x1024xf32>
    %cst_178 = arith.constant 0.000000e+00 : f32
    %157 = vector.broadcast %cst_178 : f32 to vector<32x1024xf32>
    %158 = arith.maximumf %156, %157 : vector<32x1024xf32>
    %c0_179 = arith.constant 0 : index
    %c0_180 = arith.constant 0 : index
    %c0_181 = arith.constant 0 : index
    %159 = vector.load %arg6[%c0_179, %c0_180, %c0_181] : memref<1x32x1024xf32, #tpu.memory_space<vmem>>, vector<1x32x1024xf32>
    %160 = vector.shape_cast %159 : vector<1x32x1024xf32> to vector<32x1024xf32>
    %161 = vector.shape_cast %158 : vector<32x1024xf32> to vector<1x32x1024xf32>
    tpu.vector_store %arg6[%c0_179, %c0_180, %c0_181], %161 {strides = array<i32>} : memref<1x32x1024xf32, #tpu.memory_space<vmem>>, vector<1x32x1024xf32>,
    return
  }
  func.func @transform_0(%arg0: i32) -> (i32, i32, i32) {
    %c0_i32 = arith.constant 0 : i32
    %c0_i32_0 = arith.constant 0 : i32
    %c0_i32_1 = arith.constant 0 : i32
    return %arg0, %c0_i32, %c0_i32_0 : i32, i32, i32
  }
  func.func @transform_1(%arg0: i32) -> (i32, i32) {
    %c0_i32 = arith.constant 0 : i32
    %c0_i32_0 = arith.constant 0 : i32
    %c0_i32_1 = arith.constant 0 : i32
    return %c0_i32, %c0_i32_0 : i32, i32
  }
  func.func @transform_2(%arg0: i32) -> (i32, i32) {
    %c0_i32 = arith.constant 0 : i32
    %c0_i32_0 = arith.constant 0 : i32
    %c0_i32_1 = arith.constant 0 : i32
    return %c0_i32, %c0_i32_0 : i32, i32
  }
  func.func @transform_3(%arg0: i32) -> (i32, i32, i32) {
    %c0_i32 = arith.constant 0 : i32
    %c0_i32_0 = arith.constant 0 : i32
    %c0_i32_1 = arith.constant 0 : i32
    %c0_i32_2 = arith.constant 0 : i32
    return %c0_i32, %c0_i32_0, %c0_i32_1 : i32, i32, i32
  }
  func.func @transform_4(%arg0: i32) -> (i32, i32) {
    %c0_i32 = arith.constant 0 : i32
    %c0_i32_0 = arith.constant 0 : i32
    %c0_i32_1 = arith.constant 0 : i32
    return %c0_i32, %c0_i32_0 : i32, i32
  }
  func.func @transform_5(%arg0: i32) -> (i32, i32, i32) {
    %c0_i32 = arith.constant 0 : i32
    %c0_i32_0 = arith.constant 0 : i32
    %c0_i32_1 = arith.constant 0 : i32
    return %arg0, %c0_i32, %c0_i32_0 : i32, i32, i32
  }
}

module attributes {stable_mosaic.version = 11 : i64} {
  func.func @fc_head_kernel(%arg0: i32, %arg1: memref<2x9216xbf16, #tpu.memory_space<vmem>>, %arg2: memref<9216x84xbf16, #tpu.memory_space<vmem>>, %arg3: memref<1x84xf32, #tpu.memory_space<vmem>>, %arg4: memref<1x84xf32, #tpu.memory_space<vmem>>, %arg5: memref<1x1xf32, #tpu.memory_space<vmem>>, %arg6: memref<2x84xf32, #tpu.memory_space<vmem>>, %arg7: memref<2x1xf32, #tpu.memory_space<vmem>>, %arg8: memref<2x84xf32, #tpu.memory_space<vmem>>) attributes {dimension_semantics = [#tpu.dimension_semantics<arbitrary>], iteration_bounds = array<i64: 2>, scalar_prefetch = 0 : i64, scratch_operands = 1 : i64, tpu.core_type = #tpu.core_type<tc>, window_params = [{transform_indices = @transform_0, window_bounds = array<i64: 2, 9216>}, {transform_indices = @transform_1, window_bounds = array<i64: 9216, 84>}, {pipeline_mode = #tpu.pipeline_mode<synchronous>, transform_indices = @transform_2, window_bounds = array<i64: 1, 84>}, {pipeline_mode = #tpu.pipeline_mode<synchronous>, transform_indices = @transform_3, window_bounds = array<i64: 1, 84>}, {pipeline_mode = #tpu.pipeline_mode<synchronous>, transform_indices = @transform_4, window_bounds = array<i64: 1, 1>}, {pipeline_mode = #tpu.pipeline_mode<synchronous>, transform_indices = @transform_5, window_bounds = array<i64: 2, 84>}, {pipeline_mode = #tpu.pipeline_mode<synchronous>, transform_indices = @transform_6, window_bounds = array<i64: 2, 1>}]} {
    %c0_i32 = arith.constant 0 : i32
    %0 = arith.cmpi eq, %arg0, %c0_i32 : i32
    %1 = arith.extui %0 : i1 to i32
    %c0_i32_0 = arith.constant 0 : i32
    %2 = arith.cmpi ne, %1, %c0_i32_0 : i32
    scf.if %2 {
      %cst_9 = arith.constant 0.000000e+00 : f32
      %12 = vector.broadcast %cst_9 : f32 to vector<2x84xf32>
      %c0_10 = arith.constant 0 : index
      %c0_11 = arith.constant 0 : index
      %13 = vector.load %arg8[%c0_10, %c0_11] : memref<2x84xf32, #tpu.memory_space<vmem>>, vector<2x84xf32>
      tpu.vector_store %arg8[%c0_10, %c0_11], %12 {strides = array<i32>} : memref<2x84xf32, #tpu.memory_space<vmem>>, vector<2x84xf32>,
    } else {
    }
    %c0 = arith.constant 0 : index
    %c0_1 = arith.constant 0 : index
    %3 = vector.load %arg8[%c0, %c0_1] : memref<2x84xf32, #tpu.memory_space<vmem>>, vector<2x84xf32>
    %c0_2 = arith.constant 0 : index
    %c0_3 = arith.constant 0 : index
    %4 = vector.load %arg1[%c0_2, %c0_3] : memref<2x9216xbf16, #tpu.memory_space<vmem>>, vector<2x9216xbf16>
    %c0_4 = arith.constant 0 : index
    %c0_5 = arith.constant 0 : index
    %5 = vector.load %arg2[%c0_4, %c0_5] : memref<9216x84xbf16, #tpu.memory_space<vmem>>, vector<9216x84xbf16>
    %cst = arith.constant dense<0.000000e+00> : vector<2x84xf32>
    %6 = tpu.matmul %4, %5, %cst {dimension_numbers = #tpu.dot_dimension_numbers<[1], [0], [0], [1], [0, 0, 1, 1], [], []>} : vector<2x9216xbf16>, vector<9216x84xbf16>, vector<2x84xf32> -> vector<2x84xf32>
    %7 = arith.addf %3, %6 : vector<2x84xf32>
    %c0_6 = arith.constant 0 : index
    %c0_7 = arith.constant 0 : index
    %8 = vector.load %arg8[%c0_6, %c0_7] : memref<2x84xf32, #tpu.memory_space<vmem>>, vector<2x84xf32>
    tpu.vector_store %arg8[%c0_6, %c0_7], %7 {strides = array<i32>} : memref<2x84xf32, #tpu.memory_space<vmem>>, vector<2x84xf32>,
    %c1_i32 = arith.constant 1 : i32
    %9 = arith.cmpi eq, %arg0, %c1_i32 : i32
    %10 = arith.extui %9 : i1 to i32
    %c0_i32_8 = arith.constant 0 : i32
    %11 = arith.cmpi ne, %10, %c0_i32_8 : i32
    scf.if %11 {
      %c0_9 = arith.constant 0 : index
      %c0_10 = arith.constant 0 : index
      %12 = vector.load %arg8[%c0_9, %c0_10] : memref<2x84xf32, #tpu.memory_space<vmem>>, vector<2x84xf32>
      %c0_11 = arith.constant 0 : index
      %c0_12 = arith.constant 0 : index
      %13 = vector.load %arg3[%c0_11, %c0_12] : memref<1x84xf32, #tpu.memory_space<vmem>>, vector<1x84xf32>
      %14 = vector.broadcast %13 : vector<1x84xf32> to vector<2x84xf32>
      %15 = arith.addf %12, %14 : vector<2x84xf32>
      %c0_13 = arith.constant 0 : index
      %c0_14 = arith.constant 0 : index
      %16 = vector.load %arg6[%c0_13, %c0_14] : memref<2x84xf32, #tpu.memory_space<vmem>>, vector<2x84xf32>
      tpu.vector_store %arg6[%c0_13, %c0_14], %15 {strides = array<i32>} : memref<2x84xf32, #tpu.memory_space<vmem>>, vector<2x84xf32>,
      %cst_15 = arith.constant 0.000000e+00 : f32
      %17 = vector.broadcast %cst_15 : f32 to vector<2x84xf32>
      %18 = arith.maximumf %15, %17 : vector<2x84xf32>
      %c0_16 = arith.constant 0 : index
      %c0_17 = arith.constant 0 : index
      %19 = vector.load %arg4[%c0_16, %c0_17] : memref<1x84xf32, #tpu.memory_space<vmem>>, vector<1x84xf32>
      %20 = vector.broadcast %19 : vector<1x84xf32> to vector<2x84xf32>
      %21 = arith.mulf %18, %20 : vector<2x84xf32>
      %cst_18 = arith.constant dense<0.000000e+00> : vector<2xf32>
      %22 = vector.multi_reduction <add>, %21, %cst_18 [1] : vector<2x84xf32> to vector<2xf32>
      %23 = vector.shape_cast %22 : vector<2xf32> to vector<2x1xf32>
      %c0_19 = arith.constant 0 : index
      %c0_20 = arith.constant 0 : index
      %24 = vector.load %arg5[%c0_19, %c0_20] : memref<1x1xf32, #tpu.memory_space<vmem>>, vector<1x1xf32>
      %25 = vector.broadcast %24 : vector<1x1xf32> to vector<2x1xf32>
      %26 = arith.addf %23, %25 : vector<2x1xf32>
      %cst_21 = arith.constant 0.000000e+00 : f32
      %27 = vector.broadcast %cst_21 : f32 to vector<2x1xf32>
      %28 = arith.subf %27, %26 : vector<2x1xf32>
      %29 = math.exp %28 : vector<2x1xf32>
      %cst_22 = arith.constant 1.000000e+00 : f32
      %30 = vector.broadcast %cst_22 : f32 to vector<2x1xf32>
      %31 = arith.addf %30, %29 : vector<2x1xf32>
      %cst_23 = arith.constant 1.000000e+00 : f32
      %32 = vector.broadcast %cst_23 : f32 to vector<2x1xf32>
      %33 = arith.divf %32, %31 : vector<2x1xf32>
      %c0_24 = arith.constant 0 : index
      %c0_25 = arith.constant 0 : index
      %34 = vector.load %arg7[%c0_24, %c0_25] : memref<2x1xf32, #tpu.memory_space<vmem>>, vector<2x1xf32>
      tpu.vector_store %arg7[%c0_24, %c0_25], %33 {strides = array<i32>} : memref<2x1xf32, #tpu.memory_space<vmem>>, vector<2x1xf32>,
    } else {
    }
    return
  }
  func.func @transform_0(%arg0: i32) -> (i32, i32) {
    %c0_i32 = arith.constant 0 : i32
    %c0_i32_0 = arith.constant 0 : i32
    return %c0_i32, %arg0 : i32, i32
  }
  func.func @transform_1(%arg0: i32) -> (i32, i32) {
    %c0_i32 = arith.constant 0 : i32
    %c0_i32_0 = arith.constant 0 : i32
    return %arg0, %c0_i32 : i32, i32
  }
  func.func @transform_2(%arg0: i32) -> (i32, i32) {
    %c0_i32 = arith.constant 0 : i32
    %c0_i32_0 = arith.constant 0 : i32
    %c0_i32_1 = arith.constant 0 : i32
    return %c0_i32, %c0_i32_0 : i32, i32
  }
  func.func @transform_3(%arg0: i32) -> (i32, i32) {
    %c0_i32 = arith.constant 0 : i32
    %c0_i32_0 = arith.constant 0 : i32
    %c0_i32_1 = arith.constant 0 : i32
    return %c0_i32, %c0_i32_0 : i32, i32
  }
  func.func @transform_4(%arg0: i32) -> (i32, i32) {
    %c0_i32 = arith.constant 0 : i32
    %c0_i32_0 = arith.constant 0 : i32
    %c0_i32_1 = arith.constant 0 : i32
    return %c0_i32, %c0_i32_0 : i32, i32
  }
  func.func @transform_5(%arg0: i32) -> (i32, i32) {
    %c0_i32 = arith.constant 0 : i32
    %c0_i32_0 = arith.constant 0 : i32
    %c0_i32_1 = arith.constant 0 : i32
    return %c0_i32, %c0_i32_0 : i32, i32
  }
  func.func @transform_6(%arg0: i32) -> (i32, i32) {
    %c0_i32 = arith.constant 0 : i32
    %c0_i32_0 = arith.constant 0 : i32
    %c0_i32_1 = arith.constant 0 : i32
    return %c0_i32, %c0_i32_0 : i32, i32
  }
}

</mosaic_0001>

<llo_original>
// kernel: baseline_net_forward.2
$region0: #{baseline_net_forward.2}
  #allocation0 [shape = 'u32[]', space=smem, size = 0x4, offset = 0x4, fixed_abs, tag = 'smem constant byte address 0x4 - core index']
  #allocation1 [shape = 'u32[72,128]{1,0:T(1,128)}', space=vmem, size = 0x9000, scoped, tag = 'internal scratch']
  #allocation2 [shape = 'f32[32,1024]{1,0:T(8,128)}', space=vmem, size = 0x20000, scoped, tag = 'scratch operand']
  #allocation3 [shape = 'bf16[16,1184]{1,0:T(8,128)(2,1)}', space=vmem, size = 0xa000, scoped, tag = 'scratch operand']
  #allocation4 [shape = 'bf16[80,1024]{1,0:T(8,128)(2,1)}', space=vmem, size = 0x28000, scoped, tag = 'scratch operand']
  #allocation5 [shape = 'f32[32,1024]{1,0:T(8,128)}', space=vmem, size = 0x20000, scoped, tag = 'scratch operand']
  %s0 = inlined_call_operand.vmem [shape: f32[2,1,1184], index: 0, kind: input, shape index: {}]
  %s1 = inlined_call_operand.hbm [shape: f32[16,32], index: 1, kind: input, shape index: {}]
  %s2 = inlined_call_operand.vmem [shape: f32[16,1], index: 2, kind: input, shape index: {}]
  %s3 = inlined_call_operand.hbm [shape: bf16[5,32,80], index: 3, kind: input, shape index: {}]
  %s4 = inlined_call_operand.vmem [shape: f32[32,1], index: 4, kind: input, shape index: {}]
  %s5 = inlined_call_operand.vmem [shape: f32[2,32,1024], index: 5, kind: output, shape index: {}]
  %s6 = sld [smem:[#allocation0]]
  $region61: #{baseline_net_forward.2} parent=0
    _
  %s8 = ssub.s32 1, %s6
  %s9 = scalar_select 0, %s8, %s6
  $region1: #{baseline_net_forward.2} parent=0
    #allocation6 [shape = 'u8[8192]{0}', space=vmem, size = 0x2000, scoped, tag = 'input window, operand 1, single buffered']
    #allocation7 [shape = 's32[2]{0}', space=sflag, size = 0x8, scoped, tag = 'scoped memory for baseline_net_forward.2']
    #allocation8 [shape = 'u8[40960]{0}', space=vmem, size = 0xa000, scoped, tag = 'input window, operand 3, single buffered']
    #allocation9 [shape = 's32[1]{0}', space=sflag, size = 0x4, scoped, tag = 'scoped memory for baseline_net_forward.2']
    %10 = vsyncpa [#allocation7], 0
    %11 = vsyncpa [#allocation9], 0
    loop: start=0, step=1, limit=4
    $region2: #{baseline_net_forward.2} parent=1 // loop_pre_header
      _
    $region3: #{baseline_net_forward.2} parent=1 // loop_header
      %s13 = sphi 0, %s17
      %p14 = scmp.ge.s32.totalorder %s13, 4
      %s23 = sphi 0, %s25
      %s26 = sphi 0, %s23
      %s27 = sphi 0, %s26
      %s43 = sphi 0, %s27
      %s47 = sphi 0, %s47
      %s49 = sphi 0, %s47
      %s50 = sphi 0, %s49
      %s64 = sphi 0, %s50
      %s68 = sphi 0, %s68
      %s70 = sphi 0, %s68
      %s71 = sphi 0, %s70
      %s85 = sphi 0, %s71
      %s89 = sphi 0, %s89
      %s91 = sphi 0, %s89
      %s92 = sphi 0, %s91
      %s106 = sphi 0, %s92
      %s110 = sphi 0, %s110
      %s112 = sphi 0, %s110
      %s113 = sphi 0, %s112
      %s127 = sphi 0, %s113
      %s133 = sphi 0, %s135
      %s136 = sphi 0, %s133
      %s137 = sphi 0, %s136
      %s153 = sphi 0, %s137
    $region4: #{baseline_net_forward.2} parent=1 // loop_header_branch
      %16 = sbr.rel (%p14) target = $region8
    $region5: #{baseline_net_forward.2} parent=1 // loop_body
      %s18 = ssub.s32 %s13, 1
      %s19 = ssub.s32 %s13, 2
      %s20 = sadd.s32 %s13, 1
      %s21 = ssub.s32 %s13, %s20
      %p22 = scmp.eq.s32.totalorder %s21, 0
      %s24 = sadd.s32 %s23, 1
      %s25 = scalar_select %p22, %s23, %s24
      %p28 = pneg %p22
      %p29 = scmp.eq.s32.totalorder %s13, 1
      %p30 = por %p28, %p29
      %p31 = scmp.ne.s32.totalorder %s23, %s26
      %p32 = scmp.eq.s32.totalorder %s13, 0
      %p33 = por %p31, %p32
      %p34 = scmp.ne.s32.totalorder %s23, %s26
      %p35 = scmp.eq.s32.totalorder %s18, 1
      %p36 = por %p34, %p35
      %p37 = scmp.ne.s32.totalorder %s26, %s27
      %p38 = scmp.eq.s32.totalorder %s18, 0
      %p39 = por %p37, %p38
      %p40 = scmp.ne.s32.totalorder %s26, %s27
      %p41 = scmp.eq.s32.totalorder %s19, 1
      %p42 = por %p40, %p41
      %p44 = scmp.ne.s32.totalorder %s27, %s43
      %p45 = scmp.eq.s32.totalorder %s19, 0
      %p46 = por %p44, %p45
      %s48 = sadd.s32 %s47, 1
      %p51 = scmp.eq.s32.totalorder %s13, 1
      %p52 = scmp.ne.s32.totalorder %s47, %s49
      %p53 = scmp.eq.s32.totalorder %s13, 0
      %p54 = por %p52, %p53
      %p55 = scmp.ne.s32.totalorder %s47, %s49
      %p56 = scmp.eq.s32.totalorder %s18, 1
      %p57 = por %p55, %p56
      %p58 = scmp.ne.s32.totalorder %s49, %s50
      %p59 = scmp.eq.s32.totalorder %s18, 0
      %p60 = por %p58, %p59
      %p61 = scmp.ne.s32.totalorder %s49, %s50
      %p62 = scmp.eq.s32.totalorder %s19, 1
      %p63 = por %p61, %p62
      %p65 = scmp.ne.s32.totalorder %s50, %s64
      %p66 = scmp.eq.s32.totalorder %s19, 0
      %p67 = por %p65, %p66
      %s69 = sadd.s32 %s68, 1
      %p72 = scmp.eq.s32.totalorder %s13, 1
      %p73 = scmp.ne.s32.totalorder %s68, %s70
      %p74 = scmp.eq.s32.totalorder %s13, 0
      %p75 = por %p73, %p74
      %p76 = scmp.ne.s32.totalorder %s68, %s70
      %p77 = scmp.eq.s32.totalorder %s18, 1
      %p78 = por %p76, %p77
      %p79 = scmp.ne.s32.totalorder %s70, %s71
      %p80 = scmp.eq.s32.totalorder %s18, 0
      %p81 = por %p79, %p80
      %p82 = scmp.ne.s32.totalorder %s70, %s71
      %p83 = scmp.eq.s32.totalorder %s19, 1
      %p84 = por %p82, %p83
      %p86 = scmp.ne.s32.totalorder %s71, %s85
      %p87 = scmp.eq.s32.totalorder %s19, 0
      %p88 = por %p86, %p87
      %s90 = sadd.s32 %s89, 1
      %p93 = scmp.eq.s32.totalorder %s13, 1
      %p94 = scmp.ne.s32.totalorder %s89, %s91
      %p95 = scmp.eq.s32.totalorder %s13, 0
      %p96 = por %p94, %p95
      %p97 = scmp.ne.s32.totalorder %s89, %s91
      %p98 = scmp.eq.s32.totalorder %s18, 1
      %p99 = por %p97, %p98
      %p100 = scmp.ne.s32.totalorder %s91, %s92
      %p101 = scmp.eq.s32.totalorder %s18, 0
      %p102 = por %p100, %p101
      %p103 = scmp.ne.s32.totalorder %s91, %s92
      %p104 = scmp.eq.s32.totalorder %s19, 1
      %p105 = por %p103, %p104
      %p107 = scmp.ne.s32.totalorder %s92, %s106
      %p108 = scmp.eq.s32.totalorder %s19, 0
      %p109 = por %p107, %p108
      %s111 = sadd.s32 %s110, 1
      %p114 = scmp.eq.s32.totalorder %s13, 1
      %p115 = scmp.ne.s32.totalorder %s110, %s112
      %p116 = scmp.eq.s32.totalorder %s13, 0
      %p117 = por %p115, %p116
      %p118 = scmp.ne.s32.totalorder %s110, %s112
      %p119 = scmp.eq.s32.totalorder %s18, 1
      %p120 = por %p118, %p119
      %p121 = scmp.ne.s32.totalorder %s112, %s113
      %p122 = scmp.eq.s32.totalorder %s18, 0
      %p123 = por %p121, %p122
      %p124 = scmp.ne.s32.totalorder %s112, %s113
      %p125 = scmp.eq.s32.totalorder %s19, 1
      %p126 = por %p124, %p125
      %p128 = scmp.ne.s32.totalorder %s113, %s127
      %p129 = scmp.eq.s32.totalorder %s19, 0
      %p130 = por %p128, %p129
      %s131 = ssub.s32 %s13, %s20
      %p132 = scmp.eq.s32.totalorder %s131, 0
      %s134 = sadd.s32 %s133, 1
      %s135 = scalar_select %p132, %s133, %s134
      %p138 = pneg %p132
      %p139 = scmp.eq.s32.totalorder %s13, 1
      %p140 = por %p138, %p139
      %p141 = scmp.ne.s32.totalorder %s133, %s136
      %p142 = scmp.eq.s32.totalorder %s13, 0
      %p143 = por %p141, %p142
      %p144 = scmp.ne.s32.totalorder %s133, %s136
      %p145 = scmp.eq.s32.totalorder %s18, 1
      %p146 = por %p144, %p145
      %p147 = scmp.ne.s32.totalorder %s136, %s137
      %p148 = scmp.eq.s32.totalorder %s18, 0
      %p149 = por %p147, %p148
      %p150 = scmp.ne.s32.totalorder %s136, %s137
      %p151 = scmp.eq.s32.totalorder %s19, 1
      %p152 = por %p150, %p151
      %p154 = scmp.ne.s32.totalorder %s137, %s153
      %p155 = scmp.eq.s32.totalorder %s19, 0
      %p156 = por %p154, %p155
      %p157 = scmp.le.s32.totalorder 1, %s13
      %p158 = scmp.lt.s32.totalorder %s13, 3
      %p159 = pnand %p157, %p158
      %p160 = pneg %p159
      // Predicated region
      $region9: #{baseline_net_forward.2} parent=5 // pred_check
        _
      $region10: #{baseline_net_forward.2} parent=5 // pred_check_branch
        %162 = sbr.rel (%p159) target = $region12
      $region11: #{baseline_net_forward.2} parent=5 // pred_region
        %s163 = ssub.s32 %s13, 1
        // Predicated region
        $region13: #{baseline_net_forward.2} parent=11 // pred_check
          %p164 = pneg %p60
        $region14: #{baseline_net_forward.2} parent=11 // pred_check_branch
          %166 = sbr.rel (%p164) target = $region16
        $region15: #{baseline_net_forward.2} parent=11 // pred_region
          %168 = vsyncadd [#allocation7], 0
          %s169 = sshll.u32 %s1, 4
          %s170 = int_to_ptr.hbm [resolvable:$true] %s169
          %s171 = sshll.u32 [#allocation6], 4
          %s172 = int_to_ptr.vmem [resolvable:$true] %s171
          %177 = dma.hbm_to_vmem [thread:$0]  %s170, 256, %s172, [#allocation7], 128, 128, 8
        $region16: #{baseline_net_forward.2} parent=11 // pred_fallthru
          _
        // Predicated region
        $region17: #{baseline_net_forward.2} parent=11 // pred_check
          %p178 = pneg %p81
        $region18: #{baseline_net_forward.2} parent=11 // pred_check_branch
          %180 = sbr.rel (%p178) target = $region20
        $region19: #{baseline_net_forward.2} parent=11 // pred_region
          _
        $region20: #{baseline_net_forward.2} parent=11 // pred_fallthru
          _
        // Predicated region
        $region21: #{baseline_net_forward.2} parent=11 // pred_check
          %p181 = pneg %p102
        $region22: #{baseline_net_forward.2} parent=11 // pred_check_branch
          %183 = sbr.rel (%p181) target = $region24
        $region23: #{baseline_net_forward.2} parent=11 // pred_region
          %185 = vsyncadd [#allocation9], 0
          %s186 = sshll.u32 %s3, 4
          %s187 = int_to_ptr.hbm [resolvable:$true] %s186
          %s188 = sshll.u32 [#allocation8], 4
          %s189 = int_to_ptr.vmem [resolvable:$true] %s188
          %194 = dma.hbm_to_vmem [thread:$0]  %s187, 1280, %s189, [#allocation9], 64, 64, 4
        $region24: #{baseline_net_forward.2} parent=11 // pred_fallthru
          _
        // Predicated region
        $region25: #{baseline_net_forward.2} parent=11 // pred_check
          %p195 = pneg %p123
        $region26: #{baseline_net_forward.2} parent=11 // pred_check_branch
          %197 = sbr.rel (%p195) target = $region28
        $region27: #{baseline_net_forward.2} parent=11 // pred_region
          _
        $region28: #{baseline_net_forward.2} parent=11 // pred_fallthru
          _
      $region12: #{baseline_net_forward.2} parent=5 // pred_fallthru
        _
      %p198 = scmp.lt.s32.totalorder %s13, 2
      // Predicated region
      $region29: #{baseline_net_forward.2} parent=5 // pred_check
        %p199 = pneg %p198
      $region30: #{baseline_net_forward.2} parent=5 // pred_check_branch
        %201 = sbr.rel (%p199) target = $region32
      $region31: #{baseline_net_forward.2} parent=5 // pred_region
        // Predicated region
        $region33: #{baseline_net_forward.2} parent=31 // pred_check
          %p202 = pneg %p33
        $region34: #{baseline_net_forward.2} parent=31 // pred_check_branch
          %204 = sbr.rel (%p202) target = $region36
        $region35: #{baseline_net_forward.2} parent=31 // pred_region
          %p205 = scmp.lt.s32.totalorder %s13, 1
          %s206 = scalar_select %p205, %s13, 1
          %s207 = smul.addr %s206, 10
          %s208 = scalar_lea.vmem %s0, %s207
        $region36: #{baseline_net_forward.2} parent=31 // pred_fallthru
          _
      $region32: #{baseline_net_forward.2} parent=5 // pred_fallthru
        _
      %p209 = scmp.le.s32.totalorder 1, %s13
      %p210 = scmp.lt.s32.totalorder %s13, 3
      %p211 = pnand %p209, %p210
      %p212 = pneg %p211
      // Predicated region
      $region37: #{baseline_net_forward.2} parent=5 // pred_check
        _
      $region38: #{baseline_net_forward.2} parent=5 // pred_check_branch
        %214 = sbr.rel (%p211) target = $region40
      $region39: #{baseline_net_forward.2} parent=5 // pred_region
        %s215 = ssub.s32 %s13, 1
        // Predicated region
        $region41: #{baseline_net_forward.2} parent=39 // pred_check
          %p216 = pneg %p60
        $region42: #{baseline_net_forward.2} parent=39 // pred_check_branch
          %218 = sbr.rel (%p216) target = $region44
        $region43: #{baseline_net_forward.2} parent=39 // pred_region
          %220 = dma.done [#allocation7], 256
        $region44: #{baseline_net_forward.2} parent=39 // pred_fallthru
          _
        // Predicated region
        $region45: #{baseline_net_forward.2} parent=39 // pred_check
          %p221 = pneg %p102
        $region46: #{baseline_net_forward.2} parent=39 // pred_check_branch
          %223 = sbr.rel (%p221) target = $region48
        $region47: #{baseline_net_forward.2} parent=39 // pred_region
          %225 = dma.done [#allocation9], 1280
        $region48: #{baseline_net_forward.2} parent=39 // pred_fallthru
          _
        %p226 = scmp.lt.s32.totalorder %s18, 1
        %s227 = scalar_select %p226, %s18, 1
        %s228 = smul.addr %s227, 10
        %s229 = scalar_lea.vmem %s0, %s228
        %p230 = pneg %p39
        %p231 = pneg %p36
        %p232 = pneg %p60
        %p233 = pneg %p57
        %p234 = pneg %p81
        %p235 = pneg %p78
        %p236 = pneg %p102
        %p237 = pneg %p99
        %p238 = pneg %p123
        %p239 = pneg %p120
        %p240 = pneg %p149
        %p241 = pneg %p146
        %p242 = scmp.lt.s32.totalorder %s18, 1
        %s243 = scalar_select %p242, %s18, 1
        %s244 = smul.addr %s243, 32
        %s245 = smul.addr %s244, 8
        %s246 = scalar_lea.vmem %s5, %s245
        %p247 = scmp.lt.s32.totalorder %s18, 1
        %s248 = scalar_select %p247, %s18, 1
        %s249 = smul.addr %s248, 10
        %s250 = scalar_lea.vmem %s0, %s249
        %p251 = scmp.lt.s32.totalorder %s18, 1
        %s252 = scalar_select %p251, %s18, 1
        %s253 = smul.addr %s252, 32
        %s254 = smul.addr %s253, 8
        %s255 = scalar_lea.vmem %s5, %s254
        %v257 = vld [vmem:[%s250] sm:$0xff]
        %v258 = vld [vmem:[%s250 + $0x8] sm:$0x3]
        %259 = vst [vmem:[#allocation2 + $0xc0] sm:$0xff] 0.0
        %260 = vst [vmem:[#allocation2 + $0xc8] sm:$0xff] 0.0
        %261 = vst [vmem:[#allocation2 + $0xd0] sm:$0xff] 0.0
        %262 = vst [vmem:[#allocation2 + $0xd8] sm:$0xff] 0.0
        %263 = vst [vmem:[#allocation2 + $0xe0] sm:$0xff] 0.0
        %264 = vst [vmem:[#allocation2 + $0xe8] sm:$0xff] 0.0
        %265 = vst [vmem:[#allocation2 + $0xf0] sm:$0xff] 0.0
        %266 = vst [vmem:[#allocation2 + $0xf8] sm:$0xff] 0.0
        %267 = vst [vmem:[#allocation2] ss:$8 sm:$0xf] %v257
        %268 = vst [vmem:[#allocation2] ss:$8 sm:$0xf0] %v257
        %271 = vrot.lane.b32.xlu0 %v257, 127
        %v272 = vpop.permute.xlu0 %271
        %273 = vrot.lane.b32.xlu0 %v258, 127
        %v274 = vpop.permute.xlu0 %273
        %v275 = vrot.slane %v272, 1
        %v276 = vrot.slane %v274, 1
        %vm277 = vcmask 1046528
        %v278 = vsel %vm277, %v275, %v276
        %vm279 = vcmask 1039360
        %v280 = vsel %vm279, %v272, %v278
        %s282 = scalar_lea.vmem [#allocation2], 1
        %283 = vst [vmem:[%s282] ss:$8 sm:$0xf] %v280
        %284 = vst [vmem:[%s282] ss:$8 sm:$0xf0] %v280
        %285 = vrot.lane.b32.xlu0 %v257, 126
        %v286 = vpop.permute.xlu0 %285
        %287 = vrot.lane.b32.xlu0 %v258, 126
        %v288 = vpop.permute.xlu0 %287
        %v289 = vrot.slane %v286, 1
        %v290 = vrot.slane %v288, 1
        %v291 = vsel %vm277, %v289, %v290
        %vm292 = vcmask 1031168
        %v293 = vsel %vm292, %v286, %v291
        %s295 = scalar_lea.vmem [#allocation2], 2
        %296 = vst [vmem:[%s295] ss:$8 sm:$0xf] %v293
        %297 = vst [vmem:[%s295] ss:$8 sm:$0xf0] %v293
        %298 = vrot.lane.b32.xlu0 %v257, 125
        %v299 = vpop.permute.xlu0 %298
        %300 = vrot.lane.b32.xlu0 %v258, 125
        %v301 = vpop.permute.xlu0 %300
        %v302 = vrot.slane %v299, 1
        %v303 = vrot.slane %v301, 1
        %v304 = vsel %vm277, %v302, %v303
        %vm305 = vcmask 1022976
        %v306 = vsel %vm305, %v299, %v304
        %s308 = scalar_lea.vmem [#allocation2], 3
        %309 = vst [vmem:[%s308] ss:$8 sm:$0xf] %v306
        %310 = vst [vmem:[%s308] ss:$8 sm:$0xf0] %v306
        %311 = vrot.lane.b32.xlu0 %v257, 124
        %v312 = vpop.permute.xlu0 %311
        %313 = vrot.lane.b32.xlu0 %v258, 124
        %v314 = vpop.permute.xlu0 %313
        %v315 = vrot.slane %v312, 1
        %v316 = vrot.slane %v314, 1
        %v317 = vsel %vm277, %v315, %v316
        %vm318 = vcmask 1014784
        %v319 = vsel %vm318, %v312, %v317
        %s321 = scalar_lea.vmem [#allocation2], 4
        %322 = vst [vmem:[%s321] ss:$8 sm:$0xf] %v319
        %323 = vst [vmem:[%s321] ss:$8 sm:$0xf0] %v319
        %324 = vrot.lane.b32.xlu0 %v257, 96
        %v325 = vpop.permute.xlu0 %324
        %326 = vrot.lane.b32.xlu0 %v258, 96
        %v327 = vpop.permute.xlu0 %326
        %v328 = vrot.slane %v325, 1
        %v329 = vrot.slane %v327, 1
        %v330 = vsel %vm277, %v328, %v329
        %vm331 = vcmask 785408
        %v332 = vsel %vm331, %v325, %v330
        %s334 = scalar_lea.vmem [#allocation2], 5
        %335 = vst [vmem:[%s334] ss:$8 sm:$0xf] %v332
        %336 = vst [vmem:[%s334] ss:$8 sm:$0xf0] %v332
        %337 = vrot.lane.b32.xlu0 %v257, 95
        %v338 = vpop.permute.xlu0 %337
        %339 = vrot.lane.b32.xlu0 %v258, 95
        %v340 = vpop.permute.xlu0 %339
        %v341 = vrot.slane %v338, 1
        %v342 = vrot.slane %v340, 1
        %v343 = vsel %vm277, %v341, %v342
        %vm344 = vcmask 777216
        %v345 = vsel %vm344, %v338, %v343
        %s347 = scalar_lea.vmem [#allocation2], 6
        %348 = vst [vmem:[%s347] ss:$8 sm:$0xf] %v345
        %349 = vst [vmem:[%s347] ss:$8 sm:$0xf0] %v345
        %350 = vrot.lane.b32.xlu0 %v257, 94
        %v351 = vpop.permute.xlu0 %350
        %352 = vrot.lane.b32.xlu0 %v258, 94
        %v353 = vpop.permute.xlu0 %352
        %v354 = vrot.slane %v351, 1
        %v355 = vrot.slane %v353, 1
        %v356 = vsel %vm277, %v354, %v355
        %vm357 = vcmask 769024
        %v358 = vsel %vm357, %v351, %v356
        %s360 = scalar_lea.vmem [#allocation2], 7
        %361 = vst [vmem:[%s360] ss:$8 sm:$0xf] %v358
        %362 = vst [vmem:[%s360] ss:$8 sm:$0xf0] %v358
        %363 = vrot.lane.b32.xlu0 %v257, 93
        %v364 = vpop.permute.xlu0 %363
        %365 = vrot.lane.b32.xlu0 %v258, 93
        %v366 = vpop.permute.xlu0 %365
        %v367 = vrot.slane %v364, 1
        %v368 = vrot.slane %v366, 1
        %v369 = vsel %vm277, %v367, %v368
        %vm370 = vcmask 760832
        %v371 = vsel %vm370, %v364, %v369
        %s373 = scalar_lea.vmem [#allocation2], 64
        %374 = vst [vmem:[%s373] ss:$8 sm:$0xf] %v371
        %375 = vst [vmem:[%s373] ss:$8 sm:$0xf0] %v371
        %376 = vrot.lane.b32.xlu0 %v257, 92
        %v377 = vpop.permute.xlu0 %376
        %378 = vrot.lane.b32.xlu0 %v258, 92
        %v379 = vpop.permute.xlu0 %378
        %v380 = vrot.slane %v377, 1
        %v381 = vrot.slane %v379, 1
        %v382 = vsel %vm277, %v380, %v381
        %vm383 = vcmask 752640
        %v384 = vsel %vm383, %v377, %v382
        %s386 = scalar_lea.vmem [#allocation2], 65
        %387 = vst [vmem:[%s386] ss:$8 sm:$0xf] %v384
        %388 = vst [vmem:[%s386] ss:$8 sm:$0xf0] %v384
        %389 = vrot.lane.b32.xlu0 %v257, 64
        %v390 = vpop.permute.xlu0 %389
        %391 = vrot.lane.b32.xlu0 %v258, 64
        %v392 = vpop.permute.xlu0 %391
        %v393 = vrot.slane %v390, 1
        %v394 = vrot.slane %v392, 1
        %v395 = vsel %vm277, %v393, %v394
        %vm396 = vcmask 523264
        %v397 = vsel %vm396, %v390, %v395
        %s399 = scalar_lea.vmem [#allocation2], 66
        %400 = vst [vmem:[%s399] ss:$8 sm:$0xf] %v397
        %401 = vst [vmem:[%s399] ss:$8 sm:$0xf0] %v397
        %402 = vrot.lane.b32.xlu0 %v257, 63
        %v403 = vpop.permute.xlu0 %402
        %404 = vrot.lane.b32.xlu0 %v258, 63
        %v405 = vpop.permute.xlu0 %404
        %v406 = vrot.slane %v403, 1
        %v407 = vrot.slane %v405, 1
        %v408 = vsel %vm277, %v406, %v407
        %vm409 = vcmask 515072
        %v410 = vsel %vm409, %v403, %v408
        %s412 = scalar_lea.vmem [#allocation2], 67
        %413 = vst [vmem:[%s412] ss:$8 sm:$0xf] %v410
        %414 = vst [vmem:[%s412] ss:$8 sm:$0xf0] %v410
        %415 = vrot.lane.b32.xlu0 %v257, 62
        %v416 = vpop.permute.xlu0 %415
        %417 = vrot.lane.b32.xlu0 %v258, 62
        %v418 = vpop.permute.xlu0 %417
        %v419 = vrot.slane %v416, 1
        %v420 = vrot.slane %v418, 1
        %v421 = vsel %vm277, %v419, %v420
        %vm422 = vcmask 506880
        %v423 = vsel %vm422, %v416, %v421
        %s425 = scalar_lea.vmem [#allocation2], 68
        %426 = vst [vmem:[%s425] ss:$8 sm:$0xf] %v423
        %427 = vst [vmem:[%s425] ss:$8 sm:$0xf0] %v423
        %428 = vrot.lane.b32.xlu0 %v257, 61
        %v429 = vpop.permute.xlu0 %428
        %430 = vrot.lane.b32.xlu0 %v258, 61
        %v431 = vpop.permute.xlu0 %430
        %v432 = vrot.slane %v429, 1
        %v433 = vrot.slane %v431, 1
        %v434 = vsel %vm277, %v432, %v433
        %vm435 = vcmask 498688
        %v436 = vsel %vm435, %v429, %v434
        %s438 = scalar_lea.vmem [#allocation2], 69
        %439 = vst [vmem:[%s438] ss:$8 sm:$0xf] %v436
        %440 = vst [vmem:[%s438] ss:$8 sm:$0xf0] %v436
        %441 = vrot.lane.b32.xlu0 %v257, 60
        %v442 = vpop.permute.xlu0 %441
        %443 = vrot.lane.b32.xlu0 %v258, 60
        %v444 = vpop.permute.xlu0 %443
        %v445 = vrot.slane %v442, 1
        %v446 = vrot.slane %v444, 1
        %v447 = vsel %vm277, %v445, %v446
        %vm448 = vcmask 490496
        %v449 = vsel %vm448, %v442, %v447
        %s451 = scalar_lea.vmem [#allocation2], 70
        %452 = vst [vmem:[%s451] ss:$8 sm:$0xf] %v449
        %453 = vst [vmem:[%s451] ss:$8 sm:$0xf0] %v449
        %454 = vrot.lane.b32.xlu0 %v257, 32
        %v455 = vpop.permute.xlu0 %454
        %456 = vrot.lane.b32.xlu0 %v258, 32
        %v457 = vpop.permute.xlu0 %456
        %v458 = vrot.slane %v455, 1
        %v459 = vrot.slane %v457, 1
        %v460 = vsel %vm277, %v458, %v459
        %vm461 = vcmask 261120
        %v462 = vsel %vm461, %v455, %v460
        %s464 = scalar_lea.vmem [#allocation2], 71
        %465 = vst [vmem:[%s464] ss:$8 sm:$0xf] %v462
        %466 = vst [vmem:[%s464] ss:$8 sm:$0xf0] %v462
        %467 = vrot.lane.b32.xlu0 %v257, 31
        %v468 = vpop.permute.xlu0 %467
        %469 = vrot.lane.b32.xlu0 %v258, 31
        %v470 = vpop.permute.xlu0 %469
        %v471 = vrot.slane %v468, 1
        %v472 = vrot.slane %v470, 1
        %v473 = vsel %vm277, %v471, %v472
        %vm474 = vcmask 252928
        %v475 = vsel %vm474, %v468, %v473
        %s477 = scalar_lea.vmem [#allocation2], 128
        %478 = vst [vmem:[%s477] ss:$8 sm:$0xf] %v475
        %479 = vst [vmem:[%s477] ss:$8 sm:$0xf0] %v475
        %480 = vrot.lane.b32.xlu0 %v257, 30
        %v481 = vpop.permute.xlu0 %480
        %482 = vrot.lane.b32.xlu0 %v258, 30
        %v483 = vpop.permute.xlu0 %482
        %v484 = vrot.slane %v481, 1
        %v485 = vrot.slane %v483, 1
        %v486 = vsel %vm277, %v484, %v485
        %vm487 = vcmask 244736
        %v488 = vsel %vm487, %v481, %v486
        %s490 = scalar_lea.vmem [#allocation2], 129
        %491 = vst [vmem:[%s490] ss:$8 sm:$0xf] %v488
        %492 = vst [vmem:[%s490] ss:$8 sm:$0xf0] %v488
        %493 = vrot.lane.b32.xlu0 %v257, 29
        %v494 = vpop.permute.xlu0 %493
        %495 = vrot.lane.b32.xlu0 %v258, 29
        %v496 = vpop.permute.xlu0 %495
        %v497 = vrot.slane %v494, 1
        %v498 = vrot.slane %v496, 1
        %v499 = vsel %vm277, %v497, %v498
        %vm500 = vcmask 236544
        %v501 = vsel %vm500, %v494, %v499
        %s503 = scalar_lea.vmem [#allocation2], 130
        %504 = vst [vmem:[%s503] ss:$8 sm:$0xf] %v501
        %505 = vst [vmem:[%s503] ss:$8 sm:$0xf0] %v501
        %506 = vrot.lane.b32.xlu0 %v257, 28
        %v507 = vpop.permute.xlu0 %506
        %508 = vrot.lane.b32.xlu0 %v258, 28
        %v509 = vpop.permute.xlu0 %508
        %v510 = vrot.slane %v507, 1
        %v511 = vrot.slane %v509, 1
        %v512 = vsel %vm277, %v510, %v511
        %vm513 = vcmask 228352
        %v514 = vsel %vm513, %v507, %v512
        %s516 = scalar_lea.vmem [#allocation2], 131
        %517 = vst [vmem:[%s516] ss:$8 sm:$0xf] %v514
        %518 = vst [vmem:[%s516] ss:$8 sm:$0xf0] %v514
        %v519 = vrot.slane %v257, 1
        %v520 = vrot.slane %v258, 1
        %v521 = vsel %vm277, %v519, %v520
        %s523 = scalar_lea.vmem [#allocation2], 132
        %524 = vst [vmem:[%s523] ss:$8 sm:$0xf] %v521
        %525 = vst [vmem:[%s523] ss:$8 sm:$0xf0] %v521
        %v526 = vrot.slane %v272, 2
        %v527 = vrot.slane %v274, 2
        %vm528 = vcmask 1045504
        %v529 = vsel %vm528, %v526, %v527
        %v530 = vsel %vm279, %v278, %v529
        %s532 = scalar_lea.vmem [#allocation2], 133
        %533 = vst [vmem:[%s532] ss:$8 sm:$0xf] %v530
        %534 = vst [vmem:[%s532] ss:$8 sm:$0xf0] %v530
        %v535 = vrot.slane %v286, 2
        %v536 = vrot.slane %v288, 2
        %v537 = vsel %vm528, %v535, %v536
        %v538 = vsel %vm292, %v291, %v537
        %s540 = scalar_lea.vmem [#allocation2], 134
        %541 = vst [vmem:[%s540] ss:$8 sm:$0xf] %v538
        %542 = vst [vmem:[%s540] ss:$8 sm:$0xf0] %v538
        %v543 = vrot.slane %v299, 2
        %v544 = vrot.slane %v301, 2
        %v545 = vsel %vm528, %v543, %v544
        %v546 = vsel %vm305, %v304, %v545
        %s548 = scalar_lea.vmem [#allocation2], 135
        %549 = vst [vmem:[%s548] ss:$8 sm:$0xf] %v546
        %550 = vst [vmem:[%s548] ss:$8 sm:$0xf0] %v546
        %v551 = vrot.slane %v312, 2
        %v552 = vrot.slane %v314, 2
        %v553 = vsel %vm528, %v551, %v552
        %v554 = vsel %vm318, %v317, %v553
        %s556 = scalar_lea.vmem [#allocation2], 192
        %557 = vst [vmem:[%s556] ss:$8 sm:$0xf] %v554
        %558 = vst [vmem:[%s556] ss:$8 sm:$0xf0] %v554
        %v559 = vld [vmem:[#allocation6] sm:$0xff]
        %v560 = vld [vmem:[#allocation6 + $0x8] sm:$0xff]
        %v561 = vld [vmem:[#allocation2] sm:$0xff]
        %v562 = vld [vmem:[#allocation2 + $0x8] sm:$0xff]
        %v563 = vld [vmem:[#allocation2 + $0x10] sm:$0xff]
        %v564 = vld [vmem:[#allocation2 + $0x18] sm:$0xff]
        %v565 = vld [vmem:[#allocation2 + $0x20] sm:$0xff]
        %v566 = vld [vmem:[#allocation2 + $0x28] sm:$0xff]
        %v567 = vld [vmem:[#allocation2 + $0x30] sm:$0xff]
        %v568 = vld [vmem:[#allocation2 + $0x38] sm:$0xff]
        %v569 = vld [vmem:[#allocation2 + $0x40] sm:$0xff]
        %v570 = vld [vmem:[#allocation2 + $0x48] sm:$0xff]
        %v571 = vld [vmem:[#allocation2 + $0x50] sm:$0xff]
        %v572 = vld [vmem:[#allocation2 + $0x58] sm:$0xff]
        %v573 = vld [vmem:[#allocation2 + $0x60] sm:$0xff]
        %v574 = vld [vmem:[#allocation2 + $0x68] sm:$0xff]
        %v575 = vld [vmem:[#allocation2 + $0x70] sm:$0xff]
        %v576 = vld [vmem:[#allocation2 + $0x78] sm:$0xff]
        %v577 = vld [vmem:[#allocation2 + $0x80] sm:$0xff]
        %v578 = vld [vmem:[#allocation2 + $0x88] sm:$0xff]
        %v579 = vld [vmem:[#allocation2 + $0x90] sm:$0xff]
        %v580 = vld [vmem:[#allocation2 + $0x98] sm:$0xff]
        %v581 = vld [vmem:[#allocation2 + $0xa0] sm:$0xff]
        %v582 = vld [vmem:[#allocation2 + $0xa8] sm:$0xff]
        %v583 = vld [vmem:[#allocation2 + $0xb0] sm:$0xff]
        %v584 = vld [vmem:[#allocation2 + $0xb8] sm:$0xff]
        %v585 = vld [vmem:[#allocation2 + $0xc0] sm:$0xff]
        %v586 = vld [vmem:[#allocation2 + $0xc8] sm:$0xff]
        %v587 = vld [vmem:[#allocation2 + $0xd0] sm:$0xff]
        %v588 = vld [vmem:[#allocation2 + $0xd8] sm:$0xff]
        %v589 = vld [vmem:[#allocation2 + $0xe0] sm:$0xff]
        %v590 = vld [vmem:[#allocation2 + $0xe8] sm:$0xff]
        %v591 = vld [vmem:[#allocation2 + $0xf0] sm:$0xff]
        %v592 = vld [vmem:[#allocation2 + $0xf8] sm:$0xff]
        %v593 = vld [vmem:[%s2] sm:$0xff]
        %v594 = vld [vmem:[%s2 + $0x8] sm:$0xff]
        %596 = vset.pattern.permute.xlu0 0
        %597 = vperm.xlu0 %596, %v593
        %v598 = vpop.permute.xlu0 %597
        %601 = vset.pattern.permute.xlu0 0
        %602 = vperm.xlu0 %601, %v594
        %v603 = vpop.permute.xlu0 %602
        %v606 = vsel %vm461, %v559, 0
        %v609 = vsel %vm461, %v560, 0
        %611 = vmatpush.msra.mxu0 0.0
        %612 = vmatpush.msra.mxu0 0.0
        %613 = vmatpush.msra.mxu0 0.0
        %614 = vmatpush.msra.mxu0 0.0
        %615 = vmatpush.msra.mxu0 0.0
        %616 = vmatpush.msra.mxu0 0.0
        %617 = vmatpush.msra.mxu0 0.0
        %618 = vmatpush.msra.mxu0 0.0
        %619 = vmatpush.msra.mxu0 0.0
        %620 = vmatpush.msra.mxu0 0.0
        %621 = vmatpush.msra.mxu0 0.0
        %622 = vmatpush.msra.mxu0 0.0
        %623 = vmatpush.msra.mxu0 %v585
        %624 = vmatpush.msra.mxu0 %v577
        %625 = vmatpush.msra.mxu0 %v569
        %626 = vmatpush.msra.mxu0 %v561
        %627 = vmatmul.f32.gmra.mxu0 %v606
        %v628 = vpop.f32.mrf.mxu0
        %v629 = vadd.f32 %v598, %v628
        %630 = vmatmul.f32.gmra.mxu0 %v609
        %v631 = vpop.f32.mrf.mxu0
        %v632 = vadd.f32 %v603, %v631
        %633 = vdwg.mxu0
        %634 = vmatpush.msra.mxu0 0.0
        %635 = vmatpush.msra.mxu0 0.0
        %636 = vmatpush.msra.mxu0 0.0
        %637 = vmatpush.msra.mxu0 0.0
        %638 = vmatpush.msra.mxu0 0.0
        %639 = vmatpush.msra.mxu0 0.0
        %640 = vmatpush.msra.mxu0 0.0
        %641 = vmatpush.msra.mxu0 0.0
        %642 = vmatpush.msra.mxu0 0.0
        %643 = vmatpush.msra.mxu0 0.0
        %644 = vmatpush.msra.mxu0 0.0
        %645 = vmatpush.msra.mxu0 0.0
        %646 = vmatpush.msra.mxu0 %v586
        %647 = vmatpush.msra.mxu0 %v578
        %648 = vmatpush.msra.mxu0 %v570
        %649 = vmatpush.msra.mxu0 %v562
        %650 = vmatmul.f32.gmra.mxu0 %v606
        %v651 = vpop.f32.mrf.mxu0
        %v652 = vadd.f32 %v598, %v651
        %653 = vmatmul.f32.gmra.mxu0 %v609
        %v654 = vpop.f32.mrf.mxu0
        %v655 = vadd.f32 %v603, %v654
        %656 = vdwg.mxu0
        %657 = vmatpush.msra.mxu0 0.0
        %658 = vmatpush.msra.mxu0 0.0
        %659 = vmatpush.msra.mxu0 0.0
        %660 = vmatpush.msra.mxu0 0.0
        %661 = vmatpush.msra.mxu0 0.0
        %662 = vmatpush.msra.mxu0 0.0
        %663 = vmatpush.msra.mxu0 0.0
        %664 = vmatpush.msra.mxu0 0.0
        %665 = vmatpush.msra.mxu0 0.0
        %666 = vmatpush.msra.mxu0 0.0
        %667 = vmatpush.msra.mxu0 0.0
        %668 = vmatpush.msra.mxu0 0.0
        %669 = vmatpush.msra.mxu0 %v587
        %670 = vmatpush.msra.mxu0 %v579
        %671 = vmatpush.msra.mxu0 %v571
        %672 = vmatpush.msra.mxu0 %v563
        %673 = vmatmul.f32.gmra.mxu0 %v606
        %v674 = vpop.f32.mrf.mxu0
        %v675 = vadd.f32 %v598, %v674
        %676 = vmatmul.f32.gmra.mxu0 %v609
        %v677 = vpop.f32.mrf.mxu0
        %v678 = vadd.f32 %v603, %v677
        %679 = vdwg.mxu0
        %680 = vmatpush.msra.mxu0 0.0
        %681 = vmatpush.msra.mxu0 0.0
        %682 = vmatpush.msra.mxu0 0.0
        %683 = vmatpush.msra.mxu0 0.0
        %684 = vmatpush.msra.mxu0 0.0
        %685 = vmatpush.msra.mxu0 0.0
        %686 = vmatpush.msra.mxu0 0.0
        %687 = vmatpush.msra.mxu0 0.0
        %688 = vmatpush.msra.mxu0 0.0
        %689 = vmatpush.msra.mxu0 0.0
        %690 = vmatpush.msra.mxu0 0.0
        %691 = vmatpush.msra.mxu0 0.0
        %692 = vmatpush.msra.mxu0 %v588
        %693 = vmatpush.msra.mxu0 %v580
        %694 = vmatpush.msra.mxu0 %v572
        %695 = vmatpush.msra.mxu0 %v564
        %696 = vmatmul.f32.gmra.mxu0 %v606
        %v697 = vpop.f32.mrf.mxu0
        %v698 = vadd.f32 %v598, %v697
        %699 = vmatmul.f32.gmra.mxu0 %v609
        %v700 = vpop.f32.mrf.mxu0
        %v701 = vadd.f32 %v603, %v700
        %702 = vdwg.mxu0
        %703 = vmatpush.msra.mxu0 0.0
        %704 = vmatpush.msra.mxu0 0.0
        %705 = vmatpush.msra.mxu0 0.0
        %706 = vmatpush.msra.mxu0 0.0
        %707 = vmatpush.msra.mxu0 0.0
        %708 = vmatpush.msra.mxu0 0.0
        %709 = vmatpush.msra.mxu0 0.0
        %710 = vmatpush.msra.mxu0 0.0
        %711 = vmatpush.msra.mxu0 0.0
        %712 = vmatpush.msra.mxu0 0.0
        %713 = vmatpush.msra.mxu0 0.0
        %714 = vmatpush.msra.mxu0 0.0
        %715 = vmatpush.msra.mxu0 %v589
        %716 = vmatpush.msra.mxu0 %v581
        %717 = vmatpush.msra.mxu0 %v573
        %718 = vmatpush.msra.mxu0 %v565
        %719 = vmatmul.f32.gmra.mxu0 %v606
        %v720 = vpop.f32.mrf.mxu0
        %v721 = vadd.f32 %v598, %v720
        %722 = vmatmul.f32.gmra.mxu0 %v609
        %v723 = vpop.f32.mrf.mxu0
        %v724 = vadd.f32 %v603, %v723
        %725 = vdwg.mxu0
        %726 = vmatpush.msra.mxu0 0.0
        %727 = vmatpush.msra.mxu0 0.0
        %728 = vmatpush.msra.mxu0 0.0
        %729 = vmatpush.msra.mxu0 0.0
        %730 = vmatpush.msra.mxu0 0.0
        %731 = vmatpush.msra.mxu0 0.0
        %732 = vmatpush.msra.mxu0 0.0
        %733 = vmatpush.msra.mxu0 0.0
        %734 = vmatpush.msra.mxu0 0.0
        %735 = vmatpush.msra.mxu0 0.0
        %736 = vmatpush.msra.mxu0 0.0
        %737 = vmatpush.msra.mxu0 0.0
        %738 = vmatpush.msra.mxu0 %v590
        %739 = vmatpush.msra.mxu0 %v582
        %740 = vmatpush.msra.mxu0 %v574
        %741 = vmatpush.msra.mxu0 %v566
        %742 = vmatmul.f32.gmra.mxu0 %v606
        %v743 = vpop.f32.mrf.mxu0
        %v744 = vadd.f32 %v598, %v743
        %745 = vmatmul.f32.gmra.mxu0 %v609
        %v746 = vpop.f32.mrf.mxu0
        %v747 = vadd.f32 %v603, %v746
        %748 = vdwg.mxu0
        %749 = vmatpush.msra.mxu0 0.0
        %750 = vmatpush.msra.mxu0 0.0
        %751 = vmatpush.msra.mxu0 0.0
        %752 = vmatpush.msra.mxu0 0.0
        %753 = vmatpush.msra.mxu0 0.0
        %754 = vmatpush.msra.mxu0 0.0
        %755 = vmatpush.msra.mxu0 0.0
        %756 = vmatpush.msra.mxu0 0.0
        %757 = vmatpush.msra.mxu0 0.0
        %758 = vmatpush.msra.mxu0 0.0
        %759 = vmatpush.msra.mxu0 0.0
        %760 = vmatpush.msra.mxu0 0.0
        %761 = vmatpush.msra.mxu0 %v591
        %762 = vmatpush.msra.mxu0 %v583
        %763 = vmatpush.msra.mxu0 %v575
        %764 = vmatpush.msra.mxu0 %v567
        %765 = vmatmul.f32.gmra.mxu0 %v606
        %v766 = vpop.f32.mrf.mxu0
        %v767 = vadd.f32 %v598, %v766
        %768 = vmatmul.f32.gmra.mxu0 %v609
        %v769 = vpop.f32.mrf.mxu0
        %v770 = vadd.f32 %v603, %v769
        %771 = vdwg.mxu0
        %772 = vmatpush.msra.mxu0 0.0
        %773 = vmatpush.msra.mxu0 0.0
        %774 = vmatpush.msra.mxu0 0.0
        %775 = vmatpush.msra.mxu0 0.0
        %776 = vmatpush.msra.mxu0 0.0
        %777 = vmatpush.msra.mxu0 0.0
        %778 = vmatpush.msra.mxu0 0.0
        %779 = vmatpush.msra.mxu0 0.0
        %780 = vmatpush.msra.mxu0 0.0
        %781 = vmatpush.msra.mxu0 0.0
        %782 = vmatpush.msra.mxu0 0.0
        %783 = vmatpush.msra.mxu0 0.0
        %784 = vmatpush.msra.mxu0 %v592
        %785 = vmatpush.msra.mxu0 %v584
        %786 = vmatpush.msra.mxu0 %v576
        %787 = vmatpush.msra.mxu0 %v568
        %788 = vmatmul.f32.gmra.mxu0 %v606
        %v789 = vpop.f32.mrf.mxu0
        %v790 = vadd.f32 %v598, %v789
        %791 = vmatmul.f32.gmra.mxu0 %v609
        %v792 = vpop.f32.mrf.mxu0
        %v793 = vadd.f32 %v603, %v792
        %794 = vdwg.mxu0
        %v795 = vmax.f32 %v629, 0.0
        %v796 = vmax.f32 %v652, 0.0
        %v797 = vmax.f32 %v675, 0.0
        %v798 = vmax.f32 %v698, 0.0
        %v799 = vmax.f32 %v721, 0.0
        %v800 = vmax.f32 %v744, 0.0
        %v801 = vmax.f32 %v767, 0.0
        %v802 = vmax.f32 %v790, 0.0
        %v803 = vmax.f32 %v632, 0.0
        %v804 = vmax.f32 %v655, 0.0
        %v805 = vmax.f32 %v678, 0.0
        %v806 = vmax.f32 %v701, 0.0
        %v807 = vmax.f32 %v724, 0.0
        %v808 = vmax.f32 %v747, 0.0
        %v809 = vmax.f32 %v770, 0.0
        %v810 = vmax.f32 %v793, 0.0
        %v811 = vpack.c.bf16 %v796, %v795
        %v812 = vpack.c.bf16 %v798, %v797
        %v813 = vpack.c.bf16 %v800, %v799
        %v814 = vpack.c.bf16 %v802, %v801
        %v815 = vpack.c.bf16 %v804, %v803
        %v816 = vpack.c.bf16 %v806, %v805
        %v817 = vpack.c.bf16 %v808, %v807
        %v818 = vpack.c.bf16 %v810, %v809
        %819 = vst [vmem:[#allocation3] sm:$0xff] %v811
        %820 = vst [vmem:[#allocation3 + $0x8] sm:$0xff] %v812
        %821 = vst [vmem:[#allocation3 + $0x10] sm:$0xff] %v813
        %822 = vst [vmem:[#allocation3 + $0x18] sm:$0xff] %v814
        %823 = vst [vmem:[#allocation3 + $0x28] sm:$0xff] %v815
        %824 = vst [vmem:[#allocation3 + $0x30] sm:$0xff] %v816
        %825 = vst [vmem:[#allocation3 + $0x38] sm:$0xff] %v817
        %826 = vst [vmem:[#allocation3 + $0x40] sm:$0xff] %v818
        %vm827 = vcmask 1043456
        %vm828 = vcmask 261124
        %vm829 = vmor %vm828, %vm827
        %830 = vst.msk [vmem:[#allocation3 + $0x20] sm:$0xff] %vm829, 0
        %831 = vst.msk [vmem:[#allocation3 + $0x48] sm:$0xff] %vm829, 0
        %832 = vst [vmem:[#allocation5] sm:$0xff] 0.0
        %833 = vst [vmem:[#allocation5 + $0x8] sm:$0xff] 0.0
        %834 = vst [vmem:[#allocation5 + $0x10] sm:$0xff] 0.0
        %835 = vst [vmem:[#allocation5 + $0x18] sm:$0xff] 0.0
        %836 = vst [vmem:[#allocation5 + $0x20] sm:$0xff] 0.0
        %837 = vst [vmem:[#allocation5 + $0x28] sm:$0xff] 0.0
        %838 = vst [vmem:[#allocation5 + $0x30] sm:$0xff] 0.0
        %839 = vst [vmem:[#allocation5 + $0x38] sm:$0xff] 0.0
        %840 = vst [vmem:[#allocation5 + $0x40] sm:$0xff] 0.0
        %841 = vst [vmem:[#allocation5 + $0x48] sm:$0xff] 0.0
        %842 = vst [vmem:[#allocation5 + $0x50] sm:$0xff] 0.0
        %843 = vst [vmem:[#allocation5 + $0x58] sm:$0xff] 0.0
        %844 = vst [vmem:[#allocation5 + $0x60] sm:$0xff] 0.0
        %845 = vst [vmem:[#allocation5 + $0x68] sm:$0xff] 0.0
        %846 = vst [vmem:[#allocation5 + $0x70] sm:$0xff] 0.0
        %847 = vst [vmem:[#allocation5 + $0x78] sm:$0xff] 0.0
        %848 = vst [vmem:[#allocation5 + $0x80] sm:$0xff] 0.0
        %849 = vst [vmem:[#allocation5 + $0x88] sm:$0xff] 0.0
        %850 = vst [vmem:[#allocation5 + $0x90] sm:$0xff] 0.0
        %851 = vst [vmem:[#allocation5 + $0x98] sm:$0xff] 0.0
        %852 = vst [vmem:[#allocation5 + $0xa0] sm:$0xff] 0.0
        %853 = vst [vmem:[#allocation5 + $0xa8] sm:$0xff] 0.0
        %854 = vst [vmem:[#allocation5 + $0xb0] sm:$0xff] 0.0
        %855 = vst [vmem:[#allocation5 + $0xb8] sm:$0xff] 0.0
        %856 = vst [vmem:[#allocation5 + $0xc0] sm:$0xff] 0.0
        %857 = vst [vmem:[#allocation5 + $0xc8] sm:$0xff] 0.0
        %858 = vst [vmem:[#allocation5 + $0xd0] sm:$0xff] 0.0
        %859 = vst [vmem:[#allocation5 + $0xd8] sm:$0xff] 0.0
        %860 = vst [vmem:[#allocation5 + $0xe0] sm:$0xff] 0.0
        %861 = vst [vmem:[#allocation5 + $0xe8] sm:$0xff] 0.0
        %862 = vst [vmem:[#allocation5 + $0xf0] sm:$0xff] 0.0
        %863 = vst [vmem:[#allocation5 + $0xf8] sm:$0xff] 0.0
        %v864 = vld [vmem:[#allocation3] sm:$0xff]
        %v865 = vld [vmem:[#allocation3 + $0x8] sm:$0xff]
        %v866 = vld [vmem:[#allocation3 + $0x10] sm:$0xff]
        %v867 = vld [vmem:[#allocation3 + $0x18] sm:$0xff]
        %v868 = vld [vmem:[#allocation3 + $0x28] sm:$0xff]
        %v869 = vld [vmem:[#allocation3 + $0x30] sm:$0xff]
        %v870 = vld [vmem:[#allocation3 + $0x38] sm:$0xff]
        %v871 = vld [vmem:[#allocation3 + $0x40] sm:$0xff]
        %872 = vst [vmem:[#allocation4] sm:$0xff] %v864
        %873 = vst [vmem:[#allocation4 + $0x8] sm:$0xff] %v865
        %874 = vst [vmem:[#allocation4 + $0x10] sm:$0xff] %v866
        %875 = vst [vmem:[#allocation4 + $0x18] sm:$0xff] %v867
        %876 = vst [vmem:[#allocation4 + $0x20] sm:$0xff] %v868
        %877 = vst [vmem:[#allocation4 + $0x28] sm:$0xff] %v869
        %878 = vst [vmem:[#allocation4 + $0x30] sm:$0xff] %v870
        %879 = vst [vmem:[#allocation4 + $0x38] sm:$0xff] %v871
        %v880 = vld [vmem:[#allocation3] sm:$0xff]
        %v881 = vld [vmem:[#allocation3 + $0x8] sm:$0xff]
        %v882 = vld [vmem:[#allocation3 + $0x10] sm:$0xff]
        %v883 = vld [vmem:[#allocation3 + $0x18] sm:$0xff]
        %v884 = vld [vmem:[#allocation3 + $0x20] sm:$0xf]
        %v885 = vld [vmem:[#allocation3 + $0x28] sm:$0xff]
        %v886 = vld [vmem:[#allocation3 + $0x30] sm:$0xff]
        %v887 = vld [vmem:[#allocation3 + $0x38] sm:$0xff]
        %v888 = vld [vmem:[#allocation3 + $0x40] sm:$0xff]
        %v889 = vld [vmem:[#allocation3 + $0x48] sm:$0xf]
        %900 = vrot.lane.b32.xlu0 %v880, 127
        %v901 = vpop.permute.xlu0 %900
        %902 = vrot.lane.b32.xlu0 %v881, 127
        %v903 = vpop.permute.xlu0 %902
        %904 = vrot.lane.b32.xlu0 %v882, 127
        %v905 = vpop.permute.xlu0 %904
        %906 = vrot.lane.b32.xlu0 %v883, 127
        %v907 = vpop.permute.xlu0 %906
        %908 = vrot.lane.b32.xlu0 %v884, 127
        %v909 = vpop.permute.xlu0 %908
        %910 = vrot.lane.b32.xlu0 %v885, 127
        %v911 = vpop.permute.xlu0 %910
        %912 = vrot.lane.b32.xlu0 %v886, 127
        %v913 = vpop.permute.xlu0 %912
        %914 = vrot.lane.b32.xlu0 %v887, 127
        %v915 = vpop.permute.xlu0 %914
        %916 = vrot.lane.b32.xlu0 %v888, 127
        %v917 = vpop.permute.xlu0 %916
        %918 = vrot.lane.b32.xlu0 %v889, 127
        %v919 = vpop.permute.xlu0 %918
        %v920 = vrot.slane %v901, 4
        %v921 = vrot.slane %v903, 4
        %v922 = vrot.slane %v905, 4
        %v923 = vrot.slane %v907, 4
        %v924 = vrot.slane %v909, 4
        %v925 = vrot.slane %v911, 4
        %v926 = vrot.slane %v913, 4
        %v927 = vrot.slane %v915, 4
        %v928 = vrot.slane %v917, 4
        %v929 = vrot.slane %v919, 4
        %vm930 = vcmask 1043456
        %v931 = vsel %vm930, %v920, %v921
        %vm932 = vcmask 1039360
        %v933 = vsel %vm932, %v901, %v931
        %v934 = vsel %vm930, %v921, %v922
        %v935 = vsel %vm932, %v903, %v934
        %v936 = vsel %vm930, %v922, %v923
        %v937 = vsel %vm932, %v905, %v936
        %v938 = vsel %vm930, %v923, %v924
        %v939 = vsel %vm932, %v907, %v938
        %v940 = vsel %vm930, %v925, %v926
        %v941 = vsel %vm932, %v911, %v940
        %v942 = vsel %vm930, %v926, %v927
        %v943 = vsel %vm932, %v913, %v942
        %v944 = vsel %vm930, %v927, %v928
        %v945 = vsel %vm932, %v915, %v944
        %v946 = vsel %vm930, %v928, %v929
        %v947 = vsel %vm932, %v917, %v946
        %956 = vst [vmem:[#allocation4 + $0x40] sm:$0xff] %v933
        %957 = vst [vmem:[#allocation4 + $0x48] sm:$0xff] %v935
        %958 = vst [vmem:[#allocation4 + $0x50] sm:$0xff] %v937
        %959 = vst [vmem:[#allocation4 + $0x58] sm:$0xff] %v939
        %960 = vst [vmem:[#allocation4 + $0x60] sm:$0xff] %v941
        %961 = vst [vmem:[#allocation4 + $0x68] sm:$0xff] %v943
        %962 = vst [vmem:[#allocation4 + $0x70] sm:$0xff] %v945
        %963 = vst [vmem:[#allocation4 + $0x78] sm:$0xff] %v947
        %v964 = vld [vmem:[#allocation3] sm:$0xff]
        %v965 = vld [vmem:[#allocation3 + $0x8] sm:$0xff]
        %v966 = vld [vmem:[#allocation3 + $0x10] sm:$0xff]
        %v967 = vld [vmem:[#allocation3 + $0x18] sm:$0xff]
        %v968 = vld [vmem:[#allocation3 + $0x20] sm:$0xf]
        %v969 = vld [vmem:[#allocation3 + $0x28] sm:$0xff]
        %v970 = vld [vmem:[#allocation3 + $0x30] sm:$0xff]
        %v971 = vld [vmem:[#allocation3 + $0x38] sm:$0xff]
        %v972 = vld [vmem:[#allocation3 + $0x40] sm:$0xff]
        %v973 = vld [vmem:[#allocation3 + $0x48] sm:$0xf]
        %984 = vrot.lane.b32.xlu0 %v964, 126
        %v985 = vpop.permute.xlu0 %984
        %986 = vrot.lane.b32.xlu0 %v965, 126
        %v987 = vpop.permute.xlu0 %986
        %988 = vrot.lane.b32.xlu0 %v966, 126
        %v989 = vpop.permute.xlu0 %988
        %990 = vrot.lane.b32.xlu0 %v967, 126
        %v991 = vpop.permute.xlu0 %990
        %992 = vrot.lane.b32.xlu0 %v968, 126
        %v993 = vpop.permute.xlu0 %992
        %994 = vrot.lane.b32.xlu0 %v969, 126
        %v995 = vpop.permute.xlu0 %994
        %996 = vrot.lane.b32.xlu0 %v970, 126
        %v997 = vpop.permute.xlu0 %996
        %998 = vrot.lane.b32.xlu0 %v971, 126
        %v999 = vpop.permute.xlu0 %998
        %1000 = vrot.lane.b32.xlu0 %v972, 126
        %v1001 = vpop.permute.xlu0 %1000
        %1002 = vrot.lane.b32.xlu0 %v973, 126
        %v1003 = vpop.permute.xlu0 %1002
        %v1004 = vrot.slane %v985, 4
        %v1005 = vrot.slane %v987, 4
        %v1006 = vrot.slane %v989, 4
        %v1007 = vrot.slane %v991, 4
        %v1008 = vrot.slane %v993, 4
        %v1009 = vrot.slane %v995, 4
        %v1010 = vrot.slane %v997, 4
        %v1011 = vrot.slane %v999, 4
        %v1012 = vrot.slane %v1001, 4
        %v1013 = vrot.slane %v1003, 4
        %v1014 = vsel %vm930, %v1004, %v1005
        %vm1015 = vcmask 1031168
        %v1016 = vsel %vm1015, %v985, %v1014
        %v1017 = vsel %vm930, %v1005, %v1006
        %v1018 = vsel %vm1015, %v987, %v1017
        %v1019 = vsel %vm930, %v1006, %v1007
        %v1020 = vsel %vm1015, %v989, %v1019
        %v1021 = vsel %vm930, %v1007, %v1008
        %v1022 = vsel %vm1015, %v991, %v1021
        %v1023 = vsel %vm930, %v1009, %v1010
        %v1024 = vsel %vm1015, %v995, %v1023
        %v1025 = vsel %vm930, %v1010, %v1011
        %v1026 = vsel %vm1015, %v997, %v1025
        %v1027 = vsel %vm930, %v1011, %v1012
        %v1028 = vsel %vm1015, %v999, %v1027
        %v1029 = vsel %vm930, %v1012, %v1013
        %v1030 = vsel %vm1015, %v1001, %v1029
        %1039 = vst [vmem:[#allocation4 + $0x80] sm:$0xff] %v1016
        %1040 = vst [vmem:[#allocation4 + $0x88] sm:$0xff] %v1018
        %1041 = vst [vmem:[#allocation4 + $0x90] sm:$0xff] %v1020
        %1042 = vst [vmem:[#allocation4 + $0x98] sm:$0xff] %v1022
        %1043 = vst [vmem:[#allocation4 + $0xa0] sm:$0xff] %v1024
        %1044 = vst [vmem:[#allocation4 + $0xa8] sm:$0xff] %v1026
        %1045 = vst [vmem:[#allocation4 + $0xb0] sm:$0xff] %v1028
        %1046 = vst [vmem:[#allocation4 + $0xb8] sm:$0xff] %v1030
        %v1047 = vld [vmem:[#allocation3] sm:$0xff]
        %v1048 = vld [vmem:[#allocation3 + $0x8] sm:$0xff]
        %v1049 = vld [vmem:[#allocation3 + $0x10] sm:$0xff]
        %v1050 = vld [vmem:[#allocation3 + $0x18] sm:$0xff]
        %v1051 = vld [vmem:[#allocation3 + $0x20] sm:$0xf]
        %v1052 = vld [vmem:[#allocation3 + $0x28] sm:$0xff]
        %v1053 = vld [vmem:[#allocation3 + $0x30] sm:$0xff]
        %v1054 = vld [vmem:[#allocation3 + $0x38] sm:$0xff]
        %v1055 = vld [vmem:[#allocation3 + $0x40] sm:$0xff]
        %v1056 = vld [vmem:[#allocation3 + $0x48] sm:$0xf]
        %1067 = vrot.lane.b32.xlu0 %v1047, 125
        %v1068 = vpop.permute.xlu0 %1067
        %1069 = vrot.lane.b32.xlu0 %v1048, 125
        %v1070 = vpop.permute.xlu0 %1069
        %1071 = vrot.lane.b32.xlu0 %v1049, 125
        %v1072 = vpop.permute.xlu0 %1071
        %1073 = vrot.lane.b32.xlu0 %v1050, 125
        %v1074 = vpop.permute.xlu0 %1073
        %1075 = vrot.lane.b32.xlu0 %v1051, 125
        %v1076 = vpop.permute.xlu0 %1075
        %1077 = vrot.lane.b32.xlu0 %v1052, 125
        %v1078 = vpop.permute.xlu0 %1077
        %1079 = vrot.lane.b32.xlu0 %v1053, 125
        %v1080 = vpop.permute.xlu0 %1079
        %1081 = vrot.lane.b32.xlu0 %v1054, 125
        %v1082 = vpop.permute.xlu0 %1081
        %1083 = vrot.lane.b32.xlu0 %v1055, 125
        %v1084 = vpop.permute.xlu0 %1083
        %1085 = vrot.lane.b32.xlu0 %v1056, 125
        %v1086 = vpop.permute.xlu0 %1085
        %v1087 = vrot.slane %v1068, 4
        %v1088 = vrot.slane %v1070, 4
        %v1089 = vrot.slane %v1072, 4
        %v1090 = vrot.slane %v1074, 4
        %v1091 = vrot.slane %v1076, 4
        %v1092 = vrot.slane %v1078, 4
        %v1093 = vrot.slane %v1080, 4
        %v1094 = vrot.slane %v1082, 4
        %v1095 = vrot.slane %v1084, 4
        %v1096 = vrot.slane %v1086, 4
        %v1097 = vsel %vm930, %v1087, %v1088
        %vm1098 = vcmask 1022976
        %v1099 = vsel %vm1098, %v1068, %v1097
        %v1100 = vsel %vm930, %v1088, %v1089
        %v1101 = vsel %vm1098, %v1070, %v1100
        %v1102 = vsel %vm930, %v1089, %v1090
        %v1103 = vsel %vm1098, %v1072, %v1102
        %v1104 = vsel %vm930, %v1090, %v1091
        %v1105 = vsel %vm1098, %v1074, %v1104
        %v1106 = vsel %vm930, %v1092, %v1093
        %v1107 = vsel %vm1098, %v1078, %v1106
        %v1108 = vsel %vm930, %v1093, %v1094
        %v1109 = vsel %vm1098, %v1080, %v1108
        %v1110 = vsel %vm930, %v1094, %v1095
        %v1111 = vsel %vm1098, %v1082, %v1110
        %v1112 = vsel %vm930, %v1095, %v1096
        %v1113 = vsel %vm1098, %v1084, %v1112
        %1122 = vst [vmem:[#allocation4 + $0xc0] sm:$0xff] %v1099
        %1123 = vst [vmem:[#allocation4 + $0xc8] sm:$0xff] %v1101
        %1124 = vst [vmem:[#allocation4 + $0xd0] sm:$0xff] %v1103
        %1125 = vst [vmem:[#allocation4 + $0xd8] sm:$0xff] %v1105
        %1126 = vst [vmem:[#allocation4 + $0xe0] sm:$0xff] %v1107
        %1127 = vst [vmem:[#allocation4 + $0xe8] sm:$0xff] %v1109
        %1128 = vst [vmem:[#allocation4 + $0xf0] sm:$0xff] %v1111
        %1129 = vst [vmem:[#allocation4 + $0xf8] sm:$0xff] %v1113
        %v1130 = vld [vmem:[#allocation3] sm:$0xff]
        %v1131 = vld [vmem:[#allocation3 + $0x8] sm:$0xff]
        %v1132 = vld [vmem:[#allocation3 + $0x10] sm:$0xff]
        %v1133 = vld [vmem:[#allocation3 + $0x18] sm:$0xff]
        %v1134 = vld [vmem:[#allocation3 + $0x20] sm:$0xf]
        %v1135 = vld [vmem:[#allocation3 + $0x28] sm:$0xff]
        %v1136 = vld [vmem:[#allocation3 + $0x30] sm:$0xff]
        %v1137 = vld [vmem:[#allocation3 + $0x38] sm:$0xff]
        %v1138 = vld [vmem:[#allocation3 + $0x40] sm:$0xff]
        %v1139 = vld [vmem:[#allocation3 + $0x48] sm:$0xf]
        %1150 = vrot.lane.b32.xlu0 %v1130, 124
        %v1151 = vpop.permute.xlu0 %1150
        %1152 = vrot.lane.b32.xlu0 %v1131, 124
        %v1153 = vpop.permute.xlu0 %1152
        %1154 = vrot.lane.b32.xlu0 %v1132, 124
        %v1155 = vpop.permute.xlu0 %1154
        %1156 = vrot.lane.b32.xlu0 %v1133, 124
        %v1157 = vpop.permute.xlu0 %1156
        %1158 = vrot.lane.b32.xlu0 %v1134, 124
        %v1159 = vpop.permute.xlu0 %1158
        %1160 = vrot.lane.b32.xlu0 %v1135, 124
        %v1161 = vpop.permute.xlu0 %1160
        %1162 = vrot.lane.b32.xlu0 %v1136, 124
        %v1163 = vpop.permute.xlu0 %1162
        %1164 = vrot.lane.b32.xlu0 %v1137, 124
        %v1165 = vpop.permute.xlu0 %1164
        %1166 = vrot.lane.b32.xlu0 %v1138, 124
        %v1167 = vpop.permute.xlu0 %1166
        %1168 = vrot.lane.b32.xlu0 %v1139, 124
        %v1169 = vpop.permute.xlu0 %1168
        %v1170 = vrot.slane %v1151, 4
        %v1171 = vrot.slane %v1153, 4
        %v1172 = vrot.slane %v1155, 4
        %v1173 = vrot.slane %v1157, 4
        %v1174 = vrot.slane %v1159, 4
        %v1175 = vrot.slane %v1161, 4
        %v1176 = vrot.slane %v1163, 4
        %v1177 = vrot.slane %v1165, 4
        %v1178 = vrot.slane %v1167, 4
        %v1179 = vrot.slane %v1169, 4
        %v1180 = vsel %vm930, %v1170, %v1171
        %vm1181 = vcmask 1014784
        %v1182 = vsel %vm1181, %v1151, %v1180
        %v1183 = vsel %vm930, %v1171, %v1172
        %v1184 = vsel %vm1181, %v1153, %v1183
        %v1185 = vsel %vm930, %v1172, %v1173
        %v1186 = vsel %vm1181, %v1155, %v1185
        %v1187 = vsel %vm930, %v1173, %v1174
        %v1188 = vsel %vm1181, %v1157, %v1187
        %v1189 = vsel %vm930, %v1175, %v1176
        %v1190 = vsel %vm1181, %v1161, %v1189
        %v1191 = vsel %vm930, %v1176, %v1177
        %v1192 = vsel %vm1181, %v1163, %v1191
        %v1193 = vsel %vm930, %v1177, %v1178
        %v1194 = vsel %vm1181, %v1165, %v1193
        %v1195 = vsel %vm930, %v1178, %v1179
        %v1196 = vsel %vm1181, %v1167, %v1195
        %1205 = vst [vmem:[#allocation4 + $0x100] sm:$0xff] %v1182
        %1206 = vst [vmem:[#allocation4 + $0x108] sm:$0xff] %v1184
        %1207 = vst [vmem:[#allocation4 + $0x110] sm:$0xff] %v1186
        %1208 = vst [vmem:[#allocation4 + $0x118] sm:$0xff] %v1188
        %1209 = vst [vmem:[#allocation4 + $0x120] sm:$0xff] %v1190
        %1210 = vst [vmem:[#allocation4 + $0x128] sm:$0xff] %v1192
        %1211 = vst [vmem:[#allocation4 + $0x130] sm:$0xff] %v1194
        %1212 = vst [vmem:[#allocation4 + $0x138] sm:$0xff] %v1196
        %v1213 = vld [vmem:[#allocation5] sm:$0xff]
        %v1214 = vld [vmem:[#allocation5 + $0x8] sm:$0xff]
        %v1215 = vld [vmem:[#allocation5 + $0x10] sm:$0xff]
        %v1216 = vld [vmem:[#allocation5 + $0x18] sm:$0xff]
        %v1217 = vld [vmem:[#allocation5 + $0x20] sm:$0xff]
        %v1218 = vld [vmem:[#allocation5 + $0x28] sm:$0xff]
        %v1219 = vld [vmem:[#allocation5 + $0x30] sm:$0xff]
        %v1220 = vld [vmem:[#allocation5 + $0x38] sm:$0xff]
        %v1221 = vld [vmem:[#allocation5 + $0x40] sm:$0xff]
        %v1222 = vld [vmem:[#allocation5 + $0x48] sm:$0xff]
        %v1223 = vld [vmem:[#allocation5 + $0x50] sm:$0xff]
        %v1224 = vld [vmem:[#allocation5 + $0x58] sm:$0xff]
        %v1225 = vld [vmem:[#allocation5 + $0x60] sm:$0xff]
        %v1226 = vld [vmem:[#allocation5 + $0x68] sm:$0xff]
        %v1227 = vld [vmem:[#allocation5 + $0x70] sm:$0xff]
        %v1228 = vld [vmem:[#allocation5 + $0x78] sm:$0xff]
        %v1229 = vld [vmem:[#allocation5 + $0x80] sm:$0xff]
        %v1230 = vld [vmem:[#allocation5 + $0x88] sm:$0xff]
        %v1231 = vld [vmem:[#allocation5 + $0x90] sm:$0xff]
        %v1232 = vld [vmem:[#allocation5 + $0x98] sm:$0xff]
        %v1233 = vld [vmem:[#allocation5 + $0xa0] sm:$0xff]
        %v1234 = vld [vmem:[#allocation5 + $0xa8] sm:$0xff]
        %v1235 = vld [vmem:[#allocation5 + $0xb0] sm:$0xff]
        %v1236 = vld [vmem:[#allocation5 + $0xb8] sm:$0xff]
        %v1237 = vld [vmem:[#allocation5 + $0xc0] sm:$0xff]
        %v1238 = vld [vmem:[#allocation5 + $0xc8] sm:$0xff]
        %v1239 = vld [vmem:[#allocation5 + $0xd0] sm:$0xff]
        %v1240 = vld [vmem:[#allocation5 + $0xd8] sm:$0xff]
        %v1241 = vld [vmem:[#allocation5 + $0xe0] sm:$0xff]
        %v1242 = vld [vmem:[#allocation5 + $0xe8] sm:$0xff]
        %v1243 = vld [vmem:[#allocation5 + $0xf0] sm:$0xff]
        %v1244 = vld [vmem:[#allocation5 + $0xf8] sm:$0xff]
        %v1245 = vld [vmem:[#allocation8] sm:$0xf]
        %v1246 = vld [vmem:[#allocation8 + $0x4] sm:$0xf]
        %v1247 = vld [vmem:[#allocation8 + $0x8] sm:$0xf]
        %v1248 = vld [vmem:[#allocation8 + $0xc] sm:$0xf]
        %v1249 = vld [vmem:[#allocation4] sm:$0xff]
        %v1250 = vld [vmem:[#allocation4 + $0x8] sm:$0xff]
        %v1251 = vld [vmem:[#allocation4 + $0x10] sm:$0xff]
        %v1252 = vld [vmem:[#allocation4 + $0x18] sm:$0xff]
        %v1253 = vld [vmem:[#allocation4 + $0x20] sm:$0xff]
        %v1254 = vld [vmem:[#allocation4 + $0x28] sm:$0xff]
        %v1255 = vld [vmem:[#allocation4 + $0x30] sm:$0xff]
        %v1256 = vld [vmem:[#allocation4 + $0x38] sm:$0xff]
        %v1257 = vld [vmem:[#allocation4 + $0x40] sm:$0xff]
        %v1258 = vld [vmem:[#allocation4 + $0x48] sm:$0xff]
        %v1259 = vld [vmem:[#allocation4 + $0x50] sm:$0xff]
        %v1260 = vld [vmem:[#allocation4 + $0x58] sm:$0xff]
        %v1261 = vld [vmem:[#allocation4 + $0x60] sm:$0xff]
        %v1262 = vld [vmem:[#allocation4 + $0x68] sm:$0xff]
        %v1263 = vld [vmem:[#allocation4 + $0x70] sm:$0xff]
        %v1264 = vld [vmem:[#allocation4 + $0x78] sm:$0xff]
        %v1265 = vld [vmem:[#allocation4 + $0x80] sm:$0xff]
        %v1266 = vld [vmem:[#allocation4 + $0x88] sm:$0xff]
        %v1267 = vld [vmem:[#allocation4 + $0x90] sm:$0xff]
        %v1268 = vld [vmem:[#allocation4 + $0x98] sm:$0xff]
        %v1269 = vld [vmem:[#allocation4 + $0xa0] sm:$0xff]
        %v1270 = vld [vmem:[#allocation4 + $0xa8] sm:$0xff]
        %v1271 = vld [vmem:[#allocation4 + $0xb0] sm:$0xff]
        %v1272 = vld [vmem:[#allocation4 + $0xb8] sm:$0xff]
        %v1273 = vld [vmem:[#allocation4 + $0xc0] sm:$0xff]
        %v1274 = vld [vmem:[#allocation4 + $0xc8] sm:$0xff]
        %v1275 = vld [vmem:[#allocation4 + $0xd0] sm:$0xff]
        %v1276 = vld [vmem:[#allocation4 + $0xd8] sm:$0xff]
        %v1277 = vld [vmem:[#allocation4 + $0xe0] sm:$0xff]
        %v1278 = vld [vmem:[#allocation4 + $0xe8] sm:$0xff]
        %v1279 = vld [vmem:[#allocation4 + $0xf0] sm:$0xff]
        %v1280 = vld [vmem:[#allocation4 + $0xf8] sm:$0xff]
        %v1281 = vld [vmem:[#allocation4 + $0x100] sm:$0xff]
        %v1282 = vld [vmem:[#allocation4 + $0x108] sm:$0xff]
        %v1283 = vld [vmem:[#allocation4 + $0x110] sm:$0xff]
        %v1284 = vld [vmem:[#allocation4 + $0x118] sm:$0xff]
        %v1285 = vld [vmem:[#allocation4 + $0x120] sm:$0xff]
        %v1286 = vld [vmem:[#allocation4 + $0x128] sm:$0xff]
        %v1287 = vld [vmem:[#allocation4 + $0x130] sm:$0xff]
        %v1288 = vld [vmem:[#allocation4 + $0x138] sm:$0xff]
        %v1293 = vunpack.c.l.b16 %v1245
        %v1294 = vunpack.c.l.b16 %v1246
        %v1295 = vunpack.c.l.b16 %v1247
        %v1296 = vunpack.c.l.b16 %v1248
        %v1297 = vpack.c.b16 %v1294, %v1293
        %v1298 = vpack.c.b16 %v1296, %v1295
        %v1339 = vunpack.c.l.b16 %v1249
        %v1340 = vunpack.c.h.b16 %v1249
        %v1341 = vunpack.c.l.b16 %v1250
        %v1342 = vunpack.c.h.b16 %v1250
        %v1343 = vunpack.c.l.b16 %v1251
        %v1344 = vunpack.c.h.b16 %v1251
        %v1345 = vunpack.c.l.b16 %v1252
        %v1346 = vunpack.c.h.b16 %v1252
        %v1347 = vunpack.c.l.b16 %v1253
        %v1348 = vunpack.c.h.b16 %v1253
        %v1349 = vunpack.c.l.b16 %v1254
        %v1350 = vunpack.c.h.b16 %v1254
        %v1351 = vunpack.c.l.b16 %v1255
        %v1352 = vunpack.c.h.b16 %v1255
        %v1353 = vunpack.c.l.b16 %v1256
        %v1354 = vunpack.c.h.b16 %v1256
        %v1355 = vunpack.c.l.b16 %v1257
        %v1356 = vunpack.c.h.b16 %v1257
        %v1357 = vunpack.c.l.b16 %v1258
        %v1358 = vunpack.c.h.b16 %v1258
        %v1359 = vunpack.c.l.b16 %v1259
        %v1360 = vunpack.c.h.b16 %v1259
        %v1361 = vunpack.c.l.b16 %v1260
        %v1362 = vunpack.c.h.b16 %v1260
        %v1363 = vunpack.c.l.b16 %v1261
        %v1364 = vunpack.c.h.b16 %v1261
        %v1365 = vunpack.c.l.b16 %v1262
        %v1366 = vunpack.c.h.b16 %v1262
        %v1367 = vunpack.c.l.b16 %v1263
        %v1368 = vunpack.c.h.b16 %v1263
        %v1369 = vunpack.c.l.b16 %v1264
        %v1370 = vunpack.c.h.b16 %v1264
        %v1371 = vunpack.c.l.b16 %v1265
        %v1372 = vunpack.c.h.b16 %v1265
        %v1373 = vunpack.c.l.b16 %v1266
        %v1374 = vunpack.c.h.b16 %v1266
        %v1375 = vunpack.c.l.b16 %v1267
        %v1376 = vunpack.c.h.b16 %v1267
        %v1377 = vunpack.c.l.b16 %v1268
        %v1378 = vunpack.c.h.b16 %v1268
        %v1379 = vunpack.c.l.b16 %v1269
        %v1380 = vunpack.c.h.b16 %v1269
        %v1381 = vunpack.c.l.b16 %v1270
        %v1382 = vunpack.c.h.b16 %v1270
        %v1383 = vunpack.c.l.b16 %v1271
        %v1384 = vunpack.c.h.b16 %v1271
        %v1385 = vunpack.c.l.b16 %v1272
        %v1386 = vunpack.c.h.b16 %v1272
        %v1387 = vunpack.c.l.b16 %v1273
        %v1388 = vunpack.c.h.b16 %v1273
        %v1389 = vunpack.c.l.b16 %v1274
        %v1390 = vunpack.c.h.b16 %v1274
        %v1391 = vunpack.c.l.b16 %v1275
        %v1392 = vunpack.c.h.b16 %v1275
        %v1393 = vunpack.c.l.b16 %v1276
        %v1394 = vunpack.c.h.b16 %v1276
        %v1395 = vunpack.c.l.b16 %v1277
        %v1396 = vunpack.c.h.b16 %v1277
        %v1397 = vunpack.c.l.b16 %v1278
        %v1398 = vunpack.c.h.b16 %v1278
        %v1399 = vunpack.c.l.b16 %v1279
        %v1400 = vunpack.c.h.b16 %v1279
        %v1401 = vunpack.c.l.b16 %v1280
        %v1402 = vunpack.c.h.b16 %v1280
        %v1403 = vunpack.c.l.b16 %v1281
        %v1404 = vunpack.c.h.b16 %v1281
        %v1405 = vunpack.c.l.b16 %v1282
        %v1406 = vunpack.c.h.b16 %v1282
        %v1407 = vunpack.c.l.b16 %v1283
        %v1408 = vunpack.c.h.b16 %v1283
        %v1409 = vunpack.c.l.b16 %v1284
        %v1410 = vunpack.c.h.b16 %v1284
        %v1411 = vunpack.c.l.b16 %v1285
        %v1412 = vunpack.c.h.b16 %v1285
        %v1413 = vunpack.c.l.b16 %v1286
        %v1414 = vunpack.c.h.b16 %v1286
        %v1415 = vunpack.c.l.b16 %v1287
        %v1416 = vunpack.c.h.b16 %v1287
        %v1417 = vunpack.c.l.b16 %v1288
        %v1418 = vunpack.c.h.b16 %v1288
        %v1419 = vpack.c.b16 %v1347, %v1339
        %v1420 = vpack.c.b16 %v1348, %v1340
        %v1421 = vpack.c.b16 %v1349, %v1341
        %v1422 = vpack.c.b16 %v1350, %v1342
        %v1423 = vpack.c.b16 %v1351, %v1343
        %v1424 = vpack.c.b16 %v1352, %v1344
        %v1425 = vpack.c.b16 %v1353, %v1345
        %v1426 = vpack.c.b16 %v1354, %v1346
        %v1427 = vpack.c.b16 %v1363, %v1355
        %v1428 = vpack.c.b16 %v1364, %v1356
        %v1429 = vpack.c.b16 %v1365, %v1357
        %v1430 = vpack.c.b16 %v1366, %v1358
        %v1431 = vpack.c.b16 %v1367, %v1359
        %v1432 = vpack.c.b16 %v1368, %v1360
        %v1433 = vpack.c.b16 %v1369, %v1361
        %v1434 = vpack.c.b16 %v1370, %v1362
        %v1435 = vpack.c.b16 %v1379, %v1371
        %v1436 = vpack.c.b16 %v1380, %v1372
        %v1437 = vpack.c.b16 %v1381, %v1373
        %v1438 = vpack.c.b16 %v1382, %v1374
        %v1439 = vpack.c.b16 %v1383, %v1375
        %v1440 = vpack.c.b16 %v1384, %v1376
        %v1441 = vpack.c.b16 %v1385, %v1377
        %v1442 = vpack.c.b16 %v1386, %v1378
        %v1443 = vpack.c.b16 %v1395, %v1387
        %v1444 = vpack.c.b16 %v1396, %v1388
        %v1445 = vpack.c.b16 %v1397, %v1389
        %v1446 = vpack.c.b16 %v1398, %v1390
        %v1447 = vpack.c.b16 %v1399, %v1391
        %v1448 = vpack.c.b16 %v1400, %v1392
        %v1449 = vpack.c.b16 %v1401, %v1393
        %v1450 = vpack.c.b16 %v1402, %v1394
        %v1451 = vpack.c.b16 %v1411, %v1403
        %v1452 = vpack.c.b16 %v1412, %v1404
        %v1453 = vpack.c.b16 %v1413, %v1405
        %v1454 = vpack.c.b16 %v1414, %v1406
        %v1455 = vpack.c.b16 %v1415, %v1407
        %v1456 = vpack.c.b16 %v1416, %v1408
        %v1457 = vpack.c.b16 %v1417, %v1409
        %v1458 = vpack.c.b16 %v1418, %v1410
        %vm1499 = vcmask 654336
        %v1501 = vsel %vm1499, %v1297, 0
        %v1504 = vsel %vm1499, %v1298, 0
        %1506 = vmatpush.bf16.msra.mxu0 0
        %1507 = vmatpush.bf16.msra.mxu0 0
        %1508 = vmatpush.bf16.msra.mxu0 0
        %1509 = vmatpush.bf16.msra.mxu0 %v1451
        %1510 = vmatpush.bf16.msra.mxu0 %v1443
        %1511 = vmatpush.bf16.msra.mxu0 %v1435
        %1512 = vmatpush.bf16.msra.mxu0 %v1427
        %1513 = vmatpush.bf16.msra.mxu0 %v1419
        %1514 = vmatmul.bf16.gmra.mxu0 %v1501
        %v1515 = vpop.f32.mrf.mxu0
        %v1516 = vadd.f32 0.0, %v1515
        %v1517 = vpop.f32.mrf.mxu0
        %v1518 = vadd.f32 0.0, %v1517
        %1519 = vmatmul.bf16.gmra.mxu0 %v1504
        %v1520 = vpop.f32.mrf.mxu0
        %v1521 = vadd.f32 0.0, %v1520
        %v1522 = vpop.f32.mrf.mxu0
        %v1523 = vadd.f32 0.0, %v1522
        %1524 = vdwg.mxu0
        %1525 = vmatpush.bf16.msra.mxu0 0
        %1526 = vmatpush.bf16.msra.mxu0 0
        %1527 = vmatpush.bf16.msra.mxu0 0
        %1528 = vmatpush.bf16.msra.mxu0 %v1452
        %1529 = vmatpush.bf16.msra.mxu0 %v1444
        %1530 = vmatpush.bf16.msra.mxu0 %v1436
        %1531 = vmatpush.bf16.msra.mxu0 %v1428
        %1532 = vmatpush.bf16.msra.mxu0 %v1420
        %1533 = vmatmul.bf16.gmra.mxu0 %v1501
        %v1534 = vpop.f32.mrf.mxu0
        %v1535 = vadd.f32 0.0, %v1534
        %v1536 = vpop.f32.mrf.mxu0
        %v1537 = vadd.f32 0.0, %v1536
        %1538 = vmatmul.bf16.gmra.mxu0 %v1504
        %v1539 = vpop.f32.mrf.mxu0
        %v1540 = vadd.f32 0.0, %v1539
        %v1541 = vpop.f32.mrf.mxu0
        %v1542 = vadd.f32 0.0, %v1541
        %1543 = vdwg.mxu0
        %1544 = vmatpush.bf16.msra.mxu0 0
        %1545 = vmatpush.bf16.msra.mxu0 0
        %1546 = vmatpush.bf16.msra.mxu0 0
        %1547 = vmatpush.bf16.msra.mxu0 %v1453
        %1548 = vmatpush.bf16.msra.mxu0 %v1445
        %1549 = vmatpush.bf16.msra.mxu0 %v1437
        %1550 = vmatpush.bf16.msra.mxu0 %v1429
        %1551 = vmatpush.bf16.msra.mxu0 %v1421
        %1552 = vmatmul.bf16.gmra.mxu0 %v1501
        %v1553 = vpop.f32.mrf.mxu0
        %v1554 = vadd.f32 0.0, %v1553
        %v1555 = vpop.f32.mrf.mxu0
        %v1556 = vadd.f32 0.0, %v1555
        %1557 = vmatmul.bf16.gmra.mxu0 %v1504
        %v1558 = vpop.f32.mrf.mxu0
        %v1559 = vadd.f32 0.0, %v1558
        %v1560 = vpop.f32.mrf.mxu0
        %v1561 = vadd.f32 0.0, %v1560
        %1562 = vdwg.mxu0
        %1563 = vmatpush.bf16.msra.mxu0 0
        %1564 = vmatpush.bf16.msra.mxu0 0
        %1565 = vmatpush.bf16.msra.mxu0 0
        %1566 = vmatpush.bf16.msra.mxu0 %v1454
        %1567 = vmatpush.bf16.msra.mxu0 %v1446
        %1568 = vmatpush.bf16.msra.mxu0 %v1438
        %1569 = vmatpush.bf16.msra.mxu0 %v1430
        %1570 = vmatpush.bf16.msra.mxu0 %v1422
        %1571 = vmatmul.bf16.gmra.mxu0 %v1501
        %v1572 = vpop.f32.mrf.mxu0
        %v1573 = vadd.f32 0.0, %v1572
        %v1574 = vpop.f32.mrf.mxu0
        %v1575 = vadd.f32 0.0, %v1574
        %1576 = vmatmul.bf16.gmra.mxu0 %v1504
        %v1577 = vpop.f32.mrf.mxu0
        %v1578 = vadd.f32 0.0, %v1577
        %v1579 = vpop.f32.mrf.mxu0
        %v1580 = vadd.f32 0.0, %v1579
        %1581 = vdwg.mxu0
        %1582 = vmatpush.bf16.msra.mxu0 0
        %1583 = vmatpush.bf16.msra.mxu0 0
        %1584 = vmatpush.bf16.msra.mxu0 0
        %1585 = vmatpush.bf16.msra.mxu0 %v1455
        %1586 = vmatpush.bf16.msra.mxu0 %v1447
        %1587 = vmatpush.bf16.msra.mxu0 %v1439
        %1588 = vmatpush.bf16.msra.mxu0 %v1431
        %1589 = vmatpush.bf16.msra.mxu0 %v1423
        %1590 = vmatmul.bf16.gmra.mxu0 %v1501
        %v1591 = vpop.f32.mrf.mxu0
        %v1592 = vadd.f32 0.0, %v1591
        %v1593 = vpop.f32.mrf.mxu0
        %v1594 = vadd.f32 0.0, %v1593
        %1595 = vmatmul.bf16.gmra.mxu0 %v1504
        %v1596 = vpop.f32.mrf.mxu0
        %v1597 = vadd.f32 0.0, %v1596
        %v1598 = vpop.f32.mrf.mxu0
        %v1599 = vadd.f32 0.0, %v1598
        %1600 = vdwg.mxu0
        %1601 = vmatpush.bf16.msra.mxu0 0
        %1602 = vmatpush.bf16.msra.mxu0 0
        %1603 = vmatpush.bf16.msra.mxu0 0
        %1604 = vmatpush.bf16.msra.mxu0 %v1456
        %1605 = vmatpush.bf16.msra.mxu0 %v1448
        %1606 = vmatpush.bf16.msra.mxu0 %v1440
        %1607 = vmatpush.bf16.msra.mxu0 %v1432
        %1608 = vmatpush.bf16.msra.mxu0 %v1424
        %1609 = vmatmul.bf16.gmra.mxu0 %v1501
        %v1610 = vpop.f32.mrf.mxu0
        %v1611 = vadd.f32 0.0, %v1610
        %v1612 = vpop.f32.mrf.mxu0
        %v1613 = vadd.f32 0.0, %v1612
        %1614 = vmatmul.bf16.gmra.mxu0 %v1504
        %v1615 = vpop.f32.mrf.mxu0
        %v1616 = vadd.f32 0.0, %v1615
        %v1617 = vpop.f32.mrf.mxu0
        %v1618 = vadd.f32 0.0, %v1617
        %1619 = vdwg.mxu0
        %1620 = vmatpush.bf16.msra.mxu0 0
        %1621 = vmatpush.bf16.msra.mxu0 0
        %1622 = vmatpush.bf16.msra.mxu0 0
        %1623 = vmatpush.bf16.msra.mxu0 %v1457
        %1624 = vmatpush.bf16.msra.mxu0 %v1449
        %1625 = vmatpush.bf16.msra.mxu0 %v1441
        %1626 = vmatpush.bf16.msra.mxu0 %v1433
        %1627 = vmatpush.bf16.msra.mxu0 %v1425
        %1628 = vmatmul.bf16.gmra.mxu0 %v1501
        %v1629 = vpop.f32.mrf.mxu0
        %v1630 = vadd.f32 0.0, %v1629
        %v1631 = vpop.f32.mrf.mxu0
        %v1632 = vadd.f32 0.0, %v1631
        %1633 = vmatmul.bf16.gmra.mxu0 %v1504
        %v1634 = vpop.f32.mrf.mxu0
        %v1635 = vadd.f32 0.0, %v1634
        %v1636 = vpop.f32.mrf.mxu0
        %v1637 = vadd.f32 0.0, %v1636
        %1638 = vdwg.mxu0
        %1639 = vmatpush.bf16.msra.mxu0 0
        %1640 = vmatpush.bf16.msra.mxu0 0
        %1641 = vmatpush.bf16.msra.mxu0 0
        %1642 = vmatpush.bf16.msra.mxu0 %v1458
        %1643 = vmatpush.bf16.msra.mxu0 %v1450
        %1644 = vmatpush.bf16.msra.mxu0 %v1442
        %1645 = vmatpush.bf16.msra.mxu0 %v1434
        %1646 = vmatpush.bf16.msra.mxu0 %v1426
        %1647 = vmatmul.bf16.gmra.mxu0 %v1501
        %v1648 = vpop.f32.mrf.mxu0
        %v1649 = vadd.f32 0.0, %v1648
        %v1650 = vpop.f32.mrf.mxu0
        %v1651 = vadd.f32 0.0, %v1650
        %1652 = vmatmul.bf16.gmra.mxu0 %v1504
        %v1653 = vpop.f32.mrf.mxu0
        %v1654 = vadd.f32 0.0, %v1653
        %v1655 = vpop.f32.mrf.mxu0
        %v1656 = vadd.f32 0.0, %v1655
        %1657 = vdwg.mxu0
        %v1658 = vadd.f32 %v1213, %v1516
        %v1659 = vadd.f32 %v1214, %v1535
        %v1660 = vadd.f32 %v1215, %v1554
        %v1661 = vadd.f32 %v1216, %v1573
        %v1662 = vadd.f32 %v1217, %v1592
        %v1663 = vadd.f32 %v1218, %v1611
        %v1664 = vadd.f32 %v1219, %v1630
        %v1665 = vadd.f32 %v1220, %v1649
        %v1666 = vadd.f32 %v1221, %v1518
        %v1667 = vadd.f32 %v1222, %v1537
        %v1668 = vadd.f32 %v1223, %v1556
        %v1669 = vadd.f32 %v1224, %v1575
        %v1670 = vadd.f32 %v1225, %v1594
        %v1671 = vadd.f32 %v1226, %v1613
        %v1672 = vadd.f32 %v1227, %v1632
        %v1673 = vadd.f32 %v1228, %v1651
        %v1674 = vadd.f32 %v1229, %v1521
        %v1675 = vadd.f32 %v1230, %v1540
        %v1676 = vadd.f32 %v1231, %v1559
        %v1677 = vadd.f32 %v1232, %v1578
        %v1678 = vadd.f32 %v1233, %v1597
        %v1679 = vadd.f32 %v1234, %v1616
        %v1680 = vadd.f32 %v1235, %v1635
        %v1681 = vadd.f32 %v1236, %v1654
        %v1682 = vadd.f32 %v1237, %v1523
        %v1683 = vadd.f32 %v1238, %v1542
        %v1684 = vadd.f32 %v1239, %v1561
        %v1685 = vadd.f32 %v1240, %v1580
        %v1686 = vadd.f32 %v1241, %v1599
        %v1687 = vadd.f32 %v1242, %v1618
        %v1688 = vadd.f32 %v1243, %v1637
        %v1689 = vadd.f32 %v1244, %v1656
        %1690 = vst [vmem:[#allocation5] sm:$0xff] %v1658
        %1691 = vst [vmem:[#allocation5 + $0x8] sm:$0xff] %v1659
        %1692 = vst [vmem:[#allocation5 + $0x10] sm:$0xff] %v1660
        %1693 = vst [vmem:[#allocation5 + $0x18] sm:$0xff] %v1661
        %1694 = vst [vmem:[#allocation5 + $0x20] sm:$0xff] %v1662
        %1695 = vst [vmem:[#allocation5 + $0x28] sm:$0xff] %v1663
        %1696 = vst [vmem:[#allocation5 + $0x30] sm:$0xff] %v1664
        %1697 = vst [vmem:[#allocation5 + $0x38] sm:$0xff] %v1665
        %1698 = vst [vmem:[#allocation5 + $0x40] sm:$0xff] %v1666
        %1699 = vst [vmem:[#allocation5 + $0x48] sm:$0xff] %v1667
        %1700 = vst [vmem:[#allocation5 + $0x50] sm:$0xff] %v1668
        %1701 = vst [vmem:[#allocation5 + $0x58] sm:$0xff] %v1669
        %1702 = vst [vmem:[#allocation5 + $0x60] sm:$0xff] %v1670
        %1703 = vst [vmem:[#allocation5 + $0x68] sm:$0xff] %v1671
        %1704 = vst [vmem:[#allocation5 + $0x70] sm:$0xff] %v1672
        %1705 = vst [vmem:[#allocation5 + $0x78] sm:$0xff] %v1673
        %1706 = vst [vmem:[#allocation5 + $0x80] sm:$0xff] %v1674
        %1707 = vst [vmem:[#allocation5 + $0x88] sm:$0xff] %v1675
        %1708 = vst [vmem:[#allocation5 + $0x90] sm:$0xff] %v1676
        %1709 = vst [vmem:[#allocation5 + $0x98] sm:$0xff] %v1677
        %1710 = vst [vmem:[#allocation5 + $0xa0] sm:$0xff] %v1678
        %1711 = vst [vmem:[#allocation5 + $0xa8] sm:$0xff] %v1679
        %1712 = vst [vmem:[#allocation5 + $0xb0] sm:$0xff] %v1680
        %1713 = vst [vmem:[#allocation5 + $0xb8] sm:$0xff] %v1681
        %1714 = vst [vmem:[#allocation5 + $0xc0] sm:$0xff] %v1682
        %1715 = vst [vmem:[#allocation5 + $0xc8] sm:$0xff] %v1683
        %1716 = vst [vmem:[#allocation5 + $0xd0] sm:$0xff] %v1684
        %1717 = vst [vmem:[#allocation5 + $0xd8] sm:$0xff] %v1685
        %1718 = vst [vmem:[#allocation5 + $0xe0] sm:$0xff] %v1686
        %1719 = vst [vmem:[#allocation5 + $0xe8] sm:$0xff] %v1687
        %1720 = vst [vmem:[#allocation5 + $0xf0] sm:$0xff] %v1688
        %1721 = vst [vmem:[#allocation5 + $0xf8] sm:$0xff] %v1689
        %v1722 = vld [vmem:[#allocation3] sm:$0xff]
        %v1723 = vld [vmem:[#allocation3 + $0x8] sm:$0xff]
        %v1724 = vld [vmem:[#allocation3 + $0x10] sm:$0xff]
        %v1725 = vld [vmem:[#allocation3 + $0x18] sm:$0xff]
        %v1726 = vld [vmem:[#allocation3 + $0x20] sm:$0xf]
        %v1727 = vld [vmem:[#allocation3 + $0x28] sm:$0xff]
        %v1728 = vld [vmem:[#allocation3 + $0x30] sm:$0xff]
        %v1729 = vld [vmem:[#allocation3 + $0x38] sm:$0xff]
        %v1730 = vld [vmem:[#allocation3 + $0x40] sm:$0xff]
        %v1731 = vld [vmem:[#allocation3 + $0x48] sm:$0xf]
        %1742 = vrot.lane.b32.xlu0 %v1722, 96
        %v1743 = vpop.permute.xlu0 %1742
        %1744 = vrot.lane.b32.xlu0 %v1723, 96
        %v1745 = vpop.permute.xlu0 %1744
        %1746 = vrot.lane.b32.xlu0 %v1724, 96
        %v1747 = vpop.permute.xlu0 %1746
        %1748 = vrot.lane.b32.xlu0 %v1725, 96
        %v1749 = vpop.permute.xlu0 %1748
        %1750 = vrot.lane.b32.xlu0 %v1726, 96
        %v1751 = vpop.permute.xlu0 %1750
        %1752 = vrot.lane.b32.xlu0 %v1727, 96
        %v1753 = vpop.permute.xlu0 %1752
        %1754 = vrot.lane.b32.xlu0 %v1728, 96
        %v1755 = vpop.permute.xlu0 %1754
        %1756 = vrot.lane.b32.xlu0 %v1729, 96
        %v1757 = vpop.permute.xlu0 %1756
        %1758 = vrot.lane.b32.xlu0 %v1730, 96
        %v1759 = vpop.permute.xlu0 %1758
        %1760 = vrot.lane.b32.xlu0 %v1731, 96
        %v1761 = vpop.permute.xlu0 %1760
        %v1762 = vrot.slane %v1743, 4
        %v1763 = vrot.slane %v1745, 4
        %v1764 = vrot.slane %v1747, 4
        %v1765 = vrot.slane %v1749, 4
        %v1766 = vrot.slane %v1751, 4
        %v1767 = vrot.slane %v1753, 4
        %v1768 = vrot.slane %v1755, 4
        %v1769 = vrot.slane %v1757, 4
        %v1770 = vrot.slane %v1759, 4
        %v1771 = vrot.slane %v1761, 4
        %v1772 = vsel %vm930, %v1762, %v1763
        %vm1773 = vcmask 785408
        %v1774 = vsel %vm1773, %v1743, %v1772
        %v1775 = vsel %vm930, %v1763, %v1764
        %v1776 = vsel %vm1773, %v1745, %v1775
        %v1777 = vsel %vm930, %v1764, %v1765
        %v1778 = vsel %vm1773, %v1747, %v1777
        %v1779 = vsel %vm930, %v1765, %v1766
        %v1780 = vsel %vm1773, %v1749, %v1779
        %v1781 = vsel %vm930, %v1767, %v1768
        %v1782 = vsel %vm1773, %v1753, %v1781
        %v1783 = vsel %vm930, %v1768, %v1769
        %v1784 = vsel %vm1773, %v1755, %v1783
        %v1785 = vsel %vm930, %v1769, %v1770
        %v1786 = vsel %vm1773, %v1757, %v1785
        %v1787 = vsel %vm930, %v1770, %v1771
        %v1788 = vsel %vm1773, %v1759, %v1787
        %1797 = vst [vmem:[#allocation4] sm:$0xff] %v1774
        %1798 = vst [vmem:[#allocation4 + $0x8] sm:$0xff] %v1776
        %1799 = vst [vmem:[#allocation4 + $0x10] sm:$0xff] %v1778
        %1800 = vst [vmem:[#allocation4 + $0x18] sm:$0xff] %v1780
        %1801 = vst [vmem:[#allocation4 + $0x20] sm:$0xff] %v1782
        %1802 = vst [vmem:[#allocation4 + $0x28] sm:$0xff] %v1784
        %1803 = vst [vmem:[#allocation4 + $0x30] sm:$0xff] %v1786
        %1804 = vst [vmem:[#allocation4 + $0x38] sm:$0xff] %v1788
        %v1805 = vld [vmem:[#allocation3] sm:$0xff]
        %v1806 = vld [vmem:[#allocation3 + $0x8] sm:$0xff]
        %v1807 = vld [vmem:[#allocation3 + $0x10] sm:$0xff]
        %v1808 = vld [vmem:[#allocation3 + $0x18] sm:$0xff]
        %v1809 = vld [vmem:[#allocation3 + $0x20] sm:$0xf]
        %v1810 = vld [vmem:[#allocation3 + $0x28] sm:$0xff]
        %v1811 = vld [vmem:[#allocation3 + $0x30] sm:$0xff]
        %v1812 = vld [vmem:[#allocation3 + $0x38] sm:$0xff]
        %v1813 = vld [vmem:[#allocation3 + $0x40] sm:$0xff]
        %v1814 = vld [vmem:[#allocation3 + $0x48] sm:$0xf]
        %1825 = vrot.lane.b32.xlu0 %v1805, 95
        %v1826 = vpop.permute.xlu0 %1825
        %1827 = vrot.lane.b32.xlu0 %v1806, 95
        %v1828 = vpop.permute.xlu0 %1827
        %1829 = vrot.lane.b32.xlu0 %v1807, 95
        %v1830 = vpop.permute.xlu0 %1829
        %1831 = vrot.lane.b32.xlu0 %v1808, 95
        %v1832 = vpop.permute.xlu0 %1831
        %1833 = vrot.lane.b32.xlu0 %v1809, 95
        %v1834 = vpop.permute.xlu0 %1833
        %1835 = vrot.lane.b32.xlu0 %v1810, 95
        %v1836 = vpop.permute.xlu0 %1835
        %1837 = vrot.lane.b32.xlu0 %v1811, 95
        %v1838 = vpop.permute.xlu0 %1837
        %1839 = vrot.lane.b32.xlu0 %v1812, 95
        %v1840 = vpop.permute.xlu0 %1839
        %1841 = vrot.lane.b32.xlu0 %v1813, 95
        %v1842 = vpop.permute.xlu0 %1841
        %1843 = vrot.lane.b32.xlu0 %v1814, 95
        %v1844 = vpop.permute.xlu0 %1843
        %v1845 = vrot.slane %v1826, 4
        %v1846 = vrot.slane %v1828, 4
        %v1847 = vrot.slane %v1830, 4
        %v1848 = vrot.slane %v1832, 4
        %v1849 = vrot.slane %v1834, 4
        %v1850 = vrot.slane %v1836, 4
        %v1851 = vrot.slane %v1838, 4
        %v1852 = vrot.slane %v1840, 4
        %v1853 = vrot.slane %v1842, 4
        %v1854 = vrot.slane %v1844, 4
        %v1855 = vsel %vm930, %v1845, %v1846
        %vm1856 = vcmask 777216
        %v1857 = vsel %vm1856, %v1826, %v1855
        %v1858 = vsel %vm930, %v1846, %v1847
        %v1859 = vsel %vm1856, %v1828, %v1858
        %v1860 = vsel %vm930, %v1847, %v1848
        %v1861 = vsel %vm1856, %v1830, %v1860
        %v1862 = vsel %vm930, %v1848, %v1849
        %v1863 = vsel %vm1856, %v1832, %v1862
        %v1864 = vsel %vm930, %v1850, %v1851
        %v1865 = vsel %vm1856, %v1836, %v1864
        %v1866 = vsel %vm930, %v1851, %v1852
        %v1867 = vsel %vm1856, %v1838, %v1866
        %v1868 = vsel %vm930, %v1852, %v1853
        %v1869 = vsel %vm1856, %v1840, %v1868
        %v1870 = vsel %vm930, %v1853, %v1854
        %v1871 = vsel %vm1856, %v1842, %v1870
        %1880 = vst [vmem:[#allocation4 + $0x40] sm:$0xff] %v1857
        %1881 = vst [vmem:[#allocation4 + $0x48] sm:$0xff] %v1859
        %1882 = vst [vmem:[#allocation4 + $0x50] sm:$0xff] %v1861
        %1883 = vst [vmem:[#allocation4 + $0x58] sm:$0xff] %v1863
        %1884 = vst [vmem:[#allocation4 + $0x60] sm:$0xff] %v1865
        %1885 = vst [vmem:[#allocation4 + $0x68] sm:$0xff] %v1867
        %1886 = vst [vmem:[#allocation4 + $0x70] sm:$0xff] %v1869
        %1887 = vst [vmem:[#allocation4 + $0x78] sm:$0xff] %v1871
        %v1888 = vld [vmem:[#allocation3] sm:$0xff]
        %v1889 = vld [vmem:[#allocation3 + $0x8] sm:$0xff]
        %v1890 = vld [vmem:[#allocation3 + $0x10] sm:$0xff]
        %v1891 = vld [vmem:[#allocation3 + $0x18] sm:$0xff]
        %v1892 = vld [vmem:[#allocation3 + $0x20] sm:$0xf]
        %v1893 = vld [vmem:[#allocation3 + $0x28] sm:$0xff]
        %v1894 = vld [vmem:[#allocation3 + $0x30] sm:$0xff]
        %v1895 = vld [vmem:[#allocation3 + $0x38] sm:$0xff]
        %v1896 = vld [vmem:[#allocation3 + $0x40] sm:$0xff]
        %v1897 = vld [vmem:[#allocation3 + $0x48] sm:$0xf]
        %1908 = vrot.lane.b32.xlu0 %v1888, 94
        %v1909 = vpop.permute.xlu0 %1908
        %1910 = vrot.lane.b32.xlu0 %v1889, 94
        %v1911 = vpop.permute.xlu0 %1910
        %1912 = vrot.lane.b32.xlu0 %v1890, 94
        %v1913 = vpop.permute.xlu0 %1912
        %1914 = vrot.lane.b32.xlu0 %v1891, 94
        %v1915 = vpop.permute.xlu0 %1914
        %1916 = vrot.lane.b32.xlu0 %v1892, 94
        %v1917 = vpop.permute.xlu0 %1916
        %1918 = vrot.lane.b32.xlu0 %v1893, 94
        %v1919 = vpop.permute.xlu0 %1918
        %1920 = vrot.lane.b32.xlu0 %v1894, 94
        %v1921 = vpop.permute.xlu0 %1920
        %1922 = vrot.lane.b32.xlu0 %v1895, 94
        %v1923 = vpop.permute.xlu0 %1922
        %1924 = vrot.lane.b32.xlu0 %v1896, 94
        %v1925 = vpop.permute.xlu0 %1924
        %1926 = vrot.lane.b32.xlu0 %v1897, 94
        %v1927 = vpop.permute.xlu0 %1926
        %v1928 = vrot.slane %v1909, 4
        %v1929 = vrot.slane %v1911, 4
        %v1930 = vrot.slane %v1913, 4
        %v1931 = vrot.slane %v1915, 4
        %v1932 = vrot.slane %v1917, 4
        %v1933 = vrot.slane %v1919, 4
        %v1934 = vrot.slane %v1921, 4
        %v1935 = vrot.slane %v1923, 4
        %v1936 = vrot.slane %v1925, 4
        %v1937 = vrot.slane %v1927, 4
        %v1938 = vsel %vm930, %v1928, %v1929
        %vm1939 = vcmask 769024
        %v1940 = vsel %vm1939, %v1909, %v1938
        %v1941 = vsel %vm930, %v1929, %v1930
        %v1942 = vsel %vm1939, %v1911, %v1941
        %v1943 = vsel %vm930, %v1930, %v1931
        %v1944 = vsel %vm1939, %v1913, %v1943
        %v1945 = vsel %vm930, %v1931, %v1932
        %v1946 = vsel %vm1939, %v1915, %v1945
        %v1947 = vsel %vm930, %v1933, %v1934
        %v1948 = vsel %vm1939, %v1919, %v1947
        %v1949 = vsel %vm930, %v1934, %v1935
        %v1950 = vsel %vm1939, %v1921, %v1949
        %v1951 = vsel %vm930, %v1935, %v1936
        %v1952 = vsel %vm1939, %v1923, %v1951
        %v1953 = vsel %vm930, %v1936, %v1937
        %v1954 = vsel %vm1939, %v1925, %v1953
        %1963 = vst [vmem:[#allocation4 + $0x80] sm:$0xff] %v1940
        %1964 = vst [vmem:[#allocation4 + $0x88] sm:$0xff] %v1942
        %1965 = vst [vmem:[#allocation4 + $0x90] sm:$0xff] %v1944
        %1966 = vst [vmem:[#allocation4 + $0x98] sm:$0xff] %v1946
        %1967 = vst [vmem:[#allocation4 + $0xa0] sm:$0xff] %v1948
        %1968 = vst [vmem:[#allocation4 + $0xa8] sm:$0xff] %v1950
        %1969 = vst [vmem:[#allocation4 + $0xb0] sm:$0xff] %v1952
        %1970 = vst [vmem:[#allocation4 + $0xb8] sm:$0xff] %v1954
        %v1971 = vld [vmem:[#allocation3] sm:$0xff]
        %v1972 = vld [vmem:[#allocation3 + $0x8] sm:$0xff]
        %v1973 = vld [vmem:[#allocation3 + $0x10] sm:$0xff]
        %v1974 = vld [vmem:[#allocation3 + $0x18] sm:$0xff]
        %v1975 = vld [vmem:[#allocation3 + $0x20] sm:$0xf]
        %v1976 = vld [vmem:[#allocation3 + $0x28] sm:$0xff]
        %v1977 = vld [vmem:[#allocation3 + $0x30] sm:$0xff]
        %v1978 = vld [vmem:[#allocation3 + $0x38] sm:$0xff]
        %v1979 = vld [vmem:[#allocation3 + $0x40] sm:$0xff]
        %v1980 = vld [vmem:[#allocation3 + $0x48] sm:$0xf]
        %1991 = vrot.lane.b32.xlu0 %v1971, 93
        %v1992 = vpop.permute.xlu0 %1991
        %1993 = vrot.lane.b32.xlu0 %v1972, 93
        %v1994 = vpop.permute.xlu0 %1993
        %1995 = vrot.lane.b32.xlu0 %v1973, 93
        %v1996 = vpop.permute.xlu0 %1995
        %1997 = vrot.lane.b32.xlu0 %v1974, 93
        %v1998 = vpop.permute.xlu0 %1997
        %1999 = vrot.lane.b32.xlu0 %v1975, 93
        %v2000 = vpop.permute.xlu0 %1999
        %2001 = vrot.lane.b32.xlu0 %v1976, 93
        %v2002 = vpop.permute.xlu0 %2001
        %2003 = vrot.lane.b32.xlu0 %v1977, 93
        %v2004 = vpop.permute.xlu0 %2003
        %2005 = vrot.lane.b32.xlu0 %v1978, 93
        %v2006 = vpop.permute.xlu0 %2005
        %2007 = vrot.lane.b32.xlu0 %v1979, 93
        %v2008 = vpop.permute.xlu0 %2007
        %2009 = vrot.lane.b32.xlu0 %v1980, 93
        %v2010 = vpop.permute.xlu0 %2009
        %v2011 = vrot.slane %v1992, 4
        %v2012 = vrot.slane %v1994, 4
        %v2013 = vrot.slane %v1996, 4
        %v2014 = vrot.slane %v1998, 4
        %v2015 = vrot.slane %v2000, 4
        %v2016 = vrot.slane %v2002, 4
        %v2017 = vrot.slane %v2004, 4
        %v2018 = vrot.slane %v2006, 4
        %v2019 = vrot.slane %v2008, 4
        %v2020 = vrot.slane %v2010, 4
        %v2021 = vsel %vm930, %v2011, %v2012
        %vm2022 = vcmask 760832
        %v2023 = vsel %vm2022, %v1992, %v2021
        %v2024 = vsel %vm930, %v2012, %v2013
        %v2025 = vsel %vm2022, %v1994, %v2024
        %v2026 = vsel %vm930, %v2013, %v2014
        %v2027 = vsel %vm2022, %v1996, %v2026
        %v2028 = vsel %vm930, %v2014, %v2015
        %v2029 = vsel %vm2022, %v1998, %v2028
        %v2030 = vsel %vm930, %v2016, %v2017
        %v2031 = vsel %vm2022, %v2002, %v2030
        %v2032 = vsel %vm930, %v2017, %v2018
        %v2033 = vsel %vm2022, %v2004, %v2032
        %v2034 = vsel %vm930, %v2018, %v2019
        %v2035 = vsel %vm2022, %v2006, %v2034
        %v2036 = vsel %vm930, %v2019, %v2020
        %v2037 = vsel %vm2022, %v2008, %v2036
        %2046 = vst [vmem:[#allocation4 + $0xc0] sm:$0xff] %v2023
        %2047 = vst [vmem:[#allocation4 + $0xc8] sm:$0xff] %v2025
        %2048 = vst [vmem:[#allocation4 + $0xd0] sm:$0xff] %v2027
        %2049 = vst [vmem:[#allocation4 + $0xd8] sm:$0xff] %v2029
        %2050 = vst [vmem:[#allocation4 + $0xe0] sm:$0xff] %v2031
        %2051 = vst [vmem:[#allocation4 + $0xe8] sm:$0xff] %v2033
        %2052 = vst [vmem:[#allocation4 + $0xf0] sm:$0xff] %v2035
        %2053 = vst [vmem:[#allocation4 + $0xf8] sm:$0xff] %v2037
        %v2054 = vld [vmem:[#allocation3] sm:$0xff]
        %v2055 = vld [vmem:[#allocation3 + $0x8] sm:$0xff]
        %v2056 = vld [vmem:[#allocation3 + $0x10] sm:$0xff]
        %v2057 = vld [vmem:[#allocation3 + $0x18] sm:$0xff]
        %v2058 = vld [vmem:[#allocation3 + $0x20] sm:$0xf]
        %v2059 = vld [vmem:[#allocation3 + $0x28] sm:$0xff]
        %v2060 = vld [vmem:[#allocation3 + $0x30] sm:$0xff]
        %v2061 = vld [vmem:[#allocation3 + $0x38] sm:$0xff]
        %v2062 = vld [vmem:[#allocation3 + $0x40] sm:$0xff]
        %v2063 = vld [vmem:[#allocation3 + $0x48] sm:$0xf]
        %2074 = vrot.lane.b32.xlu0 %v2054, 92
        %v2075 = vpop.permute.xlu0 %2074
        %2076 = vrot.lane.b32.xlu0 %v2055, 92
        %v2077 = vpop.permute.xlu0 %2076
        %2078 = vrot.lane.b32.xlu0 %v2056, 92
        %v2079 = vpop.permute.xlu0 %2078
        %2080 = vrot.lane.b32.xlu0 %v2057, 92
        %v2081 = vpop.permute.xlu0 %2080
        %2082 = vrot.lane.b32.xlu0 %v2058, 92
        %v2083 = vpop.permute.xlu0 %2082
        %2084 = vrot.lane.b32.xlu0 %v2059, 92
        %v2085 = vpop.permute.xlu0 %2084
        %2086 = vrot.lane.b32.xlu0 %v2060, 92
        %v2087 = vpop.permute.xlu0 %2086
        %2088 = vrot.lane.b32.xlu0 %v2061, 92
        %v2089 = vpop.permute.xlu0 %2088
        %2090 = vrot.lane.b32.xlu0 %v2062, 92
        %v2091 = vpop.permute.xlu0 %2090
        %2092 = vrot.lane.b32.xlu0 %v2063, 92
        %v2093 = vpop.permute.xlu0 %2092
        %v2094 = vrot.slane %v2075, 4
        %v2095 = vrot.slane %v2077, 4
        %v2096 = vrot.slane %v2079, 4
        %v2097 = vrot.slane %v2081, 4
        %v2098 = vrot.slane %v2083, 4
        %v2099 = vrot.slane %v2085, 4
        %v2100 = vrot.slane %v2087, 4
        %v2101 = vrot.slane %v2089, 4
        %v2102 = vrot.slane %v2091, 4
        %v2103 = vrot.slane %v2093, 4
        %v2104 = vsel %vm930, %v2094, %v2095
        %vm2105 = vcmask 752640
        %v2106 = vsel %vm2105, %v2075, %v2104
        %v2107 = vsel %vm930, %v2095, %v2096
        %v2108 = vsel %vm2105, %v2077, %v2107
        %v2109 = vsel %vm930, %v2096, %v2097
        %v2110 = vsel %vm2105, %v2079, %v2109
        %v2111 = vsel %vm930, %v2097, %v2098
        %v2112 = vsel %vm2105, %v2081, %v2111
        %v2113 = vsel %vm930, %v2099, %v2100
        %v2114 = vsel %vm2105, %v2085, %v2113
        %v2115 = vsel %vm930, %v2100, %v2101
        %v2116 = vsel %vm2105, %v2087, %v2115
        %v2117 = vsel %vm930, %v2101, %v2102
        %v2118 = vsel %vm2105, %v2089, %v2117
        %v2119 = vsel %vm930, %v2102, %v2103
        %v2120 = vsel %vm2105, %v2091, %v2119
        %2129 = vst [vmem:[#allocation4 + $0x100] sm:$0xff] %v2106
        %2130 = vst [vmem:[#allocation4 + $0x108] sm:$0xff] %v2108
        %2131 = vst [vmem:[#allocation4 + $0x110] sm:$0xff] %v2110
        %2132 = vst [vmem:[#allocation4 + $0x118] sm:$0xff] %v2112
        %2133 = vst [vmem:[#allocation4 + $0x120] sm:$0xff] %v2114
        %2134 = vst [vmem:[#allocation4 + $0x128] sm:$0xff] %v2116
        %2135 = vst [vmem:[#allocation4 + $0x130] sm:$0xff] %v2118
        %2136 = vst [vmem:[#allocation4 + $0x138] sm:$0xff] %v2120
        %v2137 = vld [vmem:[#allocation5] sm:$0xff]
        %v2138 = vld [vmem:[#allocation5 + $0x8] sm:$0xff]
        %v2139 = vld [vmem:[#allocation5 + $0x10] sm:$0xff]
        %v2140 = vld [vmem:[#allocation5 + $0x18] sm:$0xff]
        %v2141 = vld [vmem:[#allocation5 + $0x20] sm:$0xff]
        %v2142 = vld [vmem:[#allocation5 + $0x28] sm:$0xff]
        %v2143 = vld [vmem:[#allocation5 + $0x30] sm:$0xff]
        %v2144 = vld [vmem:[#allocation5 + $0x38] sm:$0xff]
        %v2145 = vld [vmem:[#allocation5 + $0x40] sm:$0xff]
        %v2146 = vld [vmem:[#allocation5 + $0x48] sm:$0xff]
        %v2147 = vld [vmem:[#allocation5 + $0x50] sm:$0xff]
        %v2148 = vld [vmem:[#allocation5 + $0x58] sm:$0xff]
        %v2149 = vld [vmem:[#allocation5 + $0x60] sm:$0xff]
        %v2150 = vld [vmem:[#allocation5 + $0x68] sm:$0xff]
        %v2151 = vld [vmem:[#allocation5 + $0x70] sm:$0xff]
        %v2152 = vld [vmem:[#allocation5 + $0x78] sm:$0xff]
        %v2153 = vld [vmem:[#allocation5 + $0x80] sm:$0xff]
        %v2154 = vld [vmem:[#allocation5 + $0x88] sm:$0xff]
        %v2155 = vld [vmem:[#allocation5 + $0x90] sm:$0xff]
        %v2156 = vld [vmem:[#allocation5 + $0x98] sm:$0xff]
        %v2157 = vld [vmem:[#allocation5 + $0xa0] sm:$0xff]
        %v2158 = vld [vmem:[#allocation5 + $0xa8] sm:$0xff]
        %v2159 = vld [vmem:[#allocation5 + $0xb0] sm:$0xff]
        %v2160 = vld [vmem:[#allocation5 + $0xb8] sm:$0xff]
        %v2161 = vld [vmem:[#allocation5 + $0xc0] sm:$0xff]
        %v2162 = vld [vmem:[#allocation5 + $0xc8] sm:$0xff]
        %v2163 = vld [vmem:[#allocation5 + $0xd0] sm:$0xff]
        %v2164 = vld [vmem:[#allocation5 + $0xd8] sm:$0xff]
        %v2165 = vld [vmem:[#allocation5 + $0xe0] sm:$0xff]
        %v2166 = vld [vmem:[#allocation5 + $0xe8] sm:$0xff]
        %v2167 = vld [vmem:[#allocation5 + $0xf0] sm:$0xff]
        %v2168 = vld [vmem:[#allocation5 + $0xf8] sm:$0xff]
        %s2169 = scalar_lea.vmem [#allocation8], 16
        %v2170 = vld [vmem:[%s2169] sm:$0xf]
        %v2171 = vld [vmem:[%s2169 + $0x4] sm:$0xf]
        %v2172 = vld [vmem:[%s2169 + $0x8] sm:$0xf]
        %v2173 = vld [vmem:[%s2169 + $0xc] sm:$0xf]
        %v2174 = vld [vmem:[#allocation4] sm:$0xff]
        %v2175 = vld [vmem:[#allocation4 + $0x8] sm:$0xff]
        %v2176 = vld [vmem:[#allocation4 + $0x10] sm:$0xff]
        %v2177 = vld [vmem:[#allocation4 + $0x18] sm:$0xff]
        %v2178 = vld [vmem:[#allocation4 + $0x20] sm:$0xff]
        %v2179 = vld [vmem:[#allocation4 + $0x28] sm:$0xff]
        %v2180 = vld [vmem:[#allocation4 + $0x30] sm:$0xff]
        %v2181 = vld [vmem:[#allocation4 + $0x38] sm:$0xff]
        %v2182 = vld [vmem:[#allocation4 + $0x40] sm:$0xff]
        %v2183 = vld [vmem:[#allocation4 + $0x48] sm:$0xff]
        %v2184 = vld [vmem:[#allocation4 + $0x50] sm:$0xff]
        %v2185 = vld [vmem:[#allocation4 + $0x58] sm:$0xff]
        %v2186 = vld [vmem:[#allocation4 + $0x60] sm:$0xff]
        %v2187 = vld [vmem:[#allocation4 + $0x68] sm:$0xff]
        %v2188 = vld [vmem:[#allocation4 + $0x70] sm:$0xff]
        %v2189 = vld [vmem:[#allocation4 + $0x78] sm:$0xff]
        %v2190 = vld [vmem:[#allocation4 + $0x80] sm:$0xff]
        %v2191 = vld [vmem:[#allocation4 + $0x88] sm:$0xff]
        %v2192 = vld [vmem:[#allocation4 + $0x90] sm:$0xff]
        %v2193 = vld [vmem:[#allocation4 + $0x98] sm:$0xff]
        %v2194 = vld [vmem:[#allocation4 + $0xa0] sm:$0xff]
        %v2195 = vld [vmem:[#allocation4 + $0xa8] sm:$0xff]
        %v2196 = vld [vmem:[#allocation4 + $0xb0] sm:$0xff]
        %v2197 = vld [vmem:[#allocation4 + $0xb8] sm:$0xff]
        %v2198 = vld [vmem:[#allocation4 + $0xc0] sm:$0xff]
        %v2199 = vld [vmem:[#allocation4 + $0xc8] sm:$0xff]
        %v2200 = vld [vmem:[#allocation4 + $0xd0] sm:$0xff]
        %v2201 = vld [vmem:[#allocation4 + $0xd8] sm:$0xff]
        %v2202 = vld [vmem:[#allocation4 + $0xe0] sm:$0xff]
        %v2203 = vld [vmem:[#allocation4 + $0xe8] sm:$0xff]
        %v2204 = vld [vmem:[#allocation4 + $0xf0] sm:$0xff]
        %v2205 = vld [vmem:[#allocation4 + $0xf8] sm:$0xff]
        %v2206 = vld [vmem:[#allocation4 + $0x100] sm:$0xff]
        %v2207 = vld [vmem:[#allocation4 + $0x108] sm:$0xff]
        %v2208 = vld [vmem:[#allocation4 + $0x110] sm:$0xff]
        %v2209 = vld [vmem:[#allocation4 + $0x118] sm:$0xff]
        %v2210 = vld [vmem:[#allocation4 + $0x120] sm:$0xff]
        %v2211 = vld [vmem:[#allocation4 + $0x128] sm:$0xff]
        %v2212 = vld [vmem:[#allocation4 + $0x130] sm:$0xff]
        %v2213 = vld [vmem:[#allocation4 + $0x138] sm:$0xff]
        %v2218 = vunpack.c.l.b16 %v2170
        %v2219 = vunpack.c.l.b16 %v2171
        %v2220 = vunpack.c.l.b16 %v2172
        %v2221 = vunpack.c.l.b16 %v2173
        %v2222 = vpack.c.b16 %v2219, %v2218
        %v2223 = vpack.c.b16 %v2221, %v2220
        %v2264 = vunpack.c.l.b16 %v2174
        %v2265 = vunpack.c.h.b16 %v2174
        %v2266 = vunpack.c.l.b16 %v2175
        %v2267 = vunpack.c.h.b16 %v2175
        %v2268 = vunpack.c.l.b16 %v2176
        %v2269 = vunpack.c.h.b16 %v2176
        %v2270 = vunpack.c.l.b16 %v2177
        %v2271 = vunpack.c.h.b16 %v2177
        %v2272 = vunpack.c.l.b16 %v2178
        %v2273 = vunpack.c.h.b16 %v2178
        %v2274 = vunpack.c.l.b16 %v2179
        %v2275 = vunpack.c.h.b16 %v2179
        %v2276 = vunpack.c.l.b16 %v2180
        %v2277 = vunpack.c.h.b16 %v2180
        %v2278 = vunpack.c.l.b16 %v2181
        %v2279 = vunpack.c.h.b16 %v2181
        %v2280 = vunpack.c.l.b16 %v2182
        %v2281 = vunpack.c.h.b16 %v2182
        %v2282 = vunpack.c.l.b16 %v2183
        %v2283 = vunpack.c.h.b16 %v2183
        %v2284 = vunpack.c.l.b16 %v2184
        %v2285 = vunpack.c.h.b16 %v2184
        %v2286 = vunpack.c.l.b16 %v2185
        %v2287 = vunpack.c.h.b16 %v2185
        %v2288 = vunpack.c.l.b16 %v2186
        %v2289 = vunpack.c.h.b16 %v2186
        %v2290 = vunpack.c.l.b16 %v2187
        %v2291 = vunpack.c.h.b16 %v2187
        %v2292 = vunpack.c.l.b16 %v2188
        %v2293 = vunpack.c.h.b16 %v2188
        %v2294 = vunpack.c.l.b16 %v2189
        %v2295 = vunpack.c.h.b16 %v2189
        %v2296 = vunpack.c.l.b16 %v2190
        %v2297 = vunpack.c.h.b16 %v2190
        %v2298 = vunpack.c.l.b16 %v2191
        %v2299 = vunpack.c.h.b16 %v2191
        %v2300 = vunpack.c.l.b16 %v2192
        %v2301 = vunpack.c.h.b16 %v2192
        %v2302 = vunpack.c.l.b16 %v2193
        %v2303 = vunpack.c.h.b16 %v2193
        %v2304 = vunpack.c.l.b16 %v2194
        %v2305 = vunpack.c.h.b16 %v2194
        %v2306 = vunpack.c.l.b16 %v2195
        %v2307 = vunpack.c.h.b16 %v2195
        %v2308 = vunpack.c.l.b16 %v2196
        %v2309 = vunpack.c.h.b16 %v2196
        %v2310 = vunpack.c.l.b16 %v2197
        %v2311 = vunpack.c.h.b16 %v2197
        %v2312 = vunpack.c.l.b16 %v2198
        %v2313 = vunpack.c.h.b16 %v2198
        %v2314 = vunpack.c.l.b16 %v2199
        %v2315 = vunpack.c.h.b16 %v2199
        %v2316 = vunpack.c.l.b16 %v2200
        %v2317 = vunpack.c.h.b16 %v2200
        %v2318 = vunpack.c.l.b16 %v2201
        %v2319 = vunpack.c.h.b16 %v2201
        %v2320 = vunpack.c.l.b16 %v2202
        %v2321 = vunpack.c.h.b16 %v2202
        %v2322 = vunpack.c.l.b16 %v2203
        %v2323 = vunpack.c.h.b16 %v2203
        %v2324 = vunpack.c.l.b16 %v2204
        %v2325 = vunpack.c.h.b16 %v2204
        %v2326 = vunpack.c.l.b16 %v2205
        %v2327 = vunpack.c.h.b16 %v2205
        %v2328 = vunpack.c.l.b16 %v2206
        %v2329 = vunpack.c.h.b16 %v2206
        %v2330 = vunpack.c.l.b16 %v2207
        %v2331 = vunpack.c.h.b16 %v2207
        %v2332 = vunpack.c.l.b16 %v2208
        %v2333 = vunpack.c.h.b16 %v2208
        %v2334 = vunpack.c.l.b16 %v2209
        %v2335 = vunpack.c.h.b16 %v2209
        %v2336 = vunpack.c.l.b16 %v2210
        %v2337 = vunpack.c.h.b16 %v2210
        %v2338 = vunpack.c.l.b16 %v2211
        %v2339 = vunpack.c.h.b16 %v2211
        %v2340 = vunpack.c.l.b16 %v2212
        %v2341 = vunpack.c.h.b16 %v2212
        %v2342 = vunpack.c.l.b16 %v2213
        %v2343 = vunpack.c.h.b16 %v2213
        %v2344 = vpack.c.b16 %v2272, %v2264
        %v2345 = vpack.c.b16 %v2273, %v2265
        %v2346 = vpack.c.b16 %v2274, %v2266
        %v2347 = vpack.c.b16 %v2275, %v2267
        %v2348 = vpack.c.b16 %v2276, %v2268
        %v2349 = vpack.c.b16 %v2277, %v2269
        %v2350 = vpack.c.b16 %v2278, %v2270
        %v2351 = vpack.c.b16 %v2279, %v2271
        %v2352 = vpack.c.b16 %v2288, %v2280
        %v2353 = vpack.c.b16 %v2289, %v2281
        %v2354 = vpack.c.b16 %v2290, %v2282
        %v2355 = vpack.c.b16 %v2291, %v2283
        %v2356 = vpack.c.b16 %v2292, %v2284
        %v2357 = vpack.c.b16 %v2293, %v2285
        %v2358 = vpack.c.b16 %v2294, %v2286
        %v2359 = vpack.c.b16 %v2295, %v2287
        %v2360 = vpack.c.b16 %v2304, %v2296
        %v2361 = vpack.c.b16 %v2305, %v2297
        %v2362 = vpack.c.b16 %v2306, %v2298
        %v2363 = vpack.c.b16 %v2307, %v2299
        %v2364 = vpack.c.b16 %v2308, %v2300
        %v2365 = vpack.c.b16 %v2309, %v2301
        %v2366 = vpack.c.b16 %v2310, %v2302
        %v2367 = vpack.c.b16 %v2311, %v2303
        %v2368 = vpack.c.b16 %v2320, %v2312
        %v2369 = vpack.c.b16 %v2321, %v2313
        %v2370 = vpack.c.b16 %v2322, %v2314
        %v2371 = vpack.c.b16 %v2323, %v2315
        %v2372 = vpack.c.b16 %v2324, %v2316
        %v2373 = vpack.c.b16 %v2325, %v2317
        %v2374 = vpack.c.b16 %v2326, %v2318
        %v2375 = vpack.c.b16 %v2327, %v2319
        %v2376 = vpack.c.b16 %v2336, %v2328
        %v2377 = vpack.c.b16 %v2337, %v2329
        %v2378 = vpack.c.b16 %v2338, %v2330
        %v2379 = vpack.c.b16 %v2339, %v2331
        %v2380 = vpack.c.b16 %v2340, %v2332
        %v2381 = vpack.c.b16 %v2341, %v2333
        %v2382 = vpack.c.b16 %v2342, %v2334
        %v2383 = vpack.c.b16 %v2343, %v2335
        %v2425 = vsel %vm1499, %v2222, 0
        %v2428 = vsel %vm1499, %v2223, 0
        %2430 = vmatpush.bf16.msra.mxu0 0
        %2431 = vmatpush.bf16.msra.mxu0 0
        %2432 = vmatpush.bf16.msra.mxu0 0
        %2433 = vmatpush.bf16.msra.mxu0 %v2376
        %2434 = vmatpush.bf16.msra.mxu0 %v2368
        %2435 = vmatpush.bf16.msra.mxu0 %v2360
        %2436 = vmatpush.bf16.msra.mxu0 %v2352
        %2437 = vmatpush.bf16.msra.mxu0 %v2344
        %2438 = vmatmul.bf16.gmra.mxu0 %v2425
        %v2439 = vpop.f32.mrf.mxu0
        %v2440 = vadd.f32 0.0, %v2439
        %v2441 = vpop.f32.mrf.mxu0
        %v2442 = vadd.f32 0.0, %v2441
        %2443 = vmatmul.bf16.gmra.mxu0 %v2428
        %v2444 = vpop.f32.mrf.mxu0
        %v2445 = vadd.f32 0.0, %v2444
        %v2446 = vpop.f32.mrf.mxu0
        %v2447 = vadd.f32 0.0, %v2446
        %2448 = vdwg.mxu0
        %2449 = vmatpush.bf16.msra.mxu0 0
        %2450 = vmatpush.bf16.msra.mxu0 0
        %2451 = vmatpush.bf16.msra.mxu0 0
        %2452 = vmatpush.bf16.msra.mxu0 %v2377
        %2453 = vmatpush.bf16.msra.mxu0 %v2369
        %2454 = vmatpush.bf16.msra.mxu0 %v2361
        %2455 = vmatpush.bf16.msra.mxu0 %v2353
        %2456 = vmatpush.bf16.msra.mxu0 %v2345
        %2457 = vmatmul.bf16.gmra.mxu0 %v2425
        %v2458 = vpop.f32.mrf.mxu0
        %v2459 = vadd.f32 0.0, %v2458
        %v2460 = vpop.f32.mrf.mxu0
        %v2461 = vadd.f32 0.0, %v2460
        %2462 = vmatmul.bf16.gmra.mxu0 %v2428
        %v2463 = vpop.f32.mrf.mxu0
        %v2464 = vadd.f32 0.0, %v2463
        %v2465 = vpop.f32.mrf.mxu0
        %v2466 = vadd.f32 0.0, %v2465
        %2467 = vdwg.mxu0
        %2468 = vmatpush.bf16.msra.mxu0 0
        %2469 = vmatpush.bf16.msra.mxu0 0
        %2470 = vmatpush.bf16.msra.mxu0 0
        %2471 = vmatpush.bf16.msra.mxu0 %v2378
        %2472 = vmatpush.bf16.msra.mxu0 %v2370
        %2473 = vmatpush.bf16.msra.mxu0 %v2362
        %2474 = vmatpush.bf16.msra.mxu0 %v2354
        %2475 = vmatpush.bf16.msra.mxu0 %v2346
        %2476 = vmatmul.bf16.gmra.mxu0 %v2425
        %v2477 = vpop.f32.mrf.mxu0
        %v2478 = vadd.f32 0.0, %v2477
        %v2479 = vpop.f32.mrf.mxu0
        %v2480 = vadd.f32 0.0, %v2479
        %2481 = vmatmul.bf16.gmra.mxu0 %v2428
        %v2482 = vpop.f32.mrf.mxu0
        %v2483 = vadd.f32 0.0, %v2482
        %v2484 = vpop.f32.mrf.mxu0
        %v2485 = vadd.f32 0.0, %v2484
        %2486 = vdwg.mxu0
        %2487 = vmatpush.bf16.msra.mxu0 0
        %2488 = vmatpush.bf16.msra.mxu0 0
        %2489 = vmatpush.bf16.msra.mxu0 0
        %2490 = vmatpush.bf16.msra.mxu0 %v2379
        %2491 = vmatpush.bf16.msra.mxu0 %v2371
        %2492 = vmatpush.bf16.msra.mxu0 %v2363
        %2493 = vmatpush.bf16.msra.mxu0 %v2355
        %2494 = vmatpush.bf16.msra.mxu0 %v2347
        %2495 = vmatmul.bf16.gmra.mxu0 %v2425
        %v2496 = vpop.f32.mrf.mxu0
        %v2497 = vadd.f32 0.0, %v2496
        %v2498 = vpop.f32.mrf.mxu0
        %v2499 = vadd.f32 0.0, %v2498
        %2500 = vmatmul.bf16.gmra.mxu0 %v2428
        %v2501 = vpop.f32.mrf.mxu0
        %v2502 = vadd.f32 0.0, %v2501
        %v2503 = vpop.f32.mrf.mxu0
        %v2504 = vadd.f32 0.0, %v2503
        %2505 = vdwg.mxu0
        %2506 = vmatpush.bf16.msra.mxu0 0
        %2507 = vmatpush.bf16.msra.mxu0 0
        %2508 = vmatpush.bf16.msra.mxu0 0
        %2509 = vmatpush.bf16.msra.mxu0 %v2380
        %2510 = vmatpush.bf16.msra.mxu0 %v2372
        %2511 = vmatpush.bf16.msra.mxu0 %v2364
        %2512 = vmatpush.bf16.msra.mxu0 %v2356
        %2513 = vmatpush.bf16.msra.mxu0 %v2348
        %2514 = vmatmul.bf16.gmra.mxu0 %v2425
        %v2515 = vpop.f32.mrf.mxu0
        %v2516 = vadd.f32 0.0, %v2515
        %v2517 = vpop.f32.mrf.mxu0
        %v2518 = vadd.f32 0.0, %v2517
        %2519 = vmatmul.bf16.gmra.mxu0 %v2428
        %v2520 = vpop.f32.mrf.mxu0
        %v2521 = vadd.f32 0.0, %v2520
        %v2522 = vpop.f32.mrf.mxu0
        %v2523 = vadd.f32 0.0, %v2522
        %2524 = vdwg.mxu0
        %2525 = vmatpush.bf16.msra.mxu0 0
        %2526 = vmatpush.bf16.msra.mxu0 0
        %2527 = vmatpush.bf16.msra.mxu0 0
        %2528 = vmatpush.bf16.msra.mxu0 %v2381
        %2529 = vmatpush.bf16.msra.mxu0 %v2373
        %2530 = vmatpush.bf16.msra.mxu0 %v2365
        %2531 = vmatpush.bf16.msra.mxu0 %v2357
        %2532 = vmatpush.bf16.msra.mxu0 %v2349
        %2533 = vmatmul.bf16.gmra.mxu0 %v2425
        %v2534 = vpop.f32.mrf.mxu0
        %v2535 = vadd.f32 0.0, %v2534
        %v2536 = vpop.f32.mrf.mxu0
        %v2537 = vadd.f32 0.0, %v2536
        %2538 = vmatmul.bf16.gmra.mxu0 %v2428
        %v2539 = vpop.f32.mrf.mxu0
        %v2540 = vadd.f32 0.0, %v2539
        %v2541 = vpop.f32.mrf.mxu0
        %v2542 = vadd.f32 0.0, %v2541
        %2543 = vdwg.mxu0
        %2544 = vmatpush.bf16.msra.mxu0 0
        %2545 = vmatpush.bf16.msra.mxu0 0
        %2546 = vmatpush.bf16.msra.mxu0 0
        %2547 = vmatpush.bf16.msra.mxu0 %v2382
        %2548 = vmatpush.bf16.msra.mxu0 %v2374
        %2549 = vmatpush.bf16.msra.mxu0 %v2366
        %2550 = vmatpush.bf16.msra.mxu0 %v2358
        %2551 = vmatpush.bf16.msra.mxu0 %v2350
        %2552 = vmatmul.bf16.gmra.mxu0 %v2425
        %v2553 = vpop.f32.mrf.mxu0
        %v2554 = vadd.f32 0.0, %v2553
        %v2555 = vpop.f32.mrf.mxu0
        %v2556 = vadd.f32 0.0, %v2555
        %2557 = vmatmul.bf16.gmra.mxu0 %v2428
        %v2558 = vpop.f32.mrf.mxu0
        %v2559 = vadd.f32 0.0, %v2558
        %v2560 = vpop.f32.mrf.mxu0
        %v2561 = vadd.f32 0.0, %v2560
        %2562 = vdwg.mxu0
        %2563 = vmatpush.bf16.msra.mxu0 0
        %2564 = vmatpush.bf16.msra.mxu0 0
        %2565 = vmatpush.bf16.msra.mxu0 0
        %2566 = vmatpush.bf16.msra.mxu0 %v2383
        %2567 = vmatpush.bf16.msra.mxu0 %v2375
        %2568 = vmatpush.bf16.msra.mxu0 %v2367
        %2569 = vmatpush.bf16.msra.mxu0 %v2359
        %2570 = vmatpush.bf16.msra.mxu0 %v2351
        %2571 = vmatmul.bf16.gmra.mxu0 %v2425
        %v2572 = vpop.f32.mrf.mxu0
        %v2573 = vadd.f32 0.0, %v2572
        %v2574 = vpop.f32.mrf.mxu0
        %v2575 = vadd.f32 0.0, %v2574
        %2576 = vmatmul.bf16.gmra.mxu0 %v2428
        %v2577 = vpop.f32.mrf.mxu0
        %v2578 = vadd.f32 0.0, %v2577
        %v2579 = vpop.f32.mrf.mxu0
        %v2580 = vadd.f32 0.0, %v2579
        %2581 = vdwg.mxu0
        %v2582 = vadd.f32 %v2137, %v2440
        %v2583 = vadd.f32 %v2138, %v2459
        %v2584 = vadd.f32 %v2139, %v2478
        %v2585 = vadd.f32 %v2140, %v2497
        %v2586 = vadd.f32 %v2141, %v2516
        %v2587 = vadd.f32 %v2142, %v2535
        %v2588 = vadd.f32 %v2143, %v2554
        %v2589 = vadd.f32 %v2144, %v2573
        %v2590 = vadd.f32 %v2145, %v2442
        %v2591 = vadd.f32 %v2146, %v2461
        %v2592 = vadd.f32 %v2147, %v2480
        %v2593 = vadd.f32 %v2148, %v2499
        %v2594 = vadd.f32 %v2149, %v2518
        %v2595 = vadd.f32 %v2150, %v2537
        %v2596 = vadd.f32 %v2151, %v2556
        %v2597 = vadd.f32 %v2152, %v2575
        %v2598 = vadd.f32 %v2153, %v2445
        %v2599 = vadd.f32 %v2154, %v2464
        %v2600 = vadd.f32 %v2155, %v2483
        %v2601 = vadd.f32 %v2156, %v2502
        %v2602 = vadd.f32 %v2157, %v2521
        %v2603 = vadd.f32 %v2158, %v2540
        %v2604 = vadd.f32 %v2159, %v2559
        %v2605 = vadd.f32 %v2160, %v2578
        %v2606 = vadd.f32 %v2161, %v2447
        %v2607 = vadd.f32 %v2162, %v2466
        %v2608 = vadd.f32 %v2163, %v2485
        %v2609 = vadd.f32 %v2164, %v2504
        %v2610 = vadd.f32 %v2165, %v2523
        %v2611 = vadd.f32 %v2166, %v2542
        %v2612 = vadd.f32 %v2167, %v2561
        %v2613 = vadd.f32 %v2168, %v2580
        %2614 = vst [vmem:[#allocation5] sm:$0xff] %v2582
        %2615 = vst [vmem:[#allocation5 + $0x8] sm:$0xff] %v2583
        %2616 = vst [vmem:[#allocation5 + $0x10] sm:$0xff] %v2584
        %2617 = vst [vmem:[#allocation5 + $0x18] sm:$0xff] %v2585
        %2618 = vst [vmem:[#allocation5 + $0x20] sm:$0xff] %v2586
        %2619 = vst [vmem:[#allocation5 + $0x28] sm:$0xff] %v2587
        %2620 = vst [vmem:[#allocation5 + $0x30] sm:$0xff] %v2588
        %2621 = vst [vmem:[#allocation5 + $0x38] sm:$0xff] %v2589
        %2622 = vst [vmem:[#allocation5 + $0x40] sm:$0xff] %v2590
        %2623 = vst [vmem:[#allocation5 + $0x48] sm:$0xff] %v2591
        %2624 = vst [vmem:[#allocation5 + $0x50] sm:$0xff] %v2592
        %2625 = vst [vmem:[#allocation5 + $0x58] sm:$0xff] %v2593
        %2626 = vst [vmem:[#allocation5 + $0x60] sm:$0xff] %v2594
        %2627 = vst [vmem:[#allocation5 + $0x68] sm:$0xff] %v2595
        %2628 = vst [vmem:[#allocation5 + $0x70] sm:$0xff] %v2596
        %2629 = vst [vmem:[#allocation5 + $0x78] sm:$0xff] %v2597
        %2630 = vst [vmem:[#allocation5 + $0x80] sm:$0xff] %v2598
        %2631 = vst [vmem:[#allocation5 + $0x88] sm:$0xff] %v2599
        %2632 = vst [vmem:[#allocation5 + $0x90] sm:$0xff] %v2600
        %2633 = vst [vmem:[#allocation5 + $0x98] sm:$0xff] %v2601
        %2634 = vst [vmem:[#allocation5 + $0xa0] sm:$0xff] %v2602
        %2635 = vst [vmem:[#allocation5 + $0xa8] sm:$0xff] %v2603
        %2636 = vst [vmem:[#allocation5 + $0xb0] sm:$0xff] %v2604
        %2637 = vst [vmem:[#allocation5 + $0xb8] sm:$0xff] %v2605
        %2638 = vst [vmem:[#allocation5 + $0xc0] sm:$0xff] %v2606
        %2639 = vst [vmem:[#allocation5 + $0xc8] sm:$0xff] %v2607
        %2640 = vst [vmem:[#allocation5 + $0xd0] sm:$0xff] %v2608
        %2641 = vst [vmem:[#allocation5 + $0xd8] sm:$0xff] %v2609
        %2642 = vst [vmem:[#allocation5 + $0xe0] sm:$0xff] %v2610
        %2643 = vst [vmem:[#allocation5 + $0xe8] sm:$0xff] %v2611
        %2644 = vst [vmem:[#allocation5 + $0xf0] sm:$0xff] %v2612
        %2645 = vst [vmem:[#allocation5 + $0xf8] sm:$0xff] %v2613
        %v2646 = vld [vmem:[#allocation3] sm:$0xff]
        %v2647 = vld [vmem:[#allocation3 + $0x8] sm:$0xff]
        %v2648 = vld [vmem:[#allocation3 + $0x10] sm:$0xff]
        %v2649 = vld [vmem:[#allocation3 + $0x18] sm:$0xff]
        %v2650 = vld [vmem:[#allocation3 + $0x20] sm:$0xf]
        %v2651 = vld [vmem:[#allocation3 + $0x28] sm:$0xff]
        %v2652 = vld [vmem:[#allocation3 + $0x30] sm:$0xff]
        %v2653 = vld [vmem:[#allocation3 + $0x38] sm:$0xff]
        %v2654 = vld [vmem:[#allocation3 + $0x40] sm:$0xff]
        %v2655 = vld [vmem:[#allocation3 + $0x48] sm:$0xf]
        %2666 = vrot.lane.b32.xlu0 %v2646, 64
        %v2667 = vpop.permute.xlu0 %2666
        %2668 = vrot.lane.b32.xlu0 %v2647, 64
        %v2669 = vpop.permute.xlu0 %2668
        %2670 = vrot.lane.b32.xlu0 %v2648, 64
        %v2671 = vpop.permute.xlu0 %2670
        %2672 = vrot.lane.b32.xlu0 %v2649, 64
        %v2673 = vpop.permute.xlu0 %2672
        %2674 = vrot.lane.b32.xlu0 %v2650, 64
        %v2675 = vpop.permute.xlu0 %2674
        %2676 = vrot.lane.b32.xlu0 %v2651, 64
        %v2677 = vpop.permute.xlu0 %2676
        %2678 = vrot.lane.b32.xlu0 %v2652, 64
        %v2679 = vpop.permute.xlu0 %2678
        %2680 = vrot.lane.b32.xlu0 %v2653, 64
        %v2681 = vpop.permute.xlu0 %2680
        %2682 = vrot.lane.b32.xlu0 %v2654, 64
        %v2683 = vpop.permute.xlu0 %2682
        %2684 = vrot.lane.b32.xlu0 %v2655, 64
        %v2685 = vpop.permute.xlu0 %2684
        %v2686 = vrot.slane %v2667, 4
        %v2687 = vrot.slane %v2669, 4
        %v2688 = vrot.slane %v2671, 4
        %v2689 = vrot.slane %v2673, 4
        %v2690 = vrot.slane %v2675, 4
        %v2691 = vrot.slane %v2677, 4
        %v2692 = vrot.slane %v2679, 4
        %v2693 = vrot.slane %v2681, 4
        %v2694 = vrot.slane %v2683, 4
        %v2695 = vrot.slane %v2685, 4
        %v2696 = vsel %vm930, %v2686, %v2687
        %vm2697 = vcmask 523264
        %v2698 = vsel %vm2697, %v2667, %v2696
        %v2699 = vsel %vm930, %v2687, %v2688
        %v2700 = vsel %vm2697, %v2669, %v2699
        %v2701 = vsel %vm930, %v2688, %v2689
        %v2702 = vsel %vm2697, %v2671, %v2701
        %v2703 = vsel %vm930, %v2689, %v2690
        %v2704 = vsel %vm2697, %v2673, %v2703
        %v2705 = vsel %vm930, %v2691, %v2692
        %v2706 = vsel %vm2697, %v2677, %v2705
        %v2707 = vsel %vm930, %v2692, %v2693
        %v2708 = vsel %vm2697, %v2679, %v2707
        %v2709 = vsel %vm930, %v2693, %v2694
        %v2710 = vsel %vm2697, %v2681, %v2709
        %v2711 = vsel %vm930, %v2694, %v2695
        %v2712 = vsel %vm2697, %v2683, %v2711
        %2721 = vst [vmem:[#allocation4] sm:$0xff] %v2698
        %2722 = vst [vmem:[#allocation4 + $0x8] sm:$0xff] %v2700
        %2723 = vst [vmem:[#allocation4 + $0x10] sm:$0xff] %v2702
        %2724 = vst [vmem:[#allocation4 + $0x18] sm:$0xff] %v2704
        %2725 = vst [vmem:[#allocation4 + $0x20] sm:$0xff] %v2706
        %2726 = vst [vmem:[#allocation4 + $0x28] sm:$0xff] %v2708
        %2727 = vst [vmem:[#allocation4 + $0x30] sm:$0xff] %v2710
        %2728 = vst [vmem:[#allocation4 + $0x38] sm:$0xff] %v2712
        %v2729 = vld [vmem:[#allocation3] sm:$0xff]
        %v2730 = vld [vmem:[#allocation3 + $0x8] sm:$0xff]
        %v2731 = vld [vmem:[#allocation3 + $0x10] sm:$0xff]
        %v2732 = vld [vmem:[#allocation3 + $0x18] sm:$0xff]
        %v2733 = vld [vmem:[#allocation3 + $0x20] sm:$0xf]
        %v2734 = vld [vmem:[#allocation3 + $0x28] sm:$0xff]
        %v2735 = vld [vmem:[#allocation3 + $0x30] sm:$0xff]
        %v2736 = vld [vmem:[#allocation3 + $0x38] sm:$0xff]
        %v2737 = vld [vmem:[#allocation3 + $0x40] sm:$0xff]
        %v2738 = vld [vmem:[#allocation3 + $0x48] sm:$0xf]
        %2749 = vrot.lane.b32.xlu0 %v2729, 63
        %v2750 = vpop.permute.xlu0 %2749
        %2751 = vrot.lane.b32.xlu0 %v2730, 63
        %v2752 = vpop.permute.xlu0 %2751
        %2753 = vrot.lane.b32.xlu0 %v2731, 63
        %v2754 = vpop.permute.xlu0 %2753
        %2755 = vrot.lane.b32.xlu0 %v2732, 63
        %v2756 = vpop.permute.xlu0 %2755
        %2757 = vrot.lane.b32.xlu0 %v2733, 63
        %v2758 = vpop.permute.xlu0 %2757
        %2759 = vrot.lane.b32.xlu0 %v2734, 63
        %v2760 = vpop.permute.xlu0 %2759
        %2761 = vrot.lane.b32.xlu0 %v2735, 63
        %v2762 = vpop.permute.xlu0 %2761
        %2763 = vrot.lane.b32.xlu0 %v2736, 63
        %v2764 = vpop.permute.xlu0 %2763
        %2765 = vrot.lane.b32.xlu0 %v2737, 63
        %v2766 = vpop.permute.xlu0 %2765
        %2767 = vrot.lane.b32.xlu0 %v2738, 63
        %v2768 = vpop.permute.xlu0 %2767
        %v2769 = vrot.slane %v2750, 4
        %v2770 = vrot.slane %v2752, 4
        %v2771 = vrot.slane %v2754, 4
        %v2772 = vrot.slane %v2756, 4
        %v2773 = vrot.slane %v2758, 4
        %v2774 = vrot.slane %v2760, 4
        %v2775 = vrot.slane %v2762, 4
        %v2776 = vrot.slane %v2764, 4
        %v2777 = vrot.slane %v2766, 4
        %v2778 = vrot.slane %v2768, 4
        %v2779 = vsel %vm930, %v2769, %v2770
        %vm2780 = vcmask 515072
        %v2781 = vsel %vm2780, %v2750, %v2779
        %v2782 = vsel %vm930, %v2770, %v2771
        %v2783 = vsel %vm2780, %v2752, %v2782
        %v2784 = vsel %vm930, %v2771, %v2772
        %v2785 = vsel %vm2780, %v2754, %v2784
        %v2786 = vsel %vm930, %v2772, %v2773
        %v2787 = vsel %vm2780, %v2756, %v2786
        %v2788 = vsel %vm930, %v2774, %v2775
        %v2789 = vsel %vm2780, %v2760, %v2788
        %v2790 = vsel %vm930, %v2775, %v2776
        %v2791 = vsel %vm2780, %v2762, %v2790
        %v2792 = vsel %vm930, %v2776, %v2777
        %v2793 = vsel %vm2780, %v2764, %v2792
        %v2794 = vsel %vm930, %v2777, %v2778
        %v2795 = vsel %vm2780, %v2766, %v2794
        %2804 = vst [vmem:[#allocation4 + $0x40] sm:$0xff] %v2781
        %2805 = vst [vmem:[#allocation4 + $0x48] sm:$0xff] %v2783
        %2806 = vst [vmem:[#allocation4 + $0x50] sm:$0xff] %v2785
        %2807 = vst [vmem:[#allocation4 + $0x58] sm:$0xff] %v2787
        %2808 = vst [vmem:[#allocation4 + $0x60] sm:$0xff] %v2789
        %2809 = vst [vmem:[#allocation4 + $0x68] sm:$0xff] %v2791
        %2810 = vst [vmem:[#allocation4 + $0x70] sm:$0xff] %v2793
        %2811 = vst [vmem:[#allocation4 + $0x78] sm:$0xff] %v2795
        %v2812 = vld [vmem:[#allocation3] sm:$0xff]
        %v2813 = vld [vmem:[#allocation3 + $0x8] sm:$0xff]
        %v2814 = vld [vmem:[#allocation3 + $0x10] sm:$0xff]
        %v2815 = vld [vmem:[#allocation3 + $0x18] sm:$0xff]
        %v2816 = vld [vmem:[#allocation3 + $0x20] sm:$0xf]
        %v2817 = vld [vmem:[#allocation3 + $0x28] sm:$0xff]
        %v2818 = vld [vmem:[#allocation3 + $0x30] sm:$0xff]
        %v2819 = vld [vmem:[#allocation3 + $0x38] sm:$0xff]
        %v2820 = vld [vmem:[#allocation3 + $0x40] sm:$0xff]
        %v2821 = vld [vmem:[#allocation3 + $0x48] sm:$0xf]
        %2832 = vrot.lane.b32.xlu0 %v2812, 62
        %v2833 = vpop.permute.xlu0 %2832
        %2834 = vrot.lane.b32.xlu0 %v2813, 62
        %v2835 = vpop.permute.xlu0 %2834
        %2836 = vrot.lane.b32.xlu0 %v2814, 62
        %v2837 = vpop.permute.xlu0 %2836
        %2838 = vrot.lane.b32.xlu0 %v2815, 62
        %v2839 = vpop.permute.xlu0 %2838
        %2840 = vrot.lane.b32.xlu0 %v2816, 62
        %v2841 = vpop.permute.xlu0 %2840
        %2842 = vrot.lane.b32.xlu0 %v2817, 62
        %v2843 = vpop.permute.xlu0 %2842
        %2844 = vrot.lane.b32.xlu0 %v2818, 62
        %v2845 = vpop.permute.xlu0 %2844
        %2846 = vrot.lane.b32.xlu0 %v2819, 62
        %v2847 = vpop.permute.xlu0 %2846
        %2848 = vrot.lane.b32.xlu0 %v2820, 62
        %v2849 = vpop.permute.xlu0 %2848
        %2850 = vrot.lane.b32.xlu0 %v2821, 62
        %v2851 = vpop.permute.xlu0 %2850
        %v2852 = vrot.slane %v2833, 4
        %v2853 = vrot.slane %v2835, 4
        %v2854 = vrot.slane %v2837, 4
        %v2855 = vrot.slane %v2839, 4
        %v2856 = vrot.slane %v2841, 4
        %v2857 = vrot.slane %v2843, 4
        %v2858 = vrot.slane %v2845, 4
        %v2859 = vrot.slane %v2847, 4
        %v2860 = vrot.slane %v2849, 4
        %v2861 = vrot.slane %v2851, 4
        %v2862 = vsel %vm930, %v2852, %v2853
        %vm2863 = vcmask 506880
        %v2864 = vsel %vm2863, %v2833, %v2862
        %v2865 = vsel %vm930, %v2853, %v2854
        %v2866 = vsel %vm2863, %v2835, %v2865
        %v2867 = vsel %vm930, %v2854, %v2855
        %v2868 = vsel %vm2863, %v2837, %v2867
        %v2869 = vsel %vm930, %v2855, %v2856
        %v2870 = vsel %vm2863, %v2839, %v2869
        %v2871 = vsel %vm930, %v2857, %v2858
        %v2872 = vsel %vm2863, %v2843, %v2871
        %v2873 = vsel %vm930, %v2858, %v2859
        %v2874 = vsel %vm2863, %v2845, %v2873
        %v2875 = vsel %vm930, %v2859, %v2860
        %v2876 = vsel %vm2863, %v2847, %v2875
        %v2877 = vsel %vm930, %v2860, %v2861
        %v2878 = vsel %vm2863, %v2849, %v2877
        %2887 = vst [vmem:[#allocation4 + $0x80] sm:$0xff] %v2864
        %2888 = vst [vmem:[#allocation4 + $0x88] sm:$0xff] %v2866
        %2889 = vst [vmem:[#allocation4 + $0x90] sm:$0xff] %v2868
        %2890 = vst [vmem:[#allocation4 + $0x98] sm:$0xff] %v2870
        %2891 = vst [vmem:[#allocation4 + $0xa0] sm:$0xff] %v2872
        %2892 = vst [vmem:[#allocation4 + $0xa8] sm:$0xff] %v2874
        %2893 = vst [vmem:[#allocation4 + $0xb0] sm:$0xff] %v2876
        %2894 = vst [vmem:[#allocation4 + $0xb8] sm:$0xff] %v2878
        %v2895 = vld [vmem:[#allocation3] sm:$0xff]
        %v2896 = vld [vmem:[#allocation3 + $0x8] sm:$0xff]
        %v2897 = vld [vmem:[#allocation3 + $0x10] sm:$0xff]
        %v2898 = vld [vmem:[#allocation3 + $0x18] sm:$0xff]
        %v2899 = vld [vmem:[#allocation3 + $0x20] sm:$0xf]
        %v2900 = vld [vmem:[#allocation3 + $0x28] sm:$0xff]
        %v2901 = vld [vmem:[#allocation3 + $0x30] sm:$0xff]
        %v2902 = vld [vmem:[#allocation3 + $0x38] sm:$0xff]
        %v2903 = vld [vmem:[#allocation3 + $0x40] sm:$0xff]
        %v2904 = vld [vmem:[#allocation3 + $0x48] sm:$0xf]
        %2915 = vrot.lane.b32.xlu0 %v2895, 61
        %v2916 = vpop.permute.xlu0 %2915
        %2917 = vrot.lane.b32.xlu0 %v2896, 61
        %v2918 = vpop.permute.xlu0 %2917
        %2919 = vrot.lane.b32.xlu0 %v2897, 61
        %v2920 = vpop.permute.xlu0 %2919
        %2921 = vrot.lane.b32.xlu0 %v2898, 61
        %v2922 = vpop.permute.xlu0 %2921
        %2923 = vrot.lane.b32.xlu0 %v2899, 61
        %v2924 = vpop.permute.xlu0 %2923
        %2925 = vrot.lane.b32.xlu0 %v2900, 61
        %v2926 = vpop.permute.xlu0 %2925
        %2927 = vrot.lane.b32.xlu0 %v2901, 61
        %v2928 = vpop.permute.xlu0 %2927
        %2929 = vrot.lane.b32.xlu0 %v2902, 61
        %v2930 = vpop.permute.xlu0 %2929
        %2931 = vrot.lane.b32.xlu0 %v2903, 61
        %v2932 = vpop.permute.xlu0 %2931
        %2933 = vrot.lane.b32.xlu0 %v2904, 61
        %v2934 = vpop.permute.xlu0 %2933
        %v2935 = vrot.slane %v2916, 4
        %v2936 = vrot.slane %v2918, 4
        %v2937 = vrot.slane %v2920, 4
        %v2938 = vrot.slane %v2922, 4
        %v2939 = vrot.slane %v2924, 4
        %v2940 = vrot.slane %v2926, 4
        %v2941 = vrot.slane %v2928, 4
        %v2942 = vrot.slane %v2930, 4
        %v2943 = vrot.slane %v2932, 4
        %v2944 = vrot.slane %v2934, 4
        %v2945 = vsel %vm930, %v2935, %v2936
        %vm2946 = vcmask 498688
        %v2947 = vsel %vm2946, %v2916, %v2945
        %v2948 = vsel %vm930, %v2936, %v2937
        %v2949 = vsel %vm2946, %v2918, %v2948
        %v2950 = vsel %vm930, %v2937, %v2938
        %v2951 = vsel %vm2946, %v2920, %v2950
        %v2952 = vsel %vm930, %v2938, %v2939
        %v2953 = vsel %vm2946, %v2922, %v2952
        %v2954 = vsel %vm930, %v2940, %v2941
        %v2955 = vsel %vm2946, %v2926, %v2954
        %v2956 = vsel %vm930, %v2941, %v2942
        %v2957 = vsel %vm2946, %v2928, %v2956
        %v2958 = vsel %vm930, %v2942, %v2943
        %v2959 = vsel %vm2946, %v2930, %v2958
        %v2960 = vsel %vm930, %v2943, %v2944
        %v2961 = vsel %vm2946, %v2932, %v2960
        %2970 = vst [vmem:[#allocation4 + $0xc0] sm:$0xff] %v2947
        %2971 = vst [vmem:[#allocation4 + $0xc8] sm:$0xff] %v2949
        %2972 = vst [vmem:[#allocation4 + $0xd0] sm:$0xff] %v2951
        %2973 = vst [vmem:[#allocation4 + $0xd8] sm:$0xff] %v2953
        %2974 = vst [vmem:[#allocation4 + $0xe0] sm:$0xff] %v2955
        %2975 = vst [vmem:[#allocation4 + $0xe8] sm:$0xff] %v2957
        %2976 = vst [vmem:[#allocation4 + $0xf0] sm:$0xff] %v2959
        %2977 = vst [vmem:[#allocation4 + $0xf8] sm:$0xff] %v2961
        %v2978 = vld [vmem:[#allocation3] sm:$0xff]
        %v2979 = vld [vmem:[#allocation3 + $0x8] sm:$0xff]
        %v2980 = vld [vmem:[#allocation3 + $0x10] sm:$0xff]
        %v2981 = vld [vmem:[#allocation3 + $0x18] sm:$0xff]
        %v2982 = vld [vmem:[#allocation3 + $0x20] sm:$0xf]
        %v2983 = vld [vmem:[#allocation3 + $0x28] sm:$0xff]
        %v2984 = vld [vmem:[#allocation3 + $0x30] sm:$0xff]
        %v2985 = vld [vmem:[#allocation3 + $0x38] sm:$0xff]
        %v2986 = vld [vmem:[#allocation3 + $0x40] sm:$0xff]
        %v2987 = vld [vmem:[#allocation3 + $0x48] sm:$0xf]
        %2998 = vrot.lane.b32.xlu0 %v2978, 60
        %v2999 = vpop.permute.xlu0 %2998
        %3000 = vrot.lane.b32.xlu0 %v2979, 60
        %v3001 = vpop.permute.xlu0 %3000
        %3002 = vrot.lane.b32.xlu0 %v2980, 60
        %v3003 = vpop.permute.xlu0 %3002
        %3004 = vrot.lane.b32.xlu0 %v2981, 60
        %v3005 = vpop.permute.xlu0 %3004
        %3006 = vrot.lane.b32.xlu0 %v2982, 60
        %v3007 = vpop.permute.xlu0 %3006
        %3008 = vrot.lane.b32.xlu0 %v2983, 60
        %v3009 = vpop.permute.xlu0 %3008
        %3010 = vrot.lane.b32.xlu0 %v2984, 60
        %v3011 = vpop.permute.xlu0 %3010
        %3012 = vrot.lane.b32.xlu0 %v2985, 60
        %v3013 = vpop.permute.xlu0 %3012
        %3014 = vrot.lane.b32.xlu0 %v2986, 60
        %v3015 = vpop.permute.xlu0 %3014
        %3016 = vrot.lane.b32.xlu0 %v2987, 60
        %v3017 = vpop.permute.xlu0 %3016
        %v3018 = vrot.slane %v2999, 4
        %v3019 = vrot.slane %v3001, 4
        %v3020 = vrot.slane %v3003, 4
        %v3021 = vrot.slane %v3005, 4
        %v3022 = vrot.slane %v3007, 4
        %v3023 = vrot.slane %v3009, 4
        %v3024 = vrot.slane %v3011, 4
        %v3025 = vrot.slane %v3013, 4
        %v3026 = vrot.slane %v3015, 4
        %v3027 = vrot.slane %v3017, 4
        %v3028 = vsel %vm930, %v3018, %v3019
        %vm3029 = vcmask 490496
        %v3030 = vsel %vm3029, %v2999, %v3028
        %v3031 = vsel %vm930, %v3019, %v3020
        %v3032 = vsel %vm3029, %v3001, %v3031
        %v3033 = vsel %vm930, %v3020, %v3021
        %v3034 = vsel %vm3029, %v3003, %v3033
        %v3035 = vsel %vm930, %v3021, %v3022
        %v3036 = vsel %vm3029, %v3005, %v3035
        %v3037 = vsel %vm930, %v3023, %v3024
        %v3038 = vsel %vm3029, %v3009, %v3037
        %v3039 = vsel %vm930, %v3024, %v3025
        %v3040 = vsel %vm3029, %v3011, %v3039
        %v3041 = vsel %vm930, %v3025, %v3026
        %v3042 = vsel %vm3029, %v3013, %v3041
        %v3043 = vsel %vm930, %v3026, %v3027
        %v3044 = vsel %vm3029, %v3015, %v3043
        %3053 = vst [vmem:[#allocation4 + $0x100] sm:$0xff] %v3030
        %3054 = vst [vmem:[#allocation4 + $0x108] sm:$0xff] %v3032
        %3055 = vst [vmem:[#allocation4 + $0x110] sm:$0xff] %v3034
        %3056 = vst [vmem:[#allocation4 + $0x118] sm:$0xff] %v3036
        %3057 = vst [vmem:[#allocation4 + $0x120] sm:$0xff] %v3038
        %3058 = vst [vmem:[#allocation4 + $0x128] sm:$0xff] %v3040
        %3059 = vst [vmem:[#allocation4 + $0x130] sm:$0xff] %v3042
        %3060 = vst [vmem:[#allocation4 + $0x138] sm:$0xff] %v3044
        %v3061 = vld [vmem:[#allocation5] sm:$0xff]
        %v3062 = vld [vmem:[#allocation5 + $0x8] sm:$0xff]
        %v3063 = vld [vmem:[#allocation5 + $0x10] sm:$0xff]
        %v3064 = vld [vmem:[#allocation5 + $0x18] sm:$0xff]
        %v3065 = vld [vmem:[#allocation5 + $0x20] sm:$0xff]
        %v3066 = vld [vmem:[#allocation5 + $0x28] sm:$0xff]
        %v3067 = vld [vmem:[#allocation5 + $0x30] sm:$0xff]
        %v3068 = vld [vmem:[#allocation5 + $0x38] sm:$0xff]
        %v3069 = vld [vmem:[#allocation5 + $0x40] sm:$0xff]
        %v3070 = vld [vmem:[#allocation5 + $0x48] sm:$0xff]
        %v3071 = vld [vmem:[#allocation5 + $0x50] sm:$0xff]
        %v3072 = vld [vmem:[#allocation5 + $0x58] sm:$0xff]
        %v3073 = vld [vmem:[#allocation5 + $0x60] sm:$0xff]
        %v3074 = vld [vmem:[#allocation5 + $0x68] sm:$0xff]
        %v3075 = vld [vmem:[#allocation5 + $0x70] sm:$0xff]
        %v3076 = vld [vmem:[#allocation5 + $0x78] sm:$0xff]
        %v3077 = vld [vmem:[#allocation5 + $0x80] sm:$0xff]
        %v3078 = vld [vmem:[#allocation5 + $0x88] sm:$0xff]
        %v3079 = vld [vmem:[#allocation5 + $0x90] sm:$0xff]
        %v3080 = vld [vmem:[#allocation5 + $0x98] sm:$0xff]
        %v3081 = vld [vmem:[#allocation5 + $0xa0] sm:$0xff]
        %v3082 = vld [vmem:[#allocation5 + $0xa8] sm:$0xff]
        %v3083 = vld [vmem:[#allocation5 + $0xb0] sm:$0xff]
        %v3084 = vld [vmem:[#allocation5 + $0xb8] sm:$0xff]
        %v3085 = vld [vmem:[#allocation5 + $0xc0] sm:$0xff]
        %v3086 = vld [vmem:[#allocation5 + $0xc8] sm:$0xff]
        %v3087 = vld [vmem:[#allocation5 + $0xd0] sm:$0xff]
        %v3088 = vld [vmem:[#allocation5 + $0xd8] sm:$0xff]
        %v3089 = vld [vmem:[#allocation5 + $0xe0] sm:$0xff]
        %v3090 = vld [vmem:[#allocation5 + $0xe8] sm:$0xff]
        %v3091 = vld [vmem:[#allocation5 + $0xf0] sm:$0xff]
        %v3092 = vld [vmem:[#allocation5 + $0xf8] sm:$0xff]
        %s3093 = scalar_lea.vmem [#allocation8], 32
        %v3094 = vld [vmem:[%s3093] sm:$0xf]
        %v3095 = vld [vmem:[%s3093 + $0x4] sm:$0xf]
        %v3096 = vld [vmem:[%s3093 + $0x8] sm:$0xf]
        %v3097 = vld [vmem:[%s3093 + $0xc] sm:$0xf]
        %v3098 = vld [vmem:[#allocation4] sm:$0xff]
        %v3099 = vld [vmem:[#allocation4 + $0x8] sm:$0xff]
        %v3100 = vld [vmem:[#allocation4 + $0x10] sm:$0xff]
        %v3101 = vld [vmem:[#allocation4 + $0x18] sm:$0xff]
        %v3102 = vld [vmem:[#allocation4 + $0x20] sm:$0xff]
        %v3103 = vld [vmem:[#allocation4 + $0x28] sm:$0xff]
        %v3104 = vld [vmem:[#allocation4 + $0x30] sm:$0xff]
        %v3105 = vld [vmem:[#allocation4 + $0x38] sm:$0xff]
        %v3106 = vld [vmem:[#allocation4 + $0x40] sm:$0xff]
        %v3107 = vld [vmem:[#allocation4 + $0x48] sm:$0xff]
        %v3108 = vld [vmem:[#allocation4 + $0x50] sm:$0xff]
        %v3109 = vld [vmem:[#allocation4 + $0x58] sm:$0xff]
        %v3110 = vld [vmem:[#allocation4 + $0x60] sm:$0xff]
        %v3111 = vld [vmem:[#allocation4 + $0x68] sm:$0xff]
        %v3112 = vld [vmem:[#allocation4 + $0x70] sm:$0xff]
        %v3113 = vld [vmem:[#allocation4 + $0x78] sm:$0xff]
        %v3114 = vld [vmem:[#allocation4 + $0x80] sm:$0xff]
        %v3115 = vld [vmem:[#allocation4 + $0x88] sm:$0xff]
        %v3116 = vld [vmem:[#allocation4 + $0x90] sm:$0xff]
        %v3117 = vld [vmem:[#allocation4 + $0x98] sm:$0xff]
        %v3118 = vld [vmem:[#allocation4 + $0xa0] sm:$0xff]
        %v3119 = vld [vmem:[#allocation4 + $0xa8] sm:$0xff]
        %v3120 = vld [vmem:[#allocation4 + $0xb0] sm:$0xff]
        %v3121 = vld [vmem:[#allocation4 + $0xb8] sm:$0xff]
        %v3122 = vld [vmem:[#allocation4 + $0xc0] sm:$0xff]
        %v3123 = vld [vmem:[#allocation4 + $0xc8] sm:$0xff]
        %v3124 = vld [vmem:[#allocation4 + $0xd0] sm:$0xff]
        %v3125 = vld [vmem:[#allocation4 + $0xd8] sm:$0xff]
        %v3126 = vld [vmem:[#allocation4 + $0xe0] sm:$0xff]
        %v3127 = vld [vmem:[#allocation4 + $0xe8] sm:$0xff]
        %v3128 = vld [vmem:[#allocation4 + $0xf0] sm:$0xff]
        %v3129 = vld [vmem:[#allocation4 + $0xf8] sm:$0xff]
        %v3130 = vld [vmem:[#allocation4 + $0x100] sm:$0xff]
        %v3131 = vld [vmem:[#allocation4 + $0x108] sm:$0xff]
        %v3132 = vld [vmem:[#allocation4 + $0x110] sm:$0xff]
        %v3133 = vld [vmem:[#allocation4 + $0x118] sm:$0xff]
        %v3134 = vld [vmem:[#allocation4 + $0x120] sm:$0xff]
        %v3135 = vld [vmem:[#allocation4 + $0x128] sm:$0xff]
        %v3136 = vld [vmem:[#allocation4 + $0x130] sm:$0xff]
        %v3137 = vld [vmem:[#allocation4 + $0x138] sm:$0xff]
        %v3142 = vunpack.c.l.b16 %v3094
        %v3143 = vunpack.c.l.b16 %v3095
        %v3144 = vunpack.c.l.b16 %v3096
        %v3145 = vunpack.c.l.b16 %v3097
        %v3146 = vpack.c.b16 %v3143, %v3142
        %v3147 = vpack.c.b16 %v3145, %v3144
        %v3188 = vunpack.c.l.b16 %v3098
        %v3189 = vunpack.c.h.b16 %v3098
        %v3190 = vunpack.c.l.b16 %v3099
        %v3191 = vunpack.c.h.b16 %v3099
        %v3192 = vunpack.c.l.b16 %v3100
        %v3193 = vunpack.c.h.b16 %v3100
        %v3194 = vunpack.c.l.b16 %v3101
        %v3195 = vunpack.c.h.b16 %v3101
        %v3196 = vunpack.c.l.b16 %v3102
        %v3197 = vunpack.c.h.b16 %v3102
        %v3198 = vunpack.c.l.b16 %v3103
        %v3199 = vunpack.c.h.b16 %v3103
        %v3200 = vunpack.c.l.b16 %v3104
        %v3201 = vunpack.c.h.b16 %v3104
        %v3202 = vunpack.c.l.b16 %v3105
        %v3203 = vunpack.c.h.b16 %v3105
        %v3204 = vunpack.c.l.b16 %v3106
        %v3205 = vunpack.c.h.b16 %v3106
        %v3206 = vunpack.c.l.b16 %v3107
        %v3207 = vunpack.c.h.b16 %v3107
        %v3208 = vunpack.c.l.b16 %v3108
        %v3209 = vunpack.c.h.b16 %v3108
        %v3210 = vunpack.c.l.b16 %v3109
        %v3211 = vunpack.c.h.b16 %v3109
        %v3212 = vunpack.c.l.b16 %v3110
        %v3213 = vunpack.c.h.b16 %v3110
        %v3214 = vunpack.c.l.b16 %v3111
        %v3215 = vunpack.c.h.b16 %v3111
        %v3216 = vunpack.c.l.b16 %v3112
        %v3217 = vunpack.c.h.b16 %v3112
        %v3218 = vunpack.c.l.b16 %v3113
        %v3219 = vunpack.c.h.b16 %v3113
        %v3220 = vunpack.c.l.b16 %v3114
        %v3221 = vunpack.c.h.b16 %v3114
        %v3222 = vunpack.c.l.b16 %v3115
        %v3223 = vunpack.c.h.b16 %v3115
        %v3224 = vunpack.c.l.b16 %v3116
        %v3225 = vunpack.c.h.b16 %v3116
        %v3226 = vunpack.c.l.b16 %v3117
        %v3227 = vunpack.c.h.b16 %v3117
        %v3228 = vunpack.c.l.b16 %v3118
        %v3229 = vunpack.c.h.b16 %v3118
        %v3230 = vunpack.c.l.b16 %v3119
        %v3231 = vunpack.c.h.b16 %v3119
        %v3232 = vunpack.c.l.b16 %v3120
        %v3233 = vunpack.c.h.b16 %v3120
        %v3234 = vunpack.c.l.b16 %v3121
        %v3235 = vunpack.c.h.b16 %v3121
        %v3236 = vunpack.c.l.b16 %v3122
        %v3237 = vunpack.c.h.b16 %v3122
        %v3238 = vunpack.c.l.b16 %v3123
        %v3239 = vunpack.c.h.b16 %v3123
        %v3240 = vunpack.c.l.b16 %v3124
        %v3241 = vunpack.c.h.b16 %v3124
        %v3242 = vunpack.c.l.b16 %v3125
        %v3243 = vunpack.c.h.b16 %v3125
        %v3244 = vunpack.c.l.b16 %v3126
        %v3245 = vunpack.c.h.b16 %v3126
        %v3246 = vunpack.c.l.b16 %v3127
        %v3247 = vunpack.c.h.b16 %v3127
        %v3248 = vunpack.c.l.b16 %v3128
        %v3249 = vunpack.c.h.b16 %v3128
        %v3250 = vunpack.c.l.b16 %v3129
        %v3251 = vunpack.c.h.b16 %v3129
        %v3252 = vunpack.c.l.b16 %v3130
        %v3253 = vunpack.c.h.b16 %v3130
        %v3254 = vunpack.c.l.b16 %v3131
        %v3255 = vunpack.c.h.b16 %v3131
        %v3256 = vunpack.c.l.b16 %v3132
        %v3257 = vunpack.c.h.b16 %v3132
        %v3258 = vunpack.c.l.b16 %v3133
        %v3259 = vunpack.c.h.b16 %v3133
        %v3260 = vunpack.c.l.b16 %v3134
        %v3261 = vunpack.c.h.b16 %v3134
        %v3262 = vunpack.c.l.b16 %v3135
        %v3263 = vunpack.c.h.b16 %v3135
        %v3264 = vunpack.c.l.b16 %v3136
        %v3265 = vunpack.c.h.b16 %v3136
        %v3266 = vunpack.c.l.b16 %v3137
        %v3267 = vunpack.c.h.b16 %v3137
        %v3268 = vpack.c.b16 %v3196, %v3188
        %v3269 = vpack.c.b16 %v3197, %v3189
        %v3270 = vpack.c.b16 %v3198, %v3190
        %v3271 = vpack.c.b16 %v3199, %v3191
        %v3272 = vpack.c.b16 %v3200, %v3192
        %v3273 = vpack.c.b16 %v3201, %v3193
        %v3274 = vpack.c.b16 %v3202, %v3194
        %v3275 = vpack.c.b16 %v3203, %v3195
        %v3276 = vpack.c.b16 %v3212, %v3204
        %v3277 = vpack.c.b16 %v3213, %v3205
        %v3278 = vpack.c.b16 %v3214, %v3206
        %v3279 = vpack.c.b16 %v3215, %v3207
        %v3280 = vpack.c.b16 %v3216, %v3208
        %v3281 = vpack.c.b16 %v3217, %v3209
        %v3282 = vpack.c.b16 %v3218, %v3210
        %v3283 = vpack.c.b16 %v3219, %v3211
        %v3284 = vpack.c.b16 %v3228, %v3220
        %v3285 = vpack.c.b16 %v3229, %v3221
        %v3286 = vpack.c.b16 %v3230, %v3222
        %v3287 = vpack.c.b16 %v3231, %v3223
        %v3288 = vpack.c.b16 %v3232, %v3224
        %v3289 = vpack.c.b16 %v3233, %v3225
        %v3290 = vpack.c.b16 %v3234, %v3226
        %v3291 = vpack.c.b16 %v3235, %v3227
        %v3292 = vpack.c.b16 %v3244, %v3236
        %v3293 = vpack.c.b16 %v3245, %v3237
        %v3294 = vpack.c.b16 %v3246, %v3238
        %v3295 = vpack.c.b16 %v3247, %v3239
        %v3296 = vpack.c.b16 %v3248, %v3240
        %v3297 = vpack.c.b16 %v3249, %v3241
        %v3298 = vpack.c.b16 %v3250, %v3242
        %v3299 = vpack.c.b16 %v3251, %v3243
        %v3300 = vpack.c.b16 %v3260, %v3252
        %v3301 = vpack.c.b16 %v3261, %v3253
        %v3302 = vpack.c.b16 %v3262, %v3254
        %v3303 = vpack.c.b16 %v3263, %v3255
        %v3304 = vpack.c.b16 %v3264, %v3256
        %v3305 = vpack.c.b16 %v3265, %v3257
        %v3306 = vpack.c.b16 %v3266, %v3258
        %v3307 = vpack.c.b16 %v3267, %v3259
        %v3349 = vsel %vm1499, %v3146, 0
        %v3352 = vsel %vm1499, %v3147, 0
        %3354 = vmatpush.bf16.msra.mxu0 0
        %3355 = vmatpush.bf16.msra.mxu0 0
        %3356 = vmatpush.bf16.msra.mxu0 0
        %3357 = vmatpush.bf16.msra.mxu0 %v3300
        %3358 = vmatpush.bf16.msra.mxu0 %v3292
        %3359 = vmatpush.bf16.msra.mxu0 %v3284
        %3360 = vmatpush.bf16.msra.mxu0 %v3276
        %3361 = vmatpush.bf16.msra.mxu0 %v3268
        %3362 = vmatmul.bf16.gmra.mxu0 %v3349
        %v3363 = vpop.f32.mrf.mxu0
        %v3364 = vadd.f32 0.0, %v3363
        %v3365 = vpop.f32.mrf.mxu0
        %v3366 = vadd.f32 0.0, %v3365
        %3367 = vmatmul.bf16.gmra.mxu0 %v3352
        %v3368 = vpop.f32.mrf.mxu0
        %v3369 = vadd.f32 0.0, %v3368
        %v3370 = vpop.f32.mrf.mxu0
        %v3371 = vadd.f32 0.0, %v3370
        %3372 = vdwg.mxu0
        %3373 = vmatpush.bf16.msra.mxu0 0
        %3374 = vmatpush.bf16.msra.mxu0 0
        %3375 = vmatpush.bf16.msra.mxu0 0
        %3376 = vmatpush.bf16.msra.mxu0 %v3301
        %3377 = vmatpush.bf16.msra.mxu0 %v3293
        %3378 = vmatpush.bf16.msra.mxu0 %v3285
        %3379 = vmatpush.bf16.msra.mxu0 %v3277
        %3380 = vmatpush.bf16.msra.mxu0 %v3269
        %3381 = vmatmul.bf16.gmra.mxu0 %v3349
        %v3382 = vpop.f32.mrf.mxu0
        %v3383 = vadd.f32 0.0, %v3382
        %v3384 = vpop.f32.mrf.mxu0
        %v3385 = vadd.f32 0.0, %v3384
        %3386 = vmatmul.bf16.gmra.mxu0 %v3352
        %v3387 = vpop.f32.mrf.mxu0
        %v3388 = vadd.f32 0.0, %v3387
        %v3389 = vpop.f32.mrf.mxu0
        %v3390 = vadd.f32 0.0, %v3389
        %3391 = vdwg.mxu0
        %3392 = vmatpush.bf16.msra.mxu0 0
        %3393 = vmatpush.bf16.msra.mxu0 0
        %3394 = vmatpush.bf16.msra.mxu0 0
        %3395 = vmatpush.bf16.msra.mxu0 %v3302
        %3396 = vmatpush.bf16.msra.mxu0 %v3294
        %3397 = vmatpush.bf16.msra.mxu0 %v3286
        %3398 = vmatpush.bf16.msra.mxu0 %v3278
        %3399 = vmatpush.bf16.msra.mxu0 %v3270
        %3400 = vmatmul.bf16.gmra.mxu0 %v3349
        %v3401 = vpop.f32.mrf.mxu0
        %v3402 = vadd.f32 0.0, %v3401
        %v3403 = vpop.f32.mrf.mxu0
        %v3404 = vadd.f32 0.0, %v3403
        %3405 = vmatmul.bf16.gmra.mxu0 %v3352
        %v3406 = vpop.f32.mrf.mxu0
        %v3407 = vadd.f32 0.0, %v3406
        %v3408 = vpop.f32.mrf.mxu0
        %v3409 = vadd.f32 0.0, %v3408
        %3410 = vdwg.mxu0
        %3411 = vmatpush.bf16.msra.mxu0 0
        %3412 = vmatpush.bf16.msra.mxu0 0
        %3413 = vmatpush.bf16.msra.mxu0 0
        %3414 = vmatpush.bf16.msra.mxu0 %v3303
        %3415 = vmatpush.bf16.msra.mxu0 %v3295
        %3416 = vmatpush.bf16.msra.mxu0 %v3287
        %3417 = vmatpush.bf16.msra.mxu0 %v3279
        %3418 = vmatpush.bf16.msra.mxu0 %v3271
        %3419 = vmatmul.bf16.gmra.mxu0 %v3349
        %v3420 = vpop.f32.mrf.mxu0
        %v3421 = vadd.f32 0.0, %v3420
        %v3422 = vpop.f32.mrf.mxu0
        %v3423 = vadd.f32 0.0, %v3422
        %3424 = vmatmul.bf16.gmra.mxu0 %v3352
        %v3425 = vpop.f32.mrf.mxu0
        %v3426 = vadd.f32 0.0, %v3425
        %v3427 = vpop.f32.mrf.mxu0
        %v3428 = vadd.f32 0.0, %v3427
        %3429 = vdwg.mxu0
        %3430 = vmatpush.bf16.msra.mxu0 0
        %3431 = vmatpush.bf16.msra.mxu0 0
        %3432 = vmatpush.bf16.msra.mxu0 0
        %3433 = vmatpush.bf16.msra.mxu0 %v3304
        %3434 = vmatpush.bf16.msra.mxu0 %v3296
        %3435 = vmatpush.bf16.msra.mxu0 %v3288
        %3436 = vmatpush.bf16.msra.mxu0 %v3280
        %3437 = vmatpush.bf16.msra.mxu0 %v3272
        %3438 = vmatmul.bf16.gmra.mxu0 %v3349
        %v3439 = vpop.f32.mrf.mxu0
        %v3440 = vadd.f32 0.0, %v3439
        %v3441 = vpop.f32.mrf.mxu0
        %v3442 = vadd.f32 0.0, %v3441
        %3443 = vmatmul.bf16.gmra.mxu0 %v3352
        %v3444 = vpop.f32.mrf.mxu0
        %v3445 = vadd.f32 0.0, %v3444
        %v3446 = vpop.f32.mrf.mxu0
        %v3447 = vadd.f32 0.0, %v3446
        %3448 = vdwg.mxu0
        %3449 = vmatpush.bf16.msra.mxu0 0
        %3450 = vmatpush.bf16.msra.mxu0 0
        %3451 = vmatpush.bf16.msra.mxu0 0
        %3452 = vmatpush.bf16.msra.mxu0 %v3305
        %3453 = vmatpush.bf16.msra.mxu0 %v3297
        %3454 = vmatpush.bf16.msra.mxu0 %v3289
        %3455 = vmatpush.bf16.msra.mxu0 %v3281
        %3456 = vmatpush.bf16.msra.mxu0 %v3273
        %3457 = vmatmul.bf16.gmra.mxu0 %v3349
        %v3458 = vpop.f32.mrf.mxu0
        %v3459 = vadd.f32 0.0, %v3458
        %v3460 = vpop.f32.mrf.mxu0
        %v3461 = vadd.f32 0.0, %v3460
        %3462 = vmatmul.bf16.gmra.mxu0 %v3352
        %v3463 = vpop.f32.mrf.mxu0
        %v3464 = vadd.f32 0.0, %v3463
        %v3465 = vpop.f32.mrf.mxu0
        %v3466 = vadd.f32 0.0, %v3465
        %3467 = vdwg.mxu0
        %3468 = vmatpush.bf16.msra.mxu0 0
        %3469 = vmatpush.bf16.msra.mxu0 0
        %3470 = vmatpush.bf16.msra.mxu0 0
        %3471 = vmatpush.bf16.msra.mxu0 %v3306
        %3472 = vmatpush.bf16.msra.mxu0 %v3298
        %3473 = vmatpush.bf16.msra.mxu0 %v3290
        %3474 = vmatpush.bf16.msra.mxu0 %v3282
        %3475 = vmatpush.bf16.msra.mxu0 %v3274
        %3476 = vmatmul.bf16.gmra.mxu0 %v3349
        %v3477 = vpop.f32.mrf.mxu0
        %v3478 = vadd.f32 0.0, %v3477
        %v3479 = vpop.f32.mrf.mxu0
        %v3480 = vadd.f32 0.0, %v3479
        %3481 = vmatmul.bf16.gmra.mxu0 %v3352
        %v3482 = vpop.f32.mrf.mxu0
        %v3483 = vadd.f32 0.0, %v3482
        %v3484 = vpop.f32.mrf.mxu0
        %v3485 = vadd.f32 0.0, %v3484
        %3486 = vdwg.mxu0
        %3487 = vmatpush.bf16.msra.mxu0 0
        %3488 = vmatpush.bf16.msra.mxu0 0
        %3489 = vmatpush.bf16.msra.mxu0 0
        %3490 = vmatpush.bf16.msra.mxu0 %v3307
        %3491 = vmatpush.bf16.msra.mxu0 %v3299
        %3492 = vmatpush.bf16.msra.mxu0 %v3291
        %3493 = vmatpush.bf16.msra.mxu0 %v3283
        %3494 = vmatpush.bf16.msra.mxu0 %v3275
        %3495 = vmatmul.bf16.gmra.mxu0 %v3349
        %v3496 = vpop.f32.mrf.mxu0
        %v3497 = vadd.f32 0.0, %v3496
        %v3498 = vpop.f32.mrf.mxu0
        %v3499 = vadd.f32 0.0, %v3498
        %3500 = vmatmul.bf16.gmra.mxu0 %v3352
        %v3501 = vpop.f32.mrf.mxu0
        %v3502 = vadd.f32 0.0, %v3501
        %v3503 = vpop.f32.mrf.mxu0
        %v3504 = vadd.f32 0.0, %v3503
        %3505 = vdwg.mxu0
        %v3506 = vadd.f32 %v3061, %v3364
        %v3507 = vadd.f32 %v3062, %v3383
        %v3508 = vadd.f32 %v3063, %v3402
        %v3509 = vadd.f32 %v3064, %v3421
        %v3510 = vadd.f32 %v3065, %v3440
        %v3511 = vadd.f32 %v3066, %v3459
        %v3512 = vadd.f32 %v3067, %v3478
        %v3513 = vadd.f32 %v3068, %v3497
        %v3514 = vadd.f32 %v3069, %v3366
        %v3515 = vadd.f32 %v3070, %v3385
        %v3516 = vadd.f32 %v3071, %v3404
        %v3517 = vadd.f32 %v3072, %v3423
        %v3518 = vadd.f32 %v3073, %v3442
        %v3519 = vadd.f32 %v3074, %v3461
        %v3520 = vadd.f32 %v3075, %v3480
        %v3521 = vadd.f32 %v3076, %v3499
        %v3522 = vadd.f32 %v3077, %v3369
        %v3523 = vadd.f32 %v3078, %v3388
        %v3524 = vadd.f32 %v3079, %v3407
        %v3525 = vadd.f32 %v3080, %v3426
        %v3526 = vadd.f32 %v3081, %v3445
        %v3527 = vadd.f32 %v3082, %v3464
        %v3528 = vadd.f32 %v3083, %v3483
        %v3529 = vadd.f32 %v3084, %v3502
        %v3530 = vadd.f32 %v3085, %v3371
        %v3531 = vadd.f32 %v3086, %v3390
        %v3532 = vadd.f32 %v3087, %v3409
        %v3533 = vadd.f32 %v3088, %v3428
        %v3534 = vadd.f32 %v3089, %v3447
        %v3535 = vadd.f32 %v3090, %v3466
        %v3536 = vadd.f32 %v3091, %v3485
        %v3537 = vadd.f32 %v3092, %v3504
        %3538 = vst [vmem:[#allocation5] sm:$0xff] %v3506
        %3539 = vst [vmem:[#allocation5 + $0x8] sm:$0xff] %v3507
        %3540 = vst [vmem:[#allocation5 + $0x10] sm:$0xff] %v3508
        %3541 = vst [vmem:[#allocation5 + $0x18] sm:$0xff] %v3509
        %3542 = vst [vmem:[#allocation5 + $0x20] sm:$0xff] %v3510
        %3543 = vst [vmem:[#allocation5 + $0x28] sm:$0xff] %v3511
        %3544 = vst [vmem:[#allocation5 + $0x30] sm:$0xff] %v3512
        %3545 = vst [vmem:[#allocation5 + $0x38] sm:$0xff] %v3513
        %3546 = vst [vmem:[#allocation5 + $0x40] sm:$0xff] %v3514
        %3547 = vst [vmem:[#allocation5 + $0x48] sm:$0xff] %v3515
        %3548 = vst [vmem:[#allocation5 + $0x50] sm:$0xff] %v3516
        %3549 = vst [vmem:[#allocation5 + $0x58] sm:$0xff] %v3517
        %3550 = vst [vmem:[#allocation5 + $0x60] sm:$0xff] %v3518
        %3551 = vst [vmem:[#allocation5 + $0x68] sm:$0xff] %v3519
        %3552 = vst [vmem:[#allocation5 + $0x70] sm:$0xff] %v3520
        %3553 = vst [vmem:[#allocation5 + $0x78] sm:$0xff] %v3521
        %3554 = vst [vmem:[#allocation5 + $0x80] sm:$0xff] %v3522
        %3555 = vst [vmem:[#allocation5 + $0x88] sm:$0xff] %v3523
        %3556 = vst [vmem:[#allocation5 + $0x90] sm:$0xff] %v3524
        %3557 = vst [vmem:[#allocation5 + $0x98] sm:$0xff] %v3525
        %3558 = vst [vmem:[#allocation5 + $0xa0] sm:$0xff] %v3526
        %3559 = vst [vmem:[#allocation5 + $0xa8] sm:$0xff] %v3527
        %3560 = vst [vmem:[#allocation5 + $0xb0] sm:$0xff] %v3528
        %3561 = vst [vmem:[#allocation5 + $0xb8] sm:$0xff] %v3529
        %3562 = vst [vmem:[#allocation5 + $0xc0] sm:$0xff] %v3530
        %3563 = vst [vmem:[#allocation5 + $0xc8] sm:$0xff] %v3531
        %3564 = vst [vmem:[#allocation5 + $0xd0] sm:$0xff] %v3532
        %3565 = vst [vmem:[#allocation5 + $0xd8] sm:$0xff] %v3533
        %3566 = vst [vmem:[#allocation5 + $0xe0] sm:$0xff] %v3534
        %3567 = vst [vmem:[#allocation5 + $0xe8] sm:$0xff] %v3535
        %3568 = vst [vmem:[#allocation5 + $0xf0] sm:$0xff] %v3536
        %3569 = vst [vmem:[#allocation5 + $0xf8] sm:$0xff] %v3537
        %v3570 = vld [vmem:[#allocation3] sm:$0xff]
        %v3571 = vld [vmem:[#allocation3 + $0x8] sm:$0xff]
        %v3572 = vld [vmem:[#allocation3 + $0x10] sm:$0xff]
        %v3573 = vld [vmem:[#allocation3 + $0x18] sm:$0xff]
        %v3574 = vld [vmem:[#allocation3 + $0x20] sm:$0xf]
        %v3575 = vld [vmem:[#allocation3 + $0x28] sm:$0xff]
        %v3576 = vld [vmem:[#allocation3 + $0x30] sm:$0xff]
        %v3577 = vld [vmem:[#allocation3 + $0x38] sm:$0xff]
        %v3578 = vld [vmem:[#allocation3 + $0x40] sm:$0xff]
        %v3579 = vld [vmem:[#allocation3 + $0x48] sm:$0xf]
        %3590 = vrot.lane.b32.xlu0 %v3570, 32
        %v3591 = vpop.permute.xlu0 %3590
        %3592 = vrot.lane.b32.xlu0 %v3571, 32
        %v3593 = vpop.permute.xlu0 %3592
        %3594 = vrot.lane.b32.xlu0 %v3572, 32
        %v3595 = vpop.permute.xlu0 %3594
        %3596 = vrot.lane.b32.xlu0 %v3573, 32
        %v3597 = vpop.permute.xlu0 %3596
        %3598 = vrot.lane.b32.xlu0 %v3574, 32
        %v3599 = vpop.permute.xlu0 %3598
        %3600 = vrot.lane.b32.xlu0 %v3575, 32
        %v3601 = vpop.permute.xlu0 %3600
        %3602 = vrot.lane.b32.xlu0 %v3576, 32
        %v3603 = vpop.permute.xlu0 %3602
        %3604 = vrot.lane.b32.xlu0 %v3577, 32
        %v3605 = vpop.permute.xlu0 %3604
        %3606 = vrot.lane.b32.xlu0 %v3578, 32
        %v3607 = vpop.permute.xlu0 %3606
        %3608 = vrot.lane.b32.xlu0 %v3579, 32
        %v3609 = vpop.permute.xlu0 %3608
        %v3610 = vrot.slane %v3591, 4
        %v3611 = vrot.slane %v3593, 4
        %v3612 = vrot.slane %v3595, 4
        %v3613 = vrot.slane %v3597, 4
        %v3614 = vrot.slane %v3599, 4
        %v3615 = vrot.slane %v3601, 4
        %v3616 = vrot.slane %v3603, 4
        %v3617 = vrot.slane %v3605, 4
        %v3618 = vrot.slane %v3607, 4
        %v3619 = vrot.slane %v3609, 4
        %v3620 = vsel %vm930, %v3610, %v3611
        %vm3621 = vcmask 261120
        %v3622 = vsel %vm3621, %v3591, %v3620
        %v3623 = vsel %vm930, %v3611, %v3612
        %v3624 = vsel %vm3621, %v3593, %v3623
        %v3625 = vsel %vm930, %v3612, %v3613
        %v3626 = vsel %vm3621, %v3595, %v3625
        %v3627 = vsel %vm930, %v3613, %v3614
        %v3628 = vsel %vm3621, %v3597, %v3627
        %v3629 = vsel %vm930, %v3615, %v3616
        %v3630 = vsel %vm3621, %v3601, %v3629
        %v3631 = vsel %vm930, %v3616, %v3617
        %v3632 = vsel %vm3621, %v3603, %v3631
        %v3633 = vsel %vm930, %v3617, %v3618
        %v3634 = vsel %vm3621, %v3605, %v3633
        %v3635 = vsel %vm930, %v3618, %v3619
        %v3636 = vsel %vm3621, %v3607, %v3635
        %3645 = vst [vmem:[#allocation4] sm:$0xff] %v3622
        %3646 = vst [vmem:[#allocation4 + $0x8] sm:$0xff] %v3624
        %3647 = vst [vmem:[#allocation4 + $0x10] sm:$0xff] %v3626
        %3648 = vst [vmem:[#allocation4 + $0x18] sm:$0xff] %v3628
        %3649 = vst [vmem:[#allocation4 + $0x20] sm:$0xff] %v3630
        %3650 = vst [vmem:[#allocation4 + $0x28] sm:$0xff] %v3632
        %3651 = vst [vmem:[#allocation4 + $0x30] sm:$0xff] %v3634
        %3652 = vst [vmem:[#allocation4 + $0x38] sm:$0xff] %v3636
        %v3653 = vld [vmem:[#allocation3] sm:$0xff]
        %v3654 = vld [vmem:[#allocation3 + $0x8] sm:$0xff]
        %v3655 = vld [vmem:[#allocation3 + $0x10] sm:$0xff]
        %v3656 = vld [vmem:[#allocation3 + $0x18] sm:$0xff]
        %v3657 = vld [vmem:[#allocation3 + $0x20] sm:$0xf]
        %v3658 = vld [vmem:[#allocation3 + $0x28] sm:$0xff]
        %v3659 = vld [vmem:[#allocation3 + $0x30] sm:$0xff]
        %v3660 = vld [vmem:[#allocation3 + $0x38] sm:$0xff]
        %v3661 = vld [vmem:[#allocation3 + $0x40] sm:$0xff]
        %v3662 = vld [vmem:[#allocation3 + $0x48] sm:$0xf]
        %3673 = vrot.lane.b32.xlu0 %v3653, 31
        %v3674 = vpop.permute.xlu0 %3673
        %3675 = vrot.lane.b32.xlu0 %v3654, 31
        %v3676 = vpop.permute.xlu0 %3675
        %3677 = vrot.lane.b32.xlu0 %v3655, 31
        %v3678 = vpop.permute.xlu0 %3677
        %3679 = vrot.lane.b32.xlu0 %v3656, 31
        %v3680 = vpop.permute.xlu0 %3679
        %3681 = vrot.lane.b32.xlu0 %v3657, 31
        %v3682 = vpop.permute.xlu0 %3681
        %3683 = vrot.lane.b32.xlu0 %v3658, 31
        %v3684 = vpop.permute.xlu0 %3683
        %3685 = vrot.lane.b32.xlu0 %v3659, 31
        %v3686 = vpop.permute.xlu0 %3685
        %3687 = vrot.lane.b32.xlu0 %v3660, 31
        %v3688 = vpop.permute.xlu0 %3687
        %3689 = vrot.lane.b32.xlu0 %v3661, 31
        %v3690 = vpop.permute.xlu0 %3689
        %3691 = vrot.lane.b32.xlu0 %v3662, 31
        %v3692 = vpop.permute.xlu0 %3691
        %v3693 = vrot.slane %v3674, 4
        %v3694 = vrot.slane %v3676, 4
        %v3695 = vrot.slane %v3678, 4
        %v3696 = vrot.slane %v3680, 4
        %v3697 = vrot.slane %v3682, 4
        %v3698 = vrot.slane %v3684, 4
        %v3699 = vrot.slane %v3686, 4
        %v3700 = vrot.slane %v3688, 4
        %v3701 = vrot.slane %v3690, 4
        %v3702 = vrot.slane %v3692, 4
        %v3703 = vsel %vm930, %v3693, %v3694
        %vm3704 = vcmask 252928
        %v3705 = vsel %vm3704, %v3674, %v3703
        %v3706 = vsel %vm930, %v3694, %v3695
        %v3707 = vsel %vm3704, %v3676, %v3706
        %v3708 = vsel %vm930, %v3695, %v3696
        %v3709 = vsel %vm3704, %v3678, %v3708
        %v3710 = vsel %vm930, %v3696, %v3697
        %v3711 = vsel %vm3704, %v3680, %v3710
        %v3712 = vsel %vm930, %v3698, %v3699
        %v3713 = vsel %vm3704, %v3684, %v3712
        %v3714 = vsel %vm930, %v3699, %v3700
        %v3715 = vsel %vm3704, %v3686, %v3714
        %v3716 = vsel %vm930, %v3700, %v3701
        %v3717 = vsel %vm3704, %v3688, %v3716
        %v3718 = vsel %vm930, %v3701, %v3702
        %v3719 = vsel %vm3704, %v3690, %v3718
        %3728 = vst [vmem:[#allocation4 + $0x40] sm:$0xff] %v3705
        %3729 = vst [vmem:[#allocation4 + $0x48] sm:$0xff] %v3707
        %3730 = vst [vmem:[#allocation4 + $0x50] sm:$0xff] %v3709
        %3731 = vst [vmem:[#allocation4 + $0x58] sm:$0xff] %v3711
        %3732 = vst [vmem:[#allocation4 + $0x60] sm:$0xff] %v3713
        %3733 = vst [vmem:[#allocation4 + $0x68] sm:$0xff] %v3715
        %3734 = vst [vmem:[#allocation4 + $0x70] sm:$0xff] %v3717
        %3735 = vst [vmem:[#allocation4 + $0x78] sm:$0xff] %v3719
        %v3736 = vld [vmem:[#allocation3] sm:$0xff]
        %v3737 = vld [vmem:[#allocation3 + $0x8] sm:$0xff]
        %v3738 = vld [vmem:[#allocation3 + $0x10] sm:$0xff]
        %v3739 = vld [vmem:[#allocation3 + $0x18] sm:$0xff]
        %v3740 = vld [vmem:[#allocation3 + $0x20] sm:$0xf]
        %v3741 = vld [vmem:[#allocation3 + $0x28] sm:$0xff]
        %v3742 = vld [vmem:[#allocation3 + $0x30] sm:$0xff]
        %v3743 = vld [vmem:[#allocation3 + $0x38] sm:$0xff]
        %v3744 = vld [vmem:[#allocation3 + $0x40] sm:$0xff]
        %v3745 = vld [vmem:[#allocation3 + $0x48] sm:$0xf]
        %3756 = vrot.lane.b32.xlu0 %v3736, 30
        %v3757 = vpop.permute.xlu0 %3756
        %3758 = vrot.lane.b32.xlu0 %v3737, 30
        %v3759 = vpop.permute.xlu0 %3758
        %3760 = vrot.lane.b32.xlu0 %v3738, 30
        %v3761 = vpop.permute.xlu0 %3760
        %3762 = vrot.lane.b32.xlu0 %v3739, 30
        %v3763 = vpop.permute.xlu0 %3762
        %3764 = vrot.lane.b32.xlu0 %v3740, 30
        %v3765 = vpop.permute.xlu0 %3764
        %3766 = vrot.lane.b32.xlu0 %v3741, 30
        %v3767 = vpop.permute.xlu0 %3766
        %3768 = vrot.lane.b32.xlu0 %v3742, 30
        %v3769 = vpop.permute.xlu0 %3768
        %3770 = vrot.lane.b32.xlu0 %v3743, 30
        %v3771 = vpop.permute.xlu0 %3770
        %3772 = vrot.lane.b32.xlu0 %v3744, 30
        %v3773 = vpop.permute.xlu0 %3772
        %3774 = vrot.lane.b32.xlu0 %v3745, 30
        %v3775 = vpop.permute.xlu0 %3774
        %v3776 = vrot.slane %v3757, 4
        %v3777 = vrot.slane %v3759, 4
        %v3778 = vrot.slane %v3761, 4
        %v3779 = vrot.slane %v3763, 4
        %v3780 = vrot.slane %v3765, 4
        %v3781 = vrot.slane %v3767, 4
        %v3782 = vrot.slane %v3769, 4
        %v3783 = vrot.slane %v3771, 4
        %v3784 = vrot.slane %v3773, 4
        %v3785 = vrot.slane %v3775, 4
        %v3786 = vsel %vm930, %v3776, %v3777
        %vm3787 = vcmask 244736
        %v3788 = vsel %vm3787, %v3757, %v3786
        %v3789 = vsel %vm930, %v3777, %v3778
        %v3790 = vsel %vm3787, %v3759, %v3789
        %v3791 = vsel %vm930, %v3778, %v3779
        %v3792 = vsel %vm3787, %v3761, %v3791
        %v3793 = vsel %vm930, %v3779, %v3780
        %v3794 = vsel %vm3787, %v3763, %v3793
        %v3795 = vsel %vm930, %v3781, %v3782
        %v3796 = vsel %vm3787, %v3767, %v3795
        %v3797 = vsel %vm930, %v3782, %v3783
        %v3798 = vsel %vm3787, %v3769, %v3797
        %v3799 = vsel %vm930, %v3783, %v3784
        %v3800 = vsel %vm3787, %v3771, %v3799
        %v3801 = vsel %vm930, %v3784, %v3785
        %v3802 = vsel %vm3787, %v3773, %v3801
        %3811 = vst [vmem:[#allocation4 + $0x80] sm:$0xff] %v3788
        %3812 = vst [vmem:[#allocation4 + $0x88] sm:$0xff] %v3790
        %3813 = vst [vmem:[#allocation4 + $0x90] sm:$0xff] %v3792
        %3814 = vst [vmem:[#allocation4 + $0x98] sm:$0xff] %v3794
        %3815 = vst [vmem:[#allocation4 + $0xa0] sm:$0xff] %v3796
        %3816 = vst [vmem:[#allocation4 + $0xa8] sm:$0xff] %v3798
        %3817 = vst [vmem:[#allocation4 + $0xb0] sm:$0xff] %v3800
        %3818 = vst [vmem:[#allocation4 + $0xb8] sm:$0xff] %v3802
        %v3819 = vld [vmem:[#allocation3] sm:$0xff]
        %v3820 = vld [vmem:[#allocation3 + $0x8] sm:$0xff]
        %v3821 = vld [vmem:[#allocation3 + $0x10] sm:$0xff]
        %v3822 = vld [vmem:[#allocation3 + $0x18] sm:$0xff]
        %v3823 = vld [vmem:[#allocation3 + $0x20] sm:$0xf]
        %v3824 = vld [vmem:[#allocation3 + $0x28] sm:$0xff]
        %v3825 = vld [vmem:[#allocation3 + $0x30] sm:$0xff]
        %v3826 = vld [vmem:[#allocation3 + $0x38] sm:$0xff]
        %v3827 = vld [vmem:[#allocation3 + $0x40] sm:$0xff]
        %v3828 = vld [vmem:[#allocation3 + $0x48] sm:$0xf]
        %3839 = vrot.lane.b32.xlu0 %v3819, 29
        %v3840 = vpop.permute.xlu0 %3839
        %3841 = vrot.lane.b32.xlu0 %v3820, 29
        %v3842 = vpop.permute.xlu0 %3841
        %3843 = vrot.lane.b32.xlu0 %v3821, 29
        %v3844 = vpop.permute.xlu0 %3843
        %3845 = vrot.lane.b32.xlu0 %v3822, 29
        %v3846 = vpop.permute.xlu0 %3845
        %3847 = vrot.lane.b32.xlu0 %v3823, 29
        %v3848 = vpop.permute.xlu0 %3847
        %3849 = vrot.lane.b32.xlu0 %v3824, 29
        %v3850 = vpop.permute.xlu0 %3849
        %3851 = vrot.lane.b32.xlu0 %v3825, 29
        %v3852 = vpop.permute.xlu0 %3851
        %3853 = vrot.lane.b32.xlu0 %v3826, 29
        %v3854 = vpop.permute.xlu0 %3853
        %3855 = vrot.lane.b32.xlu0 %v3827, 29
        %v3856 = vpop.permute.xlu0 %3855
        %3857 = vrot.lane.b32.xlu0 %v3828, 29
        %v3858 = vpop.permute.xlu0 %3857
        %v3859 = vrot.slane %v3840, 4
        %v3860 = vrot.slane %v3842, 4
        %v3861 = vrot.slane %v3844, 4
        %v3862 = vrot.slane %v3846, 4
        %v3863 = vrot.slane %v3848, 4
        %v3864 = vrot.slane %v3850, 4
        %v3865 = vrot.slane %v3852, 4
        %v3866 = vrot.slane %v3854, 4
        %v3867 = vrot.slane %v3856, 4
        %v3868 = vrot.slane %v3858, 4
        %v3869 = vsel %vm930, %v3859, %v3860
        %vm3870 = vcmask 236544
        %v3871 = vsel %vm3870, %v3840, %v3869
        %v3872 = vsel %vm930, %v3860, %v3861
        %v3873 = vsel %vm3870, %v3842, %v3872
        %v3874 = vsel %vm930, %v3861, %v3862
        %v3875 = vsel %vm3870, %v3844, %v3874
        %v3876 = vsel %vm930, %v3862, %v3863
        %v3877 = vsel %vm3870, %v3846, %v3876
        %v3878 = vsel %vm930, %v3864, %v3865
        %v3879 = vsel %vm3870, %v3850, %v3878
        %v3880 = vsel %vm930, %v3865, %v3866
        %v3881 = vsel %vm3870, %v3852, %v3880
        %v3882 = vsel %vm930, %v3866, %v3867
        %v3883 = vsel %vm3870, %v3854, %v3882
        %v3884 = vsel %vm930, %v3867, %v3868
        %v3885 = vsel %vm3870, %v3856, %v3884
        %3894 = vst [vmem:[#allocation4 + $0xc0] sm:$0xff] %v3871
        %3895 = vst [vmem:[#allocation4 + $0xc8] sm:$0xff] %v3873
        %3896 = vst [vmem:[#allocation4 + $0xd0] sm:$0xff] %v3875
        %3897 = vst [vmem:[#allocation4 + $0xd8] sm:$0xff] %v3877
        %3898 = vst [vmem:[#allocation4 + $0xe0] sm:$0xff] %v3879
        %3899 = vst [vmem:[#allocation4 + $0xe8] sm:$0xff] %v3881
        %3900 = vst [vmem:[#allocation4 + $0xf0] sm:$0xff] %v3883
        %3901 = vst [vmem:[#allocation4 + $0xf8] sm:$0xff] %v3885
        %v3902 = vld [vmem:[#allocation3] sm:$0xff]
        %v3903 = vld [vmem:[#allocation3 + $0x8] sm:$0xff]
        %v3904 = vld [vmem:[#allocation3 + $0x10] sm:$0xff]
        %v3905 = vld [vmem:[#allocation3 + $0x18] sm:$0xff]
        %v3906 = vld [vmem:[#allocation3 + $0x20] sm:$0xf]
        %v3907 = vld [vmem:[#allocation3 + $0x28] sm:$0xff]
        %v3908 = vld [vmem:[#allocation3 + $0x30] sm:$0xff]
        %v3909 = vld [vmem:[#allocation3 + $0x38] sm:$0xff]
        %v3910 = vld [vmem:[#allocation3 + $0x40] sm:$0xff]
        %v3911 = vld [vmem:[#allocation3 + $0x48] sm:$0xf]
        %3922 = vrot.lane.b32.xlu0 %v3902, 28
        %v3923 = vpop.permute.xlu0 %3922
        %3924 = vrot.lane.b32.xlu0 %v3903, 28
        %v3925 = vpop.permute.xlu0 %3924
        %3926 = vrot.lane.b32.xlu0 %v3904, 28
        %v3927 = vpop.permute.xlu0 %3926
        %3928 = vrot.lane.b32.xlu0 %v3905, 28
        %v3929 = vpop.permute.xlu0 %3928
        %3930 = vrot.lane.b32.xlu0 %v3906, 28
        %v3931 = vpop.permute.xlu0 %3930
        %3932 = vrot.lane.b32.xlu0 %v3907, 28
        %v3933 = vpop.permute.xlu0 %3932
        %3934 = vrot.lane.b32.xlu0 %v3908, 28
        %v3935 = vpop.permute.xlu0 %3934
        %3936 = vrot.lane.b32.xlu0 %v3909, 28
        %v3937 = vpop.permute.xlu0 %3936
        %3938 = vrot.lane.b32.xlu0 %v3910, 28
        %v3939 = vpop.permute.xlu0 %3938
        %3940 = vrot.lane.b32.xlu0 %v3911, 28
        %v3941 = vpop.permute.xlu0 %3940
        %v3942 = vrot.slane %v3923, 4
        %v3943 = vrot.slane %v3925, 4
        %v3944 = vrot.slane %v3927, 4
        %v3945 = vrot.slane %v3929, 4
        %v3946 = vrot.slane %v3931, 4
        %v3947 = vrot.slane %v3933, 4
        %v3948 = vrot.slane %v3935, 4
        %v3949 = vrot.slane %v3937, 4
        %v3950 = vrot.slane %v3939, 4
        %v3951 = vrot.slane %v3941, 4
        %v3952 = vsel %vm930, %v3942, %v3943
        %vm3953 = vcmask 228352
        %v3954 = vsel %vm3953, %v3923, %v3952
        %v3955 = vsel %vm930, %v3943, %v3944
        %v3956 = vsel %vm3953, %v3925, %v3955
        %v3957 = vsel %vm930, %v3944, %v3945
        %v3958 = vsel %vm3953, %v3927, %v3957
        %v3959 = vsel %vm930, %v3945, %v3946
        %v3960 = vsel %vm3953, %v3929, %v3959
        %v3961 = vsel %vm930, %v3947, %v3948
        %v3962 = vsel %vm3953, %v3933, %v3961
        %v3963 = vsel %vm930, %v3948, %v3949
        %v3964 = vsel %vm3953, %v3935, %v3963
        %v3965 = vsel %vm930, %v3949, %v3950
        %v3966 = vsel %vm3953, %v3937, %v3965
        %v3967 = vsel %vm930, %v3950, %v3951
        %v3968 = vsel %vm3953, %v3939, %v3967
        %3977 = vst [vmem:[#allocation4 + $0x100] sm:$0xff] %v3954
        %3978 = vst [vmem:[#allocation4 + $0x108] sm:$0xff] %v3956
        %3979 = vst [vmem:[#allocation4 + $0x110] sm:$0xff] %v3958
        %3980 = vst [vmem:[#allocation4 + $0x118] sm:$0xff] %v3960
        %3981 = vst [vmem:[#allocation4 + $0x120] sm:$0xff] %v3962
        %3982 = vst [vmem:[#allocation4 + $0x128] sm:$0xff] %v3964
        %3983 = vst [vmem:[#allocation4 + $0x130] sm:$0xff] %v3966
        %3984 = vst [vmem:[#allocation4 + $0x138] sm:$0xff] %v3968
        %v3985 = vld [vmem:[#allocation5] sm:$0xff]
        %v3986 = vld [vmem:[#allocation5 + $0x8] sm:$0xff]
        %v3987 = vld [vmem:[#allocation5 + $0x10] sm:$0xff]
        %v3988 = vld [vmem:[#allocation5 + $0x18] sm:$0xff]
        %v3989 = vld [vmem:[#allocation5 + $0x20] sm:$0xff]
        %v3990 = vld [vmem:[#allocation5 + $0x28] sm:$0xff]
        %v3991 = vld [vmem:[#allocation5 + $0x30] sm:$0xff]
        %v3992 = vld [vmem:[#allocation5 + $0x38] sm:$0xff]
        %v3993 = vld [vmem:[#allocation5 + $0x40] sm:$0xff]
        %v3994 = vld [vmem:[#allocation5 + $0x48] sm:$0xff]
        %v3995 = vld [vmem:[#allocation5 + $0x50] sm:$0xff]
        %v3996 = vld [vmem:[#allocation5 + $0x58] sm:$0xff]
        %v3997 = vld [vmem:[#allocation5 + $0x60] sm:$0xff]
        %v3998 = vld [vmem:[#allocation5 + $0x68] sm:$0xff]
        %v3999 = vld [vmem:[#allocation5 + $0x70] sm:$0xff]
        %v4000 = vld [vmem:[#allocation5 + $0x78] sm:$0xff]
        %v4001 = vld [vmem:[#allocation5 + $0x80] sm:$0xff]
        %v4002 = vld [vmem:[#allocation5 + $0x88] sm:$0xff]
        %v4003 = vld [vmem:[#allocation5 + $0x90] sm:$0xff]
        %v4004 = vld [vmem:[#allocation5 + $0x98] sm:$0xff]
        %v4005 = vld [vmem:[#allocation5 + $0xa0] sm:$0xff]
        %v4006 = vld [vmem:[#allocation5 + $0xa8] sm:$0xff]
        %v4007 = vld [vmem:[#allocation5 + $0xb0] sm:$0xff]
        %v4008 = vld [vmem:[#allocation5 + $0xb8] sm:$0xff]
        %v4009 = vld [vmem:[#allocation5 + $0xc0] sm:$0xff]
        %v4010 = vld [vmem:[#allocation5 + $0xc8] sm:$0xff]
        %v4011 = vld [vmem:[#allocation5 + $0xd0] sm:$0xff]
        %v4012 = vld [vmem:[#allocation5 + $0xd8] sm:$0xff]
        %v4013 = vld [vmem:[#allocation5 + $0xe0] sm:$0xff]
        %v4014 = vld [vmem:[#allocation5 + $0xe8] sm:$0xff]
        %v4015 = vld [vmem:[#allocation5 + $0xf0] sm:$0xff]
        %v4016 = vld [vmem:[#allocation5 + $0xf8] sm:$0xff]
        %s4017 = scalar_lea.vmem [#allocation8], 48
        %v4018 = vld [vmem:[%s4017] sm:$0xf]
        %v4019 = vld [vmem:[%s4017 + $0x4] sm:$0xf]
        %v4020 = vld [vmem:[%s4017 + $0x8] sm:$0xf]
        %v4021 = vld [vmem:[%s4017 + $0xc] sm:$0xf]
        %v4022 = vld [vmem:[#allocation4] sm:$0xff]
        %v4023 = vld [vmem:[#allocation4 + $0x8] sm:$0xff]
        %v4024 = vld [vmem:[#allocation4 + $0x10] sm:$0xff]
        %v4025 = vld [vmem:[#allocation4 + $0x18] sm:$0xff]
        %v4026 = vld [vmem:[#allocation4 + $0x20] sm:$0xff]
        %v4027 = vld [vmem:[#allocation4 + $0x28] sm:$0xff]
        %v4028 = vld [vmem:[#allocation4 + $0x30] sm:$0xff]
        %v4029 = vld [vmem:[#allocation4 + $0x38] sm:$0xff]
        %v4030 = vld [vmem:[#allocation4 + $0x40] sm:$0xff]
        %v4031 = vld [vmem:[#allocation4 + $0x48] sm:$0xff]
        %v4032 = vld [vmem:[#allocation4 + $0x50] sm:$0xff]
        %v4033 = vld [vmem:[#allocation4 + $0x58] sm:$0xff]
        %v4034 = vld [vmem:[#allocation4 + $0x60] sm:$0xff]
        %v4035 = vld [vmem:[#allocation4 + $0x68] sm:$0xff]
        %v4036 = vld [vmem:[#allocation4 + $0x70] sm:$0xff]
        %v4037 = vld [vmem:[#allocation4 + $0x78] sm:$0xff]
        %v4038 = vld [vmem:[#allocation4 + $0x80] sm:$0xff]
        %v4039 = vld [vmem:[#allocation4 + $0x88] sm:$0xff]
        %v4040 = vld [vmem:[#allocation4 + $0x90] sm:$0xff]
        %v4041 = vld [vmem:[#allocation4 + $0x98] sm:$0xff]
        %v4042 = vld [vmem:[#allocation4 + $0xa0] sm:$0xff]
        %v4043 = vld [vmem:[#allocation4 + $0xa8] sm:$0xff]
        %v4044 = vld [vmem:[#allocation4 + $0xb0] sm:$0xff]
        %v4045 = vld [vmem:[#allocation4 + $0xb8] sm:$0xff]
        %v4046 = vld [vmem:[#allocation4 + $0xc0] sm:$0xff]
        %v4047 = vld [vmem:[#allocation4 + $0xc8] sm:$0xff]
        %v4048 = vld [vmem:[#allocation4 + $0xd0] sm:$0xff]
        %v4049 = vld [vmem:[#allocation4 + $0xd8] sm:$0xff]
        %v4050 = vld [vmem:[#allocation4 + $0xe0] sm:$0xff]
        %v4051 = vld [vmem:[#allocation4 + $0xe8] sm:$0xff]
        %v4052 = vld [vmem:[#allocation4 + $0xf0] sm:$0xff]
        %v4053 = vld [vmem:[#allocation4 + $0xf8] sm:$0xff]
        %v4054 = vld [vmem:[#allocation4 + $0x100] sm:$0xff]
        %v4055 = vld [vmem:[#allocation4 + $0x108] sm:$0xff]
        %v4056 = vld [vmem:[#allocation4 + $0x110] sm:$0xff]
        %v4057 = vld [vmem:[#allocation4 + $0x118] sm:$0xff]
        %v4058 = vld [vmem:[#allocation4 + $0x120] sm:$0xff]
        %v4059 = vld [vmem:[#allocation4 + $0x128] sm:$0xff]
        %v4060 = vld [vmem:[#allocation4 + $0x130] sm:$0xff]
        %v4061 = vld [vmem:[#allocation4 + $0x138] sm:$0xff]
        %v4066 = vunpack.c.l.b16 %v4018
        %v4067 = vunpack.c.l.b16 %v4019
        %v4068 = vunpack.c.l.b16 %v4020
        %v4069 = vunpack.c.l.b16 %v4021
        %v4070 = vpack.c.b16 %v4067, %v4066
        %v4071 = vpack.c.b16 %v4069, %v4068
        %v4112 = vunpack.c.l.b16 %v4022
        %v4113 = vunpack.c.h.b16 %v4022
        %v4114 = vunpack.c.l.b16 %v4023
        %v4115 = vunpack.c.h.b16 %v4023
        %v4116 = vunpack.c.l.b16 %v4024
        %v4117 = vunpack.c.h.b16 %v4024
        %v4118 = vunpack.c.l.b16 %v4025
        %v4119 = vunpack.c.h.b16 %v4025
        %v4120 = vunpack.c.l.b16 %v4026
        %v4121 = vunpack.c.h.b16 %v4026
        %v4122 = vunpack.c.l.b16 %v4027
        %v4123 = vunpack.c.h.b16 %v4027
        %v4124 = vunpack.c.l.b16 %v4028
        %v4125 = vunpack.c.h.b16 %v4028
        %v4126 = vunpack.c.l.b16 %v4029
        %v4127 = vunpack.c.h.b16 %v4029
        %v4128 = vunpack.c.l.b16 %v4030
        %v4129 = vunpack.c.h.b16 %v4030
        %v4130 = vunpack.c.l.b16 %v4031
        %v4131 = vunpack.c.h.b16 %v4031
        %v4132 = vunpack.c.l.b16 %v4032
        %v4133 = vunpack.c.h.b16 %v4032
        %v4134 = vunpack.c.l.b16 %v4033
        %v4135 = vunpack.c.h.b16 %v4033
        %v4136 = vunpack.c.l.b16 %v4034
        %v4137 = vunpack.c.h.b16 %v4034
        %v4138 = vunpack.c.l.b16 %v4035
        %v4139 = vunpack.c.h.b16 %v4035
        %v4140 = vunpack.c.l.b16 %v4036
        %v4141 = vunpack.c.h.b16 %v4036
        %v4142 = vunpack.c.l.b16 %v4037
        %v4143 = vunpack.c.h.b16 %v4037
        %v4144 = vunpack.c.l.b16 %v4038
        %v4145 = vunpack.c.h.b16 %v4038
        %v4146 = vunpack.c.l.b16 %v4039
        %v4147 = vunpack.c.h.b16 %v4039
        %v4148 = vunpack.c.l.b16 %v4040
        %v4149 = vunpack.c.h.b16 %v4040
        %v4150 = vunpack.c.l.b16 %v4041
        %v4151 = vunpack.c.h.b16 %v4041
        %v4152 = vunpack.c.l.b16 %v4042
        %v4153 = vunpack.c.h.b16 %v4042
        %v4154 = vunpack.c.l.b16 %v4043
        %v4155 = vunpack.c.h.b16 %v4043
        %v4156 = vunpack.c.l.b16 %v4044
        %v4157 = vunpack.c.h.b16 %v4044
        %v4158 = vunpack.c.l.b16 %v4045
        %v4159 = vunpack.c.h.b16 %v4045
        %v4160 = vunpack.c.l.b16 %v4046
        %v4161 = vunpack.c.h.b16 %v4046
        %v4162 = vunpack.c.l.b16 %v4047
        %v4163 = vunpack.c.h.b16 %v4047
        %v4164 = vunpack.c.l.b16 %v4048
        %v4165 = vunpack.c.h.b16 %v4048
        %v4166 = vunpack.c.l.b16 %v4049
        %v4167 = vunpack.c.h.b16 %v4049
        %v4168 = vunpack.c.l.b16 %v4050
        %v4169 = vunpack.c.h.b16 %v4050
        %v4170 = vunpack.c.l.b16 %v4051
        %v4171 = vunpack.c.h.b16 %v4051
        %v4172 = vunpack.c.l.b16 %v4052
        %v4173 = vunpack.c.h.b16 %v4052
        %v4174 = vunpack.c.l.b16 %v4053
        %v4175 = vunpack.c.h.b16 %v4053
        %v4176 = vunpack.c.l.b16 %v4054
        %v4177 = vunpack.c.h.b16 %v4054
        %v4178 = vunpack.c.l.b16 %v4055
        %v4179 = vunpack.c.h.b16 %v4055
        %v4180 = vunpack.c.l.b16 %v4056
        %v4181 = vunpack.c.h.b16 %v4056
        %v4182 = vunpack.c.l.b16 %v4057
        %v4183 = vunpack.c.h.b16 %v4057
        %v4184 = vunpack.c.l.b16 %v4058
        %v4185 = vunpack.c.h.b16 %v4058
        %v4186 = vunpack.c.l.b16 %v4059
        %v4187 = vunpack.c.h.b16 %v4059
        %v4188 = vunpack.c.l.b16 %v4060
        %v4189 = vunpack.c.h.b16 %v4060
        %v4190 = vunpack.c.l.b16 %v4061
        %v4191 = vunpack.c.h.b16 %v4061
        %v4192 = vpack.c.b16 %v4120, %v4112
        %v4193 = vpack.c.b16 %v4121, %v4113
        %v4194 = vpack.c.b16 %v4122, %v4114
        %v4195 = vpack.c.b16 %v4123, %v4115
        %v4196 = vpack.c.b16 %v4124, %v4116
        %v4197 = vpack.c.b16 %v4125, %v4117
        %v4198 = vpack.c.b16 %v4126, %v4118
        %v4199 = vpack.c.b16 %v4127, %v4119
        %v4200 = vpack.c.b16 %v4136, %v4128
        %v4201 = vpack.c.b16 %v4137, %v4129
        %v4202 = vpack.c.b16 %v4138, %v4130
        %v4203 = vpack.c.b16 %v4139, %v4131
        %v4204 = vpack.c.b16 %v4140, %v4132
        %v4205 = vpack.c.b16 %v4141, %v4133
        %v4206 = vpack.c.b16 %v4142, %v4134
        %v4207 = vpack.c.b16 %v4143, %v4135
        %v4208 = vpack.c.b16 %v4152, %v4144
        %v4209 = vpack.c.b16 %v4153, %v4145
        %v4210 = vpack.c.b16 %v4154, %v4146
        %v4211 = vpack.c.b16 %v4155, %v4147
        %v4212 = vpack.c.b16 %v4156, %v4148
        %v4213 = vpack.c.b16 %v4157, %v4149
        %v4214 = vpack.c.b16 %v4158, %v4150
        %v4215 = vpack.c.b16 %v4159, %v4151
        %v4216 = vpack.c.b16 %v4168, %v4160
        %v4217 = vpack.c.b16 %v4169, %v4161
        %v4218 = vpack.c.b16 %v4170, %v4162
        %v4219 = vpack.c.b16 %v4171, %v4163
        %v4220 = vpack.c.b16 %v4172, %v4164
        %v4221 = vpack.c.b16 %v4173, %v4165
        %v4222 = vpack.c.b16 %v4174, %v4166
        %v4223 = vpack.c.b16 %v4175, %v4167
        %v4224 = vpack.c.b16 %v4184, %v4176
        %v4225 = vpack.c.b16 %v4185, %v4177
        %v4226 = vpack.c.b16 %v4186, %v4178
        %v4227 = vpack.c.b16 %v4187, %v4179
        %v4228 = vpack.c.b16 %v4188, %v4180
        %v4229 = vpack.c.b16 %v4189, %v4181
        %v4230 = vpack.c.b16 %v4190, %v4182
        %v4231 = vpack.c.b16 %v4191, %v4183
        %v4273 = vsel %vm1499, %v4070, 0
        %v4276 = vsel %vm1499, %v4071, 0
        %4278 = vmatpush.bf16.msra.mxu0 0
        %4279 = vmatpush.bf16.msra.mxu0 0
        %4280 = vmatpush.bf16.msra.mxu0 0
        %4281 = vmatpush.bf16.msra.mxu0 %v4224
        %4282 = vmatpush.bf16.msra.mxu0 %v4216
        %4283 = vmatpush.bf16.msra.mxu0 %v4208
        %4284 = vmatpush.bf16.msra.mxu0 %v4200
        %4285 = vmatpush.bf16.msra.mxu0 %v4192
        %4286 = vmatmul.bf16.gmra.mxu0 %v4273
        %v4287 = vpop.f32.mrf.mxu0
        %v4288 = vadd.f32 0.0, %v4287
        %v4289 = vpop.f32.mrf.mxu0
        %v4290 = vadd.f32 0.0, %v4289
        %4291 = vmatmul.bf16.gmra.mxu0 %v4276
        %v4292 = vpop.f32.mrf.mxu0
        %v4293 = vadd.f32 0.0, %v4292
        %v4294 = vpop.f32.mrf.mxu0
        %v4295 = vadd.f32 0.0, %v4294
        %4296 = vdwg.mxu0
        %4297 = vmatpush.bf16.msra.mxu0 0
        %4298 = vmatpush.bf16.msra.mxu0 0
        %4299 = vmatpush.bf16.msra.mxu0 0
        %4300 = vmatpush.bf16.msra.mxu0 %v4225
        %4301 = vmatpush.bf16.msra.mxu0 %v4217
        %4302 = vmatpush.bf16.msra.mxu0 %v4209
        %4303 = vmatpush.bf16.msra.mxu0 %v4201
        %4304 = vmatpush.bf16.msra.mxu0 %v4193
        %4305 = vmatmul.bf16.gmra.mxu0 %v4273
        %v4306 = vpop.f32.mrf.mxu0
        %v4307 = vadd.f32 0.0, %v4306
        %v4308 = vpop.f32.mrf.mxu0
        %v4309 = vadd.f32 0.0, %v4308
        %4310 = vmatmul.bf16.gmra.mxu0 %v4276
        %v4311 = vpop.f32.mrf.mxu0
        %v4312 = vadd.f32 0.0, %v4311
        %v4313 = vpop.f32.mrf.mxu0
        %v4314 = vadd.f32 0.0, %v4313
        %4315 = vdwg.mxu0
        %4316 = vmatpush.bf16.msra.mxu0 0
        %4317 = vmatpush.bf16.msra.mxu0 0
        %4318 = vmatpush.bf16.msra.mxu0 0
        %4319 = vmatpush.bf16.msra.mxu0 %v4226
        %4320 = vmatpush.bf16.msra.mxu0 %v4218
        %4321 = vmatpush.bf16.msra.mxu0 %v4210
        %4322 = vmatpush.bf16.msra.mxu0 %v4202
        %4323 = vmatpush.bf16.msra.mxu0 %v4194
        %4324 = vmatmul.bf16.gmra.mxu0 %v4273
        %v4325 = vpop.f32.mrf.mxu0
        %v4326 = vadd.f32 0.0, %v4325
        %v4327 = vpop.f32.mrf.mxu0
        %v4328 = vadd.f32 0.0, %v4327
        %4329 = vmatmul.bf16.gmra.mxu0 %v4276
        %v4330 = vpop.f32.mrf.mxu0
        %v4331 = vadd.f32 0.0, %v4330
        %v4332 = vpop.f32.mrf.mxu0
        %v4333 = vadd.f32 0.0, %v4332
        %4334 = vdwg.mxu0
        %4335 = vmatpush.bf16.msra.mxu0 0
        %4336 = vmatpush.bf16.msra.mxu0 0
        %4337 = vmatpush.bf16.msra.mxu0 0
        %4338 = vmatpush.bf16.msra.mxu0 %v4227
        %4339 = vmatpush.bf16.msra.mxu0 %v4219
        %4340 = vmatpush.bf16.msra.mxu0 %v4211
        %4341 = vmatpush.bf16.msra.mxu0 %v4203
        %4342 = vmatpush.bf16.msra.mxu0 %v4195
        %4343 = vmatmul.bf16.gmra.mxu0 %v4273
        %v4344 = vpop.f32.mrf.mxu0
        %v4345 = vadd.f32 0.0, %v4344
        %v4346 = vpop.f32.mrf.mxu0
        %v4347 = vadd.f32 0.0, %v4346
        %4348 = vmatmul.bf16.gmra.mxu0 %v4276
        %v4349 = vpop.f32.mrf.mxu0
        %v4350 = vadd.f32 0.0, %v4349
        %v4351 = vpop.f32.mrf.mxu0
        %v4352 = vadd.f32 0.0, %v4351
        %4353 = vdwg.mxu0
        %4354 = vmatpush.bf16.msra.mxu0 0
        %4355 = vmatpush.bf16.msra.mxu0 0
        %4356 = vmatpush.bf16.msra.mxu0 0
        %4357 = vmatpush.bf16.msra.mxu0 %v4228
        %4358 = vmatpush.bf16.msra.mxu0 %v4220
        %4359 = vmatpush.bf16.msra.mxu0 %v4212
        %4360 = vmatpush.bf16.msra.mxu0 %v4204
        %4361 = vmatpush.bf16.msra.mxu0 %v4196
        %4362 = vmatmul.bf16.gmra.mxu0 %v4273
        %v4363 = vpop.f32.mrf.mxu0
        %v4364 = vadd.f32 0.0, %v4363
        %v4365 = vpop.f32.mrf.mxu0
        %v4366 = vadd.f32 0.0, %v4365
        %4367 = vmatmul.bf16.gmra.mxu0 %v4276
        %v4368 = vpop.f32.mrf.mxu0
        %v4369 = vadd.f32 0.0, %v4368
        %v4370 = vpop.f32.mrf.mxu0
        %v4371 = vadd.f32 0.0, %v4370
        %4372 = vdwg.mxu0
        %4373 = vmatpush.bf16.msra.mxu0 0
        %4374 = vmatpush.bf16.msra.mxu0 0
        %4375 = vmatpush.bf16.msra.mxu0 0
        %4376 = vmatpush.bf16.msra.mxu0 %v4229
        %4377 = vmatpush.bf16.msra.mxu0 %v4221
        %4378 = vmatpush.bf16.msra.mxu0 %v4213
        %4379 = vmatpush.bf16.msra.mxu0 %v4205
        %4380 = vmatpush.bf16.msra.mxu0 %v4197
        %4381 = vmatmul.bf16.gmra.mxu0 %v4273
        %v4382 = vpop.f32.mrf.mxu0
        %v4383 = vadd.f32 0.0, %v4382
        %v4384 = vpop.f32.mrf.mxu0
        %v4385 = vadd.f32 0.0, %v4384
        %4386 = vmatmul.bf16.gmra.mxu0 %v4276
        %v4387 = vpop.f32.mrf.mxu0
        %v4388 = vadd.f32 0.0, %v4387
        %v4389 = vpop.f32.mrf.mxu0
        %v4390 = vadd.f32 0.0, %v4389
        %4391 = vdwg.mxu0
        %4392 = vmatpush.bf16.msra.mxu0 0
        %4393 = vmatpush.bf16.msra.mxu0 0
        %4394 = vmatpush.bf16.msra.mxu0 0
        %4395 = vmatpush.bf16.msra.mxu0 %v4230
        %4396 = vmatpush.bf16.msra.mxu0 %v4222
        %4397 = vmatpush.bf16.msra.mxu0 %v4214
        %4398 = vmatpush.bf16.msra.mxu0 %v4206
        %4399 = vmatpush.bf16.msra.mxu0 %v4198
        %4400 = vmatmul.bf16.gmra.mxu0 %v4273
        %v4401 = vpop.f32.mrf.mxu0
        %v4402 = vadd.f32 0.0, %v4401
        %v4403 = vpop.f32.mrf.mxu0
        %v4404 = vadd.f32 0.0, %v4403
        %4405 = vmatmul.bf16.gmra.mxu0 %v4276
        %v4406 = vpop.f32.mrf.mxu0
        %v4407 = vadd.f32 0.0, %v4406
        %v4408 = vpop.f32.mrf.mxu0
        %v4409 = vadd.f32 0.0, %v4408
        %4410 = vdwg.mxu0
        %4411 = vmatpush.bf16.msra.mxu0 0
        %4412 = vmatpush.bf16.msra.mxu0 0
        %4413 = vmatpush.bf16.msra.mxu0 0
        %4414 = vmatpush.bf16.msra.mxu0 %v4231
        %4415 = vmatpush.bf16.msra.mxu0 %v4223
        %4416 = vmatpush.bf16.msra.mxu0 %v4215
        %4417 = vmatpush.bf16.msra.mxu0 %v4207
        %4418 = vmatpush.bf16.msra.mxu0 %v4199
        %4419 = vmatmul.bf16.gmra.mxu0 %v4273
        %v4420 = vpop.f32.mrf.mxu0
        %v4421 = vadd.f32 0.0, %v4420
        %v4422 = vpop.f32.mrf.mxu0
        %v4423 = vadd.f32 0.0, %v4422
        %4424 = vmatmul.bf16.gmra.mxu0 %v4276
        %v4425 = vpop.f32.mrf.mxu0
        %v4426 = vadd.f32 0.0, %v4425
        %v4427 = vpop.f32.mrf.mxu0
        %v4428 = vadd.f32 0.0, %v4427
        %4429 = vdwg.mxu0
        %v4430 = vadd.f32 %v3985, %v4288
        %v4431 = vadd.f32 %v3986, %v4307
        %v4432 = vadd.f32 %v3987, %v4326
        %v4433 = vadd.f32 %v3988, %v4345
        %v4434 = vadd.f32 %v3989, %v4364
        %v4435 = vadd.f32 %v3990, %v4383
        %v4436 = vadd.f32 %v3991, %v4402
        %v4437 = vadd.f32 %v3992, %v4421
        %v4438 = vadd.f32 %v3993, %v4290
        %v4439 = vadd.f32 %v3994, %v4309
        %v4440 = vadd.f32 %v3995, %v4328
        %v4441 = vadd.f32 %v3996, %v4347
        %v4442 = vadd.f32 %v3997, %v4366
        %v4443 = vadd.f32 %v3998, %v4385
        %v4444 = vadd.f32 %v3999, %v4404
        %v4445 = vadd.f32 %v4000, %v4423
        %v4446 = vadd.f32 %v4001, %v4293
        %v4447 = vadd.f32 %v4002, %v4312
        %v4448 = vadd.f32 %v4003, %v4331
        %v4449 = vadd.f32 %v4004, %v4350
        %v4450 = vadd.f32 %v4005, %v4369
        %v4451 = vadd.f32 %v4006, %v4388
        %v4452 = vadd.f32 %v4007, %v4407
        %v4453 = vadd.f32 %v4008, %v4426
        %v4454 = vadd.f32 %v4009, %v4295
        %v4455 = vadd.f32 %v4010, %v4314
        %v4456 = vadd.f32 %v4011, %v4333
        %v4457 = vadd.f32 %v4012, %v4352
        %v4458 = vadd.f32 %v4013, %v4371
        %v4459 = vadd.f32 %v4014, %v4390
        %v4460 = vadd.f32 %v4015, %v4409
        %v4461 = vadd.f32 %v4016, %v4428
        %4462 = vst [vmem:[#allocation5] sm:$0xff] %v4430
        %4463 = vst [vmem:[#allocation5 + $0x8] sm:$0xff] %v4431
        %4464 = vst [vmem:[#allocation5 + $0x10] sm:$0xff] %v4432
        %4465 = vst [vmem:[#allocation5 + $0x18] sm:$0xff] %v4433
        %4466 = vst [vmem:[#allocation5 + $0x20] sm:$0xff] %v4434
        %4467 = vst [vmem:[#allocation5 + $0x28] sm:$0xff] %v4435
        %4468 = vst [vmem:[#allocation5 + $0x30] sm:$0xff] %v4436
        %4469 = vst [vmem:[#allocation5 + $0x38] sm:$0xff] %v4437
        %4470 = vst [vmem:[#allocation5 + $0x40] sm:$0xff] %v4438
        %4471 = vst [vmem:[#allocation5 + $0x48] sm:$0xff] %v4439
        %4472 = vst [vmem:[#allocation5 + $0x50] sm:$0xff] %v4440
        %4473 = vst [vmem:[#allocation5 + $0x58] sm:$0xff] %v4441
        %4474 = vst [vmem:[#allocation5 + $0x60] sm:$0xff] %v4442
        %4475 = vst [vmem:[#allocation5 + $0x68] sm:$0xff] %v4443
        %4476 = vst [vmem:[#allocation5 + $0x70] sm:$0xff] %v4444
        %4477 = vst [vmem:[#allocation5 + $0x78] sm:$0xff] %v4445
        %4478 = vst [vmem:[#allocation5 + $0x80] sm:$0xff] %v4446
        %4479 = vst [vmem:[#allocation5 + $0x88] sm:$0xff] %v4447
        %4480 = vst [vmem:[#allocation5 + $0x90] sm:$0xff] %v4448
        %4481 = vst [vmem:[#allocation5 + $0x98] sm:$0xff] %v4449
        %4482 = vst [vmem:[#allocation5 + $0xa0] sm:$0xff] %v4450
        %4483 = vst [vmem:[#allocation5 + $0xa8] sm:$0xff] %v4451
        %4484 = vst [vmem:[#allocation5 + $0xb0] sm:$0xff] %v4452
        %4485 = vst [vmem:[#allocation5 + $0xb8] sm:$0xff] %v4453
        %4486 = vst [vmem:[#allocation5 + $0xc0] sm:$0xff] %v4454
        %4487 = vst [vmem:[#allocation5 + $0xc8] sm:$0xff] %v4455
        %4488 = vst [vmem:[#allocation5 + $0xd0] sm:$0xff] %v4456
        %4489 = vst [vmem:[#allocation5 + $0xd8] sm:$0xff] %v4457
        %4490 = vst [vmem:[#allocation5 + $0xe0] sm:$0xff] %v4458
        %4491 = vst [vmem:[#allocation5 + $0xe8] sm:$0xff] %v4459
        %4492 = vst [vmem:[#allocation5 + $0xf0] sm:$0xff] %v4460
        %4493 = vst [vmem:[#allocation5 + $0xf8] sm:$0xff] %v4461
        %v4494 = vld [vmem:[#allocation3 + $0x4] sm:$0xff]
        %v4495 = vld [vmem:[#allocation3 + $0xc] sm:$0xff]
        %v4496 = vld [vmem:[#allocation3 + $0x14] sm:$0xff]
        %v4497 = vld [vmem:[#allocation3 + $0x1c] sm:$0xff]
        %v4498 = vld [vmem:[#allocation3 + $0x2c] sm:$0xff]
        %v4499 = vld [vmem:[#allocation3 + $0x34] sm:$0xff]
        %v4500 = vld [vmem:[#allocation3 + $0x3c] sm:$0xff]
        %v4501 = vld [vmem:[#allocation3 + $0x44] sm:$0xff]
        %4502 = vst [vmem:[#allocation4] sm:$0xff] %v4494
        %4503 = vst [vmem:[#allocation4 + $0x8] sm:$0xff] %v4495
        %4504 = vst [vmem:[#allocation4 + $0x10] sm:$0xff] %v4496
        %4505 = vst [vmem:[#allocation4 + $0x18] sm:$0xff] %v4497
        %4506 = vst [vmem:[#allocation4 + $0x20] sm:$0xff] %v4498
        %4507 = vst [vmem:[#allocation4 + $0x28] sm:$0xff] %v4499
        %4508 = vst [vmem:[#allocation4 + $0x30] sm:$0xff] %v4500
        %4509 = vst [vmem:[#allocation4 + $0x38] sm:$0xff] %v4501
        %v4510 = vld [vmem:[#allocation3 + $0x4] sm:$0xff]
        %v4511 = vld [vmem:[#allocation3 + $0xc] sm:$0xff]
        %v4512 = vld [vmem:[#allocation3 + $0x14] sm:$0xff]
        %v4513 = vld [vmem:[#allocation3 + $0x1c] sm:$0xff]
        %v4514 = vld [vmem:[#allocation3 + $0x24] sm:$0xf]
        %v4515 = vld [vmem:[#allocation3 + $0x2c] sm:$0xff]
        %v4516 = vld [vmem:[#allocation3 + $0x34] sm:$0xff]
        %v4517 = vld [vmem:[#allocation3 + $0x3c] sm:$0xff]
        %v4518 = vld [vmem:[#allocation3 + $0x44] sm:$0xff]
        %v4519 = vld [vmem:[#allocation3 + $0x4c] sm:$0xf]
        %4530 = vrot.lane.b32.xlu0 %v4510, 127
        %v4531 = vpop.permute.xlu0 %4530
        %4532 = vrot.lane.b32.xlu0 %v4511, 127
        %v4533 = vpop.permute.xlu0 %4532
        %4534 = vrot.lane.b32.xlu0 %v4512, 127
        %v4535 = vpop.permute.xlu0 %4534
        %4536 = vrot.lane.b32.xlu0 %v4513, 127
        %v4537 = vpop.permute.xlu0 %4536
        %4538 = vrot.lane.b32.xlu0 %v4514, 127
        %v4539 = vpop.permute.xlu0 %4538
        %4540 = vrot.lane.b32.xlu0 %v4515, 127
        %v4541 = vpop.permute.xlu0 %4540
        %4542 = vrot.lane.b32.xlu0 %v4516, 127
        %v4543 = vpop.permute.xlu0 %4542
        %4544 = vrot.lane.b32.xlu0 %v4517, 127
        %v4545 = vpop.permute.xlu0 %4544
        %4546 = vrot.lane.b32.xlu0 %v4518, 127
        %v4547 = vpop.permute.xlu0 %4546
        %4548 = vrot.lane.b32.xlu0 %v4519, 127
        %v4549 = vpop.permute.xlu0 %4548
        %v4550 = vrot.slane %v4531, 4
        %v4551 = vrot.slane %v4533, 4
        %v4552 = vrot.slane %v4535, 4
        %v4553 = vrot.slane %v4537, 4
        %v4554 = vrot.slane %v4539, 4
        %v4555 = vrot.slane %v4541, 4
        %v4556 = vrot.slane %v4543, 4
        %v4557 = vrot.slane %v4545, 4
        %v4558 = vrot.slane %v4547, 4
        %v4559 = vrot.slane %v4549, 4
        %v4560 = vsel %vm930, %v4550, %v4551
        %v4561 = vsel %vm932, %v4531, %v4560
        %v4562 = vsel %vm930, %v4551, %v4552
        %v4563 = vsel %vm932, %v4533, %v4562
        %v4564 = vsel %vm930, %v4552, %v4553
        %v4565 = vsel %vm932, %v4535, %v4564
        %v4566 = vsel %vm930, %v4553, %v4554
        %v4567 = vsel %vm932, %v4537, %v4566
        %v4568 = vsel %vm930, %v4555, %v4556
        %v4569 = vsel %vm932, %v4541, %v4568
        %v4570 = vsel %vm930, %v4556, %v4557
        %v4571 = vsel %vm932, %v4543, %v4570
        %v4572 = vsel %vm930, %v4557, %v4558
        %v4573 = vsel %vm932, %v4545, %v4572
        %v4574 = vsel %vm930, %v4558, %v4559
        %v4575 = vsel %vm932, %v4547, %v4574
        %4584 = vst [vmem:[#allocation4 + $0x40] sm:$0xff] %v4561
        %4585 = vst [vmem:[#allocation4 + $0x48] sm:$0xff] %v4563
        %4586 = vst [vmem:[#allocation4 + $0x50] sm:$0xff] %v4565
        %4587 = vst [vmem:[#allocation4 + $0x58] sm:$0xff] %v4567
        %4588 = vst [vmem:[#allocation4 + $0x60] sm:$0xff] %v4569
        %4589 = vst [vmem:[#allocation4 + $0x68] sm:$0xff] %v4571
        %4590 = vst [vmem:[#allocation4 + $0x70] sm:$0xff] %v4573
        %4591 = vst [vmem:[#allocation4 + $0x78] sm:$0xff] %v4575
        %v4592 = vld [vmem:[#allocation3 + $0x4] sm:$0xff]
        %v4593 = vld [vmem:[#allocation3 + $0xc] sm:$0xff]
        %v4594 = vld [vmem:[#allocation3 + $0x14] sm:$0xff]
        %v4595 = vld [vmem:[#allocation3 + $0x1c] sm:$0xff]
        %v4596 = vld [vmem:[#allocation3 + $0x24] sm:$0xf]
        %v4597 = vld [vmem:[#allocation3 + $0x2c] sm:$0xff]
        %v4598 = vld [vmem:[#allocation3 + $0x34] sm:$0xff]
        %v4599 = vld [vmem:[#allocation3 + $0x3c] sm:$0xff]
        %v4600 = vld [vmem:[#allocation3 + $0x44] sm:$0xff]
        %v4601 = vld [vmem:[#allocation3 + $0x4c] sm:$0xf]
        %4612 = vrot.lane.b32.xlu0 %v4592, 126
        %v4613 = vpop.permute.xlu0 %4612
        %4614 = vrot.lane.b32.xlu0 %v4593, 126
        %v4615 = vpop.permute.xlu0 %4614
        %4616 = vrot.lane.b32.xlu0 %v4594, 126
        %v4617 = vpop.permute.xlu0 %4616
        %4618 = vrot.lane.b32.xlu0 %v4595, 126
        %v4619 = vpop.permute.xlu0 %4618
        %4620 = vrot.lane.b32.xlu0 %v4596, 126
        %v4621 = vpop.permute.xlu0 %4620
        %4622 = vrot.lane.b32.xlu0 %v4597, 126
        %v4623 = vpop.permute.xlu0 %4622
        %4624 = vrot.lane.b32.xlu0 %v4598, 126
        %v4625 = vpop.permute.xlu0 %4624
        %4626 = vrot.lane.b32.xlu0 %v4599, 126
        %v4627 = vpop.permute.xlu0 %4626
        %4628 = vrot.lane.b32.xlu0 %v4600, 126
        %v4629 = vpop.permute.xlu0 %4628
        %4630 = vrot.lane.b32.xlu0 %v4601, 126
        %v4631 = vpop.permute.xlu0 %4630
        %v4632 = vrot.slane %v4613, 4
        %v4633 = vrot.slane %v4615, 4
        %v4634 = vrot.slane %v4617, 4
        %v4635 = vrot.slane %v4619, 4
        %v4636 = vrot.slane %v4621, 4
        %v4637 = vrot.slane %v4623, 4
        %v4638 = vrot.slane %v4625, 4
        %v4639 = vrot.slane %v4627, 4
        %v4640 = vrot.slane %v4629, 4
        %v4641 = vrot.slane %v4631, 4
        %v4642 = vsel %vm930, %v4632, %v4633
        %v4643 = vsel %vm1015, %v4613, %v4642
        %v4644 = vsel %vm930, %v4633, %v4634
        %v4645 = vsel %vm1015, %v4615, %v4644
        %v4646 = vsel %vm930, %v4634, %v4635
        %v4647 = vsel %vm1015, %v4617, %v4646
        %v4648 = vsel %vm930, %v4635, %v4636
        %v4649 = vsel %vm1015, %v4619, %v4648
        %v4650 = vsel %vm930, %v4637, %v4638
        %v4651 = vsel %vm1015, %v4623, %v4650
        %v4652 = vsel %vm930, %v4638, %v4639
        %v4653 = vsel %vm1015, %v4625, %v4652
        %v4654 = vsel %vm930, %v4639, %v4640
        %v4655 = vsel %vm1015, %v4627, %v4654
        %v4656 = vsel %vm930, %v4640, %v4641
        %v4657 = vsel %vm1015, %v4629, %v4656
        %4666 = vst [vmem:[#allocation4 + $0x80] sm:$0xff] %v4643
        %4667 = vst [vmem:[#allocation4 + $0x88] sm:$0xff] %v4645
        %4668 = vst [vmem:[#allocation4 + $0x90] sm:$0xff] %v4647
        %4669 = vst [vmem:[#allocation4 + $0x98] sm:$0xff] %v4649
        %4670 = vst [vmem:[#allocation4 + $0xa0] sm:$0xff] %v4651
        %4671 = vst [vmem:[#allocation4 + $0xa8] sm:$0xff] %v4653
        %4672 = vst [vmem:[#allocation4 + $0xb0] sm:$0xff] %v4655
        %4673 = vst [vmem:[#allocation4 + $0xb8] sm:$0xff] %v4657
        %v4674 = vld [vmem:[#allocation3 + $0x4] sm:$0xff]
        %v4675 = vld [vmem:[#allocation3 + $0xc] sm:$0xff]
        %v4676 = vld [vmem:[#allocation3 + $0x14] sm:$0xff]
        %v4677 = vld [vmem:[#allocation3 + $0x1c] sm:$0xff]
        %v4678 = vld [vmem:[#allocation3 + $0x24] sm:$0xf]
        %v4679 = vld [vmem:[#allocation3 + $0x2c] sm:$0xff]
        %v4680 = vld [vmem:[#allocation3 + $0x34] sm:$0xff]
        %v4681 = vld [vmem:[#allocation3 + $0x3c] sm:$0xff]
        %v4682 = vld [vmem:[#allocation3 + $0x44] sm:$0xff]
        %v4683 = vld [vmem:[#allocation3 + $0x4c] sm:$0xf]
        %4694 = vrot.lane.b32.xlu0 %v4674, 125
        %v4695 = vpop.permute.xlu0 %4694
        %4696 = vrot.lane.b32.xlu0 %v4675, 125
        %v4697 = vpop.permute.xlu0 %4696
        %4698 = vrot.lane.b32.xlu0 %v4676, 125
        %v4699 = vpop.permute.xlu0 %4698
        %4700 = vrot.lane.b32.xlu0 %v4677, 125
        %v4701 = vpop.permute.xlu0 %4700
        %4702 = vrot.lane.b32.xlu0 %v4678, 125
        %v4703 = vpop.permute.xlu0 %4702
        %4704 = vrot.lane.b32.xlu0 %v4679, 125
        %v4705 = vpop.permute.xlu0 %4704
        %4706 = vrot.lane.b32.xlu0 %v4680, 125
        %v4707 = vpop.permute.xlu0 %4706
        %4708 = vrot.lane.b32.xlu0 %v4681, 125
        %v4709 = vpop.permute.xlu0 %4708
        %4710 = vrot.lane.b32.xlu0 %v4682, 125
        %v4711 = vpop.permute.xlu0 %4710
        %4712 = vrot.lane.b32.xlu0 %v4683, 125
        %v4713 = vpop.permute.xlu0 %4712
        %v4714 = vrot.slane %v4695, 4
        %v4715 = vrot.slane %v4697, 4
        %v4716 = vrot.slane %v4699, 4
        %v4717 = vrot.slane %v4701, 4
        %v4718 = vrot.slane %v4703, 4
        %v4719 = vrot.slane %v4705, 4
        %v4720 = vrot.slane %v4707, 4
        %v4721 = vrot.slane %v4709, 4
        %v4722 = vrot.slane %v4711, 4
        %v4723 = vrot.slane %v4713, 4
        %v4724 = vsel %vm930, %v4714, %v4715
        %v4725 = vsel %vm1098, %v4695, %v4724
        %v4726 = vsel %vm930, %v4715, %v4716
        %v4727 = vsel %vm1098, %v4697, %v4726
        %v4728 = vsel %vm930, %v4716, %v4717
        %v4729 = vsel %vm1098, %v4699, %v4728
        %v4730 = vsel %vm930, %v4717, %v4718
        %v4731 = vsel %vm1098, %v4701, %v4730
        %v4732 = vsel %vm930, %v4719, %v4720
        %v4733 = vsel %vm1098, %v4705, %v4732
        %v4734 = vsel %vm930, %v4720, %v4721
        %v4735 = vsel %vm1098, %v4707, %v4734
        %v4736 = vsel %vm930, %v4721, %v4722
        %v4737 = vsel %vm1098, %v4709, %v4736
        %v4738 = vsel %vm930, %v4722, %v4723
        %v4739 = vsel %vm1098, %v4711, %v4738
        %4748 = vst [vmem:[#allocation4 + $0xc0] sm:$0xff] %v4725
        %4749 = vst [vmem:[#allocation4 + $0xc8] sm:$0xff] %v4727
        %4750 = vst [vmem:[#allocation4 + $0xd0] sm:$0xff] %v4729
        %4751 = vst [vmem:[#allocation4 + $0xd8] sm:$0xff] %v4731
        %4752 = vst [vmem:[#allocation4 + $0xe0] sm:$0xff] %v4733
        %4753 = vst [vmem:[#allocation4 + $0xe8] sm:$0xff] %v4735
        %4754 = vst [vmem:[#allocation4 + $0xf0] sm:$0xff] %v4737
        %4755 = vst [vmem:[#allocation4 + $0xf8] sm:$0xff] %v4739
        %v4756 = vld [vmem:[#allocation3 + $0x4] sm:$0xff]
        %v4757 = vld [vmem:[#allocation3 + $0xc] sm:$0xff]
        %v4758 = vld [vmem:[#allocation3 + $0x14] sm:$0xff]
        %v4759 = vld [vmem:[#allocation3 + $0x1c] sm:$0xff]
        %v4760 = vld [vmem:[#allocation3 + $0x24] sm:$0xf]
        %v4761 = vld [vmem:[#allocation3 + $0x2c] sm:$0xff]
        %v4762 = vld [vmem:[#allocation3 + $0x34] sm:$0xff]
        %v4763 = vld [vmem:[#allocation3 + $0x3c] sm:$0xff]
        %v4764 = vld [vmem:[#allocation3 + $0x44] sm:$0xff]
        %v4765 = vld [vmem:[#allocation3 + $0x4c] sm:$0xf]
        %4776 = vrot.lane.b32.xlu0 %v4756, 124
        %v4777 = vpop.permute.xlu0 %4776
        %4778 = vrot.lane.b32.xlu0 %v4757, 124
        %v4779 = vpop.permute.xlu0 %4778
        %4780 = vrot.lane.b32.xlu0 %v4758, 124
        %v4781 = vpop.permute.xlu0 %4780
        %4782 = vrot.lane.b32.xlu0 %v4759, 124
        %v4783 = vpop.permute.xlu0 %4782
        %4784 = vrot.lane.b32.xlu0 %v4760, 124
        %v4785 = vpop.permute.xlu0 %4784
        %4786 = vrot.lane.b32.xlu0 %v4761, 124
        %v4787 = vpop.permute.xlu0 %4786
        %4788 = vrot.lane.b32.xlu0 %v4762, 124
        %v4789 = vpop.permute.xlu0 %4788
        %4790 = vrot.lane.b32.xlu0 %v4763, 124
        %v4791 = vpop.permute.xlu0 %4790
        %4792 = vrot.lane.b32.xlu0 %v4764, 124
        %v4793 = vpop.permute.xlu0 %4792
        %4794 = vrot.lane.b32.xlu0 %v4765, 124
        %v4795 = vpop.permute.xlu0 %4794
        %v4796 = vrot.slane %v4777, 4
        %v4797 = vrot.slane %v4779, 4
        %v4798 = vrot.slane %v4781, 4
        %v4799 = vrot.slane %v4783, 4
        %v4800 = vrot.slane %v4785, 4
        %v4801 = vrot.slane %v4787, 4
        %v4802 = vrot.slane %v4789, 4
        %v4803 = vrot.slane %v4791, 4
        %v4804 = vrot.slane %v4793, 4
        %v4805 = vrot.slane %v4795, 4
        %v4806 = vsel %vm930, %v4796, %v4797
        %v4807 = vsel %vm1181, %v4777, %v4806
        %v4808 = vsel %vm930, %v4797, %v4798
        %v4809 = vsel %vm1181, %v4779, %v4808
        %v4810 = vsel %vm930, %v4798, %v4799
        %v4811 = vsel %vm1181, %v4781, %v4810
        %v4812 = vsel %vm930, %v4799, %v4800
        %v4813 = vsel %vm1181, %v4783, %v4812
        %v4814 = vsel %vm930, %v4801, %v4802
        %v4815 = vsel %vm1181, %v4787, %v4814
        %v4816 = vsel %vm930, %v4802, %v4803
        %v4817 = vsel %vm1181, %v4789, %v4816
        %v4818 = vsel %vm930, %v4803, %v4804
        %v4819 = vsel %vm1181, %v4791, %v4818
        %v4820 = vsel %vm930, %v4804, %v4805
        %v4821 = vsel %vm1181, %v4793, %v4820
        %4830 = vst [vmem:[#allocation4 + $0x100] sm:$0xff] %v4807
        %4831 = vst [vmem:[#allocation4 + $0x108] sm:$0xff] %v4809
        %4832 = vst [vmem:[#allocation4 + $0x110] sm:$0xff] %v4811
        %4833 = vst [vmem:[#allocation4 + $0x118] sm:$0xff] %v4813
        %4834 = vst [vmem:[#allocation4 + $0x120] sm:$0xff] %v4815
        %4835 = vst [vmem:[#allocation4 + $0x128] sm:$0xff] %v4817
        %4836 = vst [vmem:[#allocation4 + $0x130] sm:$0xff] %v4819
        %4837 = vst [vmem:[#allocation4 + $0x138] sm:$0xff] %v4821
        %v4838 = vld [vmem:[#allocation5] sm:$0xff]
        %v4839 = vld [vmem:[#allocation5 + $0x8] sm:$0xff]
        %v4840 = vld [vmem:[#allocation5 + $0x10] sm:$0xff]
        %v4841 = vld [vmem:[#allocation5 + $0x18] sm:$0xff]
        %v4842 = vld [vmem:[#allocation5 + $0x20] sm:$0xff]
        %v4843 = vld [vmem:[#allocation5 + $0x28] sm:$0xff]
        %v4844 = vld [vmem:[#allocation5 + $0x30] sm:$0xff]
        %v4845 = vld [vmem:[#allocation5 + $0x38] sm:$0xff]
        %v4846 = vld [vmem:[#allocation5 + $0x40] sm:$0xff]
        %v4847 = vld [vmem:[#allocation5 + $0x48] sm:$0xff]
        %v4848 = vld [vmem:[#allocation5 + $0x50] sm:$0xff]
        %v4849 = vld [vmem:[#allocation5 + $0x58] sm:$0xff]
        %v4850 = vld [vmem:[#allocation5 + $0x60] sm:$0xff]
        %v4851 = vld [vmem:[#allocation5 + $0x68] sm:$0xff]
        %v4852 = vld [vmem:[#allocation5 + $0x70] sm:$0xff]
        %v4853 = vld [vmem:[#allocation5 + $0x78] sm:$0xff]
        %v4854 = vld [vmem:[#allocation5 + $0x80] sm:$0xff]
        %v4855 = vld [vmem:[#allocation5 + $0x88] sm:$0xff]
        %v4856 = vld [vmem:[#allocation5 + $0x90] sm:$0xff]
        %v4857 = vld [vmem:[#allocation5 + $0x98] sm:$0xff]
        %v4858 = vld [vmem:[#allocation5 + $0xa0] sm:$0xff]
        %v4859 = vld [vmem:[#allocation5 + $0xa8] sm:$0xff]
        %v4860 = vld [vmem:[#allocation5 + $0xb0] sm:$0xff]
        %v4861 = vld [vmem:[#allocation5 + $0xb8] sm:$0xff]
        %v4862 = vld [vmem:[#allocation5 + $0xc0] sm:$0xff]
        %v4863 = vld [vmem:[#allocation5 + $0xc8] sm:$0xff]
        %v4864 = vld [vmem:[#allocation5 + $0xd0] sm:$0xff]
        %v4865 = vld [vmem:[#allocation5 + $0xd8] sm:$0xff]
        %v4866 = vld [vmem:[#allocation5 + $0xe0] sm:$0xff]
        %v4867 = vld [vmem:[#allocation5 + $0xe8] sm:$0xff]
        %v4868 = vld [vmem:[#allocation5 + $0xf0] sm:$0xff]
        %v4869 = vld [vmem:[#allocation5 + $0xf8] sm:$0xff]
        %s4870 = scalar_lea.vmem [#allocation8], 64
        %v4871 = vld [vmem:[%s4870] sm:$0xf]
        %v4872 = vld [vmem:[%s4870 + $0x4] sm:$0xf]
        %v4873 = vld [vmem:[%s4870 + $0x8] sm:$0xf]
        %v4874 = vld [vmem:[%s4870 + $0xc] sm:$0xf]
        %v4875 = vld [vmem:[#allocation4] sm:$0xff]
        %v4876 = vld [vmem:[#allocation4 + $0x8] sm:$0xff]
        %v4877 = vld [vmem:[#allocation4 + $0x10] sm:$0xff]
        %v4878 = vld [vmem:[#allocation4 + $0x18] sm:$0xff]
        %v4879 = vld [vmem:[#allocation4 + $0x20] sm:$0xff]
        %v4880 = vld [vmem:[#allocation4 + $0x28] sm:$0xff]
        %v4881 = vld [vmem:[#allocation4 + $0x30] sm:$0xff]
        %v4882 = vld [vmem:[#allocation4 + $0x38] sm:$0xff]
        %v4883 = vld [vmem:[#allocation4 + $0x40] sm:$0xff]
        %v4884 = vld [vmem:[#allocation4 + $0x48] sm:$0xff]
        %v4885 = vld [vmem:[#allocation4 + $0x50] sm:$0xff]
        %v4886 = vld [vmem:[#allocation4 + $0x58] sm:$0xff]
        %v4887 = vld [vmem:[#allocation4 + $0x60] sm:$0xff]
        %v4888 = vld [vmem:[#allocation4 + $0x68] sm:$0xff]
        %v4889 = vld [vmem:[#allocation4 + $0x70] sm:$0xff]
        %v4890 = vld [vmem:[#allocation4 + $0x78] sm:$0xff]
        %v4891 = vld [vmem:[#allocation4 + $0x80] sm:$0xff]
        %v4892 = vld [vmem:[#allocation4 + $0x88] sm:$0xff]
        %v4893 = vld [vmem:[#allocation4 + $0x90] sm:$0xff]
        %v4894 = vld [vmem:[#allocation4 + $0x98] sm:$0xff]
        %v4895 = vld [vmem:[#allocation4 + $0xa0] sm:$0xff]
        %v4896 = vld [vmem:[#allocation4 + $0xa8] sm:$0xff]
        %v4897 = vld [vmem:[#allocation4 + $0xb0] sm:$0xff]
        %v4898 = vld [vmem:[#allocation4 + $0xb8] sm:$0xff]
        %v4899 = vld [vmem:[#allocation4 + $0xc0] sm:$0xff]
        %v4900 = vld [vmem:[#allocation4 + $0xc8] sm:$0xff]
        %v4901 = vld [vmem:[#allocation4 + $0xd0] sm:$0xff]
        %v4902 = vld [vmem:[#allocation4 + $0xd8] sm:$0xff]
        %v4903 = vld [vmem:[#allocation4 + $0xe0] sm:$0xff]
        %v4904 = vld [vmem:[#allocation4 + $0xe8] sm:$0xff]
        %v4905 = vld [vmem:[#allocation4 + $0xf0] sm:$0xff]
        %v4906 = vld [vmem:[#allocation4 + $0xf8] sm:$0xff]
        %v4907 = vld [vmem:[#allocation4 + $0x100] sm:$0xff]
        %v4908 = vld [vmem:[#allocation4 + $0x108] sm:$0xff]
        %v4909 = vld [vmem:[#allocation4 + $0x110] sm:$0xff]
        %v4910 = vld [vmem:[#allocation4 + $0x118] sm:$0xff]
        %v4911 = vld [vmem:[#allocation4 + $0x120] sm:$0xff]
        %v4912 = vld [vmem:[#allocation4 + $0x128] sm:$0xff]
        %v4913 = vld [vmem:[#allocation4 + $0x130] sm:$0xff]
        %v4914 = vld [vmem:[#allocation4 + $0x138] sm:$0xff]
        %v4919 = vunpack.c.l.b16 %v4871
        %v4920 = vunpack.c.l.b16 %v4872
        %v4921 = vunpack.c.l.b16 %v4873
        %v4922 = vunpack.c.l.b16 %v4874
        %v4923 = vpack.c.b16 %v4920, %v4919
        %v4924 = vpack.c.b16 %v4922, %v4921
        %v4965 = vunpack.c.l.b16 %v4875
        %v4966 = vunpack.c.h.b16 %v4875
        %v4967 = vunpack.c.l.b16 %v4876
        %v4968 = vunpack.c.h.b16 %v4876
        %v4969 = vunpack.c.l.b16 %v4877
        %v4970 = vunpack.c.h.b16 %v4877
        %v4971 = vunpack.c.l.b16 %v4878
        %v4972 = vunpack.c.h.b16 %v4878
        %v4973 = vunpack.c.l.b16 %v4879
        %v4974 = vunpack.c.h.b16 %v4879
        %v4975 = vunpack.c.l.b16 %v4880
        %v4976 = vunpack.c.h.b16 %v4880
        %v4977 = vunpack.c.l.b16 %v4881
        %v4978 = vunpack.c.h.b16 %v4881
        %v4979 = vunpack.c.l.b16 %v4882
        %v4980 = vunpack.c.h.b16 %v4882
        %v4981 = vunpack.c.l.b16 %v4883
        %v4982 = vunpack.c.h.b16 %v4883
        %v4983 = vunpack.c.l.b16 %v4884
        %v4984 = vunpack.c.h.b16 %v4884
        %v4985 = vunpack.c.l.b16 %v4885
        %v4986 = vunpack.c.h.b16 %v4885
        %v4987 = vunpack.c.l.b16 %v4886
        %v4988 = vunpack.c.h.b16 %v4886
        %v4989 = vunpack.c.l.b16 %v4887
        %v4990 = vunpack.c.h.b16 %v4887
        %v4991 = vunpack.c.l.b16 %v4888
        %v4992 = vunpack.c.h.b16 %v4888
        %v4993 = vunpack.c.l.b16 %v4889
        %v4994 = vunpack.c.h.b16 %v4889
        %v4995 = vunpack.c.l.b16 %v4890
        %v4996 = vunpack.c.h.b16 %v4890
        %v4997 = vunpack.c.l.b16 %v4891
        %v4998 = vunpack.c.h.b16 %v4891
        %v4999 = vunpack.c.l.b16 %v4892
        %v5000 = vunpack.c.h.b16 %v4892
        %v5001 = vunpack.c.l.b16 %v4893
        %v5002 = vunpack.c.h.b16 %v4893
        %v5003 = vunpack.c.l.b16 %v4894
        %v5004 = vunpack.c.h.b16 %v4894
        %v5005 = vunpack.c.l.b16 %v4895
        %v5006 = vunpack.c.h.b16 %v4895
        %v5007 = vunpack.c.l.b16 %v4896
        %v5008 = vunpack.c.h.b16 %v4896
        %v5009 = vunpack.c.l.b16 %v4897
        %v5010 = vunpack.c.h.b16 %v4897
        %v5011 = vunpack.c.l.b16 %v4898
        %v5012 = vunpack.c.h.b16 %v4898
        %v5013 = vunpack.c.l.b16 %v4899
        %v5014 = vunpack.c.h.b16 %v4899
        %v5015 = vunpack.c.l.b16 %v4900
        %v5016 = vunpack.c.h.b16 %v4900
        %v5017 = vunpack.c.l.b16 %v4901
        %v5018 = vunpack.c.h.b16 %v4901
        %v5019 = vunpack.c.l.b16 %v4902
        %v5020 = vunpack.c.h.b16 %v4902
        %v5021 = vunpack.c.l.b16 %v4903
        %v5022 = vunpack.c.h.b16 %v4903
        %v5023 = vunpack.c.l.b16 %v4904
        %v5024 = vunpack.c.h.b16 %v4904
        %v5025 = vunpack.c.l.b16 %v4905
        %v5026 = vunpack.c.h.b16 %v4905
        %v5027 = vunpack.c.l.b16 %v4906
        %v5028 = vunpack.c.h.b16 %v4906
        %v5029 = vunpack.c.l.b16 %v4907
        %v5030 = vunpack.c.h.b16 %v4907
        %v5031 = vunpack.c.l.b16 %v4908
        %v5032 = vunpack.c.h.b16 %v4908
        %v5033 = vunpack.c.l.b16 %v4909
        %v5034 = vunpack.c.h.b16 %v4909
        %v5035 = vunpack.c.l.b16 %v4910
        %v5036 = vunpack.c.h.b16 %v4910
        %v5037 = vunpack.c.l.b16 %v4911
        %v5038 = vunpack.c.h.b16 %v4911
        %v5039 = vunpack.c.l.b16 %v4912
        %v5040 = vunpack.c.h.b16 %v4912
        %v5041 = vunpack.c.l.b16 %v4913
        %v5042 = vunpack.c.h.b16 %v4913
        %v5043 = vunpack.c.l.b16 %v4914
        %v5044 = vunpack.c.h.b16 %v4914
        %v5045 = vpack.c.b16 %v4973, %v4965
        %v5046 = vpack.c.b16 %v4974, %v4966
        %v5047 = vpack.c.b16 %v4975, %v4967
        %v5048 = vpack.c.b16 %v4976, %v4968
        %v5049 = vpack.c.b16 %v4977, %v4969
        %v5050 = vpack.c.b16 %v4978, %v4970
        %v5051 = vpack.c.b16 %v4979, %v4971
        %v5052 = vpack.c.b16 %v4980, %v4972
        %v5053 = vpack.c.b16 %v4989, %v4981
        %v5054 = vpack.c.b16 %v4990, %v4982
        %v5055 = vpack.c.b16 %v4991, %v4983
        %v5056 = vpack.c.b16 %v4992, %v4984
        %v5057 = vpack.c.b16 %v4993, %v4985
        %v5058 = vpack.c.b16 %v4994, %v4986
        %v5059 = vpack.c.b16 %v4995, %v4987
        %v5060 = vpack.c.b16 %v4996, %v4988
        %v5061 = vpack.c.b16 %v5005, %v4997
        %v5062 = vpack.c.b16 %v5006, %v4998
        %v5063 = vpack.c.b16 %v5007, %v4999
        %v5064 = vpack.c.b16 %v5008, %v5000
        %v5065 = vpack.c.b16 %v5009, %v5001
        %v5066 = vpack.c.b16 %v5010, %v5002
        %v5067 = vpack.c.b16 %v5011, %v5003
        %v5068 = vpack.c.b16 %v5012, %v5004
        %v5069 = vpack.c.b16 %v5021, %v5013
        %v5070 = vpack.c.b16 %v5022, %v5014
        %v5071 = vpack.c.b16 %v5023, %v5015
        %v5072 = vpack.c.b16 %v5024, %v5016
        %v5073 = vpack.c.b16 %v5025, %v5017
        %v5074 = vpack.c.b16 %v5026, %v5018
        %v5075 = vpack.c.b16 %v5027, %v5019
        %v5076 = vpack.c.b16 %v5028, %v5020
        %v5077 = vpack.c.b16 %v5037, %v5029
        %v5078 = vpack.c.b16 %v5038, %v5030
        %v5079 = vpack.c.b16 %v5039, %v5031
        %v5080 = vpack.c.b16 %v5040, %v5032
        %v5081 = vpack.c.b16 %v5041, %v5033
        %v5082 = vpack.c.b16 %v5042, %v5034
        %v5083 = vpack.c.b16 %v5043, %v5035
        %v5084 = vpack.c.b16 %v5044, %v5036
        %v5126 = vsel %vm1499, %v4923, 0
        %v5129 = vsel %vm1499, %v4924, 0
        %5131 = vmatpush.bf16.msra.mxu0 0
        %5132 = vmatpush.bf16.msra.mxu0 0
        %5133 = vmatpush.bf16.msra.mxu0 0
        %5134 = vmatpush.bf16.msra.mxu0 %v5077
        %5135 = vmatpush.bf16.msra.mxu0 %v5069
        %5136 = vmatpush.bf16.msra.mxu0 %v5061
        %5137 = vmatpush.bf16.msra.mxu0 %v5053
        %5138 = vmatpush.bf16.msra.mxu0 %v5045
        %5139 = vmatmul.bf16.gmra.mxu0 %v5126
        %v5140 = vpop.f32.mrf.mxu0
        %v5141 = vadd.f32 0.0, %v5140
        %v5142 = vpop.f32.mrf.mxu0
        %v5143 = vadd.f32 0.0, %v5142
        %5144 = vmatmul.bf16.gmra.mxu0 %v5129
        %v5145 = vpop.f32.mrf.mxu0
        %v5146 = vadd.f32 0.0, %v5145
        %v5147 = vpop.f32.mrf.mxu0
        %v5148 = vadd.f32 0.0, %v5147
        %5149 = vdwg.mxu0
        %5150 = vmatpush.bf16.msra.mxu0 0
        %5151 = vmatpush.bf16.msra.mxu0 0
        %5152 = vmatpush.bf16.msra.mxu0 0
        %5153 = vmatpush.bf16.msra.mxu0 %v5078
        %5154 = vmatpush.bf16.msra.mxu0 %v5070
        %5155 = vmatpush.bf16.msra.mxu0 %v5062
        %5156 = vmatpush.bf16.msra.mxu0 %v5054
        %5157 = vmatpush.bf16.msra.mxu0 %v5046
        %5158 = vmatmul.bf16.gmra.mxu0 %v5126
        %v5159 = vpop.f32.mrf.mxu0
        %v5160 = vadd.f32 0.0, %v5159
        %v5161 = vpop.f32.mrf.mxu0
        %v5162 = vadd.f32 0.0, %v5161
        %5163 = vmatmul.bf16.gmra.mxu0 %v5129
        %v5164 = vpop.f32.mrf.mxu0
        %v5165 = vadd.f32 0.0, %v5164
        %v5166 = vpop.f32.mrf.mxu0
        %v5167 = vadd.f32 0.0, %v5166
        %5168 = vdwg.mxu0
        %5169 = vmatpush.bf16.msra.mxu0 0
        %5170 = vmatpush.bf16.msra.mxu0 0
        %5171 = vmatpush.bf16.msra.mxu0 0
        %5172 = vmatpush.bf16.msra.mxu0 %v5079
        %5173 = vmatpush.bf16.msra.mxu0 %v5071
        %5174 = vmatpush.bf16.msra.mxu0 %v5063
        %5175 = vmatpush.bf16.msra.mxu0 %v5055
        %5176 = vmatpush.bf16.msra.mxu0 %v5047
        %5177 = vmatmul.bf16.gmra.mxu0 %v5126
        %v5178 = vpop.f32.mrf.mxu0
        %v5179 = vadd.f32 0.0, %v5178
        %v5180 = vpop.f32.mrf.mxu0
        %v5181 = vadd.f32 0.0, %v5180
        %5182 = vmatmul.bf16.gmra.mxu0 %v5129
        %v5183 = vpop.f32.mrf.mxu0
        %v5184 = vadd.f32 0.0, %v5183
        %v5185 = vpop.f32.mrf.mxu0
        %v5186 = vadd.f32 0.0, %v5185
        %5187 = vdwg.mxu0
        %5188 = vmatpush.bf16.msra.mxu0 0
        %5189 = vmatpush.bf16.msra.mxu0 0
        %5190 = vmatpush.bf16.msra.mxu0 0
        %5191 = vmatpush.bf16.msra.mxu0 %v5080
        %5192 = vmatpush.bf16.msra.mxu0 %v5072
        %5193 = vmatpush.bf16.msra.mxu0 %v5064
        %5194 = vmatpush.bf16.msra.mxu0 %v5056
        %5195 = vmatpush.bf16.msra.mxu0 %v5048
        %5196 = vmatmul.bf16.gmra.mxu0 %v5126
        %v5197 = vpop.f32.mrf.mxu0
        %v5198 = vadd.f32 0.0, %v5197
        %v5199 = vpop.f32.mrf.mxu0
        %v5200 = vadd.f32 0.0, %v5199
        %5201 = vmatmul.bf16.gmra.mxu0 %v5129
        %v5202 = vpop.f32.mrf.mxu0
        %v5203 = vadd.f32 0.0, %v5202
        %v5204 = vpop.f32.mrf.mxu0
        %v5205 = vadd.f32 0.0, %v5204
        %5206 = vdwg.mxu0
        %5207 = vmatpush.bf16.msra.mxu0 0
        %5208 = vmatpush.bf16.msra.mxu0 0
        %5209 = vmatpush.bf16.msra.mxu0 0
        %5210 = vmatpush.bf16.msra.mxu0 %v5081
        %5211 = vmatpush.bf16.msra.mxu0 %v5073
        %5212 = vmatpush.bf16.msra.mxu0 %v5065
        %5213 = vmatpush.bf16.msra.mxu0 %v5057
        %5214 = vmatpush.bf16.msra.mxu0 %v5049
        %5215 = vmatmul.bf16.gmra.mxu0 %v5126
        %v5216 = vpop.f32.mrf.mxu0
        %v5217 = vadd.f32 0.0, %v5216
        %v5218 = vpop.f32.mrf.mxu0
        %v5219 = vadd.f32 0.0, %v5218
        %5220 = vmatmul.bf16.gmra.mxu0 %v5129
        %v5221 = vpop.f32.mrf.mxu0
        %v5222 = vadd.f32 0.0, %v5221
        %v5223 = vpop.f32.mrf.mxu0
        %v5224 = vadd.f32 0.0, %v5223
        %5225 = vdwg.mxu0
        %5226 = vmatpush.bf16.msra.mxu0 0
        %5227 = vmatpush.bf16.msra.mxu0 0
        %5228 = vmatpush.bf16.msra.mxu0 0
        %5229 = vmatpush.bf16.msra.mxu0 %v5082
        %5230 = vmatpush.bf16.msra.mxu0 %v5074
        %5231 = vmatpush.bf16.msra.mxu0 %v5066
        %5232 = vmatpush.bf16.msra.mxu0 %v5058
        %5233 = vmatpush.bf16.msra.mxu0 %v5050
        %5234 = vmatmul.bf16.gmra.mxu0 %v5126
        %v5235 = vpop.f32.mrf.mxu0
        %v5236 = vadd.f32 0.0, %v5235
        %v5237 = vpop.f32.mrf.mxu0
        %v5238 = vadd.f32 0.0, %v5237
        %5239 = vmatmul.bf16.gmra.mxu0 %v5129
        %v5240 = vpop.f32.mrf.mxu0
        %v5241 = vadd.f32 0.0, %v5240
        %v5242 = vpop.f32.mrf.mxu0
        %v5243 = vadd.f32 0.0, %v5242
        %5244 = vdwg.mxu0
        %5245 = vmatpush.bf16.msra.mxu0 0
        %5246 = vmatpush.bf16.msra.mxu0 0
        %5247 = vmatpush.bf16.msra.mxu0 0
        %5248 = vmatpush.bf16.msra.mxu0 %v5083
        %5249 = vmatpush.bf16.msra.mxu0 %v5075
        %5250 = vmatpush.bf16.msra.mxu0 %v5067
        %5251 = vmatpush.bf16.msra.mxu0 %v5059
        %5252 = vmatpush.bf16.msra.mxu0 %v5051
        %5253 = vmatmul.bf16.gmra.mxu0 %v5126
        %v5254 = vpop.f32.mrf.mxu0
        %v5255 = vadd.f32 0.0, %v5254
        %v5256 = vpop.f32.mrf.mxu0
        %v5257 = vadd.f32 0.0, %v5256
        %5258 = vmatmul.bf16.gmra.mxu0 %v5129
        %v5259 = vpop.f32.mrf.mxu0
        %v5260 = vadd.f32 0.0, %v5259
        %v5261 = vpop.f32.mrf.mxu0
        %v5262 = vadd.f32 0.0, %v5261
        %5263 = vdwg.mxu0
        %5264 = vmatpush.bf16.msra.mxu0 0
        %5265 = vmatpush.bf16.msra.mxu0 0
        %5266 = vmatpush.bf16.msra.mxu0 0
        %5267 = vmatpush.bf16.msra.mxu0 %v5084
        %5268 = vmatpush.bf16.msra.mxu0 %v5076
        %5269 = vmatpush.bf16.msra.mxu0 %v5068
        %5270 = vmatpush.bf16.msra.mxu0 %v5060
        %5271 = vmatpush.bf16.msra.mxu0 %v5052
        %5272 = vmatmul.bf16.gmra.mxu0 %v5126
        %v5273 = vpop.f32.mrf.mxu0
        %v5274 = vadd.f32 0.0, %v5273
        %v5275 = vpop.f32.mrf.mxu0
        %v5276 = vadd.f32 0.0, %v5275
        %5277 = vmatmul.bf16.gmra.mxu0 %v5129
        %v5278 = vpop.f32.mrf.mxu0
        %v5279 = vadd.f32 0.0, %v5278
        %v5280 = vpop.f32.mrf.mxu0
        %v5281 = vadd.f32 0.0, %v5280
        %5282 = vdwg.mxu0
        %v5283 = vadd.f32 %v4838, %v5141
        %v5284 = vadd.f32 %v4839, %v5160
        %v5285 = vadd.f32 %v4840, %v5179
        %v5286 = vadd.f32 %v4841, %v5198
        %v5287 = vadd.f32 %v4842, %v5217
        %v5288 = vadd.f32 %v4843, %v5236
        %v5289 = vadd.f32 %v4844, %v5255
        %v5290 = vadd.f32 %v4845, %v5274
        %v5291 = vadd.f32 %v4846, %v5143
        %v5292 = vadd.f32 %v4847, %v5162
        %v5293 = vadd.f32 %v4848, %v5181
        %v5294 = vadd.f32 %v4849, %v5200
        %v5295 = vadd.f32 %v4850, %v5219
        %v5296 = vadd.f32 %v4851, %v5238
        %v5297 = vadd.f32 %v4852, %v5257
        %v5298 = vadd.f32 %v4853, %v5276
        %v5299 = vadd.f32 %v4854, %v5146
        %v5300 = vadd.f32 %v4855, %v5165
        %v5301 = vadd.f32 %v4856, %v5184
        %v5302 = vadd.f32 %v4857, %v5203
        %v5303 = vadd.f32 %v4858, %v5222
        %v5304 = vadd.f32 %v4859, %v5241
        %v5305 = vadd.f32 %v4860, %v5260
        %v5306 = vadd.f32 %v4861, %v5279
        %v5307 = vadd.f32 %v4862, %v5148
        %v5308 = vadd.f32 %v4863, %v5167
        %v5309 = vadd.f32 %v4864, %v5186
        %v5310 = vadd.f32 %v4865, %v5205
        %v5311 = vadd.f32 %v4866, %v5224
        %v5312 = vadd.f32 %v4867, %v5243
        %v5313 = vadd.f32 %v4868, %v5262
        %v5314 = vadd.f32 %v4869, %v5281
        %5315 = vst [vmem:[#allocation5] sm:$0xff] %v5283
        %5316 = vst [vmem:[#allocation5 + $0x8] sm:$0xff] %v5284
        %5317 = vst [vmem:[#allocation5 + $0x10] sm:$0xff] %v5285
        %5318 = vst [vmem:[#allocation5 + $0x18] sm:$0xff] %v5286
        %5319 = vst [vmem:[#allocation5 + $0x20] sm:$0xff] %v5287
        %5320 = vst [vmem:[#allocation5 + $0x28] sm:$0xff] %v5288
        %5321 = vst [vmem:[#allocation5 + $0x30] sm:$0xff] %v5289
        %5322 = vst [vmem:[#allocation5 + $0x38] sm:$0xff] %v5290
        %5323 = vst [vmem:[#allocation5 + $0x40] sm:$0xff] %v5291
        %5324 = vst [vmem:[#allocation5 + $0x48] sm:$0xff] %v5292
        %5325 = vst [vmem:[#allocation5 + $0x50] sm:$0xff] %v5293
        %5326 = vst [vmem:[#allocation5 + $0x58] sm:$0xff] %v5294
        %5327 = vst [vmem:[#allocation5 + $0x60] sm:$0xff] %v5295
        %5328 = vst [vmem:[#allocation5 + $0x68] sm:$0xff] %v5296
        %5329 = vst [vmem:[#allocation5 + $0x70] sm:$0xff] %v5297
        %5330 = vst [vmem:[#allocation5 + $0x78] sm:$0xff] %v5298
        %5331 = vst [vmem:[#allocation5 + $0x80] sm:$0xff] %v5299
        %5332 = vst [vmem:[#allocation5 + $0x88] sm:$0xff] %v5300
        %5333 = vst [vmem:[#allocation5 + $0x90] sm:$0xff] %v5301
        %5334 = vst [vmem:[#allocation5 + $0x98] sm:$0xff] %v5302
        %5335 = vst [vmem:[#allocation5 + $0xa0] sm:$0xff] %v5303
        %5336 = vst [vmem:[#allocation5 + $0xa8] sm:$0xff] %v5304
        %5337 = vst [vmem:[#allocation5 + $0xb0] sm:$0xff] %v5305
        %5338 = vst [vmem:[#allocation5 + $0xb8] sm:$0xff] %v5306
        %5339 = vst [vmem:[#allocation5 + $0xc0] sm:$0xff] %v5307
        %5340 = vst [vmem:[#allocation5 + $0xc8] sm:$0xff] %v5308
        %5341 = vst [vmem:[#allocation5 + $0xd0] sm:$0xff] %v5309
        %5342 = vst [vmem:[#allocation5 + $0xd8] sm:$0xff] %v5310
        %5343 = vst [vmem:[#allocation5 + $0xe0] sm:$0xff] %v5311
        %5344 = vst [vmem:[#allocation5 + $0xe8] sm:$0xff] %v5312
        %5345 = vst [vmem:[#allocation5 + $0xf0] sm:$0xff] %v5313
        %5346 = vst [vmem:[#allocation5 + $0xf8] sm:$0xff] %v5314
        %v5347 = vld [vmem:[#allocation5] sm:$0xff]
        %v5348 = vld [vmem:[#allocation5 + $0x8] sm:$0xff]
        %v5349 = vld [vmem:[#allocation5 + $0x10] sm:$0xff]
        %v5350 = vld [vmem:[#allocation5 + $0x18] sm:$0xff]
        %v5351 = vld [vmem:[#allocation5 + $0x20] sm:$0xff]
        %v5352 = vld [vmem:[#allocation5 + $0x28] sm:$0xff]
        %v5353 = vld [vmem:[#allocation5 + $0x30] sm:$0xff]
        %v5354 = vld [vmem:[#allocation5 + $0x38] sm:$0xff]
        %v5355 = vld [vmem:[#allocation5 + $0x40] sm:$0xff]
        %v5356 = vld [vmem:[#allocation5 + $0x48] sm:$0xff]
        %v5357 = vld [vmem:[#allocation5 + $0x50] sm:$0xff]
        %v5358 = vld [vmem:[#allocation5 + $0x58] sm:$0xff]
        %v5359 = vld [vmem:[#allocation5 + $0x60] sm:$0xff]
        %v5360 = vld [vmem:[#allocation5 + $0x68] sm:$0xff]
        %v5361 = vld [vmem:[#allocation5 + $0x70] sm:$0xff]
        %v5362 = vld [vmem:[#allocation5 + $0x78] sm:$0xff]
        %v5363 = vld [vmem:[#allocation5 + $0x80] sm:$0xff]
        %v5364 = vld [vmem:[#allocation5 + $0x88] sm:$0xff]
        %v5365 = vld [vmem:[#allocation5 + $0x90] sm:$0xff]
        %v5366 = vld [vmem:[#allocation5 + $0x98] sm:$0xff]
        %v5367 = vld [vmem:[#allocation5 + $0xa0] sm:$0xff]
        %v5368 = vld [vmem:[#allocation5 + $0xa8] sm:$0xff]
        %v5369 = vld [vmem:[#allocation5 + $0xb0] sm:$0xff]
        %v5370 = vld [vmem:[#allocation5 + $0xb8] sm:$0xff]
        %v5371 = vld [vmem:[#allocation5 + $0xc0] sm:$0xff]
        %v5372 = vld [vmem:[#allocation5 + $0xc8] sm:$0xff]
        %v5373 = vld [vmem:[#allocation5 + $0xd0] sm:$0xff]
        %v5374 = vld [vmem:[#allocation5 + $0xd8] sm:$0xff]
        %v5375 = vld [vmem:[#allocation5 + $0xe0] sm:$0xff]
        %v5376 = vld [vmem:[#allocation5 + $0xe8] sm:$0xff]
        %v5377 = vld [vmem:[#allocation5 + $0xf0] sm:$0xff]
        %v5378 = vld [vmem:[#allocation5 + $0xf8] sm:$0xff]
        %v5379 = vld [vmem:[%s4] sm:$0xff]
        %v5380 = vld [vmem:[%s4 + $0x8] sm:$0xff]
        %v5381 = vld [vmem:[%s4 + $0x10] sm:$0xff]
        %v5382 = vld [vmem:[%s4 + $0x18] sm:$0xff]
        %5384 = vset.pattern.permute.xlu0 0
        %5385 = vperm.xlu0 %5384, %v5379
        %v5386 = vpop.permute.xlu0 %5385
        %5389 = vset.pattern.permute.xlu0 0
        %5390 = vperm.xlu0 %5389, %v5380
        %v5391 = vpop.permute.xlu0 %5390
        %5394 = vset.pattern.permute.xlu0 0
        %5395 = vperm.xlu0 %5394, %v5381
        %v5396 = vpop.permute.xlu0 %5395
        %5399 = vset.pattern.permute.xlu0 0
        %5400 = vperm.xlu0 %5399, %v5382
        %v5401 = vpop.permute.xlu0 %5400
        %v5403 = vadd.f32 %v5347, %v5386
        %v5404 = vadd.f32 %v5348, %v5386
        %v5405 = vadd.f32 %v5349, %v5386
        %v5406 = vadd.f32 %v5350, %v5386
        %v5407 = vadd.f32 %v5351, %v5386
        %v5408 = vadd.f32 %v5352, %v5386
        %v5409 = vadd.f32 %v5353, %v5386
        %v5410 = vadd.f32 %v5354, %v5386
        %v5411 = vadd.f32 %v5355, %v5391
        %v5412 = vadd.f32 %v5356, %v5391
        %v5413 = vadd.f32 %v5357, %v5391
        %v5414 = vadd.f32 %v5358, %v5391
        %v5415 = vadd.f32 %v5359, %v5391
        %v5416 = vadd.f32 %v5360, %v5391
        %v5417 = vadd.f32 %v5361, %v5391
        %v5418 = vadd.f32 %v5362, %v5391
        %v5419 = vadd.f32 %v5363, %v5396
        %v5420 = vadd.f32 %v5364, %v5396
        %v5421 = vadd.f32 %v5365, %v5396
        %v5422 = vadd.f32 %v5366, %v5396
        %v5423 = vadd.f32 %v5367, %v5396
        %v5424 = vadd.f32 %v5368, %v5396
        %v5425 = vadd.f32 %v5369, %v5396
        %v5426 = vadd.f32 %v5370, %v5396
        %v5427 = vadd.f32 %v5371, %v5401
        %v5428 = vadd.f32 %v5372, %v5401
        %v5429 = vadd.f32 %v5373, %v5401
        %v5430 = vadd.f32 %v5374, %v5401
        %v5431 = vadd.f32 %v5375, %v5401
        %v5432 = vadd.f32 %v5376, %v5401
        %v5433 = vadd.f32 %v5377, %v5401
        %v5434 = vadd.f32 %v5378, %v5401
        %v5435 = vmax.f32 %v5403, 0.0
        %v5436 = vmax.f32 %v5404, 0.0
        %v5437 = vmax.f32 %v5405, 0.0
        %v5438 = vmax.f32 %v5406, 0.0
        %v5439 = vmax.f32 %v5407, 0.0
        %v5440 = vmax.f32 %v5408, 0.0
        %v5441 = vmax.f32 %v5409, 0.0
        %v5442 = vmax.f32 %v5410, 0.0
        %v5443 = vmax.f32 %v5411, 0.0
        %v5444 = vmax.f32 %v5412, 0.0
        %v5445 = vmax.f32 %v5413, 0.0
        %v5446 = vmax.f32 %v5414, 0.0
        %v5447 = vmax.f32 %v5415, 0.0
        %v5448 = vmax.f32 %v5416, 0.0
        %v5449 = vmax.f32 %v5417, 0.0
        %v5450 = vmax.f32 %v5418, 0.0
        %v5451 = vmax.f32 %v5419, 0.0
        %v5452 = vmax.f32 %v5420, 0.0
        %v5453 = vmax.f32 %v5421, 0.0
        %v5454 = vmax.f32 %v5422, 0.0
        %v5455 = vmax.f32 %v5423, 0.0
        %v5456 = vmax.f32 %v5424, 0.0
        %v5457 = vmax.f32 %v5425, 0.0
        %v5458 = vmax.f32 %v5426, 0.0
        %v5459 = vmax.f32 %v5427, 0.0
        %v5460 = vmax.f32 %v5428, 0.0
        %v5461 = vmax.f32 %v5429, 0.0
        %v5462 = vmax.f32 %v5430, 0.0
        %v5463 = vmax.f32 %v5431, 0.0
        %v5464 = vmax.f32 %v5432, 0.0
        %v5465 = vmax.f32 %v5433, 0.0
        %v5466 = vmax.f32 %v5434, 0.0
        %5467 = vst [vmem:[%s255] sm:$0xff] %v5435
        %5468 = vst [vmem:[%s255 + $0x8] sm:$0xff] %v5436
        %5469 = vst [vmem:[%s255 + $0x10] sm:$0xff] %v5437
        %5470 = vst [vmem:[%s255 + $0x18] sm:$0xff] %v5438
        %5471 = vst [vmem:[%s255 + $0x20] sm:$0xff] %v5439
        %5472 = vst [vmem:[%s255 + $0x28] sm:$0xff] %v5440
        %5473 = vst [vmem:[%s255 + $0x30] sm:$0xff] %v5441
        %5474 = vst [vmem:[%s255 + $0x38] sm:$0xff] %v5442
        %5475 = vst [vmem:[%s255 + $0x40] sm:$0xff] %v5443
        %5476 = vst [vmem:[%s255 + $0x48] sm:$0xff] %v5444
        %5477 = vst [vmem:[%s255 + $0x50] sm:$0xff] %v5445
        %5478 = vst [vmem:[%s255 + $0x58] sm:$0xff] %v5446
        %5479 = vst [vmem:[%s255 + $0x60] sm:$0xff] %v5447
        %5480 = vst [vmem:[%s255 + $0x68] sm:$0xff] %v5448
        %5481 = vst [vmem:[%s255 + $0x70] sm:$0xff] %v5449
        %5482 = vst [vmem:[%s255 + $0x78] sm:$0xff] %v5450
        %5483 = vst [vmem:[%s255 + $0x80] sm:$0xff] %v5451
        %5484 = vst [vmem:[%s255 + $0x88] sm:$0xff] %v5452
        %5485 = vst [vmem:[%s255 + $0x90] sm:$0xff] %v5453
        %5486 = vst [vmem:[%s255 + $0x98] sm:$0xff] %v5454
        %5487 = vst [vmem:[%s255 + $0xa0] sm:$0xff] %v5455
        %5488 = vst [vmem:[%s255 + $0xa8] sm:$0xff] %v5456
        %5489 = vst [vmem:[%s255 + $0xb0] sm:$0xff] %v5457
        %5490 = vst [vmem:[%s255 + $0xb8] sm:$0xff] %v5458
        %5491 = vst [vmem:[%s255 + $0xc0] sm:$0xff] %v5459
        %5492 = vst [vmem:[%s255 + $0xc8] sm:$0xff] %v5460
        %5493 = vst [vmem:[%s255 + $0xd0] sm:$0xff] %v5461
        %5494 = vst [vmem:[%s255 + $0xd8] sm:$0xff] %v5462
        %5495 = vst [vmem:[%s255 + $0xe0] sm:$0xff] %v5463
        %5496 = vst [vmem:[%s255 + $0xe8] sm:$0xff] %v5464
        %5497 = vst [vmem:[%s255 + $0xf0] sm:$0xff] %v5465
        %5498 = vst [vmem:[%s255 + $0xf8] sm:$0xff] %v5466
        %p5499 = scmp.lt.s32.totalorder %s18, 1
        %s5500 = scalar_select %p5499, %s18, 1
        %s5501 = smul.addr %s5500, 32
        %s5502 = smul.addr %s5501, 8
        %s5503 = scalar_lea.vmem %s5, %s5502
        // Predicated region
        $region49: #{baseline_net_forward.2} parent=39 // pred_check
          %p5504 = pneg %p146
        $region50: #{baseline_net_forward.2} parent=39 // pred_check_branch
          %5506 = sbr.rel (%p5504) target = $region52
        $region51: #{baseline_net_forward.2} parent=39 // pred_region
          _
        $region52: #{baseline_net_forward.2} parent=39 // pred_fallthru
          _
      $region40: #{baseline_net_forward.2} parent=5 // pred_fallthru
        _
      %p5507 = scmp.le.s32.totalorder 2, %s13
      // Predicated region
      $region53: #{baseline_net_forward.2} parent=5 // pred_check
        %p5508 = pneg %p5507
      $region54: #{baseline_net_forward.2} parent=5 // pred_check_branch
        %5510 = sbr.rel (%p5508) target = $region56
      $region55: #{baseline_net_forward.2} parent=5 // pred_region
        %s5511 = ssub.s32 %s13, 2
        // Predicated region
        $region57: #{baseline_net_forward.2} parent=55 // pred_check
          %p5512 = pneg %p152
        $region58: #{baseline_net_forward.2} parent=55 // pred_check_branch
          %5514 = sbr.rel (%p5512) target = $region60
        $region59: #{baseline_net_forward.2} parent=55 // pred_region
          %p5515 = scmp.lt.s32.totalorder %s19, 1
          %s5516 = scalar_select %p5515, %s19, 1
          %s5517 = smul.addr %s5516, 32
          %s5518 = smul.addr %s5517, 8
          %s5519 = scalar_lea.vmem %s5, %s5518
        $region60: #{baseline_net_forward.2} parent=55 // pred_fallthru
          _
      $region56: #{baseline_net_forward.2} parent=5 // pred_fallthru
        _
    $region6: #{baseline_net_forward.2} parent=1 // loop_footer
      %s17 = sadd.s32 1, %s13
    $region7: #{baseline_net_forward.2} parent=1 // loop_footer_branch
      %12 = sbr.rel target = $region3
    $region8: #{baseline_net_forward.2} parent=1 // loop_exit
      _
    %5520 = vsyncpa [#allocation7], 1
    %s5521 = scalar_lea.sflag [#allocation7], 1
    %5522 = vsyncpa %s5521, 1
    %5523 = vsyncpa [#allocation9], 1

// kernel: baseline_net_forward.3
$region0: #{baseline_net_forward.3}
  #allocation0 [shape = 'u32[]', space=smem, size = 0x4, offset = 0x4, fixed_abs, tag = 'smem constant byte address 0x4 - core index']
  #allocation1 [shape = 'u32[72,128]{1,0:T(1,128)}', space=vmem, size = 0x9000, scoped, tag = 'internal scratch']
  #allocation2 [shape = 'f32[2,84]{1,0:T(2,128)}', space=vmem, size = 0x400, scoped, tag = 'scratch operand']
  #allocation3 [shape = 'f32[1,1]{1,0:T(1,128)S(1)}', space=vmem, size = 0x200, scoped, tag = 'scoped memory for baseline_net_forward.3']
  %s0 = inlined_call_operand.vmem [shape: bf16[2,18432], index: 0, kind: input, shape index: {}]
  %s1 = inlined_call_operand.vmem [shape: bf16[18432,84], index: 1, kind: input, shape index: {}]
  %s2 = inlined_call_operand.vmem [shape: f32[1,84], index: 2, kind: input, shape index: {}]
  %s3 = inlined_call_operand.vmem [shape: f32[1,84], index: 3, kind: input, shape index: {}]
  %s4 = inlined_call_operand.<no memory space> [shape: f32[1,1], index: 4, kind: input, shape index: {}]
  %s5 = inlined_call_operand.hbm [shape: f32[2,84], index: 5, kind: output, shape index: {0}]
  %s6 = inlined_call_operand.vmem [shape: f32[2,1], index: 6, kind: output, shape index: {1}]
  %7 = xla_tuple %s5, %s6
  %s8 = sld [smem:[#allocation0]]
  $region69: #{baseline_net_forward.3} parent=0
    _
  %s10 = ssub.s32 1, %s8
  %s11 = scalar_select 0, %s10, %s8
  %v12 = vstv %s4
  %13 = vst [vmem:[#allocation3] sm:$0x1] %v12
  $region1: #{baseline_net_forward.3} parent=0
    #allocation4 [shape = 'u8[1024]{0}', space=vmem, size = 0x400, scoped, tag = 'output window, operand 0, single buffered']
    #allocation5 [shape = 's32[2]{0}', space=sflag, size = 0x8, scoped, tag = 'scoped memory for baseline_net_forward.3']
    %14 = vsyncpa [#allocation5], 0
    loop: start=0, step=1, limit=4
    $region2: #{baseline_net_forward.3} parent=1 // loop_pre_header
      _
    $region3: #{baseline_net_forward.3} parent=1 // loop_header
      %s16 = sphi 0, %s20
      %p17 = scmp.ge.s32.totalorder %s16, 4
      %s26 = sphi 0, %s28
      %s29 = sphi 0, %s26
      %s30 = sphi 0, %s29
      %s46 = sphi 0, %s30
      %s52 = sphi 0, %s54
      %s55 = sphi 0, %s52
      %s56 = sphi 0, %s55
      %s72 = sphi 0, %s56
      %s76 = sphi 0, %s76
      %s78 = sphi 0, %s76
      %s79 = sphi 0, %s78
      %s93 = sphi 0, %s79
      %s97 = sphi 0, %s97
      %s99 = sphi 0, %s97
      %s100 = sphi 0, %s99
      %s114 = sphi 0, %s100
      %s118 = sphi 0, %s118
      %s120 = sphi 0, %s118
      %s121 = sphi 0, %s120
      %s135 = sphi 0, %s121
      %s139 = sphi 0, %s139
      %s141 = sphi 0, %s139
      %s142 = sphi 0, %s141
      %s156 = sphi 0, %s142
      %s160 = sphi 0, %s160
      %s162 = sphi 0, %s160
      %s163 = sphi 0, %s162
      %s177 = sphi 0, %s163
    $region4: #{baseline_net_forward.3} parent=1 // loop_header_branch
      %19 = sbr.rel (%p17) target = $region8
    $region5: #{baseline_net_forward.3} parent=1 // loop_body
      %s21 = ssub.s32 %s16, 1
      %s22 = ssub.s32 %s16, 2
      %s23 = sadd.s32 %s16, 1
      %s24 = ssub.s32 %s16, %s23
      %p25 = scmp.eq.s32.totalorder %s24, 0
      %s27 = sadd.s32 %s26, 1
      %s28 = scalar_select %p25, %s26, %s27
      %p31 = pneg %p25
      %p32 = scmp.eq.s32.totalorder %s16, 1
      %p33 = por %p31, %p32
      %p34 = scmp.ne.s32.totalorder %s26, %s29
      %p35 = scmp.eq.s32.totalorder %s16, 0
      %p36 = por %p34, %p35
      %p37 = scmp.ne.s32.totalorder %s26, %s29
      %p38 = scmp.eq.s32.totalorder %s21, 1
      %p39 = por %p37, %p38
      %p40 = scmp.ne.s32.totalorder %s29, %s30
      %p41 = scmp.eq.s32.totalorder %s21, 0
      %p42 = por %p40, %p41
      %p43 = scmp.ne.s32.totalorder %s29, %s30
      %p44 = scmp.eq.s32.totalorder %s22, 1
      %p45 = por %p43, %p44
      %p47 = scmp.ne.s32.totalorder %s30, %s46
      %p48 = scmp.eq.s32.totalorder %s22, 0
      %p49 = por %p47, %p48
      %s50 = ssub.s32 %s16, %s23
      %p51 = scmp.eq.s32.totalorder %s50, 0
      %s53 = sadd.s32 %s52, 1
      %s54 = scalar_select %p51, %s52, %s53
      %p57 = pneg %p51
      %p58 = scmp.eq.s32.totalorder %s16, 1
      %p59 = por %p57, %p58
      %p60 = scmp.ne.s32.totalorder %s52, %s55
      %p61 = scmp.eq.s32.totalorder %s16, 0
      %p62 = por %p60, %p61
      %p63 = scmp.ne.s32.totalorder %s52, %s55
      %p64 = scmp.eq.s32.totalorder %s21, 1
      %p65 = por %p63, %p64
      %p66 = scmp.ne.s32.totalorder %s55, %s56
      %p67 = scmp.eq.s32.totalorder %s21, 0
      %p68 = por %p66, %p67
      %p69 = scmp.ne.s32.totalorder %s55, %s56
      %p70 = scmp.eq.s32.totalorder %s22, 1
      %p71 = por %p69, %p70
      %p73 = scmp.ne.s32.totalorder %s56, %s72
      %p74 = scmp.eq.s32.totalorder %s22, 0
      %p75 = por %p73, %p74
      %s77 = sadd.s32 %s76, 1
      %p80 = scmp.eq.s32.totalorder %s16, 1
      %p81 = scmp.ne.s32.totalorder %s76, %s78
      %p82 = scmp.eq.s32.totalorder %s16, 0
      %p83 = por %p81, %p82
      %p84 = scmp.ne.s32.totalorder %s76, %s78
      %p85 = scmp.eq.s32.totalorder %s21, 1
      %p86 = por %p84, %p85
      %p87 = scmp.ne.s32.totalorder %s78, %s79
      %p88 = scmp.eq.s32.totalorder %s21, 0
      %p89 = por %p87, %p88
      %p90 = scmp.ne.s32.totalorder %s78, %s79
      %p91 = scmp.eq.s32.totalorder %s22, 1
      %p92 = por %p90, %p91
      %p94 = scmp.ne.s32.totalorder %s79, %s93
      %p95 = scmp.eq.s32.totalorder %s22, 0
      %p96 = por %p94, %p95
      %s98 = sadd.s32 %s97, 1
      %p101 = scmp.eq.s32.totalorder %s16, 1
      %p102 = scmp.ne.s32.totalorder %s97, %s99
      %p103 = scmp.eq.s32.totalorder %s16, 0
      %p104 = por %p102, %p103
      %p105 = scmp.ne.s32.totalorder %s97, %s99
      %p106 = scmp.eq.s32.totalorder %s21, 1
      %p107 = por %p105, %p106
      %p108 = scmp.ne.s32.totalorder %s99, %s100
      %p109 = scmp.eq.s32.totalorder %s21, 0
      %p110 = por %p108, %p109
      %p111 = scmp.ne.s32.totalorder %s99, %s100
      %p112 = scmp.eq.s32.totalorder %s22, 1
      %p113 = por %p111, %p112
      %p115 = scmp.ne.s32.totalorder %s100, %s114
      %p116 = scmp.eq.s32.totalorder %s22, 0
      %p117 = por %p115, %p116
      %s119 = sadd.s32 %s118, 1
      %p122 = scmp.eq.s32.totalorder %s16, 1
      %p123 = scmp.ne.s32.totalorder %s118, %s120
      %p124 = scmp.eq.s32.totalorder %s16, 0
      %p125 = por %p123, %p124
      %p126 = scmp.ne.s32.totalorder %s118, %s120
      %p127 = scmp.eq.s32.totalorder %s21, 1
      %p128 = por %p126, %p127
      %p129 = scmp.ne.s32.totalorder %s120, %s121
      %p130 = scmp.eq.s32.totalorder %s21, 0
      %p131 = por %p129, %p130
      %p132 = scmp.ne.s32.totalorder %s120, %s121
      %p133 = scmp.eq.s32.totalorder %s22, 1
      %p134 = por %p132, %p133
      %p136 = scmp.ne.s32.totalorder %s121, %s135
      %p137 = scmp.eq.s32.totalorder %s22, 0
      %p138 = por %p136, %p137
      %s140 = sadd.s32 %s139, 1
      %p143 = scmp.eq.s32.totalorder %s16, 1
      %p144 = scmp.ne.s32.totalorder %s139, %s141
      %p145 = scmp.eq.s32.totalorder %s16, 0
      %p146 = por %p144, %p145
      %p147 = scmp.ne.s32.totalorder %s139, %s141
      %p148 = scmp.eq.s32.totalorder %s21, 1
      %p149 = por %p147, %p148
      %p150 = scmp.ne.s32.totalorder %s141, %s142
      %p151 = scmp.eq.s32.totalorder %s21, 0
      %p152 = por %p150, %p151
      %p153 = scmp.ne.s32.totalorder %s141, %s142
      %p154 = scmp.eq.s32.totalorder %s22, 1
      %p155 = por %p153, %p154
      %p157 = scmp.ne.s32.totalorder %s142, %s156
      %p158 = scmp.eq.s32.totalorder %s22, 0
      %p159 = por %p157, %p158
      %s161 = sadd.s32 %s160, 1
      %p164 = scmp.eq.s32.totalorder %s16, 1
      %p165 = scmp.ne.s32.totalorder %s160, %s162
      %p166 = scmp.eq.s32.totalorder %s16, 0
      %p167 = por %p165, %p166
      %p168 = scmp.ne.s32.totalorder %s160, %s162
      %p169 = scmp.eq.s32.totalorder %s21, 1
      %p170 = por %p168, %p169
      %p171 = scmp.ne.s32.totalorder %s162, %s163
      %p172 = scmp.eq.s32.totalorder %s21, 0
      %p173 = por %p171, %p172
      %p174 = scmp.ne.s32.totalorder %s162, %s163
      %p175 = scmp.eq.s32.totalorder %s22, 1
      %p176 = por %p174, %p175
      %p178 = scmp.ne.s32.totalorder %s163, %s177
      %p179 = scmp.eq.s32.totalorder %s22, 0
      %p180 = por %p178, %p179
      %p181 = scmp.le.s32.totalorder 1, %s16
      %p182 = scmp.lt.s32.totalorder %s16, 3
      %p183 = pnand %p181, %p182
      %p184 = pneg %p183
      // Predicated region
      $region9: #{baseline_net_forward.3} parent=5 // pred_check
        _
      $region10: #{baseline_net_forward.3} parent=5 // pred_check_branch
        %186 = sbr.rel (%p183) target = $region12
      $region11: #{baseline_net_forward.3} parent=5 // pred_region
        %s187 = ssub.s32 %s16, 1
        // Predicated region
        $region13: #{baseline_net_forward.3} parent=11 // pred_check
          %p188 = pneg %p89
        $region14: #{baseline_net_forward.3} parent=11 // pred_check_branch
          %190 = sbr.rel (%p188) target = $region16
        $region15: #{baseline_net_forward.3} parent=11 // pred_region
          _
        $region16: #{baseline_net_forward.3} parent=11 // pred_fallthru
          _
        // Predicated region
        $region17: #{baseline_net_forward.3} parent=11 // pred_check
          %p191 = pneg %p110
        $region18: #{baseline_net_forward.3} parent=11 // pred_check_branch
          %193 = sbr.rel (%p191) target = $region20
        $region19: #{baseline_net_forward.3} parent=11 // pred_region
          _
        $region20: #{baseline_net_forward.3} parent=11 // pred_fallthru
          _
        // Predicated region
        $region21: #{baseline_net_forward.3} parent=11 // pred_check
          %p194 = pneg %p131
        $region22: #{baseline_net_forward.3} parent=11 // pred_check_branch
          %196 = sbr.rel (%p194) target = $region24
        $region23: #{baseline_net_forward.3} parent=11 // pred_region
          _
        $region24: #{baseline_net_forward.3} parent=11 // pred_fallthru
          _
      $region12: #{baseline_net_forward.3} parent=5 // pred_fallthru
        _
      %p197 = scmp.lt.s32.totalorder %s16, 2
      // Predicated region
      $region25: #{baseline_net_forward.3} parent=5 // pred_check
        %p198 = pneg %p197
      $region26: #{baseline_net_forward.3} parent=5 // pred_check_branch
        %200 = sbr.rel (%p198) target = $region28
      $region27: #{baseline_net_forward.3} parent=5 // pred_region
        // Predicated region
        $region29: #{baseline_net_forward.3} parent=27 // pred_check
          %p201 = pneg %p36
        $region30: #{baseline_net_forward.3} parent=27 // pred_check_branch
          %203 = sbr.rel (%p201) target = $region32
        $region31: #{baseline_net_forward.3} parent=27 // pred_region
          %s204 = smul.u32 72, %s16
          %p205 = scmp.lt.s32.totalorder %s204, 143
          %s206 = scalar_select %p205, %s204, 143
          %s207 = scalar_lea.vmem %s0, %s206
          %s208 = smul.u32 72, %s16
        $region32: #{baseline_net_forward.3} parent=27 // pred_fallthru
          _
        // Predicated region
        $region33: #{baseline_net_forward.3} parent=27 // pred_check
          %p209 = pneg %p62
        $region34: #{baseline_net_forward.3} parent=27 // pred_check_branch
          %211 = sbr.rel (%p209) target = $region36
        $region35: #{baseline_net_forward.3} parent=27 // pred_region
          %s212 = smul.u32 1152, %s16
          %p213 = scmp.lt.s32.totalorder %s212, 2303
          %s214 = scalar_select %p213, %s212, 2303
          %s215 = smul.addr %s214, 4
          %s216 = scalar_lea.vmem %s1, %s215
          %s217 = smul.u32 1152, %s16
        $region36: #{baseline_net_forward.3} parent=27 // pred_fallthru
          _
      $region28: #{baseline_net_forward.3} parent=5 // pred_fallthru
        _
      %p218 = scmp.le.s32.totalorder 1, %s16
      %p219 = scmp.lt.s32.totalorder %s16, 3
      %p220 = pnand %p218, %p219
      %p221 = pneg %p220
      // Predicated region
      $region37: #{baseline_net_forward.3} parent=5 // pred_check
        _
      $region38: #{baseline_net_forward.3} parent=5 // pred_check_branch
        %223 = sbr.rel (%p220) target = $region40
      $region39: #{baseline_net_forward.3} parent=5 // pred_region
        %s224 = ssub.s32 %s16, 1
        %s225 = smul.u32 72, %s21
        %p226 = scmp.lt.s32.totalorder %s225, 143
        %s227 = scalar_select %p226, %s225, 143
        %s228 = scalar_lea.vmem %s0, %s227
        %p229 = pneg %p42
        %p230 = pneg %p39
        %s231 = smul.u32 1152, %s21
        %p232 = scmp.lt.s32.totalorder %s231, 2303
        %s233 = scalar_select %p232, %s231, 2303
        %s234 = smul.addr %s233, 4
        %s235 = scalar_lea.vmem %s1, %s234
        %p236 = pneg %p68
        %p237 = pneg %p65
        %p238 = pneg %p89
        %p239 = pneg %p86
        %p240 = pneg %p110
        %p241 = pneg %p107
        %p242 = pneg %p131
        %p243 = pneg %p128
        %p244 = pneg %p152
        %p245 = pneg %p149
        %p246 = pneg %p173
        %p247 = pneg %p170
        %s248 = smul.u32 72, %s21
        %p249 = scmp.lt.s32.totalorder %s248, 143
        %s250 = scalar_select %p249, %s248, 143
        %s251 = scalar_lea.vmem %s0, %s250
        %s252 = smul.u32 72, %s21
        %s253 = smul.u32 1152, %s21
        %p254 = scmp.lt.s32.totalorder %s253, 2303
        %s255 = scalar_select %p254, %s253, 2303
        %s256 = smul.addr %s255, 4
        %s257 = scalar_lea.vmem %s1, %s256
        %s258 = smul.u32 1152, %s21
        %p259 = scmp.eq.s32.totalorder %s21, 0
        // Predicated region
        $region41: #{baseline_net_forward.3} parent=39 // pred_check
          %p260 = pneg %p259
        $region42: #{baseline_net_forward.3} parent=39 // pred_check_branch
          %262 = sbr.rel (%p260) target = $region44
        $region43: #{baseline_net_forward.3} parent=39 // pred_region
          %vm263 = vcmask 680960
          %264 = vst.msk [vmem:[#allocation2] sm:$0x3] %vm263, 0.0
        $region44: #{baseline_net_forward.3} parent=39 // pred_fallthru
          _
        %v265 = vld [vmem:[#allocation2] sm:$0x3]
        %v266 = vld [vmem:[%s251] sm:$0xff]
        %v267 = vld [vmem:[%s251 + $0x8] sm:$0xff]
        %v268 = vld [vmem:[%s251 + $0x10] sm:$0xff]
        %v269 = vld [vmem:[%s251 + $0x18] sm:$0xff]
        %v270 = vld [vmem:[%s251 + $0x20] sm:$0xff]
        %v271 = vld [vmem:[%s251 + $0x28] sm:$0xff]
        %v272 = vld [vmem:[%s251 + $0x30] sm:$0xff]
        %v273 = vld [vmem:[%s251 + $0x38] sm:$0xff]
        %v274 = vld [vmem:[%s251 + $0x40] sm:$0xff]
        %v275 = vld [vmem:[%s257] sm:$0xf]
        %v276 = vld [vmem:[%s257 + $0x4] sm:$0xf]
        %v277 = vld [vmem:[%s257 + $0x8] sm:$0xf]
        %v278 = vld [vmem:[%s257 + $0xc] sm:$0xf]
        %v279 = vld [vmem:[%s257 + $0x10] sm:$0xf]
        %v280 = vld [vmem:[%s257 + $0x14] sm:$0xf]
        %v281 = vld [vmem:[%s257 + $0x18] sm:$0xf]
        %v282 = vld [vmem:[%s257 + $0x1c] sm:$0xf]
        %v283 = vld [vmem:[%s257 + $0x20] sm:$0xf]
        %v284 = vld [vmem:[%s257 + $0x24] sm:$0xf]
        %v285 = vld [vmem:[%s257 + $0x28] sm:$0xf]
        %v286 = vld [vmem:[%s257 + $0x2c] sm:$0xf]
        %v287 = vld [vmem:[%s257 + $0x30] sm:$0xf]
        %v288 = vld [vmem:[%s257 + $0x34] sm:$0xf]
        %v289 = vld [vmem:[%s257 + $0x38] sm:$0xf]
        %v290 = vld [vmem:[%s257 + $0x3c] sm:$0xf]
        %v291 = vld [vmem:[%s257 + $0x40] sm:$0xf]
        %v292 = vld [vmem:[%s257 + $0x44] sm:$0xf]
        %v293 = vld [vmem:[%s257 + $0x48] sm:$0xf]
        %v294 = vld [vmem:[%s257 + $0x4c] sm:$0xf]
        %v295 = vld [vmem:[%s257 + $0x50] sm:$0xf]
        %v296 = vld [vmem:[%s257 + $0x54] sm:$0xf]
        %v297 = vld [vmem:[%s257 + $0x58] sm:$0xf]
        %v298 = vld [vmem:[%s257 + $0x5c] sm:$0xf]
        %v299 = vld [vmem:[%s257 + $0x60] sm:$0xf]
        %v300 = vld [vmem:[%s257 + $0x64] sm:$0xf]
        %v301 = vld [vmem:[%s257 + $0x68] sm:$0xf]
        %v302 = vld [vmem:[%s257 + $0x6c] sm:$0xf]
        %v303 = vld [vmem:[%s257 + $0x70] sm:$0xf]
        %v304 = vld [vmem:[%s257 + $0x74] sm:$0xf]
        %v305 = vld [vmem:[%s257 + $0x78] sm:$0xf]
        %v306 = vld [vmem:[%s257 + $0x7c] sm:$0xf]
        %v307 = vld [vmem:[%s257 + $0x80] sm:$0xf]
        %v308 = vld [vmem:[%s257 + $0x84] sm:$0xf]
        %v309 = vld [vmem:[%s257 + $0x88] sm:$0xf]
        %v310 = vld [vmem:[%s257 + $0x8c] sm:$0xf]
        %v311 = vld [vmem:[%s257 + $0x90] sm:$0xf]
        %v312 = vld [vmem:[%s257 + $0x94] sm:$0xf]
        %v313 = vld [vmem:[%s257 + $0x98] sm:$0xf]
        %v314 = vld [vmem:[%s257 + $0x9c] sm:$0xf]
        %v315 = vld [vmem:[%s257 + $0xa0] sm:$0xf]
        %v316 = vld [vmem:[%s257 + $0xa4] sm:$0xf]
        %v317 = vld [vmem:[%s257 + $0xa8] sm:$0xf]
        %v318 = vld [vmem:[%s257 + $0xac] sm:$0xf]
        %v319 = vld [vmem:[%s257 + $0xb0] sm:$0xf]
        %v320 = vld [vmem:[%s257 + $0xb4] sm:$0xf]
        %v321 = vld [vmem:[%s257 + $0xb8] sm:$0xf]
        %v322 = vld [vmem:[%s257 + $0xbc] sm:$0xf]
        %v323 = vld [vmem:[%s257 + $0xc0] sm:$0xf]
        %v324 = vld [vmem:[%s257 + $0xc4] sm:$0xf]
        %v325 = vld [vmem:[%s257 + $0xc8] sm:$0xf]
        %v326 = vld [vmem:[%s257 + $0xcc] sm:$0xf]
        %v327 = vld [vmem:[%s257 + $0xd0] sm:$0xf]
        %v328 = vld [vmem:[%s257 + $0xd4] sm:$0xf]
        %v329 = vld [vmem:[%s257 + $0xd8] sm:$0xf]
        %v330 = vld [vmem:[%s257 + $0xdc] sm:$0xf]
        %v331 = vld [vmem:[%s257 + $0xe0] sm:$0xf]
        %v332 = vld [vmem:[%s257 + $0xe4] sm:$0xf]
        %v333 = vld [vmem:[%s257 + $0xe8] sm:$0xf]
        %v334 = vld [vmem:[%s257 + $0xec] sm:$0xf]
        %v335 = vld [vmem:[%s257 + $0xf0] sm:$0xf]
        %v336 = vld [vmem:[%s257 + $0xf4] sm:$0xf]
        %v337 = vld [vmem:[%s257 + $0xf8] sm:$0xf]
        %v338 = vld [vmem:[%s257 + $0xfc] sm:$0xf]
        %v339 = vld [vmem:[%s257 + $0x100] sm:$0xf]
        %v340 = vld [vmem:[%s257 + $0x104] sm:$0xf]
        %v341 = vld [vmem:[%s257 + $0x108] sm:$0xf]
        %v342 = vld [vmem:[%s257 + $0x10c] sm:$0xf]
        %v343 = vld [vmem:[%s257 + $0x110] sm:$0xf]
        %v344 = vld [vmem:[%s257 + $0x114] sm:$0xf]
        %v345 = vld [vmem:[%s257 + $0x118] sm:$0xf]
        %v346 = vld [vmem:[%s257 + $0x11c] sm:$0xf]
        %v347 = vld [vmem:[%s257 + $0x120] sm:$0xf]
        %v348 = vld [vmem:[%s257 + $0x124] sm:$0xf]
        %v349 = vld [vmem:[%s257 + $0x128] sm:$0xf]
        %v350 = vld [vmem:[%s257 + $0x12c] sm:$0xf]
        %v351 = vld [vmem:[%s257 + $0x130] sm:$0xf]
        %v352 = vld [vmem:[%s257 + $0x134] sm:$0xf]
        %v353 = vld [vmem:[%s257 + $0x138] sm:$0xf]
        %v354 = vld [vmem:[%s257 + $0x13c] sm:$0xf]
        %v355 = vld [vmem:[%s257 + $0x140] sm:$0xf]
        %v356 = vld [vmem:[%s257 + $0x144] sm:$0xf]
        %v357 = vld [vmem:[%s257 + $0x148] sm:$0xf]
        %v358 = vld [vmem:[%s257 + $0x14c] sm:$0xf]
        %v359 = vld [vmem:[%s257 + $0x150] sm:$0xf]
        %v360 = vld [vmem:[%s257 + $0x154] sm:$0xf]
        %v361 = vld [vmem:[%s257 + $0x158] sm:$0xf]
        %v362 = vld [vmem:[%s257 + $0x15c] sm:$0xf]
        %v363 = vld [vmem:[%s257 + $0x160] sm:$0xf]
        %v364 = vld [vmem:[%s257 + $0x164] sm:$0xf]
        %v365 = vld [vmem:[%s257 + $0x168] sm:$0xf]
        %v366 = vld [vmem:[%s257 + $0x16c] sm:$0xf]
        %v367 = vld [vmem:[%s257 + $0x170] sm:$0xf]
        %v368 = vld [vmem:[%s257 + $0x174] sm:$0xf]
        %v369 = vld [vmem:[%s257 + $0x178] sm:$0xf]
        %v370 = vld [vmem:[%s257 + $0x17c] sm:$0xf]
        %v371 = vld [vmem:[%s257 + $0x180] sm:$0xf]
        %v372 = vld [vmem:[%s257 + $0x184] sm:$0xf]
        %v373 = vld [vmem:[%s257 + $0x188] sm:$0xf]
        %v374 = vld [vmem:[%s257 + $0x18c] sm:$0xf]
        %v375 = vld [vmem:[%s257 + $0x190] sm:$0xf]
        %v376 = vld [vmem:[%s257 + $0x194] sm:$0xf]
        %v377 = vld [vmem:[%s257 + $0x198] sm:$0xf]
        %v378 = vld [vmem:[%s257 + $0x19c] sm:$0xf]
        %v379 = vld [vmem:[%s257 + $0x1a0] sm:$0xf]
        %v380 = vld [vmem:[%s257 + $0x1a4] sm:$0xf]
        %v381 = vld [vmem:[%s257 + $0x1a8] sm:$0xf]
        %v382 = vld [vmem:[%s257 + $0x1ac] sm:$0xf]
        %v383 = vld [vmem:[%s257 + $0x1b0] sm:$0xf]
        %v384 = vld [vmem:[%s257 + $0x1b4] sm:$0xf]
        %v385 = vld [vmem:[%s257 + $0x1b8] sm:$0xf]
        %v386 = vld [vmem:[%s257 + $0x1bc] sm:$0xf]
        %v387 = vld [vmem:[%s257 + $0x1c0] sm:$0xf]
        %v388 = vld [vmem:[%s257 + $0x1c4] sm:$0xf]
        %v389 = vld [vmem:[%s257 + $0x1c8] sm:$0xf]
        %v390 = vld [vmem:[%s257 + $0x1cc] sm:$0xf]
        %v391 = vld [vmem:[%s257 + $0x1d0] sm:$0xf]
        %v392 = vld [vmem:[%s257 + $0x1d4] sm:$0xf]
        %v393 = vld [vmem:[%s257 + $0x1d8] sm:$0xf]
        %v394 = vld [vmem:[%s257 + $0x1dc] sm:$0xf]
        %v395 = vld [vmem:[%s257 + $0x1e0] sm:$0xf]
        %v396 = vld [vmem:[%s257 + $0x1e4] sm:$0xf]
        %v397 = vld [vmem:[%s257 + $0x1e8] sm:$0xf]
        %v398 = vld [vmem:[%s257 + $0x1ec] sm:$0xf]
        %v399 = vld [vmem:[%s257 + $0x1f0] sm:$0xf]
        %v400 = vld [vmem:[%s257 + $0x1f4] sm:$0xf]
        %v401 = vld [vmem:[%s257 + $0x1f8] sm:$0xf]
        %v402 = vld [vmem:[%s257 + $0x1fc] sm:$0xf]
        %v403 = vld [vmem:[%s257 + $0x200] sm:$0xf]
        %v404 = vld [vmem:[%s257 + $0x204] sm:$0xf]
        %v405 = vld [vmem:[%s257 + $0x208] sm:$0xf]
        %v406 = vld [vmem:[%s257 + $0x20c] sm:$0xf]
        %v407 = vld [vmem:[%s257 + $0x210] sm:$0xf]
        %v408 = vld [vmem:[%s257 + $0x214] sm:$0xf]
        %v409 = vld [vmem:[%s257 + $0x218] sm:$0xf]
        %v410 = vld [vmem:[%s257 + $0x21c] sm:$0xf]
        %v411 = vld [vmem:[%s257 + $0x220] sm:$0xf]
        %v412 = vld [vmem:[%s257 + $0x224] sm:$0xf]
        %v413 = vld [vmem:[%s257 + $0x228] sm:$0xf]
        %v414 = vld [vmem:[%s257 + $0x22c] sm:$0xf]
        %v415 = vld [vmem:[%s257 + $0x230] sm:$0xf]
        %v416 = vld [vmem:[%s257 + $0x234] sm:$0xf]
        %v417 = vld [vmem:[%s257 + $0x238] sm:$0xf]
        %v418 = vld [vmem:[%s257 + $0x23c] sm:$0xf]
        %v419 = vld [vmem:[%s257 + $0x240] sm:$0xf]
        %v420 = vld [vmem:[%s257 + $0x244] sm:$0xf]
        %v421 = vld [vmem:[%s257 + $0x248] sm:$0xf]
        %v422 = vld [vmem:[%s257 + $0x24c] sm:$0xf]
        %v423 = vld [vmem:[%s257 + $0x250] sm:$0xf]
        %v424 = vld [vmem:[%s257 + $0x254] sm:$0xf]
        %v425 = vld [vmem:[%s257 + $0x258] sm:$0xf]
        %v426 = vld [vmem:[%s257 + $0x25c] sm:$0xf]
        %v427 = vld [vmem:[%s257 + $0x260] sm:$0xf]
        %v428 = vld [vmem:[%s257 + $0x264] sm:$0xf]
        %v429 = vld [vmem:[%s257 + $0x268] sm:$0xf]
        %v430 = vld [vmem:[%s257 + $0x26c] sm:$0xf]
        %v431 = vld [vmem:[%s257 + $0x270] sm:$0xf]
        %v432 = vld [vmem:[%s257 + $0x274] sm:$0xf]
        %v433 = vld [vmem:[%s257 + $0x278] sm:$0xf]
        %v434 = vld [vmem:[%s257 + $0x27c] sm:$0xf]
        %v435 = vld [vmem:[%s257 + $0x280] sm:$0xf]
        %v436 = vld [vmem:[%s257 + $0x284] sm:$0xf]
        %v437 = vld [vmem:[%s257 + $0x288] sm:$0xf]
        %v438 = vld [vmem:[%s257 + $0x28c] sm:$0xf]
        %v439 = vld [vmem:[%s257 + $0x290] sm:$0xf]
        %v440 = vld [vmem:[%s257 + $0x294] sm:$0xf]
        %v441 = vld [vmem:[%s257 + $0x298] sm:$0xf]
        %v442 = vld [vmem:[%s257 + $0x29c] sm:$0xf]
        %v443 = vld [vmem:[%s257 + $0x2a0] sm:$0xf]
        %v444 = vld [vmem:[%s257 + $0x2a4] sm:$0xf]
        %v445 = vld [vmem:[%s257 + $0x2a8] sm:$0xf]
        %v446 = vld [vmem:[%s257 + $0x2ac] sm:$0xf]
        %v447 = vld [vmem:[%s257 + $0x2b0] sm:$0xf]
        %v448 = vld [vmem:[%s257 + $0x2b4] sm:$0xf]
        %v449 = vld [vmem:[%s257 + $0x2b8] sm:$0xf]
        %v450 = vld [vmem:[%s257 + $0x2bc] sm:$0xf]
        %v451 = vld [vmem:[%s257 + $0x2c0] sm:$0xf]
        %v452 = vld [vmem:[%s257 + $0x2c4] sm:$0xf]
        %v453 = vld [vmem:[%s257 + $0x2c8] sm:$0xf]
        %v454 = vld [vmem:[%s257 + $0x2cc] sm:$0xf]
        %v455 = vld [vmem:[%s257 + $0x2d0] sm:$0xf]
        %v456 = vld [vmem:[%s257 + $0x2d4] sm:$0xf]
        %v457 = vld [vmem:[%s257 + $0x2d8] sm:$0xf]
        %v458 = vld [vmem:[%s257 + $0x2dc] sm:$0xf]
        %v459 = vld [vmem:[%s257 + $0x2e0] sm:$0xf]
        %v460 = vld [vmem:[%s257 + $0x2e4] sm:$0xf]
        %v461 = vld [vmem:[%s257 + $0x2e8] sm:$0xf]
        %v462 = vld [vmem:[%s257 + $0x2ec] sm:$0xf]
        %v463 = vld [vmem:[%s257 + $0x2f0] sm:$0xf]
        %v464 = vld [vmem:[%s257 + $0x2f4] sm:$0xf]
        %v465 = vld [vmem:[%s257 + $0x2f8] sm:$0xf]
        %v466 = vld [vmem:[%s257 + $0x2fc] sm:$0xf]
        %v467 = vld [vmem:[%s257 + $0x300] sm:$0xf]
        %v468 = vld [vmem:[%s257 + $0x304] sm:$0xf]
        %v469 = vld [vmem:[%s257 + $0x308] sm:$0xf]
        %v470 = vld [vmem:[%s257 + $0x30c] sm:$0xf]
        %v471 = vld [vmem:[%s257 + $0x310] sm:$0xf]
        %v472 = vld [vmem:[%s257 + $0x314] sm:$0xf]
        %v473 = vld [vmem:[%s257 + $0x318] sm:$0xf]
        %v474 = vld [vmem:[%s257 + $0x31c] sm:$0xf]
        %v475 = vld [vmem:[%s257 + $0x320] sm:$0xf]
        %v476 = vld [vmem:[%s257 + $0x324] sm:$0xf]
        %v477 = vld [vmem:[%s257 + $0x328] sm:$0xf]
        %v478 = vld [vmem:[%s257 + $0x32c] sm:$0xf]
        %v479 = vld [vmem:[%s257 + $0x330] sm:$0xf]
        %v480 = vld [vmem:[%s257 + $0x334] sm:$0xf]
        %v481 = vld [vmem:[%s257 + $0x338] sm:$0xf]
        %v482 = vld [vmem:[%s257 + $0x33c] sm:$0xf]
        %v483 = vld [vmem:[%s257 + $0x340] sm:$0xf]
        %v484 = vld [vmem:[%s257 + $0x344] sm:$0xf]
        %v485 = vld [vmem:[%s257 + $0x348] sm:$0xf]
        %v486 = vld [vmem:[%s257 + $0x34c] sm:$0xf]
        %v487 = vld [vmem:[%s257 + $0x350] sm:$0xf]
        %v488 = vld [vmem:[%s257 + $0x354] sm:$0xf]
        %v489 = vld [vmem:[%s257 + $0x358] sm:$0xf]
        %v490 = vld [vmem:[%s257 + $0x35c] sm:$0xf]
        %v491 = vld [vmem:[%s257 + $0x360] sm:$0xf]
        %v492 = vld [vmem:[%s257 + $0x364] sm:$0xf]
        %v493 = vld [vmem:[%s257 + $0x368] sm:$0xf]
        %v494 = vld [vmem:[%s257 + $0x36c] sm:$0xf]
        %v495 = vld [vmem:[%s257 + $0x370] sm:$0xf]
        %v496 = vld [vmem:[%s257 + $0x374] sm:$0xf]
        %v497 = vld [vmem:[%s257 + $0x378] sm:$0xf]
        %v498 = vld [vmem:[%s257 + $0x37c] sm:$0xf]
        %v499 = vld [vmem:[%s257 + $0x380] sm:$0xf]
        %v500 = vld [vmem:[%s257 + $0x384] sm:$0xf]
        %v501 = vld [vmem:[%s257 + $0x388] sm:$0xf]
        %v502 = vld [vmem:[%s257 + $0x38c] sm:$0xf]
        %v503 = vld [vmem:[%s257 + $0x390] sm:$0xf]
        %v504 = vld [vmem:[%s257 + $0x394] sm:$0xf]
        %v505 = vld [vmem:[%s257 + $0x398] sm:$0xf]
        %v506 = vld [vmem:[%s257 + $0x39c] sm:$0xf]
        %v507 = vld [vmem:[%s257 + $0x3a0] sm:$0xf]
        %v508 = vld [vmem:[%s257 + $0x3a4] sm:$0xf]
        %v509 = vld [vmem:[%s257 + $0x3a8] sm:$0xf]
        %v510 = vld [vmem:[%s257 + $0x3ac] sm:$0xf]
        %v511 = vld [vmem:[%s257 + $0x3b0] sm:$0xf]
        %v512 = vld [vmem:[%s257 + $0x3b4] sm:$0xf]
        %v513 = vld [vmem:[%s257 + $0x3b8] sm:$0xf]
        %v514 = vld [vmem:[%s257 + $0x3bc] sm:$0xf]
        %v515 = vld [vmem:[%s257 + $0x3c0] sm:$0xf]
        %v516 = vld [vmem:[%s257 + $0x3c4] sm:$0xf]
        %v517 = vld [vmem:[%s257 + $0x3c8] sm:$0xf]
        %v518 = vld [vmem:[%s257 + $0x3cc] sm:$0xf]
        %v519 = vld [vmem:[%s257 + $0x3d0] sm:$0xf]
        %v520 = vld [vmem:[%s257 + $0x3d4] sm:$0xf]
        %v521 = vld [vmem:[%s257 + $0x3d8] sm:$0xf]
        %v522 = vld [vmem:[%s257 + $0x3dc] sm:$0xf]
        %v523 = vld [vmem:[%s257 + $0x3e0] sm:$0xf]
        %v524 = vld [vmem:[%s257 + $0x3e4] sm:$0xf]
        %v525 = vld [vmem:[%s257 + $0x3e8] sm:$0xf]
        %v526 = vld [vmem:[%s257 + $0x3ec] sm:$0xf]
        %v527 = vld [vmem:[%s257 + $0x3f0] sm:$0xf]
        %v528 = vld [vmem:[%s257 + $0x3f4] sm:$0xf]
        %v529 = vld [vmem:[%s257 + $0x3f8] sm:$0xf]
        %v530 = vld [vmem:[%s257 + $0x3fc] sm:$0xf]
        %v531 = vld [vmem:[%s257 + $0x400] sm:$0xf]
        %v532 = vld [vmem:[%s257 + $0x404] sm:$0xf]
        %v533 = vld [vmem:[%s257 + $0x408] sm:$0xf]
        %v534 = vld [vmem:[%s257 + $0x40c] sm:$0xf]
        %v535 = vld [vmem:[%s257 + $0x410] sm:$0xf]
        %v536 = vld [vmem:[%s257 + $0x414] sm:$0xf]
        %v537 = vld [vmem:[%s257 + $0x418] sm:$0xf]
        %v538 = vld [vmem:[%s257 + $0x41c] sm:$0xf]
        %v539 = vld [vmem:[%s257 + $0x420] sm:$0xf]
        %v540 = vld [vmem:[%s257 + $0x424] sm:$0xf]
        %v541 = vld [vmem:[%s257 + $0x428] sm:$0xf]
        %v542 = vld [vmem:[%s257 + $0x42c] sm:$0xf]
        %v543 = vld [vmem:[%s257 + $0x430] sm:$0xf]
        %v544 = vld [vmem:[%s257 + $0x434] sm:$0xf]
        %v545 = vld [vmem:[%s257 + $0x438] sm:$0xf]
        %v546 = vld [vmem:[%s257 + $0x43c] sm:$0xf]
        %v547 = vld [vmem:[%s257 + $0x440] sm:$0xf]
        %v548 = vld [vmem:[%s257 + $0x444] sm:$0xf]
        %v549 = vld [vmem:[%s257 + $0x448] sm:$0xf]
        %v550 = vld [vmem:[%s257 + $0x44c] sm:$0xf]
        %v551 = vld [vmem:[%s257 + $0x450] sm:$0xf]
        %v552 = vld [vmem:[%s257 + $0x454] sm:$0xf]
        %v553 = vld [vmem:[%s257 + $0x458] sm:$0xf]
        %v554 = vld [vmem:[%s257 + $0x45c] sm:$0xf]
        %v555 = vld [vmem:[%s257 + $0x460] sm:$0xf]
        %v556 = vld [vmem:[%s257 + $0x464] sm:$0xf]
        %v557 = vld [vmem:[%s257 + $0x468] sm:$0xf]
        %v558 = vld [vmem:[%s257 + $0x46c] sm:$0xf]
        %v559 = vld [vmem:[%s257 + $0x470] sm:$0xf]
        %v560 = vld [vmem:[%s257 + $0x474] sm:$0xf]
        %v561 = vld [vmem:[%s257 + $0x478] sm:$0xf]
        %v562 = vld [vmem:[%s257 + $0x47c] sm:$0xf]
        %v563 = vld [vmem:[%s257 + $0x480] sm:$0xf]
        %v564 = vld [vmem:[%s257 + $0x484] sm:$0xf]
        %v565 = vld [vmem:[%s257 + $0x488] sm:$0xf]
        %v566 = vld [vmem:[%s257 + $0x48c] sm:$0xf]
        %v567 = vld [vmem:[%s257 + $0x490] sm:$0xf]
        %v568 = vld [vmem:[%s257 + $0x494] sm:$0xf]
        %v569 = vld [vmem:[%s257 + $0x498] sm:$0xf]
        %v570 = vld [vmem:[%s257 + $0x49c] sm:$0xf]
        %v571 = vld [vmem:[%s257 + $0x4a0] sm:$0xf]
        %v572 = vld [vmem:[%s257 + $0x4a4] sm:$0xf]
        %v573 = vld [vmem:[%s257 + $0x4a8] sm:$0xf]
        %v574 = vld [vmem:[%s257 + $0x4ac] sm:$0xf]
        %v575 = vld [vmem:[%s257 + $0x4b0] sm:$0xf]
        %v576 = vld [vmem:[%s257 + $0x4b4] sm:$0xf]
        %v577 = vld [vmem:[%s257 + $0x4b8] sm:$0xf]
        %v578 = vld [vmem:[%s257 + $0x4bc] sm:$0xf]
        %v579 = vld [vmem:[%s257 + $0x4c0] sm:$0xf]
        %v580 = vld [vmem:[%s257 + $0x4c4] sm:$0xf]
        %v581 = vld [vmem:[%s257 + $0x4c8] sm:$0xf]
        %v582 = vld [vmem:[%s257 + $0x4cc] sm:$0xf]
        %v583 = vld [vmem:[%s257 + $0x4d0] sm:$0xf]
        %v584 = vld [vmem:[%s257 + $0x4d4] sm:$0xf]
        %v585 = vld [vmem:[%s257 + $0x4d8] sm:$0xf]
        %v586 = vld [vmem:[%s257 + $0x4dc] sm:$0xf]
        %v587 = vld [vmem:[%s257 + $0x4e0] sm:$0xf]
        %v588 = vld [vmem:[%s257 + $0x4e4] sm:$0xf]
        %v589 = vld [vmem:[%s257 + $0x4e8] sm:$0xf]
        %v590 = vld [vmem:[%s257 + $0x4ec] sm:$0xf]
        %v591 = vld [vmem:[%s257 + $0x4f0] sm:$0xf]
        %v592 = vld [vmem:[%s257 + $0x4f4] sm:$0xf]
        %v593 = vld [vmem:[%s257 + $0x4f8] sm:$0xf]
        %v594 = vld [vmem:[%s257 + $0x4fc] sm:$0xf]
        %v595 = vld [vmem:[%s257 + $0x500] sm:$0xf]
        %v596 = vld [vmem:[%s257 + $0x504] sm:$0xf]
        %v597 = vld [vmem:[%s257 + $0x508] sm:$0xf]
        %v598 = vld [vmem:[%s257 + $0x50c] sm:$0xf]
        %v599 = vld [vmem:[%s257 + $0x510] sm:$0xf]
        %v600 = vld [vmem:[%s257 + $0x514] sm:$0xf]
        %v601 = vld [vmem:[%s257 + $0x518] sm:$0xf]
        %v602 = vld [vmem:[%s257 + $0x51c] sm:$0xf]
        %v603 = vld [vmem:[%s257 + $0x520] sm:$0xf]
        %v604 = vld [vmem:[%s257 + $0x524] sm:$0xf]
        %v605 = vld [vmem:[%s257 + $0x528] sm:$0xf]
        %v606 = vld [vmem:[%s257 + $0x52c] sm:$0xf]
        %v607 = vld [vmem:[%s257 + $0x530] sm:$0xf]
        %v608 = vld [vmem:[%s257 + $0x534] sm:$0xf]
        %v609 = vld [vmem:[%s257 + $0x538] sm:$0xf]
        %v610 = vld [vmem:[%s257 + $0x53c] sm:$0xf]
        %v611 = vld [vmem:[%s257 + $0x540] sm:$0xf]
        %v612 = vld [vmem:[%s257 + $0x544] sm:$0xf]
        %v613 = vld [vmem:[%s257 + $0x548] sm:$0xf]
        %v614 = vld [vmem:[%s257 + $0x54c] sm:$0xf]
        %v615 = vld [vmem:[%s257 + $0x550] sm:$0xf]
        %v616 = vld [vmem:[%s257 + $0x554] sm:$0xf]
        %v617 = vld [vmem:[%s257 + $0x558] sm:$0xf]
        %v618 = vld [vmem:[%s257 + $0x55c] sm:$0xf]
        %v619 = vld [vmem:[%s257 + $0x560] sm:$0xf]
        %v620 = vld [vmem:[%s257 + $0x564] sm:$0xf]
        %v621 = vld [vmem:[%s257 + $0x568] sm:$0xf]
        %v622 = vld [vmem:[%s257 + $0x56c] sm:$0xf]
        %v623 = vld [vmem:[%s257 + $0x570] sm:$0xf]
        %v624 = vld [vmem:[%s257 + $0x574] sm:$0xf]
        %v625 = vld [vmem:[%s257 + $0x578] sm:$0xf]
        %v626 = vld [vmem:[%s257 + $0x57c] sm:$0xf]
        %v627 = vld [vmem:[%s257 + $0x580] sm:$0xf]
        %v628 = vld [vmem:[%s257 + $0x584] sm:$0xf]
        %v629 = vld [vmem:[%s257 + $0x588] sm:$0xf]
        %v630 = vld [vmem:[%s257 + $0x58c] sm:$0xf]
        %v631 = vld [vmem:[%s257 + $0x590] sm:$0xf]
        %v632 = vld [vmem:[%s257 + $0x594] sm:$0xf]
        %v633 = vld [vmem:[%s257 + $0x598] sm:$0xf]
        %v634 = vld [vmem:[%s257 + $0x59c] sm:$0xf]
        %v635 = vld [vmem:[%s257 + $0x5a0] sm:$0xf]
        %v636 = vld [vmem:[%s257 + $0x5a4] sm:$0xf]
        %v637 = vld [vmem:[%s257 + $0x5a8] sm:$0xf]
        %v638 = vld [vmem:[%s257 + $0x5ac] sm:$0xf]
        %v639 = vld [vmem:[%s257 + $0x5b0] sm:$0xf]
        %v640 = vld [vmem:[%s257 + $0x5b4] sm:$0xf]
        %v641 = vld [vmem:[%s257 + $0x5b8] sm:$0xf]
        %v642 = vld [vmem:[%s257 + $0x5bc] sm:$0xf]
        %v643 = vld [vmem:[%s257 + $0x5c0] sm:$0xf]
        %v644 = vld [vmem:[%s257 + $0x5c4] sm:$0xf]
        %v645 = vld [vmem:[%s257 + $0x5c8] sm:$0xf]
        %v646 = vld [vmem:[%s257 + $0x5cc] sm:$0xf]
        %v647 = vld [vmem:[%s257 + $0x5d0] sm:$0xf]
        %v648 = vld [vmem:[%s257 + $0x5d4] sm:$0xf]
        %v649 = vld [vmem:[%s257 + $0x5d8] sm:$0xf]
        %v650 = vld [vmem:[%s257 + $0x5dc] sm:$0xf]
        %v651 = vld [vmem:[%s257 + $0x5e0] sm:$0xf]
        %v652 = vld [vmem:[%s257 + $0x5e4] sm:$0xf]
        %v653 = vld [vmem:[%s257 + $0x5e8] sm:$0xf]
        %v654 = vld [vmem:[%s257 + $0x5ec] sm:$0xf]
        %v655 = vld [vmem:[%s257 + $0x5f0] sm:$0xf]
        %v656 = vld [vmem:[%s257 + $0x5f4] sm:$0xf]
        %v657 = vld [vmem:[%s257 + $0x5f8] sm:$0xf]
        %v658 = vld [vmem:[%s257 + $0x5fc] sm:$0xf]
        %v659 = vld [vmem:[%s257 + $0x600] sm:$0xf]
        %v660 = vld [vmem:[%s257 + $0x604] sm:$0xf]
        %v661 = vld [vmem:[%s257 + $0x608] sm:$0xf]
        %v662 = vld [vmem:[%s257 + $0x60c] sm:$0xf]
        %v663 = vld [vmem:[%s257 + $0x610] sm:$0xf]
        %v664 = vld [vmem:[%s257 + $0x614] sm:$0xf]
        %v665 = vld [vmem:[%s257 + $0x618] sm:$0xf]
        %v666 = vld [vmem:[%s257 + $0x61c] sm:$0xf]
        %v667 = vld [vmem:[%s257 + $0x620] sm:$0xf]
        %v668 = vld [vmem:[%s257 + $0x624] sm:$0xf]
        %v669 = vld [vmem:[%s257 + $0x628] sm:$0xf]
        %v670 = vld [vmem:[%s257 + $0x62c] sm:$0xf]
        %v671 = vld [vmem:[%s257 + $0x630] sm:$0xf]
        %v672 = vld [vmem:[%s257 + $0x634] sm:$0xf]
        %v673 = vld [vmem:[%s257 + $0x638] sm:$0xf]
        %v674 = vld [vmem:[%s257 + $0x63c] sm:$0xf]
        %v675 = vld [vmem:[%s257 + $0x640] sm:$0xf]
        %v676 = vld [vmem:[%s257 + $0x644] sm:$0xf]
        %v677 = vld [vmem:[%s257 + $0x648] sm:$0xf]
        %v678 = vld [vmem:[%s257 + $0x64c] sm:$0xf]
        %v679 = vld [vmem:[%s257 + $0x650] sm:$0xf]
        %v680 = vld [vmem:[%s257 + $0x654] sm:$0xf]
        %v681 = vld [vmem:[%s257 + $0x658] sm:$0xf]
        %v682 = vld [vmem:[%s257 + $0x65c] sm:$0xf]
        %v683 = vld [vmem:[%s257 + $0x660] sm:$0xf]
        %v684 = vld [vmem:[%s257 + $0x664] sm:$0xf]
        %v685 = vld [vmem:[%s257 + $0x668] sm:$0xf]
        %v686 = vld [vmem:[%s257 + $0x66c] sm:$0xf]
        %v687 = vld [vmem:[%s257 + $0x670] sm:$0xf]
        %v688 = vld [vmem:[%s257 + $0x674] sm:$0xf]
        %v689 = vld [vmem:[%s257 + $0x678] sm:$0xf]
        %v690 = vld [vmem:[%s257 + $0x67c] sm:$0xf]
        %v691 = vld [vmem:[%s257 + $0x680] sm:$0xf]
        %v692 = vld [vmem:[%s257 + $0x684] sm:$0xf]
        %v693 = vld [vmem:[%s257 + $0x688] sm:$0xf]
        %v694 = vld [vmem:[%s257 + $0x68c] sm:$0xf]
        %v695 = vld [vmem:[%s257 + $0x690] sm:$0xf]
        %v696 = vld [vmem:[%s257 + $0x694] sm:$0xf]
        %v697 = vld [vmem:[%s257 + $0x698] sm:$0xf]
        %v698 = vld [vmem:[%s257 + $0x69c] sm:$0xf]
        %v699 = vld [vmem:[%s257 + $0x6a0] sm:$0xf]
        %v700 = vld [vmem:[%s257 + $0x6a4] sm:$0xf]
        %v701 = vld [vmem:[%s257 + $0x6a8] sm:$0xf]
        %v702 = vld [vmem:[%s257 + $0x6ac] sm:$0xf]
        %v703 = vld [vmem:[%s257 + $0x6b0] sm:$0xf]
        %v704 = vld [vmem:[%s257 + $0x6b4] sm:$0xf]
        %v705 = vld [vmem:[%s257 + $0x6b8] sm:$0xf]
        %v706 = vld [vmem:[%s257 + $0x6bc] sm:$0xf]
        %v707 = vld [vmem:[%s257 + $0x6c0] sm:$0xf]
        %v708 = vld [vmem:[%s257 + $0x6c4] sm:$0xf]
        %v709 = vld [vmem:[%s257 + $0x6c8] sm:$0xf]
        %v710 = vld [vmem:[%s257 + $0x6cc] sm:$0xf]
        %v711 = vld [vmem:[%s257 + $0x6d0] sm:$0xf]
        %v712 = vld [vmem:[%s257 + $0x6d4] sm:$0xf]
        %v713 = vld [vmem:[%s257 + $0x6d8] sm:$0xf]
        %v714 = vld [vmem:[%s257 + $0x6dc] sm:$0xf]
        %v715 = vld [vmem:[%s257 + $0x6e0] sm:$0xf]
        %v716 = vld [vmem:[%s257 + $0x6e4] sm:$0xf]
        %v717 = vld [vmem:[%s257 + $0x6e8] sm:$0xf]
        %v718 = vld [vmem:[%s257 + $0x6ec] sm:$0xf]
        %v719 = vld [vmem:[%s257 + $0x6f0] sm:$0xf]
        %v720 = vld [vmem:[%s257 + $0x6f4] sm:$0xf]
        %v721 = vld [vmem:[%s257 + $0x6f8] sm:$0xf]
        %v722 = vld [vmem:[%s257 + $0x6fc] sm:$0xf]
        %v723 = vld [vmem:[%s257 + $0x700] sm:$0xf]
        %v724 = vld [vmem:[%s257 + $0x704] sm:$0xf]
        %v725 = vld [vmem:[%s257 + $0x708] sm:$0xf]
        %v726 = vld [vmem:[%s257 + $0x70c] sm:$0xf]
        %v727 = vld [vmem:[%s257 + $0x710] sm:$0xf]
        %v728 = vld [vmem:[%s257 + $0x714] sm:$0xf]
        %v729 = vld [vmem:[%s257 + $0x718] sm:$0xf]
        %v730 = vld [vmem:[%s257 + $0x71c] sm:$0xf]
        %v731 = vld [vmem:[%s257 + $0x720] sm:$0xf]
        %v732 = vld [vmem:[%s257 + $0x724] sm:$0xf]
        %v733 = vld [vmem:[%s257 + $0x728] sm:$0xf]
        %v734 = vld [vmem:[%s257 + $0x72c] sm:$0xf]
        %v735 = vld [vmem:[%s257 + $0x730] sm:$0xf]
        %v736 = vld [vmem:[%s257 + $0x734] sm:$0xf]
        %v737 = vld [vmem:[%s257 + $0x738] sm:$0xf]
        %v738 = vld [vmem:[%s257 + $0x73c] sm:$0xf]
        %v739 = vld [vmem:[%s257 + $0x740] sm:$0xf]
        %v740 = vld [vmem:[%s257 + $0x744] sm:$0xf]
        %v741 = vld [vmem:[%s257 + $0x748] sm:$0xf]
        %v742 = vld [vmem:[%s257 + $0x74c] sm:$0xf]
        %v743 = vld [vmem:[%s257 + $0x750] sm:$0xf]
        %v744 = vld [vmem:[%s257 + $0x754] sm:$0xf]
        %v745 = vld [vmem:[%s257 + $0x758] sm:$0xf]
        %v746 = vld [vmem:[%s257 + $0x75c] sm:$0xf]
        %v747 = vld [vmem:[%s257 + $0x760] sm:$0xf]
        %v748 = vld [vmem:[%s257 + $0x764] sm:$0xf]
        %v749 = vld [vmem:[%s257 + $0x768] sm:$0xf]
        %v750 = vld [vmem:[%s257 + $0x76c] sm:$0xf]
        %v751 = vld [vmem:[%s257 + $0x770] sm:$0xf]
        %v752 = vld [vmem:[%s257 + $0x774] sm:$0xf]
        %v753 = vld [vmem:[%s257 + $0x778] sm:$0xf]
        %v754 = vld [vmem:[%s257 + $0x77c] sm:$0xf]
        %v755 = vld [vmem:[%s257 + $0x780] sm:$0xf]
        %v756 = vld [vmem:[%s257 + $0x784] sm:$0xf]
        %v757 = vld [vmem:[%s257 + $0x788] sm:$0xf]
        %v758 = vld [vmem:[%s257 + $0x78c] sm:$0xf]
        %v759 = vld [vmem:[%s257 + $0x790] sm:$0xf]
        %v760 = vld [vmem:[%s257 + $0x794] sm:$0xf]
        %v761 = vld [vmem:[%s257 + $0x798] sm:$0xf]
        %v762 = vld [vmem:[%s257 + $0x79c] sm:$0xf]
        %v763 = vld [vmem:[%s257 + $0x7a0] sm:$0xf]
        %v764 = vld [vmem:[%s257 + $0x7a4] sm:$0xf]
        %v765 = vld [vmem:[%s257 + $0x7a8] sm:$0xf]
        %v766 = vld [vmem:[%s257 + $0x7ac] sm:$0xf]
        %v767 = vld [vmem:[%s257 + $0x7b0] sm:$0xf]
        %v768 = vld [vmem:[%s257 + $0x7b4] sm:$0xf]
        %v769 = vld [vmem:[%s257 + $0x7b8] sm:$0xf]
        %v770 = vld [vmem:[%s257 + $0x7bc] sm:$0xf]
        %v771 = vld [vmem:[%s257 + $0x7c0] sm:$0xf]
        %v772 = vld [vmem:[%s257 + $0x7c4] sm:$0xf]
        %v773 = vld [vmem:[%s257 + $0x7c8] sm:$0xf]
        %v774 = vld [vmem:[%s257 + $0x7cc] sm:$0xf]
        %v775 = vld [vmem:[%s257 + $0x7d0] sm:$0xf]
        %v776 = vld [vmem:[%s257 + $0x7d4] sm:$0xf]
        %v777 = vld [vmem:[%s257 + $0x7d8] sm:$0xf]
        %v778 = vld [vmem:[%s257 + $0x7dc] sm:$0xf]
        %v779 = vld [vmem:[%s257 + $0x7e0] sm:$0xf]
        %v780 = vld [vmem:[%s257 + $0x7e4] sm:$0xf]
        %v781 = vld [vmem:[%s257 + $0x7e8] sm:$0xf]
        %v782 = vld [vmem:[%s257 + $0x7ec] sm:$0xf]
        %v783 = vld [vmem:[%s257 + $0x7f0] sm:$0xf]
        %v784 = vld [vmem:[%s257 + $0x7f4] sm:$0xf]
        %v785 = vld [vmem:[%s257 + $0x7f8] sm:$0xf]
        %v786 = vld [vmem:[%s257 + $0x7fc] sm:$0xf]
        %v787 = vld [vmem:[%s257 + $0x800] sm:$0xf]
        %v788 = vld [vmem:[%s257 + $0x804] sm:$0xf]
        %v789 = vld [vmem:[%s257 + $0x808] sm:$0xf]
        %v790 = vld [vmem:[%s257 + $0x80c] sm:$0xf]
        %v791 = vld [vmem:[%s257 + $0x810] sm:$0xf]
        %v792 = vld [vmem:[%s257 + $0x814] sm:$0xf]
        %v793 = vld [vmem:[%s257 + $0x818] sm:$0xf]
        %v794 = vld [vmem:[%s257 + $0x81c] sm:$0xf]
        %v795 = vld [vmem:[%s257 + $0x820] sm:$0xf]
        %v796 = vld [vmem:[%s257 + $0x824] sm:$0xf]
        %v797 = vld [vmem:[%s257 + $0x828] sm:$0xf]
        %v798 = vld [vmem:[%s257 + $0x82c] sm:$0xf]
        %v799 = vld [vmem:[%s257 + $0x830] sm:$0xf]
        %v800 = vld [vmem:[%s257 + $0x834] sm:$0xf]
        %v801 = vld [vmem:[%s257 + $0x838] sm:$0xf]
        %v802 = vld [vmem:[%s257 + $0x83c] sm:$0xf]
        %v803 = vld [vmem:[%s257 + $0x840] sm:$0xf]
        %v804 = vld [vmem:[%s257 + $0x844] sm:$0xf]
        %v805 = vld [vmem:[%s257 + $0x848] sm:$0xf]
        %v806 = vld [vmem:[%s257 + $0x84c] sm:$0xf]
        %v807 = vld [vmem:[%s257 + $0x850] sm:$0xf]
        %v808 = vld [vmem:[%s257 + $0x854] sm:$0xf]
        %v809 = vld [vmem:[%s257 + $0x858] sm:$0xf]
        %v810 = vld [vmem:[%s257 + $0x85c] sm:$0xf]
        %v811 = vld [vmem:[%s257 + $0x860] sm:$0xf]
        %v812 = vld [vmem:[%s257 + $0x864] sm:$0xf]
        %v813 = vld [vmem:[%s257 + $0x868] sm:$0xf]
        %v814 = vld [vmem:[%s257 + $0x86c] sm:$0xf]
        %v815 = vld [vmem:[%s257 + $0x870] sm:$0xf]
        %v816 = vld [vmem:[%s257 + $0x874] sm:$0xf]
        %v817 = vld [vmem:[%s257 + $0x878] sm:$0xf]
        %v818 = vld [vmem:[%s257 + $0x87c] sm:$0xf]
        %v819 = vld [vmem:[%s257 + $0x880] sm:$0xf]
        %v820 = vld [vmem:[%s257 + $0x884] sm:$0xf]
        %v821 = vld [vmem:[%s257 + $0x888] sm:$0xf]
        %v822 = vld [vmem:[%s257 + $0x88c] sm:$0xf]
        %v823 = vld [vmem:[%s257 + $0x890] sm:$0xf]
        %v824 = vld [vmem:[%s257 + $0x894] sm:$0xf]
        %v825 = vld [vmem:[%s257 + $0x898] sm:$0xf]
        %v826 = vld [vmem:[%s257 + $0x89c] sm:$0xf]
        %v827 = vld [vmem:[%s257 + $0x8a0] sm:$0xf]
        %v828 = vld [vmem:[%s257 + $0x8a4] sm:$0xf]
        %v829 = vld [vmem:[%s257 + $0x8a8] sm:$0xf]
        %v830 = vld [vmem:[%s257 + $0x8ac] sm:$0xf]
        %v831 = vld [vmem:[%s257 + $0x8b0] sm:$0xf]
        %v832 = vld [vmem:[%s257 + $0x8b4] sm:$0xf]
        %v833 = vld [vmem:[%s257 + $0x8b8] sm:$0xf]
        %v834 = vld [vmem:[%s257 + $0x8bc] sm:$0xf]
        %v835 = vld [vmem:[%s257 + $0x8c0] sm:$0xf]
        %v836 = vld [vmem:[%s257 + $0x8c4] sm:$0xf]
        %v837 = vld [vmem:[%s257 + $0x8c8] sm:$0xf]
        %v838 = vld [vmem:[%s257 + $0x8cc] sm:$0xf]
        %v839 = vld [vmem:[%s257 + $0x8d0] sm:$0xf]
        %v840 = vld [vmem:[%s257 + $0x8d4] sm:$0xf]
        %v841 = vld [vmem:[%s257 + $0x8d8] sm:$0xf]
        %v842 = vld [vmem:[%s257 + $0x8dc] sm:$0xf]
        %v843 = vld [vmem:[%s257 + $0x8e0] sm:$0xf]
        %v844 = vld [vmem:[%s257 + $0x8e4] sm:$0xf]
        %v845 = vld [vmem:[%s257 + $0x8e8] sm:$0xf]
        %v846 = vld [vmem:[%s257 + $0x8ec] sm:$0xf]
        %v847 = vld [vmem:[%s257 + $0x8f0] sm:$0xf]
        %v848 = vld [vmem:[%s257 + $0x8f4] sm:$0xf]
        %v849 = vld [vmem:[%s257 + $0x8f8] sm:$0xf]
        %v850 = vld [vmem:[%s257 + $0x8fc] sm:$0xf]
        %v851 = vld [vmem:[%s257 + $0x900] sm:$0xf]
        %v852 = vld [vmem:[%s257 + $0x904] sm:$0xf]
        %v853 = vld [vmem:[%s257 + $0x908] sm:$0xf]
        %v854 = vld [vmem:[%s257 + $0x90c] sm:$0xf]
        %v855 = vld [vmem:[%s257 + $0x910] sm:$0xf]
        %v856 = vld [vmem:[%s257 + $0x914] sm:$0xf]
        %v857 = vld [vmem:[%s257 + $0x918] sm:$0xf]
        %v858 = vld [vmem:[%s257 + $0x91c] sm:$0xf]
        %v859 = vld [vmem:[%s257 + $0x920] sm:$0xf]
        %v860 = vld [vmem:[%s257 + $0x924] sm:$0xf]
        %v861 = vld [vmem:[%s257 + $0x928] sm:$0xf]
        %v862 = vld [vmem:[%s257 + $0x92c] sm:$0xf]
        %v863 = vld [vmem:[%s257 + $0x930] sm:$0xf]
        %v864 = vld [vmem:[%s257 + $0x934] sm:$0xf]
        %v865 = vld [vmem:[%s257 + $0x938] sm:$0xf]
        %v866 = vld [vmem:[%s257 + $0x93c] sm:$0xf]
        %v867 = vld [vmem:[%s257 + $0x940] sm:$0xf]
        %v868 = vld [vmem:[%s257 + $0x944] sm:$0xf]
        %v869 = vld [vmem:[%s257 + $0x948] sm:$0xf]
        %v870 = vld [vmem:[%s257 + $0x94c] sm:$0xf]
        %v871 = vld [vmem:[%s257 + $0x950] sm:$0xf]
        %v872 = vld [vmem:[%s257 + $0x954] sm:$0xf]
        %v873 = vld [vmem:[%s257 + $0x958] sm:$0xf]
        %v874 = vld [vmem:[%s257 + $0x95c] sm:$0xf]
        %v875 = vld [vmem:[%s257 + $0x960] sm:$0xf]
        %v876 = vld [vmem:[%s257 + $0x964] sm:$0xf]
        %v877 = vld [vmem:[%s257 + $0x968] sm:$0xf]
        %v878 = vld [vmem:[%s257 + $0x96c] sm:$0xf]
        %v879 = vld [vmem:[%s257 + $0x970] sm:$0xf]
        %v880 = vld [vmem:[%s257 + $0x974] sm:$0xf]
        %v881 = vld [vmem:[%s257 + $0x978] sm:$0xf]
        %v882 = vld [vmem:[%s257 + $0x97c] sm:$0xf]
        %v883 = vld [vmem:[%s257 + $0x980] sm:$0xf]
        %v884 = vld [vmem:[%s257 + $0x984] sm:$0xf]
        %v885 = vld [vmem:[%s257 + $0x988] sm:$0xf]
        %v886 = vld [vmem:[%s257 + $0x98c] sm:$0xf]
        %v887 = vld [vmem:[%s257 + $0x990] sm:$0xf]
        %v888 = vld [vmem:[%s257 + $0x994] sm:$0xf]
        %v889 = vld [vmem:[%s257 + $0x998] sm:$0xf]
        %v890 = vld [vmem:[%s257 + $0x99c] sm:$0xf]
        %v891 = vld [vmem:[%s257 + $0x9a0] sm:$0xf]
        %v892 = vld [vmem:[%s257 + $0x9a4] sm:$0xf]
        %v893 = vld [vmem:[%s257 + $0x9a8] sm:$0xf]
        %v894 = vld [vmem:[%s257 + $0x9ac] sm:$0xf]
        %v895 = vld [vmem:[%s257 + $0x9b0] sm:$0xf]
        %v896 = vld [vmem:[%s257 + $0x9b4] sm:$0xf]
        %v897 = vld [vmem:[%s257 + $0x9b8] sm:$0xf]
        %v898 = vld [vmem:[%s257 + $0x9bc] sm:$0xf]
        %v899 = vld [vmem:[%s257 + $0x9c0] sm:$0xf]
        %v900 = vld [vmem:[%s257 + $0x9c4] sm:$0xf]
        %v901 = vld [vmem:[%s257 + $0x9c8] sm:$0xf]
        %v902 = vld [vmem:[%s257 + $0x9cc] sm:$0xf]
        %v903 = vld [vmem:[%s257 + $0x9d0] sm:$0xf]
        %v904 = vld [vmem:[%s257 + $0x9d4] sm:$0xf]
        %v905 = vld [vmem:[%s257 + $0x9d8] sm:$0xf]
        %v906 = vld [vmem:[%s257 + $0x9dc] sm:$0xf]
        %v907 = vld [vmem:[%s257 + $0x9e0] sm:$0xf]
        %v908 = vld [vmem:[%s257 + $0x9e4] sm:$0xf]
        %v909 = vld [vmem:[%s257 + $0x9e8] sm:$0xf]
        %v910 = vld [vmem:[%s257 + $0x9ec] sm:$0xf]
        %v911 = vld [vmem:[%s257 + $0x9f0] sm:$0xf]
        %v912 = vld [vmem:[%s257 + $0x9f4] sm:$0xf]
        %v913 = vld [vmem:[%s257 + $0x9f8] sm:$0xf]
        %v914 = vld [vmem:[%s257 + $0x9fc] sm:$0xf]
        %v915 = vld [vmem:[%s257 + $0xa00] sm:$0xf]
        %v916 = vld [vmem:[%s257 + $0xa04] sm:$0xf]
        %v917 = vld [vmem:[%s257 + $0xa08] sm:$0xf]
        %v918 = vld [vmem:[%s257 + $0xa0c] sm:$0xf]
        %v919 = vld [vmem:[%s257 + $0xa10] sm:$0xf]
        %v920 = vld [vmem:[%s257 + $0xa14] sm:$0xf]
        %v921 = vld [vmem:[%s257 + $0xa18] sm:$0xf]
        %v922 = vld [vmem:[%s257 + $0xa1c] sm:$0xf]
        %v923 = vld [vmem:[%s257 + $0xa20] sm:$0xf]
        %v924 = vld [vmem:[%s257 + $0xa24] sm:$0xf]
        %v925 = vld [vmem:[%s257 + $0xa28] sm:$0xf]
        %v926 = vld [vmem:[%s257 + $0xa2c] sm:$0xf]
        %v927 = vld [vmem:[%s257 + $0xa30] sm:$0xf]
        %v928 = vld [vmem:[%s257 + $0xa34] sm:$0xf]
        %v929 = vld [vmem:[%s257 + $0xa38] sm:$0xf]
        %v930 = vld [vmem:[%s257 + $0xa3c] sm:$0xf]
        %v931 = vld [vmem:[%s257 + $0xa40] sm:$0xf]
        %v932 = vld [vmem:[%s257 + $0xa44] sm:$0xf]
        %v933 = vld [vmem:[%s257 + $0xa48] sm:$0xf]
        %v934 = vld [vmem:[%s257 + $0xa4c] sm:$0xf]
        %v935 = vld [vmem:[%s257 + $0xa50] sm:$0xf]
        %v936 = vld [vmem:[%s257 + $0xa54] sm:$0xf]
        %v937 = vld [vmem:[%s257 + $0xa58] sm:$0xf]
        %v938 = vld [vmem:[%s257 + $0xa5c] sm:$0xf]
        %v939 = vld [vmem:[%s257 + $0xa60] sm:$0xf]
        %v940 = vld [vmem:[%s257 + $0xa64] sm:$0xf]
        %v941 = vld [vmem:[%s257 + $0xa68] sm:$0xf]
        %v942 = vld [vmem:[%s257 + $0xa6c] sm:$0xf]
        %v943 = vld [vmem:[%s257 + $0xa70] sm:$0xf]
        %v944 = vld [vmem:[%s257 + $0xa74] sm:$0xf]
        %v945 = vld [vmem:[%s257 + $0xa78] sm:$0xf]
        %v946 = vld [vmem:[%s257 + $0xa7c] sm:$0xf]
        %v947 = vld [vmem:[%s257 + $0xa80] sm:$0xf]
        %v948 = vld [vmem:[%s257 + $0xa84] sm:$0xf]
        %v949 = vld [vmem:[%s257 + $0xa88] sm:$0xf]
        %v950 = vld [vmem:[%s257 + $0xa8c] sm:$0xf]
        %v951 = vld [vmem:[%s257 + $0xa90] sm:$0xf]
        %v952 = vld [vmem:[%s257 + $0xa94] sm:$0xf]
        %v953 = vld [vmem:[%s257 + $0xa98] sm:$0xf]
        %v954 = vld [vmem:[%s257 + $0xa9c] sm:$0xf]
        %v955 = vld [vmem:[%s257 + $0xaa0] sm:$0xf]
        %v956 = vld [vmem:[%s257 + $0xaa4] sm:$0xf]
        %v957 = vld [vmem:[%s257 + $0xaa8] sm:$0xf]
        %v958 = vld [vmem:[%s257 + $0xaac] sm:$0xf]
        %v959 = vld [vmem:[%s257 + $0xab0] sm:$0xf]
        %v960 = vld [vmem:[%s257 + $0xab4] sm:$0xf]
        %v961 = vld [vmem:[%s257 + $0xab8] sm:$0xf]
        %v962 = vld [vmem:[%s257 + $0xabc] sm:$0xf]
        %v963 = vld [vmem:[%s257 + $0xac0] sm:$0xf]
        %v964 = vld [vmem:[%s257 + $0xac4] sm:$0xf]
        %v965 = vld [vmem:[%s257 + $0xac8] sm:$0xf]
        %v966 = vld [vmem:[%s257 + $0xacc] sm:$0xf]
        %v967 = vld [vmem:[%s257 + $0xad0] sm:$0xf]
        %v968 = vld [vmem:[%s257 + $0xad4] sm:$0xf]
        %v969 = vld [vmem:[%s257 + $0xad8] sm:$0xf]
        %v970 = vld [vmem:[%s257 + $0xadc] sm:$0xf]
        %v971 = vld [vmem:[%s257 + $0xae0] sm:$0xf]
        %v972 = vld [vmem:[%s257 + $0xae4] sm:$0xf]
        %v973 = vld [vmem:[%s257 + $0xae8] sm:$0xf]
        %v974 = vld [vmem:[%s257 + $0xaec] sm:$0xf]
        %v975 = vld [vmem:[%s257 + $0xaf0] sm:$0xf]
        %v976 = vld [vmem:[%s257 + $0xaf4] sm:$0xf]
        %v977 = vld [vmem:[%s257 + $0xaf8] sm:$0xf]
        %v978 = vld [vmem:[%s257 + $0xafc] sm:$0xf]
        %v979 = vld [vmem:[%s257 + $0xb00] sm:$0xf]
        %v980 = vld [vmem:[%s257 + $0xb04] sm:$0xf]
        %v981 = vld [vmem:[%s257 + $0xb08] sm:$0xf]
        %v982 = vld [vmem:[%s257 + $0xb0c] sm:$0xf]
        %v983 = vld [vmem:[%s257 + $0xb10] sm:$0xf]
        %v984 = vld [vmem:[%s257 + $0xb14] sm:$0xf]
        %v985 = vld [vmem:[%s257 + $0xb18] sm:$0xf]
        %v986 = vld [vmem:[%s257 + $0xb1c] sm:$0xf]
        %v987 = vld [vmem:[%s257 + $0xb20] sm:$0xf]
        %v988 = vld [vmem:[%s257 + $0xb24] sm:$0xf]
        %v989 = vld [vmem:[%s257 + $0xb28] sm:$0xf]
        %v990 = vld [vmem:[%s257 + $0xb2c] sm:$0xf]
        %v991 = vld [vmem:[%s257 + $0xb30] sm:$0xf]
        %v992 = vld [vmem:[%s257 + $0xb34] sm:$0xf]
        %v993 = vld [vmem:[%s257 + $0xb38] sm:$0xf]
        %v994 = vld [vmem:[%s257 + $0xb3c] sm:$0xf]
        %v995 = vld [vmem:[%s257 + $0xb40] sm:$0xf]
        %v996 = vld [vmem:[%s257 + $0xb44] sm:$0xf]
        %v997 = vld [vmem:[%s257 + $0xb48] sm:$0xf]
        %v998 = vld [vmem:[%s257 + $0xb4c] sm:$0xf]
        %v999 = vld [vmem:[%s257 + $0xb50] sm:$0xf]
        %v1000 = vld [vmem:[%s257 + $0xb54] sm:$0xf]
        %v1001 = vld [vmem:[%s257 + $0xb58] sm:$0xf]
        %v1002 = vld [vmem:[%s257 + $0xb5c] sm:$0xf]
        %v1003 = vld [vmem:[%s257 + $0xb60] sm:$0xf]
        %v1004 = vld [vmem:[%s257 + $0xb64] sm:$0xf]
        %v1005 = vld [vmem:[%s257 + $0xb68] sm:$0xf]
        %v1006 = vld [vmem:[%s257 + $0xb6c] sm:$0xf]
        %v1007 = vld [vmem:[%s257 + $0xb70] sm:$0xf]
        %v1008 = vld [vmem:[%s257 + $0xb74] sm:$0xf]
        %v1009 = vld [vmem:[%s257 + $0xb78] sm:$0xf]
        %v1010 = vld [vmem:[%s257 + $0xb7c] sm:$0xf]
        %v1011 = vld [vmem:[%s257 + $0xb80] sm:$0xf]
        %v1012 = vld [vmem:[%s257 + $0xb84] sm:$0xf]
        %v1013 = vld [vmem:[%s257 + $0xb88] sm:$0xf]
        %v1014 = vld [vmem:[%s257 + $0xb8c] sm:$0xf]
        %v1015 = vld [vmem:[%s257 + $0xb90] sm:$0xf]
        %v1016 = vld [vmem:[%s257 + $0xb94] sm:$0xf]
        %v1017 = vld [vmem:[%s257 + $0xb98] sm:$0xf]
        %v1018 = vld [vmem:[%s257 + $0xb9c] sm:$0xf]
        %v1019 = vld [vmem:[%s257 + $0xba0] sm:$0xf]
        %v1020 = vld [vmem:[%s257 + $0xba4] sm:$0xf]
        %v1021 = vld [vmem:[%s257 + $0xba8] sm:$0xf]
        %v1022 = vld [vmem:[%s257 + $0xbac] sm:$0xf]
        %v1023 = vld [vmem:[%s257 + $0xbb0] sm:$0xf]
        %v1024 = vld [vmem:[%s257 + $0xbb4] sm:$0xf]
        %v1025 = vld [vmem:[%s257 + $0xbb8] sm:$0xf]
        %v1026 = vld [vmem:[%s257 + $0xbbc] sm:$0xf]
        %v1027 = vld [vmem:[%s257 + $0xbc0] sm:$0xf]
        %v1028 = vld [vmem:[%s257 + $0xbc4] sm:$0xf]
        %v1029 = vld [vmem:[%s257 + $0xbc8] sm:$0xf]
        %v1030 = vld [vmem:[%s257 + $0xbcc] sm:$0xf]
        %v1031 = vld [vmem:[%s257 + $0xbd0] sm:$0xf]
        %v1032 = vld [vmem:[%s257 + $0xbd4] sm:$0xf]
        %v1033 = vld [vmem:[%s257 + $0xbd8] sm:$0xf]
        %v1034 = vld [vmem:[%s257 + $0xbdc] sm:$0xf]
        %v1035 = vld [vmem:[%s257 + $0xbe0] sm:$0xf]
        %v1036 = vld [vmem:[%s257 + $0xbe4] sm:$0xf]
        %v1037 = vld [vmem:[%s257 + $0xbe8] sm:$0xf]
        %v1038 = vld [vmem:[%s257 + $0xbec] sm:$0xf]
        %v1039 = vld [vmem:[%s257 + $0xbf0] sm:$0xf]
        %v1040 = vld [vmem:[%s257 + $0xbf4] sm:$0xf]
        %v1041 = vld [vmem:[%s257 + $0xbf8] sm:$0xf]
        %v1042 = vld [vmem:[%s257 + $0xbfc] sm:$0xf]
        %v1043 = vld [vmem:[%s257 + $0xc00] sm:$0xf]
        %v1044 = vld [vmem:[%s257 + $0xc04] sm:$0xf]
        %v1045 = vld [vmem:[%s257 + $0xc08] sm:$0xf]
        %v1046 = vld [vmem:[%s257 + $0xc0c] sm:$0xf]
        %v1047 = vld [vmem:[%s257 + $0xc10] sm:$0xf]
        %v1048 = vld [vmem:[%s257 + $0xc14] sm:$0xf]
        %v1049 = vld [vmem:[%s257 + $0xc18] sm:$0xf]
        %v1050 = vld [vmem:[%s257 + $0xc1c] sm:$0xf]
        %v1051 = vld [vmem:[%s257 + $0xc20] sm:$0xf]
        %v1052 = vld [vmem:[%s257 + $0xc24] sm:$0xf]
        %v1053 = vld [vmem:[%s257 + $0xc28] sm:$0xf]
        %v1054 = vld [vmem:[%s257 + $0xc2c] sm:$0xf]
        %v1055 = vld [vmem:[%s257 + $0xc30] sm:$0xf]
        %v1056 = vld [vmem:[%s257 + $0xc34] sm:$0xf]
        %v1057 = vld [vmem:[%s257 + $0xc38] sm:$0xf]
        %v1058 = vld [vmem:[%s257 + $0xc3c] sm:$0xf]
        %v1059 = vld [vmem:[%s257 + $0xc40] sm:$0xf]
        %v1060 = vld [vmem:[%s257 + $0xc44] sm:$0xf]
        %v1061 = vld [vmem:[%s257 + $0xc48] sm:$0xf]
        %v1062 = vld [vmem:[%s257 + $0xc4c] sm:$0xf]
        %v1063 = vld [vmem:[%s257 + $0xc50] sm:$0xf]
        %v1064 = vld [vmem:[%s257 + $0xc54] sm:$0xf]
        %v1065 = vld [vmem:[%s257 + $0xc58] sm:$0xf]
        %v1066 = vld [vmem:[%s257 + $0xc5c] sm:$0xf]
        %v1067 = vld [vmem:[%s257 + $0xc60] sm:$0xf]
        %v1068 = vld [vmem:[%s257 + $0xc64] sm:$0xf]
        %v1069 = vld [vmem:[%s257 + $0xc68] sm:$0xf]
        %v1070 = vld [vmem:[%s257 + $0xc6c] sm:$0xf]
        %v1071 = vld [vmem:[%s257 + $0xc70] sm:$0xf]
        %v1072 = vld [vmem:[%s257 + $0xc74] sm:$0xf]
        %v1073 = vld [vmem:[%s257 + $0xc78] sm:$0xf]
        %v1074 = vld [vmem:[%s257 + $0xc7c] sm:$0xf]
        %v1075 = vld [vmem:[%s257 + $0xc80] sm:$0xf]
        %v1076 = vld [vmem:[%s257 + $0xc84] sm:$0xf]
        %v1077 = vld [vmem:[%s257 + $0xc88] sm:$0xf]
        %v1078 = vld [vmem:[%s257 + $0xc8c] sm:$0xf]
        %v1079 = vld [vmem:[%s257 + $0xc90] sm:$0xf]
        %v1080 = vld [vmem:[%s257 + $0xc94] sm:$0xf]
        %v1081 = vld [vmem:[%s257 + $0xc98] sm:$0xf]
        %v1082 = vld [vmem:[%s257 + $0xc9c] sm:$0xf]
        %v1083 = vld [vmem:[%s257 + $0xca0] sm:$0xf]
        %v1084 = vld [vmem:[%s257 + $0xca4] sm:$0xf]
        %v1085 = vld [vmem:[%s257 + $0xca8] sm:$0xf]
        %v1086 = vld [vmem:[%s257 + $0xcac] sm:$0xf]
        %v1087 = vld [vmem:[%s257 + $0xcb0] sm:$0xf]
        %v1088 = vld [vmem:[%s257 + $0xcb4] sm:$0xf]
        %v1089 = vld [vmem:[%s257 + $0xcb8] sm:$0xf]
        %v1090 = vld [vmem:[%s257 + $0xcbc] sm:$0xf]
        %v1091 = vld [vmem:[%s257 + $0xcc0] sm:$0xf]
        %v1092 = vld [vmem:[%s257 + $0xcc4] sm:$0xf]
        %v1093 = vld [vmem:[%s257 + $0xcc8] sm:$0xf]
        %v1094 = vld [vmem:[%s257 + $0xccc] sm:$0xf]
        %v1095 = vld [vmem:[%s257 + $0xcd0] sm:$0xf]
        %v1096 = vld [vmem:[%s257 + $0xcd4] sm:$0xf]
        %v1097 = vld [vmem:[%s257 + $0xcd8] sm:$0xf]
        %v1098 = vld [vmem:[%s257 + $0xcdc] sm:$0xf]
        %v1099 = vld [vmem:[%s257 + $0xce0] sm:$0xf]
        %v1100 = vld [vmem:[%s257 + $0xce4] sm:$0xf]
        %v1101 = vld [vmem:[%s257 + $0xce8] sm:$0xf]
        %v1102 = vld [vmem:[%s257 + $0xcec] sm:$0xf]
        %v1103 = vld [vmem:[%s257 + $0xcf0] sm:$0xf]
        %v1104 = vld [vmem:[%s257 + $0xcf4] sm:$0xf]
        %v1105 = vld [vmem:[%s257 + $0xcf8] sm:$0xf]
        %v1106 = vld [vmem:[%s257 + $0xcfc] sm:$0xf]
        %v1107 = vld [vmem:[%s257 + $0xd00] sm:$0xf]
        %v1108 = vld [vmem:[%s257 + $0xd04] sm:$0xf]
        %v1109 = vld [vmem:[%s257 + $0xd08] sm:$0xf]
        %v1110 = vld [vmem:[%s257 + $0xd0c] sm:$0xf]
        %v1111 = vld [vmem:[%s257 + $0xd10] sm:$0xf]
        %v1112 = vld [vmem:[%s257 + $0xd14] sm:$0xf]
        %v1113 = vld [vmem:[%s257 + $0xd18] sm:$0xf]
        %v1114 = vld [vmem:[%s257 + $0xd1c] sm:$0xf]
        %v1115 = vld [vmem:[%s257 + $0xd20] sm:$0xf]
        %v1116 = vld [vmem:[%s257 + $0xd24] sm:$0xf]
        %v1117 = vld [vmem:[%s257 + $0xd28] sm:$0xf]
        %v1118 = vld [vmem:[%s257 + $0xd2c] sm:$0xf]
        %v1119 = vld [vmem:[%s257 + $0xd30] sm:$0xf]
        %v1120 = vld [vmem:[%s257 + $0xd34] sm:$0xf]
        %v1121 = vld [vmem:[%s257 + $0xd38] sm:$0xf]
        %v1122 = vld [vmem:[%s257 + $0xd3c] sm:$0xf]
        %v1123 = vld [vmem:[%s257 + $0xd40] sm:$0xf]
        %v1124 = vld [vmem:[%s257 + $0xd44] sm:$0xf]
        %v1125 = vld [vmem:[%s257 + $0xd48] sm:$0xf]
        %v1126 = vld [vmem:[%s257 + $0xd4c] sm:$0xf]
        %v1127 = vld [vmem:[%s257 + $0xd50] sm:$0xf]
        %v1128 = vld [vmem:[%s257 + $0xd54] sm:$0xf]
        %v1129 = vld [vmem:[%s257 + $0xd58] sm:$0xf]
        %v1130 = vld [vmem:[%s257 + $0xd5c] sm:$0xf]
        %v1131 = vld [vmem:[%s257 + $0xd60] sm:$0xf]
        %v1132 = vld [vmem:[%s257 + $0xd64] sm:$0xf]
        %v1133 = vld [vmem:[%s257 + $0xd68] sm:$0xf]
        %v1134 = vld [vmem:[%s257 + $0xd6c] sm:$0xf]
        %v1135 = vld [vmem:[%s257 + $0xd70] sm:$0xf]
        %v1136 = vld [vmem:[%s257 + $0xd74] sm:$0xf]
        %v1137 = vld [vmem:[%s257 + $0xd78] sm:$0xf]
        %v1138 = vld [vmem:[%s257 + $0xd7c] sm:$0xf]
        %v1139 = vld [vmem:[%s257 + $0xd80] sm:$0xf]
        %v1140 = vld [vmem:[%s257 + $0xd84] sm:$0xf]
        %v1141 = vld [vmem:[%s257 + $0xd88] sm:$0xf]
        %v1142 = vld [vmem:[%s257 + $0xd8c] sm:$0xf]
        %v1143 = vld [vmem:[%s257 + $0xd90] sm:$0xf]
        %v1144 = vld [vmem:[%s257 + $0xd94] sm:$0xf]
        %v1145 = vld [vmem:[%s257 + $0xd98] sm:$0xf]
        %v1146 = vld [vmem:[%s257 + $0xd9c] sm:$0xf]
        %v1147 = vld [vmem:[%s257 + $0xda0] sm:$0xf]
        %v1148 = vld [vmem:[%s257 + $0xda4] sm:$0xf]
        %v1149 = vld [vmem:[%s257 + $0xda8] sm:$0xf]
        %v1150 = vld [vmem:[%s257 + $0xdac] sm:$0xf]
        %v1151 = vld [vmem:[%s257 + $0xdb0] sm:$0xf]
        %v1152 = vld [vmem:[%s257 + $0xdb4] sm:$0xf]
        %v1153 = vld [vmem:[%s257 + $0xdb8] sm:$0xf]
        %v1154 = vld [vmem:[%s257 + $0xdbc] sm:$0xf]
        %v1155 = vld [vmem:[%s257 + $0xdc0] sm:$0xf]
        %v1156 = vld [vmem:[%s257 + $0xdc4] sm:$0xf]
        %v1157 = vld [vmem:[%s257 + $0xdc8] sm:$0xf]
        %v1158 = vld [vmem:[%s257 + $0xdcc] sm:$0xf]
        %v1159 = vld [vmem:[%s257 + $0xdd0] sm:$0xf]
        %v1160 = vld [vmem:[%s257 + $0xdd4] sm:$0xf]
        %v1161 = vld [vmem:[%s257 + $0xdd8] sm:$0xf]
        %v1162 = vld [vmem:[%s257 + $0xddc] sm:$0xf]
        %v1163 = vld [vmem:[%s257 + $0xde0] sm:$0xf]
        %v1164 = vld [vmem:[%s257 + $0xde4] sm:$0xf]
        %v1165 = vld [vmem:[%s257 + $0xde8] sm:$0xf]
        %v1166 = vld [vmem:[%s257 + $0xdec] sm:$0xf]
        %v1167 = vld [vmem:[%s257 + $0xdf0] sm:$0xf]
        %v1168 = vld [vmem:[%s257 + $0xdf4] sm:$0xf]
        %v1169 = vld [vmem:[%s257 + $0xdf8] sm:$0xf]
        %v1170 = vld [vmem:[%s257 + $0xdfc] sm:$0xf]
        %v1171 = vld [vmem:[%s257 + $0xe00] sm:$0xf]
        %v1172 = vld [vmem:[%s257 + $0xe04] sm:$0xf]
        %v1173 = vld [vmem:[%s257 + $0xe08] sm:$0xf]
        %v1174 = vld [vmem:[%s257 + $0xe0c] sm:$0xf]
        %v1175 = vld [vmem:[%s257 + $0xe10] sm:$0xf]
        %v1176 = vld [vmem:[%s257 + $0xe14] sm:$0xf]
        %v1177 = vld [vmem:[%s257 + $0xe18] sm:$0xf]
        %v1178 = vld [vmem:[%s257 + $0xe1c] sm:$0xf]
        %v1179 = vld [vmem:[%s257 + $0xe20] sm:$0xf]
        %v1180 = vld [vmem:[%s257 + $0xe24] sm:$0xf]
        %v1181 = vld [vmem:[%s257 + $0xe28] sm:$0xf]
        %v1182 = vld [vmem:[%s257 + $0xe2c] sm:$0xf]
        %v1183 = vld [vmem:[%s257 + $0xe30] sm:$0xf]
        %v1184 = vld [vmem:[%s257 + $0xe34] sm:$0xf]
        %v1185 = vld [vmem:[%s257 + $0xe38] sm:$0xf]
        %v1186 = vld [vmem:[%s257 + $0xe3c] sm:$0xf]
        %v1187 = vld [vmem:[%s257 + $0xe40] sm:$0xf]
        %v1188 = vld [vmem:[%s257 + $0xe44] sm:$0xf]
        %v1189 = vld [vmem:[%s257 + $0xe48] sm:$0xf]
        %v1190 = vld [vmem:[%s257 + $0xe4c] sm:$0xf]
        %v1191 = vld [vmem:[%s257 + $0xe50] sm:$0xf]
        %v1192 = vld [vmem:[%s257 + $0xe54] sm:$0xf]
        %v1193 = vld [vmem:[%s257 + $0xe58] sm:$0xf]
        %v1194 = vld [vmem:[%s257 + $0xe5c] sm:$0xf]
        %v1195 = vld [vmem:[%s257 + $0xe60] sm:$0xf]
        %v1196 = vld [vmem:[%s257 + $0xe64] sm:$0xf]
        %v1197 = vld [vmem:[%s257 + $0xe68] sm:$0xf]
        %v1198 = vld [vmem:[%s257 + $0xe6c] sm:$0xf]
        %v1199 = vld [vmem:[%s257 + $0xe70] sm:$0xf]
        %v1200 = vld [vmem:[%s257 + $0xe74] sm:$0xf]
        %v1201 = vld [vmem:[%s257 + $0xe78] sm:$0xf]
        %v1202 = vld [vmem:[%s257 + $0xe7c] sm:$0xf]
        %v1203 = vld [vmem:[%s257 + $0xe80] sm:$0xf]
        %v1204 = vld [vmem:[%s257 + $0xe84] sm:$0xf]
        %v1205 = vld [vmem:[%s257 + $0xe88] sm:$0xf]
        %v1206 = vld [vmem:[%s257 + $0xe8c] sm:$0xf]
        %v1207 = vld [vmem:[%s257 + $0xe90] sm:$0xf]
        %v1208 = vld [vmem:[%s257 + $0xe94] sm:$0xf]
        %v1209 = vld [vmem:[%s257 + $0xe98] sm:$0xf]
        %v1210 = vld [vmem:[%s257 + $0xe9c] sm:$0xf]
        %v1211 = vld [vmem:[%s257 + $0xea0] sm:$0xf]
        %v1212 = vld [vmem:[%s257 + $0xea4] sm:$0xf]
        %v1213 = vld [vmem:[%s257 + $0xea8] sm:$0xf]
        %v1214 = vld [vmem:[%s257 + $0xeac] sm:$0xf]
        %v1215 = vld [vmem:[%s257 + $0xeb0] sm:$0xf]
        %v1216 = vld [vmem:[%s257 + $0xeb4] sm:$0xf]
        %v1217 = vld [vmem:[%s257 + $0xeb8] sm:$0xf]
        %v1218 = vld [vmem:[%s257 + $0xebc] sm:$0xf]
        %v1219 = vld [vmem:[%s257 + $0xec0] sm:$0xf]
        %v1220 = vld [vmem:[%s257 + $0xec4] sm:$0xf]
        %v1221 = vld [vmem:[%s257 + $0xec8] sm:$0xf]
        %v1222 = vld [vmem:[%s257 + $0xecc] sm:$0xf]
        %v1223 = vld [vmem:[%s257 + $0xed0] sm:$0xf]
        %v1224 = vld [vmem:[%s257 + $0xed4] sm:$0xf]
        %v1225 = vld [vmem:[%s257 + $0xed8] sm:$0xf]
        %v1226 = vld [vmem:[%s257 + $0xedc] sm:$0xf]
        %v1227 = vld [vmem:[%s257 + $0xee0] sm:$0xf]
        %v1228 = vld [vmem:[%s257 + $0xee4] sm:$0xf]
        %v1229 = vld [vmem:[%s257 + $0xee8] sm:$0xf]
        %v1230 = vld [vmem:[%s257 + $0xeec] sm:$0xf]
        %v1231 = vld [vmem:[%s257 + $0xef0] sm:$0xf]
        %v1232 = vld [vmem:[%s257 + $0xef4] sm:$0xf]
        %v1233 = vld [vmem:[%s257 + $0xef8] sm:$0xf]
        %v1234 = vld [vmem:[%s257 + $0xefc] sm:$0xf]
        %v1235 = vld [vmem:[%s257 + $0xf00] sm:$0xf]
        %v1236 = vld [vmem:[%s257 + $0xf04] sm:$0xf]
        %v1237 = vld [vmem:[%s257 + $0xf08] sm:$0xf]
        %v1238 = vld [vmem:[%s257 + $0xf0c] sm:$0xf]
        %v1239 = vld [vmem:[%s257 + $0xf10] sm:$0xf]
        %v1240 = vld [vmem:[%s257 + $0xf14] sm:$0xf]
        %v1241 = vld [vmem:[%s257 + $0xf18] sm:$0xf]
        %v1242 = vld [vmem:[%s257 + $0xf1c] sm:$0xf]
        %v1243 = vld [vmem:[%s257 + $0xf20] sm:$0xf]
        %v1244 = vld [vmem:[%s257 + $0xf24] sm:$0xf]
        %v1245 = vld [vmem:[%s257 + $0xf28] sm:$0xf]
        %v1246 = vld [vmem:[%s257 + $0xf2c] sm:$0xf]
        %v1247 = vld [vmem:[%s257 + $0xf30] sm:$0xf]
        %v1248 = vld [vmem:[%s257 + $0xf34] sm:$0xf]
        %v1249 = vld [vmem:[%s257 + $0xf38] sm:$0xf]
        %v1250 = vld [vmem:[%s257 + $0xf3c] sm:$0xf]
        %v1251 = vld [vmem:[%s257 + $0xf40] sm:$0xf]
        %v1252 = vld [vmem:[%s257 + $0xf44] sm:$0xf]
        %v1253 = vld [vmem:[%s257 + $0xf48] sm:$0xf]
        %v1254 = vld [vmem:[%s257 + $0xf4c] sm:$0xf]
        %v1255 = vld [vmem:[%s257 + $0xf50] sm:$0xf]
        %v1256 = vld [vmem:[%s257 + $0xf54] sm:$0xf]
        %v1257 = vld [vmem:[%s257 + $0xf58] sm:$0xf]
        %v1258 = vld [vmem:[%s257 + $0xf5c] sm:$0xf]
        %v1259 = vld [vmem:[%s257 + $0xf60] sm:$0xf]
        %v1260 = vld [vmem:[%s257 + $0xf64] sm:$0xf]
        %v1261 = vld [vmem:[%s257 + $0xf68] sm:$0xf]
        %v1262 = vld [vmem:[%s257 + $0xf6c] sm:$0xf]
        %v1263 = vld [vmem:[%s257 + $0xf70] sm:$0xf]
        %v1264 = vld [vmem:[%s257 + $0xf74] sm:$0xf]
        %v1265 = vld [vmem:[%s257 + $0xf78] sm:$0xf]
        %v1266 = vld [vmem:[%s257 + $0xf7c] sm:$0xf]
        %v1267 = vld [vmem:[%s257 + $0xf80] sm:$0xf]
        %v1268 = vld [vmem:[%s257 + $0xf84] sm:$0xf]
        %v1269 = vld [vmem:[%s257 + $0xf88] sm:$0xf]
        %v1270 = vld [vmem:[%s257 + $0xf8c] sm:$0xf]
        %v1271 = vld [vmem:[%s257 + $0xf90] sm:$0xf]
        %v1272 = vld [vmem:[%s257 + $0xf94] sm:$0xf]
        %v1273 = vld [vmem:[%s257 + $0xf98] sm:$0xf]
        %v1274 = vld [vmem:[%s257 + $0xf9c] sm:$0xf]
        %v1275 = vld [vmem:[%s257 + $0xfa0] sm:$0xf]
        %v1276 = vld [vmem:[%s257 + $0xfa4] sm:$0xf]
        %v1277 = vld [vmem:[%s257 + $0xfa8] sm:$0xf]
        %v1278 = vld [vmem:[%s257 + $0xfac] sm:$0xf]
        %v1279 = vld [vmem:[%s257 + $0xfb0] sm:$0xf]
        %v1280 = vld [vmem:[%s257 + $0xfb4] sm:$0xf]
        %v1281 = vld [vmem:[%s257 + $0xfb8] sm:$0xf]
        %v1282 = vld [vmem:[%s257 + $0xfbc] sm:$0xf]
        %v1283 = vld [vmem:[%s257 + $0xfc0] sm:$0xf]
        %v1284 = vld [vmem:[%s257 + $0xfc4] sm:$0xf]
        %v1285 = vld [vmem:[%s257 + $0xfc8] sm:$0xf]
        %v1286 = vld [vmem:[%s257 + $0xfcc] sm:$0xf]
        %v1287 = vld [vmem:[%s257 + $0xfd0] sm:$0xf]
        %v1288 = vld [vmem:[%s257 + $0xfd4] sm:$0xf]
        %v1289 = vld [vmem:[%s257 + $0xfd8] sm:$0xf]
        %v1290 = vld [vmem:[%s257 + $0xfdc] sm:$0xf]
        %v1291 = vld [vmem:[%s257 + $0xfe0] sm:$0xf]
        %v1292 = vld [vmem:[%s257 + $0xfe4] sm:$0xf]
        %v1293 = vld [vmem:[%s257 + $0xfe8] sm:$0xf]
        %v1294 = vld [vmem:[%s257 + $0xfec] sm:$0xf]
        %v1295 = vld [vmem:[%s257 + $0xff0] sm:$0xf]
        %v1296 = vld [vmem:[%s257 + $0xff4] sm:$0xf]
        %v1297 = vld [vmem:[%s257 + $0xff8] sm:$0xf]
        %v1298 = vld [vmem:[%s257 + $0xffc] sm:$0xf]
        %v1299 = vld [vmem:[%s257 + $0x1000] sm:$0xf]
        %v1300 = vld [vmem:[%s257 + $0x1004] sm:$0xf]
        %v1301 = vld [vmem:[%s257 + $0x1008] sm:$0xf]
        %v1302 = vld [vmem:[%s257 + $0x100c] sm:$0xf]
        %v1303 = vld [vmem:[%s257 + $0x1010] sm:$0xf]
        %v1304 = vld [vmem:[%s257 + $0x1014] sm:$0xf]
        %v1305 = vld [vmem:[%s257 + $0x1018] sm:$0xf]
        %v1306 = vld [vmem:[%s257 + $0x101c] sm:$0xf]
        %v1307 = vld [vmem:[%s257 + $0x1020] sm:$0xf]
        %v1308 = vld [vmem:[%s257 + $0x1024] sm:$0xf]
        %v1309 = vld [vmem:[%s257 + $0x1028] sm:$0xf]
        %v1310 = vld [vmem:[%s257 + $0x102c] sm:$0xf]
        %v1311 = vld [vmem:[%s257 + $0x1030] sm:$0xf]
        %v1312 = vld [vmem:[%s257 + $0x1034] sm:$0xf]
        %v1313 = vld [vmem:[%s257 + $0x1038] sm:$0xf]
        %v1314 = vld [vmem:[%s257 + $0x103c] sm:$0xf]
        %v1315 = vld [vmem:[%s257 + $0x1040] sm:$0xf]
        %v1316 = vld [vmem:[%s257 + $0x1044] sm:$0xf]
        %v1317 = vld [vmem:[%s257 + $0x1048] sm:$0xf]
        %v1318 = vld [vmem:[%s257 + $0x104c] sm:$0xf]
        %v1319 = vld [vmem:[%s257 + $0x1050] sm:$0xf]
        %v1320 = vld [vmem:[%s257 + $0x1054] sm:$0xf]
        %v1321 = vld [vmem:[%s257 + $0x1058] sm:$0xf]
        %v1322 = vld [vmem:[%s257 + $0x105c] sm:$0xf]
        %v1323 = vld [vmem:[%s257 + $0x1060] sm:$0xf]
        %v1324 = vld [vmem:[%s257 + $0x1064] sm:$0xf]
        %v1325 = vld [vmem:[%s257 + $0x1068] sm:$0xf]
        %v1326 = vld [vmem:[%s257 + $0x106c] sm:$0xf]
        %v1327 = vld [vmem:[%s257 + $0x1070] sm:$0xf]
        %v1328 = vld [vmem:[%s257 + $0x1074] sm:$0xf]
        %v1329 = vld [vmem:[%s257 + $0x1078] sm:$0xf]
        %v1330 = vld [vmem:[%s257 + $0x107c] sm:$0xf]
        %v1331 = vld [vmem:[%s257 + $0x1080] sm:$0xf]
        %v1332 = vld [vmem:[%s257 + $0x1084] sm:$0xf]
        %v1333 = vld [vmem:[%s257 + $0x1088] sm:$0xf]
        %v1334 = vld [vmem:[%s257 + $0x108c] sm:$0xf]
        %v1335 = vld [vmem:[%s257 + $0x1090] sm:$0xf]
        %v1336 = vld [vmem:[%s257 + $0x1094] sm:$0xf]
        %v1337 = vld [vmem:[%s257 + $0x1098] sm:$0xf]
        %v1338 = vld [vmem:[%s257 + $0x109c] sm:$0xf]
        %v1339 = vld [vmem:[%s257 + $0x10a0] sm:$0xf]
        %v1340 = vld [vmem:[%s257 + $0x10a4] sm:$0xf]
        %v1341 = vld [vmem:[%s257 + $0x10a8] sm:$0xf]
        %v1342 = vld [vmem:[%s257 + $0x10ac] sm:$0xf]
        %v1343 = vld [vmem:[%s257 + $0x10b0] sm:$0xf]
        %v1344 = vld [vmem:[%s257 + $0x10b4] sm:$0xf]
        %v1345 = vld [vmem:[%s257 + $0x10b8] sm:$0xf]
        %v1346 = vld [vmem:[%s257 + $0x10bc] sm:$0xf]
        %v1347 = vld [vmem:[%s257 + $0x10c0] sm:$0xf]
        %v1348 = vld [vmem:[%s257 + $0x10c4] sm:$0xf]
        %v1349 = vld [vmem:[%s257 + $0x10c8] sm:$0xf]
        %v1350 = vld [vmem:[%s257 + $0x10cc] sm:$0xf]
        %v1351 = vld [vmem:[%s257 + $0x10d0] sm:$0xf]
        %v1352 = vld [vmem:[%s257 + $0x10d4] sm:$0xf]
        %v1353 = vld [vmem:[%s257 + $0x10d8] sm:$0xf]
        %v1354 = vld [vmem:[%s257 + $0x10dc] sm:$0xf]
        %v1355 = vld [vmem:[%s257 + $0x10e0] sm:$0xf]
        %v1356 = vld [vmem:[%s257 + $0x10e4] sm:$0xf]
        %v1357 = vld [vmem:[%s257 + $0x10e8] sm:$0xf]
        %v1358 = vld [vmem:[%s257 + $0x10ec] sm:$0xf]
        %v1359 = vld [vmem:[%s257 + $0x10f0] sm:$0xf]
        %v1360 = vld [vmem:[%s257 + $0x10f4] sm:$0xf]
        %v1361 = vld [vmem:[%s257 + $0x10f8] sm:$0xf]
        %v1362 = vld [vmem:[%s257 + $0x10fc] sm:$0xf]
        %v1363 = vld [vmem:[%s257 + $0x1100] sm:$0xf]
        %v1364 = vld [vmem:[%s257 + $0x1104] sm:$0xf]
        %v1365 = vld [vmem:[%s257 + $0x1108] sm:$0xf]
        %v1366 = vld [vmem:[%s257 + $0x110c] sm:$0xf]
        %v1367 = vld [vmem:[%s257 + $0x1110] sm:$0xf]
        %v1368 = vld [vmem:[%s257 + $0x1114] sm:$0xf]
        %v1369 = vld [vmem:[%s257 + $0x1118] sm:$0xf]
        %v1370 = vld [vmem:[%s257 + $0x111c] sm:$0xf]
        %v1371 = vld [vmem:[%s257 + $0x1120] sm:$0xf]
        %v1372 = vld [vmem:[%s257 + $0x1124] sm:$0xf]
        %v1373 = vld [vmem:[%s257 + $0x1128] sm:$0xf]
        %v1374 = vld [vmem:[%s257 + $0x112c] sm:$0xf]
        %v1375 = vld [vmem:[%s257 + $0x1130] sm:$0xf]
        %v1376 = vld [vmem:[%s257 + $0x1134] sm:$0xf]
        %v1377 = vld [vmem:[%s257 + $0x1138] sm:$0xf]
        %v1378 = vld [vmem:[%s257 + $0x113c] sm:$0xf]
        %v1379 = vld [vmem:[%s257 + $0x1140] sm:$0xf]
        %v1380 = vld [vmem:[%s257 + $0x1144] sm:$0xf]
        %v1381 = vld [vmem:[%s257 + $0x1148] sm:$0xf]
        %v1382 = vld [vmem:[%s257 + $0x114c] sm:$0xf]
        %v1383 = vld [vmem:[%s257 + $0x1150] sm:$0xf]
        %v1384 = vld [vmem:[%s257 + $0x1154] sm:$0xf]
        %v1385 = vld [vmem:[%s257 + $0x1158] sm:$0xf]
        %v1386 = vld [vmem:[%s257 + $0x115c] sm:$0xf]
        %v1387 = vld [vmem:[%s257 + $0x1160] sm:$0xf]
        %v1388 = vld [vmem:[%s257 + $0x1164] sm:$0xf]
        %v1389 = vld [vmem:[%s257 + $0x1168] sm:$0xf]
        %v1390 = vld [vmem:[%s257 + $0x116c] sm:$0xf]
        %v1391 = vld [vmem:[%s257 + $0x1170] sm:$0xf]
        %v1392 = vld [vmem:[%s257 + $0x1174] sm:$0xf]
        %v1393 = vld [vmem:[%s257 + $0x1178] sm:$0xf]
        %v1394 = vld [vmem:[%s257 + $0x117c] sm:$0xf]
        %v1395 = vld [vmem:[%s257 + $0x1180] sm:$0xf]
        %v1396 = vld [vmem:[%s257 + $0x1184] sm:$0xf]
        %v1397 = vld [vmem:[%s257 + $0x1188] sm:$0xf]
        %v1398 = vld [vmem:[%s257 + $0x118c] sm:$0xf]
        %v1399 = vld [vmem:[%s257 + $0x1190] sm:$0xf]
        %v1400 = vld [vmem:[%s257 + $0x1194] sm:$0xf]
        %v1401 = vld [vmem:[%s257 + $0x1198] sm:$0xf]
        %v1402 = vld [vmem:[%s257 + $0x119c] sm:$0xf]
        %v1403 = vld [vmem:[%s257 + $0x11a0] sm:$0xf]
        %v1404 = vld [vmem:[%s257 + $0x11a4] sm:$0xf]
        %v1405 = vld [vmem:[%s257 + $0x11a8] sm:$0xf]
        %v1406 = vld [vmem:[%s257 + $0x11ac] sm:$0xf]
        %v1407 = vld [vmem:[%s257 + $0x11b0] sm:$0xf]
        %v1408 = vld [vmem:[%s257 + $0x11b4] sm:$0xf]
        %v1409 = vld [vmem:[%s257 + $0x11b8] sm:$0xf]
        %v1410 = vld [vmem:[%s257 + $0x11bc] sm:$0xf]
        %v1411 = vld [vmem:[%s257 + $0x11c0] sm:$0xf]
        %v1412 = vld [vmem:[%s257 + $0x11c4] sm:$0xf]
        %v1413 = vld [vmem:[%s257 + $0x11c8] sm:$0xf]
        %v1414 = vld [vmem:[%s257 + $0x11cc] sm:$0xf]
        %v1415 = vld [vmem:[%s257 + $0x11d0] sm:$0xf]
        %v1416 = vld [vmem:[%s257 + $0x11d4] sm:$0xf]
        %v1417 = vld [vmem:[%s257 + $0x11d8] sm:$0xf]
        %v1418 = vld [vmem:[%s257 + $0x11dc] sm:$0xf]
        %v1419 = vld [vmem:[%s257 + $0x11e0] sm:$0xf]
        %v1420 = vld [vmem:[%s257 + $0x11e4] sm:$0xf]
        %v1421 = vld [vmem:[%s257 + $0x11e8] sm:$0xf]
        %v1422 = vld [vmem:[%s257 + $0x11ec] sm:$0xf]
        %v1423 = vld [vmem:[%s257 + $0x11f0] sm:$0xf]
        %v1424 = vld [vmem:[%s257 + $0x11f4] sm:$0xf]
        %v1425 = vld [vmem:[%s257 + $0x11f8] sm:$0xf]
        %v1426 = vld [vmem:[%s257 + $0x11fc] sm:$0xf]
        %1428 = vst [vmem:[#allocation1] ss:$9 sm:$0xff] %v266
        %v1429 = vld [vmem:[#allocation1] sm:$0xff]
        %v1430 = vld [vmem:[#allocation1 + $0x9] sm:$0xff]
        %v1431 = vld [vmem:[#allocation1 + $0x12] sm:$0xff]
        %v1432 = vld [vmem:[#allocation1 + $0x1b] sm:$0xff]
        %v1433 = vld [vmem:[#allocation1 + $0x24] sm:$0xff]
        %v1434 = vld [vmem:[#allocation1 + $0x2d] sm:$0xff]
        %v1435 = vld [vmem:[#allocation1 + $0x36] sm:$0xff]
        %v1436 = vld [vmem:[#allocation1 + $0x3f] sm:$0xff]
        %1438 = vst [vmem:[#allocation1] ss:$9 sm:$0xff] %v267
        %v1439 = vld [vmem:[#allocation1] sm:$0xff]
        %v1440 = vld [vmem:[#allocation1 + $0x9] sm:$0xff]
        %v1441 = vld [vmem:[#allocation1 + $0x12] sm:$0xff]
        %v1442 = vld [vmem:[#allocation1 + $0x1b] sm:$0xff]
        %v1443 = vld [vmem:[#allocation1 + $0x24] sm:$0xff]
        %v1444 = vld [vmem:[#allocation1 + $0x2d] sm:$0xff]
        %v1445 = vld [vmem:[#allocation1 + $0x36] sm:$0xff]
        %v1446 = vld [vmem:[#allocation1 + $0x3f] sm:$0xff]
        %1448 = vst [vmem:[#allocation1] ss:$9 sm:$0xff] %v268
        %v1449 = vld [vmem:[#allocation1] sm:$0xff]
        %v1450 = vld [vmem:[#allocation1 + $0x9] sm:$0xff]
        %v1451 = vld [vmem:[#allocation1 + $0x12] sm:$0xff]
        %v1452 = vld [vmem:[#allocation1 + $0x1b] sm:$0xff]
        %v1453 = vld [vmem:[#allocation1 + $0x24] sm:$0xff]
        %v1454 = vld [vmem:[#allocation1 + $0x2d] sm:$0xff]
        %v1455 = vld [vmem:[#allocation1 + $0x36] sm:$0xff]
        %v1456 = vld [vmem:[#allocation1 + $0x3f] sm:$0xff]
        %1458 = vst [vmem:[#allocation1] ss:$9 sm:$0xff] %v269
        %v1459 = vld [vmem:[#allocation1] sm:$0xff]
        %v1460 = vld [vmem:[#allocation1 + $0x9] sm:$0xff]
        %v1461 = vld [vmem:[#allocation1 + $0x12] sm:$0xff]
        %v1462 = vld [vmem:[#allocation1 + $0x1b] sm:$0xff]
        %v1463 = vld [vmem:[#allocation1 + $0x24] sm:$0xff]
        %v1464 = vld [vmem:[#allocation1 + $0x2d] sm:$0xff]
        %v1465 = vld [vmem:[#allocation1 + $0x36] sm:$0xff]
        %v1466 = vld [vmem:[#allocation1 + $0x3f] sm:$0xff]
        %1468 = vst [vmem:[#allocation1] ss:$9 sm:$0xff] %v270
        %v1469 = vld [vmem:[#allocation1] sm:$0xff]
        %v1470 = vld [vmem:[#allocation1 + $0x9] sm:$0xff]
        %v1471 = vld [vmem:[#allocation1 + $0x12] sm:$0xff]
        %v1472 = vld [vmem:[#allocation1 + $0x1b] sm:$0xff]
        %v1473 = vld [vmem:[#allocation1 + $0x24] sm:$0xff]
        %v1474 = vld [vmem:[#allocation1 + $0x2d] sm:$0xff]
        %v1475 = vld [vmem:[#allocation1 + $0x36] sm:$0xff]
        %v1476 = vld [vmem:[#allocation1 + $0x3f] sm:$0xff]
        %1478 = vst [vmem:[#allocation1] ss:$9 sm:$0xff] %v271
        %v1479 = vld [vmem:[#allocation1] sm:$0xff]
        %v1480 = vld [vmem:[#allocation1 + $0x9] sm:$0xff]
        %v1481 = vld [vmem:[#allocation1 + $0x12] sm:$0xff]
        %v1482 = vld [vmem:[#allocation1 + $0x1b] sm:$0xff]
        %v1483 = vld [vmem:[#allocation1 + $0x24] sm:$0xff]
        %v1484 = vld [vmem:[#allocation1 + $0x2d] sm:$0xff]
        %v1485 = vld [vmem:[#allocation1 + $0x36] sm:$0xff]
        %v1486 = vld [vmem:[#allocation1 + $0x3f] sm:$0xff]
        %1488 = vst [vmem:[#allocation1] ss:$9 sm:$0xff] %v272
        %v1489 = vld [vmem:[#allocation1] sm:$0xff]
        %v1490 = vld [vmem:[#allocation1 + $0x9] sm:$0xff]
        %v1491 = vld [vmem:[#allocation1 + $0x12] sm:$0xff]
        %v1492 = vld [vmem:[#allocation1 + $0x1b] sm:$0xff]
        %v1493 = vld [vmem:[#allocation1 + $0x24] sm:$0xff]
        %v1494 = vld [vmem:[#allocation1 + $0x2d] sm:$0xff]
        %v1495 = vld [vmem:[#allocation1 + $0x36] sm:$0xff]
        %v1496 = vld [vmem:[#allocation1 + $0x3f] sm:$0xff]
        %1498 = vst [vmem:[#allocation1] ss:$9 sm:$0xff] %v273
        %v1499 = vld [vmem:[#allocation1] sm:$0xff]
        %v1500 = vld [vmem:[#allocation1 + $0x9] sm:$0xff]
        %v1501 = vld [vmem:[#allocation1 + $0x12] sm:$0xff]
        %v1502 = vld [vmem:[#allocation1 + $0x1b] sm:$0xff]
        %v1503 = vld [vmem:[#allocation1 + $0x24] sm:$0xff]
        %v1504 = vld [vmem:[#allocation1 + $0x2d] sm:$0xff]
        %v1505 = vld [vmem:[#allocation1 + $0x36] sm:$0xff]
        %v1506 = vld [vmem:[#allocation1 + $0x3f] sm:$0xff]
        %1508 = vst [vmem:[#allocation1] ss:$9 sm:$0xff] %v274
        %v1509 = vld [vmem:[#allocation1] sm:$0xff]
        %v1510 = vld [vmem:[#allocation1 + $0x9] sm:$0xff]
        %v1511 = vld [vmem:[#allocation1 + $0x12] sm:$0xff]
        %v1512 = vld [vmem:[#allocation1 + $0x1b] sm:$0xff]
        %v1513 = vld [vmem:[#allocation1 + $0x24] sm:$0xff]
        %v1514 = vld [vmem:[#allocation1 + $0x2d] sm:$0xff]
        %v1515 = vld [vmem:[#allocation1 + $0x36] sm:$0xff]
        %v1516 = vld [vmem:[#allocation1 + $0x3f] sm:$0xff]
        %v2741 = vunpack.c.l.b16 %v275
        %v2742 = vunpack.c.l.b16 %v276
        %v2743 = vunpack.c.l.b16 %v277
        %v2744 = vunpack.c.l.b16 %v278
        %v2745 = vunpack.c.l.b16 %v279
        %v2746 = vunpack.c.l.b16 %v280
        %v2747 = vunpack.c.l.b16 %v281
        %v2748 = vunpack.c.l.b16 %v282
        %v2749 = vunpack.c.l.b16 %v283
        %v2750 = vunpack.c.l.b16 %v284
        %v2751 = vunpack.c.l.b16 %v285
        %v2752 = vunpack.c.l.b16 %v286
        %v2753 = vunpack.c.l.b16 %v287
        %v2754 = vunpack.c.l.b16 %v288
        %v2755 = vunpack.c.l.b16 %v289
        %v2756 = vunpack.c.l.b16 %v290
        %v2757 = vunpack.c.l.b16 %v291
        %v2758 = vunpack.c.l.b16 %v292
        %v2759 = vunpack.c.l.b16 %v293
        %v2760 = vunpack.c.l.b16 %v294
        %v2761 = vunpack.c.l.b16 %v295
        %v2762 = vunpack.c.l.b16 %v296
        %v2763 = vunpack.c.l.b16 %v297
        %v2764 = vunpack.c.l.b16 %v298
        %v2765 = vunpack.c.l.b16 %v299
        %v2766 = vunpack.c.l.b16 %v300
        %v2767 = vunpack.c.l.b16 %v301
        %v2768 = vunpack.c.l.b16 %v302
        %v2769 = vunpack.c.l.b16 %v303
        %v2770 = vunpack.c.l.b16 %v304
        %v2771 = vunpack.c.l.b16 %v305
        %v2772 = vunpack.c.l.b16 %v306
        %v2773 = vunpack.c.l.b16 %v307
        %v2774 = vunpack.c.l.b16 %v308
        %v2775 = vunpack.c.l.b16 %v309
        %v2776 = vunpack.c.l.b16 %v310
        %v2777 = vunpack.c.l.b16 %v311
        %v2778 = vunpack.c.l.b16 %v312
        %v2779 = vunpack.c.l.b16 %v313
        %v2780 = vunpack.c.l.b16 %v314
        %v2781 = vunpack.c.l.b16 %v315
        %v2782 = vunpack.c.l.b16 %v316
        %v2783 = vunpack.c.l.b16 %v317
        %v2784 = vunpack.c.l.b16 %v318
        %v2785 = vunpack.c.l.b16 %v319
        %v2786 = vunpack.c.l.b16 %v320
        %v2787 = vunpack.c.l.b16 %v321
        %v2788 = vunpack.c.l.b16 %v322
        %v2789 = vunpack.c.l.b16 %v323
        %v2790 = vunpack.c.l.b16 %v324
        %v2791 = vunpack.c.l.b16 %v325
        %v2792 = vunpack.c.l.b16 %v326
        %v2793 = vunpack.c.l.b16 %v327
        %v2794 = vunpack.c.l.b16 %v328
        %v2795 = vunpack.c.l.b16 %v329
        %v2796 = vunpack.c.l.b16 %v330
        %v2797 = vunpack.c.l.b16 %v331
        %v2798 = vunpack.c.l.b16 %v332
        %v2799 = vunpack.c.l.b16 %v333
        %v2800 = vunpack.c.l.b16 %v334
        %v2801 = vunpack.c.l.b16 %v335
        %v2802 = vunpack.c.l.b16 %v336
        %v2803 = vunpack.c.l.b16 %v337
        %v2804 = vunpack.c.l.b16 %v338
        %v2805 = vunpack.c.l.b16 %v339
        %v2806 = vunpack.c.l.b16 %v340
        %v2807 = vunpack.c.l.b16 %v341
        %v2808 = vunpack.c.l.b16 %v342
        %v2809 = vunpack.c.l.b16 %v343
        %v2810 = vunpack.c.l.b16 %v344
        %v2811 = vunpack.c.l.b16 %v345
        %v2812 = vunpack.c.l.b16 %v346
        %v2813 = vunpack.c.l.b16 %v347
        %v2814 = vunpack.c.l.b16 %v348
        %v2815 = vunpack.c.l.b16 %v349
        %v2816 = vunpack.c.l.b16 %v350
        %v2817 = vunpack.c.l.b16 %v351
        %v2818 = vunpack.c.l.b16 %v352
        %v2819 = vunpack.c.l.b16 %v353
        %v2820 = vunpack.c.l.b16 %v354
        %v2821 = vunpack.c.l.b16 %v355
        %v2822 = vunpack.c.l.b16 %v356
        %v2823 = vunpack.c.l.b16 %v357
        %v2824 = vunpack.c.l.b16 %v358
        %v2825 = vunpack.c.l.b16 %v359
        %v2826 = vunpack.c.l.b16 %v360
        %v2827 = vunpack.c.l.b16 %v361
        %v2828 = vunpack.c.l.b16 %v362
        %v2829 = vunpack.c.l.b16 %v363
        %v2830 = vunpack.c.l.b16 %v364
        %v2831 = vunpack.c.l.b16 %v365
        %v2832 = vunpack.c.l.b16 %v366
        %v2833 = vunpack.c.l.b16 %v367
        %v2834 = vunpack.c.l.b16 %v368
        %v2835 = vunpack.c.l.b16 %v369
        %v2836 = vunpack.c.l.b16 %v370
        %v2837 = vunpack.c.l.b16 %v371
        %v2838 = vunpack.c.l.b16 %v372
        %v2839 = vunpack.c.l.b16 %v373
        %v2840 = vunpack.c.l.b16 %v374
        %v2841 = vunpack.c.l.b16 %v375
        %v2842 = vunpack.c.l.b16 %v376
        %v2843 = vunpack.c.l.b16 %v377
        %v2844 = vunpack.c.l.b16 %v378
        %v2845 = vunpack.c.l.b16 %v379
        %v2846 = vunpack.c.l.b16 %v380
        %v2847 = vunpack.c.l.b16 %v381
        %v2848 = vunpack.c.l.b16 %v382
        %v2849 = vunpack.c.l.b16 %v383
        %v2850 = vunpack.c.l.b16 %v384
        %v2851 = vunpack.c.l.b16 %v385
        %v2852 = vunpack.c.l.b16 %v386
        %v2853 = vunpack.c.l.b16 %v387
        %v2854 = vunpack.c.l.b16 %v388
        %v2855 = vunpack.c.l.b16 %v389
        %v2856 = vunpack.c.l.b16 %v390
        %v2857 = vunpack.c.l.b16 %v391
        %v2858 = vunpack.c.l.b16 %v392
        %v2859 = vunpack.c.l.b16 %v393
        %v2860 = vunpack.c.l.b16 %v394
        %v2861 = vunpack.c.l.b16 %v395
        %v2862 = vunpack.c.l.b16 %v396
        %v2863 = vunpack.c.l.b16 %v397
        %v2864 = vunpack.c.l.b16 %v398
        %v2865 = vunpack.c.l.b16 %v399
        %v2866 = vunpack.c.l.b16 %v400
        %v2867 = vunpack.c.l.b16 %v401
        %v2868 = vunpack.c.l.b16 %v402
        %v2869 = vunpack.c.l.b16 %v403
        %v2870 = vunpack.c.l.b16 %v404
        %v2871 = vunpack.c.l.b16 %v405
        %v2872 = vunpack.c.l.b16 %v406
        %v2873 = vunpack.c.l.b16 %v407
        %v2874 = vunpack.c.l.b16 %v408
        %v2875 = vunpack.c.l.b16 %v409
        %v2876 = vunpack.c.l.b16 %v410
        %v2877 = vunpack.c.l.b16 %v411
        %v2878 = vunpack.c.l.b16 %v412
        %v2879 = vunpack.c.l.b16 %v413
        %v2880 = vunpack.c.l.b16 %v414
        %v2881 = vunpack.c.l.b16 %v415
        %v2882 = vunpack.c.l.b16 %v416
        %v2883 = vunpack.c.l.b16 %v417
        %v2884 = vunpack.c.l.b16 %v418
        %v2885 = vunpack.c.l.b16 %v419
        %v2886 = vunpack.c.l.b16 %v420
        %v2887 = vunpack.c.l.b16 %v421
        %v2888 = vunpack.c.l.b16 %v422
        %v2889 = vunpack.c.l.b16 %v423
        %v2890 = vunpack.c.l.b16 %v424
        %v2891 = vunpack.c.l.b16 %v425
        %v2892 = vunpack.c.l.b16 %v426
        %v2893 = vunpack.c.l.b16 %v427
        %v2894 = vunpack.c.l.b16 %v428
        %v2895 = vunpack.c.l.b16 %v429
        %v2896 = vunpack.c.l.b16 %v430
        %v2897 = vunpack.c.l.b16 %v431
        %v2898 = vunpack.c.l.b16 %v432
        %v2899 = vunpack.c.l.b16 %v433
        %v2900 = vunpack.c.l.b16 %v434
        %v2901 = vunpack.c.l.b16 %v435
        %v2902 = vunpack.c.l.b16 %v436
        %v2903 = vunpack.c.l.b16 %v437
        %v2904 = vunpack.c.l.b16 %v438
        %v2905 = vunpack.c.l.b16 %v439
        %v2906 = vunpack.c.l.b16 %v440
        %v2907 = vunpack.c.l.b16 %v441
        %v2908 = vunpack.c.l.b16 %v442
        %v2909 = vunpack.c.l.b16 %v443
        %v2910 = vunpack.c.l.b16 %v444
        %v2911 = vunpack.c.l.b16 %v445
        %v2912 = vunpack.c.l.b16 %v446
        %v2913 = vunpack.c.l.b16 %v447
        %v2914 = vunpack.c.l.b16 %v448
        %v2915 = vunpack.c.l.b16 %v449
        %v2916 = vunpack.c.l.b16 %v450
        %v2917 = vunpack.c.l.b16 %v451
        %v2918 = vunpack.c.l.b16 %v452
        %v2919 = vunpack.c.l.b16 %v453
        %v2920 = vunpack.c.l.b16 %v454
        %v2921 = vunpack.c.l.b16 %v455
        %v2922 = vunpack.c.l.b16 %v456
        %v2923 = vunpack.c.l.b16 %v457
        %v2924 = vunpack.c.l.b16 %v458
        %v2925 = vunpack.c.l.b16 %v459
        %v2926 = vunpack.c.l.b16 %v460
        %v2927 = vunpack.c.l.b16 %v461
        %v2928 = vunpack.c.l.b16 %v462
        %v2929 = vunpack.c.l.b16 %v463
        %v2930 = vunpack.c.l.b16 %v464
        %v2931 = vunpack.c.l.b16 %v465
        %v2932 = vunpack.c.l.b16 %v466
        %v2933 = vunpack.c.l.b16 %v467
        %v2934 = vunpack.c.l.b16 %v468
        %v2935 = vunpack.c.l.b16 %v469
        %v2936 = vunpack.c.l.b16 %v470
        %v2937 = vunpack.c.l.b16 %v471
        %v2938 = vunpack.c.l.b16 %v472
        %v2939 = vunpack.c.l.b16 %v473
        %v2940 = vunpack.c.l.b16 %v474
        %v2941 = vunpack.c.l.b16 %v475
        %v2942 = vunpack.c.l.b16 %v476
        %v2943 = vunpack.c.l.b16 %v477
        %v2944 = vunpack.c.l.b16 %v478
        %v2945 = vunpack.c.l.b16 %v479
        %v2946 = vunpack.c.l.b16 %v480
        %v2947 = vunpack.c.l.b16 %v481
        %v2948 = vunpack.c.l.b16 %v482
        %v2949 = vunpack.c.l.b16 %v483
        %v2950 = vunpack.c.l.b16 %v484
        %v2951 = vunpack.c.l.b16 %v485
        %v2952 = vunpack.c.l.b16 %v486
        %v2953 = vunpack.c.l.b16 %v487
        %v2954 = vunpack.c.l.b16 %v488
        %v2955 = vunpack.c.l.b16 %v489
        %v2956 = vunpack.c.l.b16 %v490
        %v2957 = vunpack.c.l.b16 %v491
        %v2958 = vunpack.c.l.b16 %v492
        %v2959 = vunpack.c.l.b16 %v493
        %v2960 = vunpack.c.l.b16 %v494
        %v2961 = vunpack.c.l.b16 %v495
        %v2962 = vunpack.c.l.b16 %v496
        %v2963 = vunpack.c.l.b16 %v497
        %v2964 = vunpack.c.l.b16 %v498
        %v2965 = vunpack.c.l.b16 %v499
        %v2966 = vunpack.c.l.b16 %v500
        %v2967 = vunpack.c.l.b16 %v501
        %v2968 = vunpack.c.l.b16 %v502
        %v2969 = vunpack.c.l.b16 %v503
        %v2970 = vunpack.c.l.b16 %v504
        %v2971 = vunpack.c.l.b16 %v505
        %v2972 = vunpack.c.l.b16 %v506
        %v2973 = vunpack.c.l.b16 %v507
        %v2974 = vunpack.c.l.b16 %v508
        %v2975 = vunpack.c.l.b16 %v509
        %v2976 = vunpack.c.l.b16 %v510
        %v2977 = vunpack.c.l.b16 %v511
        %v2978 = vunpack.c.l.b16 %v512
        %v2979 = vunpack.c.l.b16 %v513
        %v2980 = vunpack.c.l.b16 %v514
        %v2981 = vunpack.c.l.b16 %v515
        %v2982 = vunpack.c.l.b16 %v516
        %v2983 = vunpack.c.l.b16 %v517
        %v2984 = vunpack.c.l.b16 %v518
        %v2985 = vunpack.c.l.b16 %v519
        %v2986 = vunpack.c.l.b16 %v520
        %v2987 = vunpack.c.l.b16 %v521
        %v2988 = vunpack.c.l.b16 %v522
        %v2989 = vunpack.c.l.b16 %v523
        %v2990 = vunpack.c.l.b16 %v524
        %v2991 = vunpack.c.l.b16 %v525
        %v2992 = vunpack.c.l.b16 %v526
        %v2993 = vunpack.c.l.b16 %v527
        %v2994 = vunpack.c.l.b16 %v528
        %v2995 = vunpack.c.l.b16 %v529
        %v2996 = vunpack.c.l.b16 %v530
        %v2997 = vunpack.c.l.b16 %v531
        %v2998 = vunpack.c.l.b16 %v532
        %v2999 = vunpack.c.l.b16 %v533
        %v3000 = vunpack.c.l.b16 %v534
        %v3001 = vunpack.c.l.b16 %v535
        %v3002 = vunpack.c.l.b16 %v536
        %v3003 = vunpack.c.l.b16 %v537
        %v3004 = vunpack.c.l.b16 %v538
        %v3005 = vunpack.c.l.b16 %v539
        %v3006 = vunpack.c.l.b16 %v540
        %v3007 = vunpack.c.l.b16 %v541
        %v3008 = vunpack.c.l.b16 %v542
        %v3009 = vunpack.c.l.b16 %v543
        %v3010 = vunpack.c.l.b16 %v544
        %v3011 = vunpack.c.l.b16 %v545
        %v3012 = vunpack.c.l.b16 %v546
        %v3013 = vunpack.c.l.b16 %v547
        %v3014 = vunpack.c.l.b16 %v548
        %v3015 = vunpack.c.l.b16 %v549
        %v3016 = vunpack.c.l.b16 %v550
        %v3017 = vunpack.c.l.b16 %v551
        %v3018 = vunpack.c.l.b16 %v552
        %v3019 = vunpack.c.l.b16 %v553
        %v3020 = vunpack.c.l.b16 %v554
        %v3021 = vunpack.c.l.b16 %v555
        %v3022 = vunpack.c.l.b16 %v556
        %v3023 = vunpack.c.l.b16 %v557
        %v3024 = vunpack.c.l.b16 %v558
        %v3025 = vunpack.c.l.b16 %v559
        %v3026 = vunpack.c.l.b16 %v560
        %v3027 = vunpack.c.l.b16 %v561
        %v3028 = vunpack.c.l.b16 %v562
        %v3029 = vunpack.c.l.b16 %v563
        %v3030 = vunpack.c.l.b16 %v564
        %v3031 = vunpack.c.l.b16 %v565
        %v3032 = vunpack.c.l.b16 %v566
        %v3033 = vunpack.c.l.b16 %v567
        %v3034 = vunpack.c.l.b16 %v568
        %v3035 = vunpack.c.l.b16 %v569
        %v3036 = vunpack.c.l.b16 %v570
        %v3037 = vunpack.c.l.b16 %v571
        %v3038 = vunpack.c.l.b16 %v572
        %v3039 = vunpack.c.l.b16 %v573
        %v3040 = vunpack.c.l.b16 %v574
        %v3041 = vunpack.c.l.b16 %v575
        %v3042 = vunpack.c.l.b16 %v576
        %v3043 = vunpack.c.l.b16 %v577
        %v3044 = vunpack.c.l.b16 %v578
        %v3045 = vunpack.c.l.b16 %v579
        %v3046 = vunpack.c.l.b16 %v580
        %v3047 = vunpack.c.l.b16 %v581
        %v3048 = vunpack.c.l.b16 %v582
        %v3049 = vunpack.c.l.b16 %v583
        %v3050 = vunpack.c.l.b16 %v584
        %v3051 = vunpack.c.l.b16 %v585
        %v3052 = vunpack.c.l.b16 %v586
        %v3053 = vunpack.c.l.b16 %v587
        %v3054 = vunpack.c.l.b16 %v588
        %v3055 = vunpack.c.l.b16 %v589
        %v3056 = vunpack.c.l.b16 %v590
        %v3057 = vunpack.c.l.b16 %v591
        %v3058 = vunpack.c.l.b16 %v592
        %v3059 = vunpack.c.l.b16 %v593
        %v3060 = vunpack.c.l.b16 %v594
        %v3061 = vunpack.c.l.b16 %v595
        %v3062 = vunpack.c.l.b16 %v596
        %v3063 = vunpack.c.l.b16 %v597
        %v3064 = vunpack.c.l.b16 %v598
        %v3065 = vunpack.c.l.b16 %v599
        %v3066 = vunpack.c.l.b16 %v600
        %v3067 = vunpack.c.l.b16 %v601
        %v3068 = vunpack.c.l.b16 %v602
        %v3069 = vunpack.c.l.b16 %v603
        %v3070 = vunpack.c.l.b16 %v604
        %v3071 = vunpack.c.l.b16 %v605
        %v3072 = vunpack.c.l.b16 %v606
        %v3073 = vunpack.c.l.b16 %v607
        %v3074 = vunpack.c.l.b16 %v608
        %v3075 = vunpack.c.l.b16 %v609
        %v3076 = vunpack.c.l.b16 %v610
        %v3077 = vunpack.c.l.b16 %v611
        %v3078 = vunpack.c.l.b16 %v612
        %v3079 = vunpack.c.l.b16 %v613
        %v3080 = vunpack.c.l.b16 %v614
        %v3081 = vunpack.c.l.b16 %v615
        %v3082 = vunpack.c.l.b16 %v616
        %v3083 = vunpack.c.l.b16 %v617
        %v3084 = vunpack.c.l.b16 %v618
        %v3085 = vunpack.c.l.b16 %v619
        %v3086 = vunpack.c.l.b16 %v620
        %v3087 = vunpack.c.l.b16 %v621
        %v3088 = vunpack.c.l.b16 %v622
        %v3089 = vunpack.c.l.b16 %v623
        %v3090 = vunpack.c.l.b16 %v624
        %v3091 = vunpack.c.l.b16 %v625
        %v3092 = vunpack.c.l.b16 %v626
        %v3093 = vunpack.c.l.b16 %v627
        %v3094 = vunpack.c.l.b16 %v628
        %v3095 = vunpack.c.l.b16 %v629
        %v3096 = vunpack.c.l.b16 %v630
        %v3097 = vunpack.c.l.b16 %v631
        %v3098 = vunpack.c.l.b16 %v632
        %v3099 = vunpack.c.l.b16 %v633
        %v3100 = vunpack.c.l.b16 %v634
        %v3101 = vunpack.c.l.b16 %v635
        %v3102 = vunpack.c.l.b16 %v636
        %v3103 = vunpack.c.l.b16 %v637
        %v3104 = vunpack.c.l.b16 %v638
        %v3105 = vunpack.c.l.b16 %v639
        %v3106 = vunpack.c.l.b16 %v640
        %v3107 = vunpack.c.l.b16 %v641
        %v3108 = vunpack.c.l.b16 %v642
        %v3109 = vunpack.c.l.b16 %v643
        %v3110 = vunpack.c.l.b16 %v644
        %v3111 = vunpack.c.l.b16 %v645
        %v3112 = vunpack.c.l.b16 %v646
        %v3113 = vunpack.c.l.b16 %v647
        %v3114 = vunpack.c.l.b16 %v648
        %v3115 = vunpack.c.l.b16 %v649
        %v3116 = vunpack.c.l.b16 %v650
        %v3117 = vunpack.c.l.b16 %v651
        %v3118 = vunpack.c.l.b16 %v652
        %v3119 = vunpack.c.l.b16 %v653
        %v3120 = vunpack.c.l.b16 %v654
        %v3121 = vunpack.c.l.b16 %v655
        %v3122 = vunpack.c.l.b16 %v656
        %v3123 = vunpack.c.l.b16 %v657
        %v3124 = vunpack.c.l.b16 %v658
        %v3125 = vunpack.c.l.b16 %v659
        %v3126 = vunpack.c.l.b16 %v660
        %v3127 = vunpack.c.l.b16 %v661
        %v3128 = vunpack.c.l.b16 %v662
        %v3129 = vunpack.c.l.b16 %v663
        %v3130 = vunpack.c.l.b16 %v664
        %v3131 = vunpack.c.l.b16 %v665
        %v3132 = vunpack.c.l.b16 %v666
        %v3133 = vunpack.c.l.b16 %v667
        %v3134 = vunpack.c.l.b16 %v668
        %v3135 = vunpack.c.l.b16 %v669
        %v3136 = vunpack.c.l.b16 %v670
        %v3137 = vunpack.c.l.b16 %v671
        %v3138 = vunpack.c.l.b16 %v672
        %v3139 = vunpack.c.l.b16 %v673
        %v3140 = vunpack.c.l.b16 %v674
        %v3141 = vunpack.c.l.b16 %v675
        %v3142 = vunpack.c.l.b16 %v676
        %v3143 = vunpack.c.l.b16 %v677
        %v3144 = vunpack.c.l.b16 %v678
        %v3145 = vunpack.c.l.b16 %v679
        %v3146 = vunpack.c.l.b16 %v680
        %v3147 = vunpack.c.l.b16 %v681
        %v3148 = vunpack.c.l.b16 %v682
        %v3149 = vunpack.c.l.b16 %v683
        %v3150 = vunpack.c.l.b16 %v684
        %v3151 = vunpack.c.l.b16 %v685
        %v3152 = vunpack.c.l.b16 %v686
        %v3153 = vunpack.c.l.b16 %v687
        %v3154 = vunpack.c.l.b16 %v688
        %v3155 = vunpack.c.l.b16 %v689
        %v3156 = vunpack.c.l.b16 %v690
        %v3157 = vunpack.c.l.b16 %v691
        %v3158 = vunpack.c.l.b16 %v692
        %v3159 = vunpack.c.l.b16 %v693
        %v3160 = vunpack.c.l.b16 %v694
        %v3161 = vunpack.c.l.b16 %v695
        %v3162 = vunpack.c.l.b16 %v696
        %v3163 = vunpack.c.l.b16 %v697
        %v3164 = vunpack.c.l.b16 %v698
        %v3165 = vunpack.c.l.b16 %v699
        %v3166 = vunpack.c.l.b16 %v700
        %v3167 = vunpack.c.l.b16 %v701
        %v3168 = vunpack.c.l.b16 %v702
        %v3169 = vunpack.c.l.b16 %v703
        %v3170 = vunpack.c.l.b16 %v704
        %v3171 = vunpack.c.l.b16 %v705
        %v3172 = vunpack.c.l.b16 %v706
        %v3173 = vunpack.c.l.b16 %v707
        %v3174 = vunpack.c.l.b16 %v708
        %v3175 = vunpack.c.l.b16 %v709
        %v3176 = vunpack.c.l.b16 %v710
        %v3177 = vunpack.c.l.b16 %v711
        %v3178 = vunpack.c.l.b16 %v712
        %v3179 = vunpack.c.l.b16 %v713
        %v3180 = vunpack.c.l.b16 %v714
        %v3181 = vunpack.c.l.b16 %v715
        %v3182 = vunpack.c.l.b16 %v716
        %v3183 = vunpack.c.l.b16 %v717
        %v3184 = vunpack.c.l.b16 %v718
        %v3185 = vunpack.c.l.b16 %v719
        %v3186 = vunpack.c.l.b16 %v720
        %v3187 = vunpack.c.l.b16 %v721
        %v3188 = vunpack.c.l.b16 %v722
        %v3189 = vunpack.c.l.b16 %v723
        %v3190 = vunpack.c.l.b16 %v724
        %v3191 = vunpack.c.l.b16 %v725
        %v3192 = vunpack.c.l.b16 %v726
        %v3193 = vunpack.c.l.b16 %v727
        %v3194 = vunpack.c.l.b16 %v728
        %v3195 = vunpack.c.l.b16 %v729
        %v3196 = vunpack.c.l.b16 %v730
        %v3197 = vunpack.c.l.b16 %v731
        %v3198 = vunpack.c.l.b16 %v732
        %v3199 = vunpack.c.l.b16 %v733
        %v3200 = vunpack.c.l.b16 %v734
        %v3201 = vunpack.c.l.b16 %v735
        %v3202 = vunpack.c.l.b16 %v736
        %v3203 = vunpack.c.l.b16 %v737
        %v3204 = vunpack.c.l.b16 %v738
        %v3205 = vunpack.c.l.b16 %v739
        %v3206 = vunpack.c.l.b16 %v740
        %v3207 = vunpack.c.l.b16 %v741
        %v3208 = vunpack.c.l.b16 %v742
        %v3209 = vunpack.c.l.b16 %v743
        %v3210 = vunpack.c.l.b16 %v744
        %v3211 = vunpack.c.l.b16 %v745
        %v3212 = vunpack.c.l.b16 %v746
        %v3213 = vunpack.c.l.b16 %v747
        %v3214 = vunpack.c.l.b16 %v748
        %v3215 = vunpack.c.l.b16 %v749
        %v3216 = vunpack.c.l.b16 %v750
        %v3217 = vunpack.c.l.b16 %v751
        %v3218 = vunpack.c.l.b16 %v752
        %v3219 = vunpack.c.l.b16 %v753
        %v3220 = vunpack.c.l.b16 %v754
        %v3221 = vunpack.c.l.b16 %v755
        %v3222 = vunpack.c.l.b16 %v756
        %v3223 = vunpack.c.l.b16 %v757
        %v3224 = vunpack.c.l.b16 %v758
        %v3225 = vunpack.c.l.b16 %v759
        %v3226 = vunpack.c.l.b16 %v760
        %v3227 = vunpack.c.l.b16 %v761
        %v3228 = vunpack.c.l.b16 %v762
        %v3229 = vunpack.c.l.b16 %v763
        %v3230 = vunpack.c.l.b16 %v764
        %v3231 = vunpack.c.l.b16 %v765
        %v3232 = vunpack.c.l.b16 %v766
        %v3233 = vunpack.c.l.b16 %v767
        %v3234 = vunpack.c.l.b16 %v768
        %v3235 = vunpack.c.l.b16 %v769
        %v3236 = vunpack.c.l.b16 %v770
        %v3237 = vunpack.c.l.b16 %v771
        %v3238 = vunpack.c.l.b16 %v772
        %v3239 = vunpack.c.l.b16 %v773
        %v3240 = vunpack.c.l.b16 %v774
        %v3241 = vunpack.c.l.b16 %v775
        %v3242 = vunpack.c.l.b16 %v776
        %v3243 = vunpack.c.l.b16 %v777
        %v3244 = vunpack.c.l.b16 %v778
        %v3245 = vunpack.c.l.b16 %v779
        %v3246 = vunpack.c.l.b16 %v780
        %v3247 = vunpack.c.l.b16 %v781
        %v3248 = vunpack.c.l.b16 %v782
        %v3249 = vunpack.c.l.b16 %v783
        %v3250 = vunpack.c.l.b16 %v784
        %v3251 = vunpack.c.l.b16 %v785
        %v3252 = vunpack.c.l.b16 %v786
        %v3253 = vunpack.c.l.b16 %v787
        %v3254 = vunpack.c.l.b16 %v788
        %v3255 = vunpack.c.l.b16 %v789
        %v3256 = vunpack.c.l.b16 %v790
        %v3257 = vunpack.c.l.b16 %v791
        %v3258 = vunpack.c.l.b16 %v792
        %v3259 = vunpack.c.l.b16 %v793
        %v3260 = vunpack.c.l.b16 %v794
        %v3261 = vunpack.c.l.b16 %v795
        %v3262 = vunpack.c.l.b16 %v796
        %v3263 = vunpack.c.l.b16 %v797
        %v3264 = vunpack.c.l.b16 %v798
        %v3265 = vunpack.c.l.b16 %v799
        %v3266 = vunpack.c.l.b16 %v800
        %v3267 = vunpack.c.l.b16 %v801
        %v3268 = vunpack.c.l.b16 %v802
        %v3269 = vunpack.c.l.b16 %v803
        %v3270 = vunpack.c.l.b16 %v804
        %v3271 = vunpack.c.l.b16 %v805
        %v3272 = vunpack.c.l.b16 %v806
        %v3273 = vunpack.c.l.b16 %v807
        %v3274 = vunpack.c.l.b16 %v808
        %v3275 = vunpack.c.l.b16 %v809
        %v3276 = vunpack.c.l.b16 %v810
        %v3277 = vunpack.c.l.b16 %v811
        %v3278 = vunpack.c.l.b16 %v812
        %v3279 = vunpack.c.l.b16 %v813
        %v3280 = vunpack.c.l.b16 %v814
        %v3281 = vunpack.c.l.b16 %v815
        %v3282 = vunpack.c.l.b16 %v816
        %v3283 = vunpack.c.l.b16 %v817
        %v3284 = vunpack.c.l.b16 %v818
        %v3285 = vunpack.c.l.b16 %v819
        %v3286 = vunpack.c.l.b16 %v820
        %v3287 = vunpack.c.l.b16 %v821
        %v3288 = vunpack.c.l.b16 %v822
        %v3289 = vunpack.c.l.b16 %v823
        %v3290 = vunpack.c.l.b16 %v824
        %v3291 = vunpack.c.l.b16 %v825
        %v3292 = vunpack.c.l.b16 %v826
        %v3293 = vunpack.c.l.b16 %v827
        %v3294 = vunpack.c.l.b16 %v828
        %v3295 = vunpack.c.l.b16 %v829
        %v3296 = vunpack.c.l.b16 %v830
        %v3297 = vunpack.c.l.b16 %v831
        %v3298 = vunpack.c.l.b16 %v832
        %v3299 = vunpack.c.l.b16 %v833
        %v3300 = vunpack.c.l.b16 %v834
        %v3301 = vunpack.c.l.b16 %v835
        %v3302 = vunpack.c.l.b16 %v836
        %v3303 = vunpack.c.l.b16 %v837
        %v3304 = vunpack.c.l.b16 %v838
        %v3305 = vunpack.c.l.b16 %v839
        %v3306 = vunpack.c.l.b16 %v840
        %v3307 = vunpack.c.l.b16 %v841
        %v3308 = vunpack.c.l.b16 %v842
        %v3309 = vunpack.c.l.b16 %v843
        %v3310 = vunpack.c.l.b16 %v844
        %v3311 = vunpack.c.l.b16 %v845
        %v3312 = vunpack.c.l.b16 %v846
        %v3313 = vunpack.c.l.b16 %v847
        %v3314 = vunpack.c.l.b16 %v848
        %v3315 = vunpack.c.l.b16 %v849
        %v3316 = vunpack.c.l.b16 %v850
        %v3317 = vunpack.c.l.b16 %v851
        %v3318 = vunpack.c.l.b16 %v852
        %v3319 = vunpack.c.l.b16 %v853
        %v3320 = vunpack.c.l.b16 %v854
        %v3321 = vunpack.c.l.b16 %v855
        %v3322 = vunpack.c.l.b16 %v856
        %v3323 = vunpack.c.l.b16 %v857
        %v3324 = vunpack.c.l.b16 %v858
        %v3325 = vunpack.c.l.b16 %v859
        %v3326 = vunpack.c.l.b16 %v860
        %v3327 = vunpack.c.l.b16 %v861
        %v3328 = vunpack.c.l.b16 %v862
        %v3329 = vunpack.c.l.b16 %v863
        %v3330 = vunpack.c.l.b16 %v864
        %v3331 = vunpack.c.l.b16 %v865
        %v3332 = vunpack.c.l.b16 %v866
        %v3333 = vunpack.c.l.b16 %v867
        %v3334 = vunpack.c.l.b16 %v868
        %v3335 = vunpack.c.l.b16 %v869
        %v3336 = vunpack.c.l.b16 %v870
        %v3337 = vunpack.c.l.b16 %v871
        %v3338 = vunpack.c.l.b16 %v872
        %v3339 = vunpack.c.l.b16 %v873
        %v3340 = vunpack.c.l.b16 %v874
        %v3341 = vunpack.c.l.b16 %v875
        %v3342 = vunpack.c.l.b16 %v876
        %v3343 = vunpack.c.l.b16 %v877
        %v3344 = vunpack.c.l.b16 %v878
        %v3345 = vunpack.c.l.b16 %v879
        %v3346 = vunpack.c.l.b16 %v880
        %v3347 = vunpack.c.l.b16 %v881
        %v3348 = vunpack.c.l.b16 %v882
        %v3349 = vunpack.c.l.b16 %v883
        %v3350 = vunpack.c.l.b16 %v884
        %v3351 = vunpack.c.l.b16 %v885
        %v3352 = vunpack.c.l.b16 %v886
        %v3353 = vunpack.c.l.b16 %v887
        %v3354 = vunpack.c.l.b16 %v888
        %v3355 = vunpack.c.l.b16 %v889
        %v3356 = vunpack.c.l.b16 %v890
        %v3357 = vunpack.c.l.b16 %v891
        %v3358 = vunpack.c.l.b16 %v892
        %v3359 = vunpack.c.l.b16 %v893
        %v3360 = vunpack.c.l.b16 %v894
        %v3361 = vunpack.c.l.b16 %v895
        %v3362 = vunpack.c.l.b16 %v896
        %v3363 = vunpack.c.l.b16 %v897
        %v3364 = vunpack.c.l.b16 %v898
        %v3365 = vunpack.c.l.b16 %v899
        %v3366 = vunpack.c.l.b16 %v900
        %v3367 = vunpack.c.l.b16 %v901
        %v3368 = vunpack.c.l.b16 %v902
        %v3369 = vunpack.c.l.b16 %v903
        %v3370 = vunpack.c.l.b16 %v904
        %v3371 = vunpack.c.l.b16 %v905
        %v3372 = vunpack.c.l.b16 %v906
        %v3373 = vunpack.c.l.b16 %v907
        %v3374 = vunpack.c.l.b16 %v908
        %v3375 = vunpack.c.l.b16 %v909
        %v3376 = vunpack.c.l.b16 %v910
        %v3377 = vunpack.c.l.b16 %v911
        %v3378 = vunpack.c.l.b16 %v912
        %v3379 = vunpack.c.l.b16 %v913
        %v3380 = vunpack.c.l.b16 %v914
        %v3381 = vunpack.c.l.b16 %v915
        %v3382 = vunpack.c.l.b16 %v916
        %v3383 = vunpack.c.l.b16 %v917
        %v3384 = vunpack.c.l.b16 %v918
        %v3385 = vunpack.c.l.b16 %v919
        %v3386 = vunpack.c.l.b16 %v920
        %v3387 = vunpack.c.l.b16 %v921
        %v3388 = vunpack.c.l.b16 %v922
        %v3389 = vunpack.c.l.b16 %v923
        %v3390 = vunpack.c.l.b16 %v924
        %v3391 = vunpack.c.l.b16 %v925
        %v3392 = vunpack.c.l.b16 %v926
        %v3393 = vunpack.c.l.b16 %v927
        %v3394 = vunpack.c.l.b16 %v928
        %v3395 = vunpack.c.l.b16 %v929
        %v3396 = vunpack.c.l.b16 %v930
        %v3397 = vunpack.c.l.b16 %v931
        %v3398 = vunpack.c.l.b16 %v932
        %v3399 = vunpack.c.l.b16 %v933
        %v3400 = vunpack.c.l.b16 %v934
        %v3401 = vunpack.c.l.b16 %v935
        %v3402 = vunpack.c.l.b16 %v936
        %v3403 = vunpack.c.l.b16 %v937
        %v3404 = vunpack.c.l.b16 %v938
        %v3405 = vunpack.c.l.b16 %v939
        %v3406 = vunpack.c.l.b16 %v940
        %v3407 = vunpack.c.l.b16 %v941
        %v3408 = vunpack.c.l.b16 %v942
        %v3409 = vunpack.c.l.b16 %v943
        %v3410 = vunpack.c.l.b16 %v944
        %v3411 = vunpack.c.l.b16 %v945
        %v3412 = vunpack.c.l.b16 %v946
        %v3413 = vunpack.c.l.b16 %v947
        %v3414 = vunpack.c.l.b16 %v948
        %v3415 = vunpack.c.l.b16 %v949
        %v3416 = vunpack.c.l.b16 %v950
        %v3417 = vunpack.c.l.b16 %v951
        %v3418 = vunpack.c.l.b16 %v952
        %v3419 = vunpack.c.l.b16 %v953
        %v3420 = vunpack.c.l.b16 %v954
        %v3421 = vunpack.c.l.b16 %v955
        %v3422 = vunpack.c.l.b16 %v956
        %v3423 = vunpack.c.l.b16 %v957
        %v3424 = vunpack.c.l.b16 %v958
        %v3425 = vunpack.c.l.b16 %v959
        %v3426 = vunpack.c.l.b16 %v960
        %v3427 = vunpack.c.l.b16 %v961
        %v3428 = vunpack.c.l.b16 %v962
        %v3429 = vunpack.c.l.b16 %v963
        %v3430 = vunpack.c.l.b16 %v964
        %v3431 = vunpack.c.l.b16 %v965
        %v3432 = vunpack.c.l.b16 %v966
        %v3433 = vunpack.c.l.b16 %v967
        %v3434 = vunpack.c.l.b16 %v968
        %v3435 = vunpack.c.l.b16 %v969
        %v3436 = vunpack.c.l.b16 %v970
        %v3437 = vunpack.c.l.b16 %v971
        %v3438 = vunpack.c.l.b16 %v972
        %v3439 = vunpack.c.l.b16 %v973
        %v3440 = vunpack.c.l.b16 %v974
        %v3441 = vunpack.c.l.b16 %v975
        %v3442 = vunpack.c.l.b16 %v976
        %v3443 = vunpack.c.l.b16 %v977
        %v3444 = vunpack.c.l.b16 %v978
        %v3445 = vunpack.c.l.b16 %v979
        %v3446 = vunpack.c.l.b16 %v980
        %v3447 = vunpack.c.l.b16 %v981
        %v3448 = vunpack.c.l.b16 %v982
        %v3449 = vunpack.c.l.b16 %v983
        %v3450 = vunpack.c.l.b16 %v984
        %v3451 = vunpack.c.l.b16 %v985
        %v3452 = vunpack.c.l.b16 %v986
        %v3453 = vunpack.c.l.b16 %v987
        %v3454 = vunpack.c.l.b16 %v988
        %v3455 = vunpack.c.l.b16 %v989
        %v3456 = vunpack.c.l.b16 %v990
        %v3457 = vunpack.c.l.b16 %v991
        %v3458 = vunpack.c.l.b16 %v992
        %v3459 = vunpack.c.l.b16 %v993
        %v3460 = vunpack.c.l.b16 %v994
        %v3461 = vunpack.c.l.b16 %v995
        %v3462 = vunpack.c.l.b16 %v996
        %v3463 = vunpack.c.l.b16 %v997
        %v3464 = vunpack.c.l.b16 %v998
        %v3465 = vunpack.c.l.b16 %v999
        %v3466 = vunpack.c.l.b16 %v1000
        %v3467 = vunpack.c.l.b16 %v1001
        %v3468 = vunpack.c.l.b16 %v1002
        %v3469 = vunpack.c.l.b16 %v1003
        %v3470 = vunpack.c.l.b16 %v1004
        %v3471 = vunpack.c.l.b16 %v1005
        %v3472 = vunpack.c.l.b16 %v1006
        %v3473 = vunpack.c.l.b16 %v1007
        %v3474 = vunpack.c.l.b16 %v1008
        %v3475 = vunpack.c.l.b16 %v1009
        %v3476 = vunpack.c.l.b16 %v1010
        %v3477 = vunpack.c.l.b16 %v1011
        %v3478 = vunpack.c.l.b16 %v1012
        %v3479 = vunpack.c.l.b16 %v1013
        %v3480 = vunpack.c.l.b16 %v1014
        %v3481 = vunpack.c.l.b16 %v1015
        %v3482 = vunpack.c.l.b16 %v1016
        %v3483 = vunpack.c.l.b16 %v1017
        %v3484 = vunpack.c.l.b16 %v1018
        %v3485 = vunpack.c.l.b16 %v1019
        %v3486 = vunpack.c.l.b16 %v1020
        %v3487 = vunpack.c.l.b16 %v1021
        %v3488 = vunpack.c.l.b16 %v1022
        %v3489 = vunpack.c.l.b16 %v1023
        %v3490 = vunpack.c.l.b16 %v1024
        %v3491 = vunpack.c.l.b16 %v1025
        %v3492 = vunpack.c.l.b16 %v1026
        %v3493 = vunpack.c.l.b16 %v1027
        %v3494 = vunpack.c.l.b16 %v1028
        %v3495 = vunpack.c.l.b16 %v1029
        %v3496 = vunpack.c.l.b16 %v1030
        %v3497 = vunpack.c.l.b16 %v1031
        %v3498 = vunpack.c.l.b16 %v1032
        %v3499 = vunpack.c.l.b16 %v1033
        %v3500 = vunpack.c.l.b16 %v1034
        %v3501 = vunpack.c.l.b16 %v1035
        %v3502 = vunpack.c.l.b16 %v1036
        %v3503 = vunpack.c.l.b16 %v1037
        %v3504 = vunpack.c.l.b16 %v1038
        %v3505 = vunpack.c.l.b16 %v1039
        %v3506 = vunpack.c.l.b16 %v1040
        %v3507 = vunpack.c.l.b16 %v1041
        %v3508 = vunpack.c.l.b16 %v1042
        %v3509 = vunpack.c.l.b16 %v1043
        %v3510 = vunpack.c.l.b16 %v1044
        %v3511 = vunpack.c.l.b16 %v1045
        %v3512 = vunpack.c.l.b16 %v1046
        %v3513 = vunpack.c.l.b16 %v1047
        %v3514 = vunpack.c.l.b16 %v1048
        %v3515 = vunpack.c.l.b16 %v1049
        %v3516 = vunpack.c.l.b16 %v1050
        %v3517 = vunpack.c.l.b16 %v1051
        %v3518 = vunpack.c.l.b16 %v1052
        %v3519 = vunpack.c.l.b16 %v1053
        %v3520 = vunpack.c.l.b16 %v1054
        %v3521 = vunpack.c.l.b16 %v1055
        %v3522 = vunpack.c.l.b16 %v1056
        %v3523 = vunpack.c.l.b16 %v1057
        %v3524 = vunpack.c.l.b16 %v1058
        %v3525 = vunpack.c.l.b16 %v1059
        %v3526 = vunpack.c.l.b16 %v1060
        %v3527 = vunpack.c.l.b16 %v1061
        %v3528 = vunpack.c.l.b16 %v1062
        %v3529 = vunpack.c.l.b16 %v1063
        %v3530 = vunpack.c.l.b16 %v1064
        %v3531 = vunpack.c.l.b16 %v1065
        %v3532 = vunpack.c.l.b16 %v1066
        %v3533 = vunpack.c.l.b16 %v1067
        %v3534 = vunpack.c.l.b16 %v1068
        %v3535 = vunpack.c.l.b16 %v1069
        %v3536 = vunpack.c.l.b16 %v1070
        %v3537 = vunpack.c.l.b16 %v1071
        %v3538 = vunpack.c.l.b16 %v1072
        %v3539 = vunpack.c.l.b16 %v1073
        %v3540 = vunpack.c.l.b16 %v1074
        %v3541 = vunpack.c.l.b16 %v1075
        %v3542 = vunpack.c.l.b16 %v1076
        %v3543 = vunpack.c.l.b16 %v1077
        %v3544 = vunpack.c.l.b16 %v1078
        %v3545 = vunpack.c.l.b16 %v1079
        %v3546 = vunpack.c.l.b16 %v1080
        %v3547 = vunpack.c.l.b16 %v1081
        %v3548 = vunpack.c.l.b16 %v1082
        %v3549 = vunpack.c.l.b16 %v1083
        %v3550 = vunpack.c.l.b16 %v1084
        %v3551 = vunpack.c.l.b16 %v1085
        %v3552 = vunpack.c.l.b16 %v1086
        %v3553 = vunpack.c.l.b16 %v1087
        %v3554 = vunpack.c.l.b16 %v1088
        %v3555 = vunpack.c.l.b16 %v1089
        %v3556 = vunpack.c.l.b16 %v1090
        %v3557 = vunpack.c.l.b16 %v1091
        %v3558 = vunpack.c.l.b16 %v1092
        %v3559 = vunpack.c.l.b16 %v1093
        %v3560 = vunpack.c.l.b16 %v1094
        %v3561 = vunpack.c.l.b16 %v1095
        %v3562 = vunpack.c.l.b16 %v1096
        %v3563 = vunpack.c.l.b16 %v1097
        %v3564 = vunpack.c.l.b16 %v1098
        %v3565 = vunpack.c.l.b16 %v1099
        %v3566 = vunpack.c.l.b16 %v1100
        %v3567 = vunpack.c.l.b16 %v1101
        %v3568 = vunpack.c.l.b16 %v1102
        %v3569 = vunpack.c.l.b16 %v1103
        %v3570 = vunpack.c.l.b16 %v1104
        %v3571 = vunpack.c.l.b16 %v1105
        %v3572 = vunpack.c.l.b16 %v1106
        %v3573 = vunpack.c.l.b16 %v1107
        %v3574 = vunpack.c.l.b16 %v1108
        %v3575 = vunpack.c.l.b16 %v1109
        %v3576 = vunpack.c.l.b16 %v1110
        %v3577 = vunpack.c.l.b16 %v1111
        %v3578 = vunpack.c.l.b16 %v1112
        %v3579 = vunpack.c.l.b16 %v1113
        %v3580 = vunpack.c.l.b16 %v1114
        %v3581 = vunpack.c.l.b16 %v1115
        %v3582 = vunpack.c.l.b16 %v1116
        %v3583 = vunpack.c.l.b16 %v1117
        %v3584 = vunpack.c.l.b16 %v1118
        %v3585 = vunpack.c.l.b16 %v1119
        %v3586 = vunpack.c.l.b16 %v1120
        %v3587 = vunpack.c.l.b16 %v1121
        %v3588 = vunpack.c.l.b16 %v1122
        %v3589 = vunpack.c.l.b16 %v1123
        %v3590 = vunpack.c.l.b16 %v1124
        %v3591 = vunpack.c.l.b16 %v1125
        %v3592 = vunpack.c.l.b16 %v1126
        %v3593 = vunpack.c.l.b16 %v1127
        %v3594 = vunpack.c.l.b16 %v1128
        %v3595 = vunpack.c.l.b16 %v1129
        %v3596 = vunpack.c.l.b16 %v1130
        %v3597 = vunpack.c.l.b16 %v1131
        %v3598 = vunpack.c.l.b16 %v1132
        %v3599 = vunpack.c.l.b16 %v1133
        %v3600 = vunpack.c.l.b16 %v1134
        %v3601 = vunpack.c.l.b16 %v1135
        %v3602 = vunpack.c.l.b16 %v1136
        %v3603 = vunpack.c.l.b16 %v1137
        %v3604 = vunpack.c.l.b16 %v1138
        %v3605 = vunpack.c.l.b16 %v1139
        %v3606 = vunpack.c.l.b16 %v1140
        %v3607 = vunpack.c.l.b16 %v1141
        %v3608 = vunpack.c.l.b16 %v1142
        %v3609 = vunpack.c.l.b16 %v1143
        %v3610 = vunpack.c.l.b16 %v1144
        %v3611 = vunpack.c.l.b16 %v1145
        %v3612 = vunpack.c.l.b16 %v1146
        %v3613 = vunpack.c.l.b16 %v1147
        %v3614 = vunpack.c.l.b16 %v1148
        %v3615 = vunpack.c.l.b16 %v1149
        %v3616 = vunpack.c.l.b16 %v1150
        %v3617 = vunpack.c.l.b16 %v1151
        %v3618 = vunpack.c.l.b16 %v1152
        %v3619 = vunpack.c.l.b16 %v1153
        %v3620 = vunpack.c.l.b16 %v1154
        %v3621 = vunpack.c.l.b16 %v1155
        %v3622 = vunpack.c.l.b16 %v1156
        %v3623 = vunpack.c.l.b16 %v1157
        %v3624 = vunpack.c.l.b16 %v1158
        %v3625 = vunpack.c.l.b16 %v1159
        %v3626 = vunpack.c.l.b16 %v1160
        %v3627 = vunpack.c.l.b16 %v1161
        %v3628 = vunpack.c.l.b16 %v1162
        %v3629 = vunpack.c.l.b16 %v1163
        %v3630 = vunpack.c.l.b16 %v1164
        %v3631 = vunpack.c.l.b16 %v1165
        %v3632 = vunpack.c.l.b16 %v1166
        %v3633 = vunpack.c.l.b16 %v1167
        %v3634 = vunpack.c.l.b16 %v1168
        %v3635 = vunpack.c.l.b16 %v1169
        %v3636 = vunpack.c.l.b16 %v1170
        %v3637 = vunpack.c.l.b16 %v1171
        %v3638 = vunpack.c.l.b16 %v1172
        %v3639 = vunpack.c.l.b16 %v1173
        %v3640 = vunpack.c.l.b16 %v1174
        %v3641 = vunpack.c.l.b16 %v1175
        %v3642 = vunpack.c.l.b16 %v1176
        %v3643 = vunpack.c.l.b16 %v1177
        %v3644 = vunpack.c.l.b16 %v1178
        %v3645 = vunpack.c.l.b16 %v1179
        %v3646 = vunpack.c.l.b16 %v1180
        %v3647 = vunpack.c.l.b16 %v1181
        %v3648 = vunpack.c.l.b16 %v1182
        %v3649 = vunpack.c.l.b16 %v1183
        %v3650 = vunpack.c.l.b16 %v1184
        %v3651 = vunpack.c.l.b16 %v1185
        %v3652 = vunpack.c.l.b16 %v1186
        %v3653 = vunpack.c.l.b16 %v1187
        %v3654 = vunpack.c.l.b16 %v1188
        %v3655 = vunpack.c.l.b16 %v1189
        %v3656 = vunpack.c.l.b16 %v1190
        %v3657 = vunpack.c.l.b16 %v1191
        %v3658 = vunpack.c.l.b16 %v1192
        %v3659 = vunpack.c.l.b16 %v1193
        %v3660 = vunpack.c.l.b16 %v1194
        %v3661 = vunpack.c.l.b16 %v1195
        %v3662 = vunpack.c.l.b16 %v1196
        %v3663 = vunpack.c.l.b16 %v1197
        %v3664 = vunpack.c.l.b16 %v1198
        %v3665 = vunpack.c.l.b16 %v1199
        %v3666 = vunpack.c.l.b16 %v1200
        %v3667 = vunpack.c.l.b16 %v1201
        %v3668 = vunpack.c.l.b16 %v1202
        %v3669 = vunpack.c.l.b16 %v1203
        %v3670 = vunpack.c.l.b16 %v1204
        %v3671 = vunpack.c.l.b16 %v1205
        %v3672 = vunpack.c.l.b16 %v1206
        %v3673 = vunpack.c.l.b16 %v1207
        %v3674 = vunpack.c.l.b16 %v1208
        %v3675 = vunpack.c.l.b16 %v1209
        %v3676 = vunpack.c.l.b16 %v1210
        %v3677 = vunpack.c.l.b16 %v1211
        %v3678 = vunpack.c.l.b16 %v1212
        %v3679 = vunpack.c.l.b16 %v1213
        %v3680 = vunpack.c.l.b16 %v1214
        %v3681 = vunpack.c.l.b16 %v1215
        %v3682 = vunpack.c.l.b16 %v1216
        %v3683 = vunpack.c.l.b16 %v1217
        %v3684 = vunpack.c.l.b16 %v1218
        %v3685 = vunpack.c.l.b16 %v1219
        %v3686 = vunpack.c.l.b16 %v1220
        %v3687 = vunpack.c.l.b16 %v1221
        %v3688 = vunpack.c.l.b16 %v1222
        %v3689 = vunpack.c.l.b16 %v1223
        %v3690 = vunpack.c.l.b16 %v1224
        %v3691 = vunpack.c.l.b16 %v1225
        %v3692 = vunpack.c.l.b16 %v1226
        %v3693 = vunpack.c.l.b16 %v1227
        %v3694 = vunpack.c.l.b16 %v1228
        %v3695 = vunpack.c.l.b16 %v1229
        %v3696 = vunpack.c.l.b16 %v1230
        %v3697 = vunpack.c.l.b16 %v1231
        %v3698 = vunpack.c.l.b16 %v1232
        %v3699 = vunpack.c.l.b16 %v1233
        %v3700 = vunpack.c.l.b16 %v1234
        %v3701 = vunpack.c.l.b16 %v1235
        %v3702 = vunpack.c.l.b16 %v1236
        %v3703 = vunpack.c.l.b16 %v1237
        %v3704 = vunpack.c.l.b16 %v1238
        %v3705 = vunpack.c.l.b16 %v1239
        %v3706 = vunpack.c.l.b16 %v1240
        %v3707 = vunpack.c.l.b16 %v1241
        %v3708 = vunpack.c.l.b16 %v1242
        %v3709 = vunpack.c.l.b16 %v1243
        %v3710 = vunpack.c.l.b16 %v1244
        %v3711 = vunpack.c.l.b16 %v1245
        %v3712 = vunpack.c.l.b16 %v1246
        %v3713 = vunpack.c.l.b16 %v1247
        %v3714 = vunpack.c.l.b16 %v1248
        %v3715 = vunpack.c.l.b16 %v1249
        %v3716 = vunpack.c.l.b16 %v1250
        %v3717 = vunpack.c.l.b16 %v1251
        %v3718 = vunpack.c.l.b16 %v1252
        %v3719 = vunpack.c.l.b16 %v1253
        %v3720 = vunpack.c.l.b16 %v1254
        %v3721 = vunpack.c.l.b16 %v1255
        %v3722 = vunpack.c.l.b16 %v1256
        %v3723 = vunpack.c.l.b16 %v1257
        %v3724 = vunpack.c.l.b16 %v1258
        %v3725 = vunpack.c.l.b16 %v1259
        %v3726 = vunpack.c.l.b16 %v1260
        %v3727 = vunpack.c.l.b16 %v1261
        %v3728 = vunpack.c.l.b16 %v1262
        %v3729 = vunpack.c.l.b16 %v1263
        %v3730 = vunpack.c.l.b16 %v1264
        %v3731 = vunpack.c.l.b16 %v1265
        %v3732 = vunpack.c.l.b16 %v1266
        %v3733 = vunpack.c.l.b16 %v1267
        %v3734 = vunpack.c.l.b16 %v1268
        %v3735 = vunpack.c.l.b16 %v1269
        %v3736 = vunpack.c.l.b16 %v1270
        %v3737 = vunpack.c.l.b16 %v1271
        %v3738 = vunpack.c.l.b16 %v1272
        %v3739 = vunpack.c.l.b16 %v1273
        %v3740 = vunpack.c.l.b16 %v1274
        %v3741 = vunpack.c.l.b16 %v1275
        %v3742 = vunpack.c.l.b16 %v1276
        %v3743 = vunpack.c.l.b16 %v1277
        %v3744 = vunpack.c.l.b16 %v1278
        %v3745 = vunpack.c.l.b16 %v1279
        %v3746 = vunpack.c.l.b16 %v1280
        %v3747 = vunpack.c.l.b16 %v1281
        %v3748 = vunpack.c.l.b16 %v1282
        %v3749 = vunpack.c.l.b16 %v1283
        %v3750 = vunpack.c.l.b16 %v1284
        %v3751 = vunpack.c.l.b16 %v1285
        %v3752 = vunpack.c.l.b16 %v1286
        %v3753 = vunpack.c.l.b16 %v1287
        %v3754 = vunpack.c.l.b16 %v1288
        %v3755 = vunpack.c.l.b16 %v1289
        %v3756 = vunpack.c.l.b16 %v1290
        %v3757 = vunpack.c.l.b16 %v1291
        %v3758 = vunpack.c.l.b16 %v1292
        %v3759 = vunpack.c.l.b16 %v1293
        %v3760 = vunpack.c.l.b16 %v1294
        %v3761 = vunpack.c.l.b16 %v1295
        %v3762 = vunpack.c.l.b16 %v1296
        %v3763 = vunpack.c.l.b16 %v1297
        %v3764 = vunpack.c.l.b16 %v1298
        %v3765 = vunpack.c.l.b16 %v1299
        %v3766 = vunpack.c.l.b16 %v1300
        %v3767 = vunpack.c.l.b16 %v1301
        %v3768 = vunpack.c.l.b16 %v1302
        %v3769 = vunpack.c.l.b16 %v1303
        %v3770 = vunpack.c.l.b16 %v1304
        %v3771 = vunpack.c.l.b16 %v1305
        %v3772 = vunpack.c.l.b16 %v1306
        %v3773 = vunpack.c.l.b16 %v1307
        %v3774 = vunpack.c.l.b16 %v1308
        %v3775 = vunpack.c.l.b16 %v1309
        %v3776 = vunpack.c.l.b16 %v1310
        %v3777 = vunpack.c.l.b16 %v1311
        %v3778 = vunpack.c.l.b16 %v1312
        %v3779 = vunpack.c.l.b16 %v1313
        %v3780 = vunpack.c.l.b16 %v1314
        %v3781 = vunpack.c.l.b16 %v1315
        %v3782 = vunpack.c.l.b16 %v1316
        %v3783 = vunpack.c.l.b16 %v1317
        %v3784 = vunpack.c.l.b16 %v1318
        %v3785 = vunpack.c.l.b16 %v1319
        %v3786 = vunpack.c.l.b16 %v1320
        %v3787 = vunpack.c.l.b16 %v1321
        %v3788 = vunpack.c.l.b16 %v1322
        %v3789 = vunpack.c.l.b16 %v1323
        %v3790 = vunpack.c.l.b16 %v1324
        %v3791 = vunpack.c.l.b16 %v1325
        %v3792 = vunpack.c.l.b16 %v1326
        %v3793 = vunpack.c.l.b16 %v1327
        %v3794 = vunpack.c.l.b16 %v1328
        %v3795 = vunpack.c.l.b16 %v1329
        %v3796 = vunpack.c.l.b16 %v1330
        %v3797 = vunpack.c.l.b16 %v1331
        %v3798 = vunpack.c.l.b16 %v1332
        %v3799 = vunpack.c.l.b16 %v1333
        %v3800 = vunpack.c.l.b16 %v1334
        %v3801 = vunpack.c.l.b16 %v1335
        %v3802 = vunpack.c.l.b16 %v1336
        %v3803 = vunpack.c.l.b16 %v1337
        %v3804 = vunpack.c.l.b16 %v1338
        %v3805 = vunpack.c.l.b16 %v1339
        %v3806 = vunpack.c.l.b16 %v1340
        %v3807 = vunpack.c.l.b16 %v1341
        %v3808 = vunpack.c.l.b16 %v1342
        %v3809 = vunpack.c.l.b16 %v1343
        %v3810 = vunpack.c.l.b16 %v1344
        %v3811 = vunpack.c.l.b16 %v1345
        %v3812 = vunpack.c.l.b16 %v1346
        %v3813 = vunpack.c.l.b16 %v1347
        %v3814 = vunpack.c.l.b16 %v1348
        %v3815 = vunpack.c.l.b16 %v1349
        %v3816 = vunpack.c.l.b16 %v1350
        %v3817 = vunpack.c.l.b16 %v1351
        %v3818 = vunpack.c.l.b16 %v1352
        %v3819 = vunpack.c.l.b16 %v1353
        %v3820 = vunpack.c.l.b16 %v1354
        %v3821 = vunpack.c.l.b16 %v1355
        %v3822 = vunpack.c.l.b16 %v1356
        %v3823 = vunpack.c.l.b16 %v1357
        %v3824 = vunpack.c.l.b16 %v1358
        %v3825 = vunpack.c.l.b16 %v1359
        %v3826 = vunpack.c.l.b16 %v1360
        %v3827 = vunpack.c.l.b16 %v1361
        %v3828 = vunpack.c.l.b16 %v1362
        %v3829 = vunpack.c.l.b16 %v1363
        %v3830 = vunpack.c.l.b16 %v1364
        %v3831 = vunpack.c.l.b16 %v1365
        %v3832 = vunpack.c.l.b16 %v1366
        %v3833 = vunpack.c.l.b16 %v1367
        %v3834 = vunpack.c.l.b16 %v1368
        %v3835 = vunpack.c.l.b16 %v1369
        %v3836 = vunpack.c.l.b16 %v1370
        %v3837 = vunpack.c.l.b16 %v1371
        %v3838 = vunpack.c.l.b16 %v1372
        %v3839 = vunpack.c.l.b16 %v1373
        %v3840 = vunpack.c.l.b16 %v1374
        %v3841 = vunpack.c.l.b16 %v1375
        %v3842 = vunpack.c.l.b16 %v1376
        %v3843 = vunpack.c.l.b16 %v1377
        %v3844 = vunpack.c.l.b16 %v1378
        %v3845 = vunpack.c.l.b16 %v1379
        %v3846 = vunpack.c.l.b16 %v1380
        %v3847 = vunpack.c.l.b16 %v1381
        %v3848 = vunpack.c.l.b16 %v1382
        %v3849 = vunpack.c.l.b16 %v1383
        %v3850 = vunpack.c.l.b16 %v1384
        %v3851 = vunpack.c.l.b16 %v1385
        %v3852 = vunpack.c.l.b16 %v1386
        %v3853 = vunpack.c.l.b16 %v1387
        %v3854 = vunpack.c.l.b16 %v1388
        %v3855 = vunpack.c.l.b16 %v1389
        %v3856 = vunpack.c.l.b16 %v1390
        %v3857 = vunpack.c.l.b16 %v1391
        %v3858 = vunpack.c.l.b16 %v1392
        %v3859 = vunpack.c.l.b16 %v1393
        %v3860 = vunpack.c.l.b16 %v1394
        %v3861 = vunpack.c.l.b16 %v1395
        %v3862 = vunpack.c.l.b16 %v1396
        %v3863 = vunpack.c.l.b16 %v1397
        %v3864 = vunpack.c.l.b16 %v1398
        %v3865 = vunpack.c.l.b16 %v1399
        %v3866 = vunpack.c.l.b16 %v1400
        %v3867 = vunpack.c.l.b16 %v1401
        %v3868 = vunpack.c.l.b16 %v1402
        %v3869 = vunpack.c.l.b16 %v1403
        %v3870 = vunpack.c.l.b16 %v1404
        %v3871 = vunpack.c.l.b16 %v1405
        %v3872 = vunpack.c.l.b16 %v1406
        %v3873 = vunpack.c.l.b16 %v1407
        %v3874 = vunpack.c.l.b16 %v1408
        %v3875 = vunpack.c.l.b16 %v1409
        %v3876 = vunpack.c.l.b16 %v1410
        %v3877 = vunpack.c.l.b16 %v1411
        %v3878 = vunpack.c.l.b16 %v1412
        %v3879 = vunpack.c.l.b16 %v1413
        %v3880 = vunpack.c.l.b16 %v1414
        %v3881 = vunpack.c.l.b16 %v1415
        %v3882 = vunpack.c.l.b16 %v1416
        %v3883 = vunpack.c.l.b16 %v1417
        %v3884 = vunpack.c.l.b16 %v1418
        %v3885 = vunpack.c.l.b16 %v1419
        %v3886 = vunpack.c.l.b16 %v1420
        %v3887 = vunpack.c.l.b16 %v1421
        %v3888 = vunpack.c.l.b16 %v1422
        %v3889 = vunpack.c.l.b16 %v1423
        %v3890 = vunpack.c.l.b16 %v1424
        %v3891 = vunpack.c.l.b16 %v1425
        %v3892 = vunpack.c.l.b16 %v1426
        %v3893 = vpack.c.b16 %v2742, %v2741
        %v3894 = vpack.c.b16 %v2744, %v2743
        %v3895 = vpack.c.b16 %v2746, %v2745
        %v3896 = vpack.c.b16 %v2748, %v2747
        %v3897 = vpack.c.b16 %v2750, %v2749
        %v3898 = vpack.c.b16 %v2752, %v2751
        %v3899 = vpack.c.b16 %v2754, %v2753
        %v3900 = vpack.c.b16 %v2756, %v2755
        %v3901 = vpack.c.b16 %v2758, %v2757
        %v3902 = vpack.c.b16 %v2760, %v2759
        %v3903 = vpack.c.b16 %v2762, %v2761
        %v3904 = vpack.c.b16 %v2764, %v2763
        %v3905 = vpack.c.b16 %v2766, %v2765
        %v3906 = vpack.c.b16 %v2768, %v2767
        %v3907 = vpack.c.b16 %v2770, %v2769
        %v3908 = vpack.c.b16 %v2772, %v2771
        %v3909 = vpack.c.b16 %v2774, %v2773
        %v3910 = vpack.c.b16 %v2776, %v2775
        %v3911 = vpack.c.b16 %v2778, %v2777
        %v3912 = vpack.c.b16 %v2780, %v2779
        %v3913 = vpack.c.b16 %v2782, %v2781
        %v3914 = vpack.c.b16 %v2784, %v2783
        %v3915 = vpack.c.b16 %v2786, %v2785
        %v3916 = vpack.c.b16 %v2788, %v2787
        %v3917 = vpack.c.b16 %v2790, %v2789
        %v3918 = vpack.c.b16 %v2792, %v2791
        %v3919 = vpack.c.b16 %v2794, %v2793
        %v3920 = vpack.c.b16 %v2796, %v2795
        %v3921 = vpack.c.b16 %v2798, %v2797
        %v3922 = vpack.c.b16 %v2800, %v2799
        %v3923 = vpack.c.b16 %v2802, %v2801
        %v3924 = vpack.c.b16 %v2804, %v2803
        %v3925 = vpack.c.b16 %v2806, %v2805
        %v3926 = vpack.c.b16 %v2808, %v2807
        %v3927 = vpack.c.b16 %v2810, %v2809
        %v3928 = vpack.c.b16 %v2812, %v2811
        %v3929 = vpack.c.b16 %v2814, %v2813
        %v3930 = vpack.c.b16 %v2816, %v2815
        %v3931 = vpack.c.b16 %v2818, %v2817
        %v3932 = vpack.c.b16 %v2820, %v2819
        %v3933 = vpack.c.b16 %v2822, %v2821
        %v3934 = vpack.c.b16 %v2824, %v2823
        %v3935 = vpack.c.b16 %v2826, %v2825
        %v3936 = vpack.c.b16 %v2828, %v2827
        %v3937 = vpack.c.b16 %v2830, %v2829
        %v3938 = vpack.c.b16 %v2832, %v2831
        %v3939 = vpack.c.b16 %v2834, %v2833
        %v3940 = vpack.c.b16 %v2836, %v2835
        %v3941 = vpack.c.b16 %v2838, %v2837
        %v3942 = vpack.c.b16 %v2840, %v2839
        %v3943 = vpack.c.b16 %v2842, %v2841
        %v3944 = vpack.c.b16 %v2844, %v2843
        %v3945 = vpack.c.b16 %v2846, %v2845
        %v3946 = vpack.c.b16 %v2848, %v2847
        %v3947 = vpack.c.b16 %v2850, %v2849
        %v3948 = vpack.c.b16 %v2852, %v2851
        %v3949 = vpack.c.b16 %v2854, %v2853
        %v3950 = vpack.c.b16 %v2856, %v2855
        %v3951 = vpack.c.b16 %v2858, %v2857
        %v3952 = vpack.c.b16 %v2860, %v2859
        %v3953 = vpack.c.b16 %v2862, %v2861
        %v3954 = vpack.c.b16 %v2864, %v2863
        %v3955 = vpack.c.b16 %v2866, %v2865
        %v3956 = vpack.c.b16 %v2868, %v2867
        %v3957 = vpack.c.b16 %v2870, %v2869
        %v3958 = vpack.c.b16 %v2872, %v2871
        %v3959 = vpack.c.b16 %v2874, %v2873
        %v3960 = vpack.c.b16 %v2876, %v2875
        %v3961 = vpack.c.b16 %v2878, %v2877
        %v3962 = vpack.c.b16 %v2880, %v2879
        %v3963 = vpack.c.b16 %v2882, %v2881
        %v3964 = vpack.c.b16 %v2884, %v2883
        %v3965 = vpack.c.b16 %v2886, %v2885
        %v3966 = vpack.c.b16 %v2888, %v2887
        %v3967 = vpack.c.b16 %v2890, %v2889
        %v3968 = vpack.c.b16 %v2892, %v2891
        %v3969 = vpack.c.b16 %v2894, %v2893
        %v3970 = vpack.c.b16 %v2896, %v2895
        %v3971 = vpack.c.b16 %v2898, %v2897
        %v3972 = vpack.c.b16 %v2900, %v2899
        %v3973 = vpack.c.b16 %v2902, %v2901
        %v3974 = vpack.c.b16 %v2904, %v2903
        %v3975 = vpack.c.b16 %v2906, %v2905
        %v3976 = vpack.c.b16 %v2908, %v2907
        %v3977 = vpack.c.b16 %v2910, %v2909
        %v3978 = vpack.c.b16 %v2912, %v2911
        %v3979 = vpack.c.b16 %v2914, %v2913
        %v3980 = vpack.c.b16 %v2916, %v2915
        %v3981 = vpack.c.b16 %v2918, %v2917
        %v3982 = vpack.c.b16 %v2920, %v2919
        %v3983 = vpack.c.b16 %v2922, %v2921
        %v3984 = vpack.c.b16 %v2924, %v2923
        %v3985 = vpack.c.b16 %v2926, %v2925
        %v3986 = vpack.c.b16 %v2928, %v2927
        %v3987 = vpack.c.b16 %v2930, %v2929
        %v3988 = vpack.c.b16 %v2932, %v2931
        %v3989 = vpack.c.b16 %v2934, %v2933
        %v3990 = vpack.c.b16 %v2936, %v2935
        %v3991 = vpack.c.b16 %v2938, %v2937
        %v3992 = vpack.c.b16 %v2940, %v2939
        %v3993 = vpack.c.b16 %v2942, %v2941
        %v3994 = vpack.c.b16 %v2944, %v2943
        %v3995 = vpack.c.b16 %v2946, %v2945
        %v3996 = vpack.c.b16 %v2948, %v2947
        %v3997 = vpack.c.b16 %v2950, %v2949
        %v3998 = vpack.c.b16 %v2952, %v2951
        %v3999 = vpack.c.b16 %v2954, %v2953
        %v4000 = vpack.c.b16 %v2956, %v2955
        %v4001 = vpack.c.b16 %v2958, %v2957
        %v4002 = vpack.c.b16 %v2960, %v2959
        %v4003 = vpack.c.b16 %v2962, %v2961
        %v4004 = vpack.c.b16 %v2964, %v2963
        %v4005 = vpack.c.b16 %v2966, %v2965
        %v4006 = vpack.c.b16 %v2968, %v2967
        %v4007 = vpack.c.b16 %v2970, %v2969
        %v4008 = vpack.c.b16 %v2972, %v2971
        %v4009 = vpack.c.b16 %v2974, %v2973
        %v4010 = vpack.c.b16 %v2976, %v2975
        %v4011 = vpack.c.b16 %v2978, %v2977
        %v4012 = vpack.c.b16 %v2980, %v2979
        %v4013 = vpack.c.b16 %v2982, %v2981
        %v4014 = vpack.c.b16 %v2984, %v2983
        %v4015 = vpack.c.b16 %v2986, %v2985
        %v4016 = vpack.c.b16 %v2988, %v2987
        %v4017 = vpack.c.b16 %v2990, %v2989
        %v4018 = vpack.c.b16 %v2992, %v2991
        %v4019 = vpack.c.b16 %v2994, %v2993
        %v4020 = vpack.c.b16 %v2996, %v2995
        %v4021 = vpack.c.b16 %v2998, %v2997
        %v4022 = vpack.c.b16 %v3000, %v2999
        %v4023 = vpack.c.b16 %v3002, %v3001
        %v4024 = vpack.c.b16 %v3004, %v3003
        %v4025 = vpack.c.b16 %v3006, %v3005
        %v4026 = vpack.c.b16 %v3008, %v3007
        %v4027 = vpack.c.b16 %v3010, %v3009
        %v4028 = vpack.c.b16 %v3012, %v3011
        %v4029 = vpack.c.b16 %v3014, %v3013
        %v4030 = vpack.c.b16 %v3016, %v3015
        %v4031 = vpack.c.b16 %v3018, %v3017
        %v4032 = vpack.c.b16 %v3020, %v3019
        %v4033 = vpack.c.b16 %v3022, %v3021
        %v4034 = vpack.c.b16 %v3024, %v3023
        %v4035 = vpack.c.b16 %v3026, %v3025
        %v4036 = vpack.c.b16 %v3028, %v3027
        %v4037 = vpack.c.b16 %v3030, %v3029
        %v4038 = vpack.c.b16 %v3032, %v3031
        %v4039 = vpack.c.b16 %v3034, %v3033
        %v4040 = vpack.c.b16 %v3036, %v3035
        %v4041 = vpack.c.b16 %v3038, %v3037
        %v4042 = vpack.c.b16 %v3040, %v3039
        %v4043 = vpack.c.b16 %v3042, %v3041
        %v4044 = vpack.c.b16 %v3044, %v3043
        %v4045 = vpack.c.b16 %v3046, %v3045
        %v4046 = vpack.c.b16 %v3048, %v3047
        %v4047 = vpack.c.b16 %v3050, %v3049
        %v4048 = vpack.c.b16 %v3052, %v3051
        %v4049 = vpack.c.b16 %v3054, %v3053
        %v4050 = vpack.c.b16 %v3056, %v3055
        %v4051 = vpack.c.b16 %v3058, %v3057
        %v4052 = vpack.c.b16 %v3060, %v3059
        %v4053 = vpack.c.b16 %v3062, %v3061
        %v4054 = vpack.c.b16 %v3064, %v3063
        %v4055 = vpack.c.b16 %v3066, %v3065
        %v4056 = vpack.c.b16 %v3068, %v3067
        %v4057 = vpack.c.b16 %v3070, %v3069
        %v4058 = vpack.c.b16 %v3072, %v3071
        %v4059 = vpack.c.b16 %v3074, %v3073
        %v4060 = vpack.c.b16 %v3076, %v3075
        %v4061 = vpack.c.b16 %v3078, %v3077
        %v4062 = vpack.c.b16 %v3080, %v3079
        %v4063 = vpack.c.b16 %v3082, %v3081
        %v4064 = vpack.c.b16 %v3084, %v3083
        %v4065 = vpack.c.b16 %v3086, %v3085
        %v4066 = vpack.c.b16 %v3088, %v3087
        %v4067 = vpack.c.b16 %v3090, %v3089
        %v4068 = vpack.c.b16 %v3092, %v3091
        %v4069 = vpack.c.b16 %v3094, %v3093
        %v4070 = vpack.c.b16 %v3096, %v3095
        %v4071 = vpack.c.b16 %v3098, %v3097
        %v4072 = vpack.c.b16 %v3100, %v3099
        %v4073 = vpack.c.b16 %v3102, %v3101
        %v4074 = vpack.c.b16 %v3104, %v3103
        %v4075 = vpack.c.b16 %v3106, %v3105
        %v4076 = vpack.c.b16 %v3108, %v3107
        %v4077 = vpack.c.b16 %v3110, %v3109
        %v4078 = vpack.c.b16 %v3112, %v3111
        %v4079 = vpack.c.b16 %v3114, %v3113
        %v4080 = vpack.c.b16 %v3116, %v3115
        %v4081 = vpack.c.b16 %v3118, %v3117
        %v4082 = vpack.c.b16 %v3120, %v3119
        %v4083 = vpack.c.b16 %v3122, %v3121
        %v4084 = vpack.c.b16 %v3124, %v3123
        %v4085 = vpack.c.b16 %v3126, %v3125
        %v4086 = vpack.c.b16 %v3128, %v3127
        %v4087 = vpack.c.b16 %v3130, %v3129
        %v4088 = vpack.c.b16 %v3132, %v3131
        %v4089 = vpack.c.b16 %v3134, %v3133
        %v4090 = vpack.c.b16 %v3136, %v3135
        %v4091 = vpack.c.b16 %v3138, %v3137
        %v4092 = vpack.c.b16 %v3140, %v3139
        %v4093 = vpack.c.b16 %v3142, %v3141
        %v4094 = vpack.c.b16 %v3144, %v3143
        %v4095 = vpack.c.b16 %v3146, %v3145
        %v4096 = vpack.c.b16 %v3148, %v3147
        %v4097 = vpack.c.b16 %v3150, %v3149
        %v4098 = vpack.c.b16 %v3152, %v3151
        %v4099 = vpack.c.b16 %v3154, %v3153
        %v4100 = vpack.c.b16 %v3156, %v3155
        %v4101 = vpack.c.b16 %v3158, %v3157
        %v4102 = vpack.c.b16 %v3160, %v3159
        %v4103 = vpack.c.b16 %v3162, %v3161
        %v4104 = vpack.c.b16 %v3164, %v3163
        %v4105 = vpack.c.b16 %v3166, %v3165
        %v4106 = vpack.c.b16 %v3168, %v3167
        %v4107 = vpack.c.b16 %v3170, %v3169
        %v4108 = vpack.c.b16 %v3172, %v3171
        %v4109 = vpack.c.b16 %v3174, %v3173
        %v4110 = vpack.c.b16 %v3176, %v3175
        %v4111 = vpack.c.b16 %v3178, %v3177
        %v4112 = vpack.c.b16 %v3180, %v3179
        %v4113 = vpack.c.b16 %v3182, %v3181
        %v4114 = vpack.c.b16 %v3184, %v3183
        %v4115 = vpack.c.b16 %v3186, %v3185
        %v4116 = vpack.c.b16 %v3188, %v3187
        %v4117 = vpack.c.b16 %v3190, %v3189
        %v4118 = vpack.c.b16 %v3192, %v3191
        %v4119 = vpack.c.b16 %v3194, %v3193
        %v4120 = vpack.c.b16 %v3196, %v3195
        %v4121 = vpack.c.b16 %v3198, %v3197
        %v4122 = vpack.c.b16 %v3200, %v3199
        %v4123 = vpack.c.b16 %v3202, %v3201
        %v4124 = vpack.c.b16 %v3204, %v3203
        %v4125 = vpack.c.b16 %v3206, %v3205
        %v4126 = vpack.c.b16 %v3208, %v3207
        %v4127 = vpack.c.b16 %v3210, %v3209
        %v4128 = vpack.c.b16 %v3212, %v3211
        %v4129 = vpack.c.b16 %v3214, %v3213
        %v4130 = vpack.c.b16 %v3216, %v3215
        %v4131 = vpack.c.b16 %v3218, %v3217
        %v4132 = vpack.c.b16 %v3220, %v3219
        %v4133 = vpack.c.b16 %v3222, %v3221
        %v4134 = vpack.c.b16 %v3224, %v3223
        %v4135 = vpack.c.b16 %v3226, %v3225
        %v4136 = vpack.c.b16 %v3228, %v3227
        %v4137 = vpack.c.b16 %v3230, %v3229
        %v4138 = vpack.c.b16 %v3232, %v3231
        %v4139 = vpack.c.b16 %v3234, %v3233
        %v4140 = vpack.c.b16 %v3236, %v3235
        %v4141 = vpack.c.b16 %v3238, %v3237
        %v4142 = vpack.c.b16 %v3240, %v3239
        %v4143 = vpack.c.b16 %v3242, %v3241
        %v4144 = vpack.c.b16 %v3244, %v3243
        %v4145 = vpack.c.b16 %v3246, %v3245
        %v4146 = vpack.c.b16 %v3248, %v3247
        %v4147 = vpack.c.b16 %v3250, %v3249
        %v4148 = vpack.c.b16 %v3252, %v3251
        %v4149 = vpack.c.b16 %v3254, %v3253
        %v4150 = vpack.c.b16 %v3256, %v3255
        %v4151 = vpack.c.b16 %v3258, %v3257
        %v4152 = vpack.c.b16 %v3260, %v3259
        %v4153 = vpack.c.b16 %v3262, %v3261
        %v4154 = vpack.c.b16 %v3264, %v3263
        %v4155 = vpack.c.b16 %v3266, %v3265
        %v4156 = vpack.c.b16 %v3268, %v3267
        %v4157 = vpack.c.b16 %v3270, %v3269
        %v4158 = vpack.c.b16 %v3272, %v3271
        %v4159 = vpack.c.b16 %v3274, %v3273
        %v4160 = vpack.c.b16 %v3276, %v3275
        %v4161 = vpack.c.b16 %v3278, %v3277
        %v4162 = vpack.c.b16 %v3280, %v3279
        %v4163 = vpack.c.b16 %v3282, %v3281
        %v4164 = vpack.c.b16 %v3284, %v3283
        %v4165 = vpack.c.b16 %v3286, %v3285
        %v4166 = vpack.c.b16 %v3288, %v3287
        %v4167 = vpack.c.b16 %v3290, %v3289
        %v4168 = vpack.c.b16 %v3292, %v3291
        %v4169 = vpack.c.b16 %v3294, %v3293
        %v4170 = vpack.c.b16 %v3296, %v3295
        %v4171 = vpack.c.b16 %v3298, %v3297
        %v4172 = vpack.c.b16 %v3300, %v3299
        %v4173 = vpack.c.b16 %v3302, %v3301
        %v4174 = vpack.c.b16 %v3304, %v3303
        %v4175 = vpack.c.b16 %v3306, %v3305
        %v4176 = vpack.c.b16 %v3308, %v3307
        %v4177 = vpack.c.b16 %v3310, %v3309
        %v4178 = vpack.c.b16 %v3312, %v3311
        %v4179 = vpack.c.b16 %v3314, %v3313
        %v4180 = vpack.c.b16 %v3316, %v3315
        %v4181 = vpack.c.b16 %v3318, %v3317
        %v4182 = vpack.c.b16 %v3320, %v3319
        %v4183 = vpack.c.b16 %v3322, %v3321
        %v4184 = vpack.c.b16 %v3324, %v3323
        %v4185 = vpack.c.b16 %v3326, %v3325
        %v4186 = vpack.c.b16 %v3328, %v3327
        %v4187 = vpack.c.b16 %v3330, %v3329
        %v4188 = vpack.c.b16 %v3332, %v3331
        %v4189 = vpack.c.b16 %v3334, %v3333
        %v4190 = vpack.c.b16 %v3336, %v3335
        %v4191 = vpack.c.b16 %v3338, %v3337
        %v4192 = vpack.c.b16 %v3340, %v3339
        %v4193 = vpack.c.b16 %v3342, %v3341
        %v4194 = vpack.c.b16 %v3344, %v3343
        %v4195 = vpack.c.b16 %v3346, %v3345
        %v4196 = vpack.c.b16 %v3348, %v3347
        %v4197 = vpack.c.b16 %v3350, %v3349
        %v4198 = vpack.c.b16 %v3352, %v3351
        %v4199 = vpack.c.b16 %v3354, %v3353
        %v4200 = vpack.c.b16 %v3356, %v3355
        %v4201 = vpack.c.b16 %v3358, %v3357
        %v4202 = vpack.c.b16 %v3360, %v3359
        %v4203 = vpack.c.b16 %v3362, %v3361
        %v4204 = vpack.c.b16 %v3364, %v3363
        %v4205 = vpack.c.b16 %v3366, %v3365
        %v4206 = vpack.c.b16 %v3368, %v3367
        %v4207 = vpack.c.b16 %v3370, %v3369
        %v4208 = vpack.c.b16 %v3372, %v3371
        %v4209 = vpack.c.b16 %v3374, %v3373
        %v4210 = vpack.c.b16 %v3376, %v3375
        %v4211 = vpack.c.b16 %v3378, %v3377
        %v4212 = vpack.c.b16 %v3380, %v3379
        %v4213 = vpack.c.b16 %v3382, %v3381
        %v4214 = vpack.c.b16 %v3384, %v3383
        %v4215 = vpack.c.b16 %v3386, %v3385
        %v4216 = vpack.c.b16 %v3388, %v3387
        %v4217 = vpack.c.b16 %v3390, %v3389
        %v4218 = vpack.c.b16 %v3392, %v3391
        %v4219 = vpack.c.b16 %v3394, %v3393
        %v4220 = vpack.c.b16 %v3396, %v3395
        %v4221 = vpack.c.b16 %v3398, %v3397
        %v4222 = vpack.c.b16 %v3400, %v3399
        %v4223 = vpack.c.b16 %v3402, %v3401
        %v4224 = vpack.c.b16 %v3404, %v3403
        %v4225 = vpack.c.b16 %v3406, %v3405
        %v4226 = vpack.c.b16 %v3408, %v3407
        %v4227 = vpack.c.b16 %v3410, %v3409
        %v4228 = vpack.c.b16 %v3412, %v3411
        %v4229 = vpack.c.b16 %v3414, %v3413
        %v4230 = vpack.c.b16 %v3416, %v3415
        %v4231 = vpack.c.b16 %v3418, %v3417
        %v4232 = vpack.c.b16 %v3420, %v3419
        %v4233 = vpack.c.b16 %v3422, %v3421
        %v4234 = vpack.c.b16 %v3424, %v3423
        %v4235 = vpack.c.b16 %v3426, %v3425
        %v4236 = vpack.c.b16 %v3428, %v3427
        %v4237 = vpack.c.b16 %v3430, %v3429
        %v4238 = vpack.c.b16 %v3432, %v3431
        %v4239 = vpack.c.b16 %v3434, %v3433
        %v4240 = vpack.c.b16 %v3436, %v3435
        %v4241 = vpack.c.b16 %v3438, %v3437
        %v4242 = vpack.c.b16 %v3440, %v3439
        %v4243 = vpack.c.b16 %v3442, %v3441
        %v4244 = vpack.c.b16 %v3444, %v3443
        %v4245 = vpack.c.b16 %v3446, %v3445
        %v4246 = vpack.c.b16 %v3448, %v3447
        %v4247 = vpack.c.b16 %v3450, %v3449
        %v4248 = vpack.c.b16 %v3452, %v3451
        %v4249 = vpack.c.b16 %v3454, %v3453
        %v4250 = vpack.c.b16 %v3456, %v3455
        %v4251 = vpack.c.b16 %v3458, %v3457
        %v4252 = vpack.c.b16 %v3460, %v3459
        %v4253 = vpack.c.b16 %v3462, %v3461
        %v4254 = vpack.c.b16 %v3464, %v3463
        %v4255 = vpack.c.b16 %v3466, %v3465
        %v4256 = vpack.c.b16 %v3468, %v3467
        %v4257 = vpack.c.b16 %v3470, %v3469
        %v4258 = vpack.c.b16 %v3472, %v3471
        %v4259 = vpack.c.b16 %v3474, %v3473
        %v4260 = vpack.c.b16 %v3476, %v3475
        %v4261 = vpack.c.b16 %v3478, %v3477
        %v4262 = vpack.c.b16 %v3480, %v3479
        %v4263 = vpack.c.b16 %v3482, %v3481
        %v4264 = vpack.c.b16 %v3484, %v3483
        %v4265 = vpack.c.b16 %v3486, %v3485
        %v4266 = vpack.c.b16 %v3488, %v3487
        %v4267 = vpack.c.b16 %v3490, %v3489
        %v4268 = vpack.c.b16 %v3492, %v3491
        %v4269 = vpack.c.b16 %v3494, %v3493
        %v4270 = vpack.c.b16 %v3496, %v3495
        %v4271 = vpack.c.b16 %v3498, %v3497
        %v4272 = vpack.c.b16 %v3500, %v3499
        %v4273 = vpack.c.b16 %v3502, %v3501
        %v4274 = vpack.c.b16 %v3504, %v3503
        %v4275 = vpack.c.b16 %v3506, %v3505
        %v4276 = vpack.c.b16 %v3508, %v3507
        %v4277 = vpack.c.b16 %v3510, %v3509
        %v4278 = vpack.c.b16 %v3512, %v3511
        %v4279 = vpack.c.b16 %v3514, %v3513
        %v4280 = vpack.c.b16 %v3516, %v3515
        %v4281 = vpack.c.b16 %v3518, %v3517
        %v4282 = vpack.c.b16 %v3520, %v3519
        %v4283 = vpack.c.b16 %v3522, %v3521
        %v4284 = vpack.c.b16 %v3524, %v3523
        %v4285 = vpack.c.b16 %v3526, %v3525
        %v4286 = vpack.c.b16 %v3528, %v3527
        %v4287 = vpack.c.b16 %v3530, %v3529
        %v4288 = vpack.c.b16 %v3532, %v3531
        %v4289 = vpack.c.b16 %v3534, %v3533
        %v4290 = vpack.c.b16 %v3536, %v3535
        %v4291 = vpack.c.b16 %v3538, %v3537
        %v4292 = vpack.c.b16 %v3540, %v3539
        %v4293 = vpack.c.b16 %v3542, %v3541
        %v4294 = vpack.c.b16 %v3544, %v3543
        %v4295 = vpack.c.b16 %v3546, %v3545
        %v4296 = vpack.c.b16 %v3548, %v3547
        %v4297 = vpack.c.b16 %v3550, %v3549
        %v4298 = vpack.c.b16 %v3552, %v3551
        %v4299 = vpack.c.b16 %v3554, %v3553
        %v4300 = vpack.c.b16 %v3556, %v3555
        %v4301 = vpack.c.b16 %v3558, %v3557
        %v4302 = vpack.c.b16 %v3560, %v3559
        %v4303 = vpack.c.b16 %v3562, %v3561
        %v4304 = vpack.c.b16 %v3564, %v3563
        %v4305 = vpack.c.b16 %v3566, %v3565
        %v4306 = vpack.c.b16 %v3568, %v3567
        %v4307 = vpack.c.b16 %v3570, %v3569
        %v4308 = vpack.c.b16 %v3572, %v3571
        %v4309 = vpack.c.b16 %v3574, %v3573
        %v4310 = vpack.c.b16 %v3576, %v3575
        %v4311 = vpack.c.b16 %v3578, %v3577
        %v4312 = vpack.c.b16 %v3580, %v3579
        %v4313 = vpack.c.b16 %v3582, %v3581
        %v4314 = vpack.c.b16 %v3584, %v3583
        %v4315 = vpack.c.b16 %v3586, %v3585
        %v4316 = vpack.c.b16 %v3588, %v3587
        %v4317 = vpack.c.b16 %v3590, %v3589
        %v4318 = vpack.c.b16 %v3592, %v3591
        %v4319 = vpack.c.b16 %v3594, %v3593
        %v4320 = vpack.c.b16 %v3596, %v3595
        %v4321 = vpack.c.b16 %v3598, %v3597
        %v4322 = vpack.c.b16 %v3600, %v3599
        %v4323 = vpack.c.b16 %v3602, %v3601
        %v4324 = vpack.c.b16 %v3604, %v3603
        %v4325 = vpack.c.b16 %v3606, %v3605
        %v4326 = vpack.c.b16 %v3608, %v3607
        %v4327 = vpack.c.b16 %v3610, %v3609
        %v4328 = vpack.c.b16 %v3612, %v3611
        %v4329 = vpack.c.b16 %v3614, %v3613
        %v4330 = vpack.c.b16 %v3616, %v3615
        %v4331 = vpack.c.b16 %v3618, %v3617
        %v4332 = vpack.c.b16 %v3620, %v3619
        %v4333 = vpack.c.b16 %v3622, %v3621
        %v4334 = vpack.c.b16 %v3624, %v3623
        %v4335 = vpack.c.b16 %v3626, %v3625
        %v4336 = vpack.c.b16 %v3628, %v3627
        %v4337 = vpack.c.b16 %v3630, %v3629
        %v4338 = vpack.c.b16 %v3632, %v3631
        %v4339 = vpack.c.b16 %v3634, %v3633
        %v4340 = vpack.c.b16 %v3636, %v3635
        %v4341 = vpack.c.b16 %v3638, %v3637
        %v4342 = vpack.c.b16 %v3640, %v3639
        %v4343 = vpack.c.b16 %v3642, %v3641
        %v4344 = vpack.c.b16 %v3644, %v3643
        %v4345 = vpack.c.b16 %v3646, %v3645
        %v4346 = vpack.c.b16 %v3648, %v3647
        %v4347 = vpack.c.b16 %v3650, %v3649
        %v4348 = vpack.c.b16 %v3652, %v3651
        %v4349 = vpack.c.b16 %v3654, %v3653
        %v4350 = vpack.c.b16 %v3656, %v3655
        %v4351 = vpack.c.b16 %v3658, %v3657
        %v4352 = vpack.c.b16 %v3660, %v3659
        %v4353 = vpack.c.b16 %v3662, %v3661
        %v4354 = vpack.c.b16 %v3664, %v3663
        %v4355 = vpack.c.b16 %v3666, %v3665
        %v4356 = vpack.c.b16 %v3668, %v3667
        %v4357 = vpack.c.b16 %v3670, %v3669
        %v4358 = vpack.c.b16 %v3672, %v3671
        %v4359 = vpack.c.b16 %v3674, %v3673
        %v4360 = vpack.c.b16 %v3676, %v3675
        %v4361 = vpack.c.b16 %v3678, %v3677
        %v4362 = vpack.c.b16 %v3680, %v3679
        %v4363 = vpack.c.b16 %v3682, %v3681
        %v4364 = vpack.c.b16 %v3684, %v3683
        %v4365 = vpack.c.b16 %v3686, %v3685
        %v4366 = vpack.c.b16 %v3688, %v3687
        %v4367 = vpack.c.b16 %v3690, %v3689
        %v4368 = vpack.c.b16 %v3692, %v3691
        %v4369 = vpack.c.b16 %v3694, %v3693
        %v4370 = vpack.c.b16 %v3696, %v3695
        %v4371 = vpack.c.b16 %v3698, %v3697
        %v4372 = vpack.c.b16 %v3700, %v3699
        %v4373 = vpack.c.b16 %v3702, %v3701
        %v4374 = vpack.c.b16 %v3704, %v3703
        %v4375 = vpack.c.b16 %v3706, %v3705
        %v4376 = vpack.c.b16 %v3708, %v3707
        %v4377 = vpack.c.b16 %v3710, %v3709
        %v4378 = vpack.c.b16 %v3712, %v3711
        %v4379 = vpack.c.b16 %v3714, %v3713
        %v4380 = vpack.c.b16 %v3716, %v3715
        %v4381 = vpack.c.b16 %v3718, %v3717
        %v4382 = vpack.c.b16 %v3720, %v3719
        %v4383 = vpack.c.b16 %v3722, %v3721
        %v4384 = vpack.c.b16 %v3724, %v3723
        %v4385 = vpack.c.b16 %v3726, %v3725
        %v4386 = vpack.c.b16 %v3728, %v3727
        %v4387 = vpack.c.b16 %v3730, %v3729
        %v4388 = vpack.c.b16 %v3732, %v3731
        %v4389 = vpack.c.b16 %v3734, %v3733
        %v4390 = vpack.c.b16 %v3736, %v3735
        %v4391 = vpack.c.b16 %v3738, %v3737
        %v4392 = vpack.c.b16 %v3740, %v3739
        %v4393 = vpack.c.b16 %v3742, %v3741
        %v4394 = vpack.c.b16 %v3744, %v3743
        %v4395 = vpack.c.b16 %v3746, %v3745
        %v4396 = vpack.c.b16 %v3748, %v3747
        %v4397 = vpack.c.b16 %v3750, %v3749
        %v4398 = vpack.c.b16 %v3752, %v3751
        %v4399 = vpack.c.b16 %v3754, %v3753
        %v4400 = vpack.c.b16 %v3756, %v3755
        %v4401 = vpack.c.b16 %v3758, %v3757
        %v4402 = vpack.c.b16 %v3760, %v3759
        %v4403 = vpack.c.b16 %v3762, %v3761
        %v4404 = vpack.c.b16 %v3764, %v3763
        %v4405 = vpack.c.b16 %v3766, %v3765
        %v4406 = vpack.c.b16 %v3768, %v3767
        %v4407 = vpack.c.b16 %v3770, %v3769
        %v4408 = vpack.c.b16 %v3772, %v3771
        %v4409 = vpack.c.b16 %v3774, %v3773
        %v4410 = vpack.c.b16 %v3776, %v3775
        %v4411 = vpack.c.b16 %v3778, %v3777
        %v4412 = vpack.c.b16 %v3780, %v3779
        %v4413 = vpack.c.b16 %v3782, %v3781
        %v4414 = vpack.c.b16 %v3784, %v3783
        %v4415 = vpack.c.b16 %v3786, %v3785
        %v4416 = vpack.c.b16 %v3788, %v3787
        %v4417 = vpack.c.b16 %v3790, %v3789
        %v4418 = vpack.c.b16 %v3792, %v3791
        %v4419 = vpack.c.b16 %v3794, %v3793
        %v4420 = vpack.c.b16 %v3796, %v3795
        %v4421 = vpack.c.b16 %v3798, %v3797
        %v4422 = vpack.c.b16 %v3800, %v3799
        %v4423 = vpack.c.b16 %v3802, %v3801
        %v4424 = vpack.c.b16 %v3804, %v3803
        %v4425 = vpack.c.b16 %v3806, %v3805
        %v4426 = vpack.c.b16 %v3808, %v3807
        %v4427 = vpack.c.b16 %v3810, %v3809
        %v4428 = vpack.c.b16 %v3812, %v3811
        %v4429 = vpack.c.b16 %v3814, %v3813
        %v4430 = vpack.c.b16 %v3816, %v3815
        %v4431 = vpack.c.b16 %v3818, %v3817
        %v4432 = vpack.c.b16 %v3820, %v3819
        %v4433 = vpack.c.b16 %v3822, %v3821
        %v4434 = vpack.c.b16 %v3824, %v3823
        %v4435 = vpack.c.b16 %v3826, %v3825
        %v4436 = vpack.c.b16 %v3828, %v3827
        %v4437 = vpack.c.b16 %v3830, %v3829
        %v4438 = vpack.c.b16 %v3832, %v3831
        %v4439 = vpack.c.b16 %v3834, %v3833
        %v4440 = vpack.c.b16 %v3836, %v3835
        %v4441 = vpack.c.b16 %v3838, %v3837
        %v4442 = vpack.c.b16 %v3840, %v3839
        %v4443 = vpack.c.b16 %v3842, %v3841
        %v4444 = vpack.c.b16 %v3844, %v3843
        %v4445 = vpack.c.b16 %v3846, %v3845
        %v4446 = vpack.c.b16 %v3848, %v3847
        %v4447 = vpack.c.b16 %v3850, %v3849
        %v4448 = vpack.c.b16 %v3852, %v3851
        %v4449 = vpack.c.b16 %v3854, %v3853
        %v4450 = vpack.c.b16 %v3856, %v3855
        %v4451 = vpack.c.b16 %v3858, %v3857
        %v4452 = vpack.c.b16 %v3860, %v3859
        %v4453 = vpack.c.b16 %v3862, %v3861
        %v4454 = vpack.c.b16 %v3864, %v3863
        %v4455 = vpack.c.b16 %v3866, %v3865
        %v4456 = vpack.c.b16 %v3868, %v3867
        %v4457 = vpack.c.b16 %v3870, %v3869
        %v4458 = vpack.c.b16 %v3872, %v3871
        %v4459 = vpack.c.b16 %v3874, %v3873
        %v4460 = vpack.c.b16 %v3876, %v3875
        %v4461 = vpack.c.b16 %v3878, %v3877
        %v4462 = vpack.c.b16 %v3880, %v3879
        %v4463 = vpack.c.b16 %v3882, %v3881
        %v4464 = vpack.c.b16 %v3884, %v3883
        %v4465 = vpack.c.b16 %v3886, %v3885
        %v4466 = vpack.c.b16 %v3888, %v3887
        %v4467 = vpack.c.b16 %v3890, %v3889
        %v4468 = vpack.c.b16 %v3892, %v3891
        %5045 = vmatpush.bf16.msra.mxu0 %v3900
        %5046 = vmatpush.bf16.msra.mxu0 %v3899
        %5047 = vmatpush.bf16.msra.mxu0 %v3898
        %5048 = vmatpush.bf16.msra.mxu0 %v3897
        %5049 = vmatpush.bf16.msra.mxu0 %v3896
        %5050 = vmatpush.bf16.msra.mxu0 %v3895
        %5051 = vmatpush.bf16.msra.mxu0 %v3894
        %5052 = vmatpush.bf16.msra.mxu0 %v3893
        %5053 = vmatmul.bf16.gmra.mxu0 %v1429
        %v5054 = vpop.f32.mrf.mxu0
        %v5055 = vadd.f32 0.0, %v5054
        %v5056 = vpop.f32.mrf.mxu0
        %5057 = vdwg.mxu0
        %5058 = vmatpush.bf16.msra.mxu0 %v3908
        %5059 = vmatpush.bf16.msra.mxu0 %v3907
        %5060 = vmatpush.bf16.msra.mxu0 %v3906
        %5061 = vmatpush.bf16.msra.mxu0 %v3905
        %5062 = vmatpush.bf16.msra.mxu0 %v3904
        %5063 = vmatpush.bf16.msra.mxu0 %v3903
        %5064 = vmatpush.bf16.msra.mxu0 %v3902
        %5065 = vmatpush.bf16.msra.mxu0 %v3901
        %5066 = vmatmul.bf16.gmra.mxu0 %v1430
        %v5067 = vpop.f32.mrf.mxu0
        %v5068 = vadd.f32 %v5055, %v5067
        %v5069 = vpop.f32.mrf.mxu0
        %5070 = vdwg.mxu0
        %5071 = vmatpush.bf16.msra.mxu0 %v3916
        %5072 = vmatpush.bf16.msra.mxu0 %v3915
        %5073 = vmatpush.bf16.msra.mxu0 %v3914
        %5074 = vmatpush.bf16.msra.mxu0 %v3913
        %5075 = vmatpush.bf16.msra.mxu0 %v3912
        %5076 = vmatpush.bf16.msra.mxu0 %v3911
        %5077 = vmatpush.bf16.msra.mxu0 %v3910
        %5078 = vmatpush.bf16.msra.mxu0 %v3909
        %5079 = vmatmul.bf16.gmra.mxu0 %v1431
        %v5080 = vpop.f32.mrf.mxu0
        %v5081 = vadd.f32 %v5068, %v5080
        %v5082 = vpop.f32.mrf.mxu0
        %5083 = vdwg.mxu0
        %5084 = vmatpush.bf16.msra.mxu0 %v3924
        %5085 = vmatpush.bf16.msra.mxu0 %v3923
        %5086 = vmatpush.bf16.msra.mxu0 %v3922
        %5087 = vmatpush.bf16.msra.mxu0 %v3921
        %5088 = vmatpush.bf16.msra.mxu0 %v3920
        %5089 = vmatpush.bf16.msra.mxu0 %v3919
        %5090 = vmatpush.bf16.msra.mxu0 %v3918
        %5091 = vmatpush.bf16.msra.mxu0 %v3917
        %5092 = vmatmul.bf16.gmra.mxu0 %v1432
        %v5093 = vpop.f32.mrf.mxu0
        %v5094 = vadd.f32 %v5081, %v5093
        %v5095 = vpop.f32.mrf.mxu0
        %5096 = vdwg.mxu0
        %5097 = vmatpush.bf16.msra.mxu0 %v3932
        %5098 = vmatpush.bf16.msra.mxu0 %v3931
        %5099 = vmatpush.bf16.msra.mxu0 %v3930
        %5100 = vmatpush.bf16.msra.mxu0 %v3929
        %5101 = vmatpush.bf16.msra.mxu0 %v3928
        %5102 = vmatpush.bf16.msra.mxu0 %v3927
        %5103 = vmatpush.bf16.msra.mxu0 %v3926
        %5104 = vmatpush.bf16.msra.mxu0 %v3925
        %5105 = vmatmul.bf16.gmra.mxu0 %v1433
        %v5106 = vpop.f32.mrf.mxu0
        %v5107 = vadd.f32 %v5094, %v5106
        %v5108 = vpop.f32.mrf.mxu0
        %5109 = vdwg.mxu0
        %5110 = vmatpush.bf16.msra.mxu0 %v3940
        %5111 = vmatpush.bf16.msra.mxu0 %v3939
        %5112 = vmatpush.bf16.msra.mxu0 %v3938
        %5113 = vmatpush.bf16.msra.mxu0 %v3937
        %5114 = vmatpush.bf16.msra.mxu0 %v3936
        %5115 = vmatpush.bf16.msra.mxu0 %v3935
        %5116 = vmatpush.bf16.msra.mxu0 %v3934
        %5117 = vmatpush.bf16.msra.mxu0 %v3933
        %5118 = vmatmul.bf16.gmra.mxu0 %v1434
        %v5119 = vpop.f32.mrf.mxu0
        %v5120 = vadd.f32 %v5107, %v5119
        %v5121 = vpop.f32.mrf.mxu0
        %5122 = vdwg.mxu0
        %5123 = vmatpush.bf16.msra.mxu0 %v3948
        %5124 = vmatpush.bf16.msra.mxu0 %v3947
        %5125 = vmatpush.bf16.msra.mxu0 %v3946
        %5126 = vmatpush.bf16.msra.mxu0 %v3945
        %5127 = vmatpush.bf16.msra.mxu0 %v3944
        %5128 = vmatpush.bf16.msra.mxu0 %v3943
        %5129 = vmatpush.bf16.msra.mxu0 %v3942
        %5130 = vmatpush.bf16.msra.mxu0 %v3941
        %5131 = vmatmul.bf16.gmra.mxu0 %v1435
        %v5132 = vpop.f32.mrf.mxu0
        %v5133 = vadd.f32 %v5120, %v5132
        %v5134 = vpop.f32.mrf.mxu0
        %5135 = vdwg.mxu0
        %5136 = vmatpush.bf16.msra.mxu0 %v3956
        %5137 = vmatpush.bf16.msra.mxu0 %v3955
        %5138 = vmatpush.bf16.msra.mxu0 %v3954
        %5139 = vmatpush.bf16.msra.mxu0 %v3953
        %5140 = vmatpush.bf16.msra.mxu0 %v3952
        %5141 = vmatpush.bf16.msra.mxu0 %v3951
        %5142 = vmatpush.bf16.msra.mxu0 %v3950
        %5143 = vmatpush.bf16.msra.mxu0 %v3949
        %5144 = vmatmul.bf16.gmra.mxu0 %v1436
        %v5145 = vpop.f32.mrf.mxu0
        %v5146 = vadd.f32 %v5133, %v5145
        %v5147 = vpop.f32.mrf.mxu0
        %5148 = vdwg.mxu0
        %5149 = vmatpush.bf16.msra.mxu0 %v3964
        %5150 = vmatpush.bf16.msra.mxu0 %v3963
        %5151 = vmatpush.bf16.msra.mxu0 %v3962
        %5152 = vmatpush.bf16.msra.mxu0 %v3961
        %5153 = vmatpush.bf16.msra.mxu0 %v3960
        %5154 = vmatpush.bf16.msra.mxu0 %v3959
        %5155 = vmatpush.bf16.msra.mxu0 %v3958
        %5156 = vmatpush.bf16.msra.mxu0 %v3957
        %5157 = vmatmul.bf16.gmra.mxu0 %v1439
        %v5158 = vpop.f32.mrf.mxu0
        %v5159 = vadd.f32 %v5146, %v5158
        %v5160 = vpop.f32.mrf.mxu0
        %5161 = vdwg.mxu0
        %5162 = vmatpush.bf16.msra.mxu0 %v3972
        %5163 = vmatpush.bf16.msra.mxu0 %v3971
        %5164 = vmatpush.bf16.msra.mxu0 %v3970
        %5165 = vmatpush.bf16.msra.mxu0 %v3969
        %5166 = vmatpush.bf16.msra.mxu0 %v3968
        %5167 = vmatpush.bf16.msra.mxu0 %v3967
        %5168 = vmatpush.bf16.msra.mxu0 %v3966
        %5169 = vmatpush.bf16.msra.mxu0 %v3965
        %5170 = vmatmul.bf16.gmra.mxu0 %v1440
        %v5171 = vpop.f32.mrf.mxu0
        %v5172 = vadd.f32 %v5159, %v5171
        %v5173 = vpop.f32.mrf.mxu0
        %5174 = vdwg.mxu0
        %5175 = vmatpush.bf16.msra.mxu0 %v3980
        %5176 = vmatpush.bf16.msra.mxu0 %v3979
        %5177 = vmatpush.bf16.msra.mxu0 %v3978
        %5178 = vmatpush.bf16.msra.mxu0 %v3977
        %5179 = vmatpush.bf16.msra.mxu0 %v3976
        %5180 = vmatpush.bf16.msra.mxu0 %v3975
        %5181 = vmatpush.bf16.msra.mxu0 %v3974
        %5182 = vmatpush.bf16.msra.mxu0 %v3973
        %5183 = vmatmul.bf16.gmra.mxu0 %v1441
        %v5184 = vpop.f32.mrf.mxu0
        %v5185 = vadd.f32 %v5172, %v5184
        %v5186 = vpop.f32.mrf.mxu0
        %5187 = vdwg.mxu0
        %5188 = vmatpush.bf16.msra.mxu0 %v3988
        %5189 = vmatpush.bf16.msra.mxu0 %v3987
        %5190 = vmatpush.bf16.msra.mxu0 %v3986
        %5191 = vmatpush.bf16.msra.mxu0 %v3985
        %5192 = vmatpush.bf16.msra.mxu0 %v3984
        %5193 = vmatpush.bf16.msra.mxu0 %v3983
        %5194 = vmatpush.bf16.msra.mxu0 %v3982
        %5195 = vmatpush.bf16.msra.mxu0 %v3981
        %5196 = vmatmul.bf16.gmra.mxu0 %v1442
        %v5197 = vpop.f32.mrf.mxu0
        %v5198 = vadd.f32 %v5185, %v5197
        %v5199 = vpop.f32.mrf.mxu0
        %5200 = vdwg.mxu0
        %5201 = vmatpush.bf16.msra.mxu0 %v3996
        %5202 = vmatpush.bf16.msra.mxu0 %v3995
        %5203 = vmatpush.bf16.msra.mxu0 %v3994
        %5204 = vmatpush.bf16.msra.mxu0 %v3993
        %5205 = vmatpush.bf16.msra.mxu0 %v3992
        %5206 = vmatpush.bf16.msra.mxu0 %v3991
        %5207 = vmatpush.bf16.msra.mxu0 %v3990
        %5208 = vmatpush.bf16.msra.mxu0 %v3989
        %5209 = vmatmul.bf16.gmra.mxu0 %v1443
        %v5210 = vpop.f32.mrf.mxu0
        %v5211 = vadd.f32 %v5198, %v5210
        %v5212 = vpop.f32.mrf.mxu0
        %5213 = vdwg.mxu0
        %5214 = vmatpush.bf16.msra.mxu0 %v4004
        %5215 = vmatpush.bf16.msra.mxu0 %v4003
        %5216 = vmatpush.bf16.msra.mxu0 %v4002
        %5217 = vmatpush.bf16.msra.mxu0 %v4001
        %5218 = vmatpush.bf16.msra.mxu0 %v4000
        %5219 = vmatpush.bf16.msra.mxu0 %v3999
        %5220 = vmatpush.bf16.msra.mxu0 %v3998
        %5221 = vmatpush.bf16.msra.mxu0 %v3997
        %5222 = vmatmul.bf16.gmra.mxu0 %v1444
        %v5223 = vpop.f32.mrf.mxu0
        %v5224 = vadd.f32 %v5211, %v5223
        %v5225 = vpop.f32.mrf.mxu0
        %5226 = vdwg.mxu0
        %5227 = vmatpush.bf16.msra.mxu0 %v4012
        %5228 = vmatpush.bf16.msra.mxu0 %v4011
        %5229 = vmatpush.bf16.msra.mxu0 %v4010
        %5230 = vmatpush.bf16.msra.mxu0 %v4009
        %5231 = vmatpush.bf16.msra.mxu0 %v4008
        %5232 = vmatpush.bf16.msra.mxu0 %v4007
        %5233 = vmatpush.bf16.msra.mxu0 %v4006
        %5234 = vmatpush.bf16.msra.mxu0 %v4005
        %5235 = vmatmul.bf16.gmra.mxu0 %v1445
        %v5236 = vpop.f32.mrf.mxu0
        %v5237 = vadd.f32 %v5224, %v5236
        %v5238 = vpop.f32.mrf.mxu0
        %5239 = vdwg.mxu0
        %5240 = vmatpush.bf16.msra.mxu0 %v4020
        %5241 = vmatpush.bf16.msra.mxu0 %v4019
        %5242 = vmatpush.bf16.msra.mxu0 %v4018
        %5243 = vmatpush.bf16.msra.mxu0 %v4017
        %5244 = vmatpush.bf16.msra.mxu0 %v4016
        %5245 = vmatpush.bf16.msra.mxu0 %v4015
        %5246 = vmatpush.bf16.msra.mxu0 %v4014
        %5247 = vmatpush.bf16.msra.mxu0 %v4013
        %5248 = vmatmul.bf16.gmra.mxu0 %v1446
        %v5249 = vpop.f32.mrf.mxu0
        %v5250 = vadd.f32 %v5237, %v5249
        %v5251 = vpop.f32.mrf.mxu0
        %5252 = vdwg.mxu0
        %5253 = vmatpush.bf16.msra.mxu0 %v4028
        %5254 = vmatpush.bf16.msra.mxu0 %v4027
        %5255 = vmatpush.bf16.msra.mxu0 %v4026
        %5256 = vmatpush.bf16.msra.mxu0 %v4025
        %5257 = vmatpush.bf16.msra.mxu0 %v4024
        %5258 = vmatpush.bf16.msra.mxu0 %v4023
        %5259 = vmatpush.bf16.msra.mxu0 %v4022
        %5260 = vmatpush.bf16.msra.mxu0 %v4021
        %5261 = vmatmul.bf16.gmra.mxu0 %v1449
        %v5262 = vpop.f32.mrf.mxu0
        %v5263 = vadd.f32 %v5250, %v5262
        %v5264 = vpop.f32.mrf.mxu0
        %5265 = vdwg.mxu0
        %5266 = vmatpush.bf16.msra.mxu0 %v4036
        %5267 = vmatpush.bf16.msra.mxu0 %v4035
        %5268 = vmatpush.bf16.msra.mxu0 %v4034
        %5269 = vmatpush.bf16.msra.mxu0 %v4033
        %5270 = vmatpush.bf16.msra.mxu0 %v4032
        %5271 = vmatpush.bf16.msra.mxu0 %v4031
        %5272 = vmatpush.bf16.msra.mxu0 %v4030
        %5273 = vmatpush.bf16.msra.mxu0 %v4029
        %5274 = vmatmul.bf16.gmra.mxu0 %v1450
        %v5275 = vpop.f32.mrf.mxu0
        %v5276 = vadd.f32 %v5263, %v5275
        %v5277 = vpop.f32.mrf.mxu0
        %5278 = vdwg.mxu0
        %5279 = vmatpush.bf16.msra.mxu0 %v4044
        %5280 = vmatpush.bf16.msra.mxu0 %v4043
        %5281 = vmatpush.bf16.msra.mxu0 %v4042
        %5282 = vmatpush.bf16.msra.mxu0 %v4041
        %5283 = vmatpush.bf16.msra.mxu0 %v4040
        %5284 = vmatpush.bf16.msra.mxu0 %v4039
        %5285 = vmatpush.bf16.msra.mxu0 %v4038
        %5286 = vmatpush.bf16.msra.mxu0 %v4037
        %5287 = vmatmul.bf16.gmra.mxu0 %v1451
        %v5288 = vpop.f32.mrf.mxu0
        %v5289 = vadd.f32 %v5276, %v5288
        %v5290 = vpop.f32.mrf.mxu0
        %5291 = vdwg.mxu0
        %5292 = vmatpush.bf16.msra.mxu0 %v4052
        %5293 = vmatpush.bf16.msra.mxu0 %v4051
        %5294 = vmatpush.bf16.msra.mxu0 %v4050
        %5295 = vmatpush.bf16.msra.mxu0 %v4049
        %5296 = vmatpush.bf16.msra.mxu0 %v4048
        %5297 = vmatpush.bf16.msra.mxu0 %v4047
        %5298 = vmatpush.bf16.msra.mxu0 %v4046
        %5299 = vmatpush.bf16.msra.mxu0 %v4045
        %5300 = vmatmul.bf16.gmra.mxu0 %v1452
        %v5301 = vpop.f32.mrf.mxu0
        %v5302 = vadd.f32 %v5289, %v5301
        %v5303 = vpop.f32.mrf.mxu0
        %5304 = vdwg.mxu0
        %5305 = vmatpush.bf16.msra.mxu0 %v4060
        %5306 = vmatpush.bf16.msra.mxu0 %v4059
        %5307 = vmatpush.bf16.msra.mxu0 %v4058
        %5308 = vmatpush.bf16.msra.mxu0 %v4057
        %5309 = vmatpush.bf16.msra.mxu0 %v4056
        %5310 = vmatpush.bf16.msra.mxu0 %v4055
        %5311 = vmatpush.bf16.msra.mxu0 %v4054
        %5312 = vmatpush.bf16.msra.mxu0 %v4053
        %5313 = vmatmul.bf16.gmra.mxu0 %v1453
        %v5314 = vpop.f32.mrf.mxu0
        %v5315 = vadd.f32 %v5302, %v5314
        %v5316 = vpop.f32.mrf.mxu0
        %5317 = vdwg.mxu0
        %5318 = vmatpush.bf16.msra.mxu0 %v4068
        %5319 = vmatpush.bf16.msra.mxu0 %v4067
        %5320 = vmatpush.bf16.msra.mxu0 %v4066
        %5321 = vmatpush.bf16.msra.mxu0 %v4065
        %5322 = vmatpush.bf16.msra.mxu0 %v4064
        %5323 = vmatpush.bf16.msra.mxu0 %v4063
        %5324 = vmatpush.bf16.msra.mxu0 %v4062
        %5325 = vmatpush.bf16.msra.mxu0 %v4061
        %5326 = vmatmul.bf16.gmra.mxu0 %v1454
        %v5327 = vpop.f32.mrf.mxu0
        %v5328 = vadd.f32 %v5315, %v5327
        %v5329 = vpop.f32.mrf.mxu0
        %5330 = vdwg.mxu0
        %5331 = vmatpush.bf16.msra.mxu0 %v4076
        %5332 = vmatpush.bf16.msra.mxu0 %v4075
        %5333 = vmatpush.bf16.msra.mxu0 %v4074
        %5334 = vmatpush.bf16.msra.mxu0 %v4073
        %5335 = vmatpush.bf16.msra.mxu0 %v4072
        %5336 = vmatpush.bf16.msra.mxu0 %v4071
        %5337 = vmatpush.bf16.msra.mxu0 %v4070
        %5338 = vmatpush.bf16.msra.mxu0 %v4069
        %5339 = vmatmul.bf16.gmra.mxu0 %v1455
        %v5340 = vpop.f32.mrf.mxu0
        %v5341 = vadd.f32 %v5328, %v5340
        %v5342 = vpop.f32.mrf.mxu0
        %5343 = vdwg.mxu0
        %5344 = vmatpush.bf16.msra.mxu0 %v4084
        %5345 = vmatpush.bf16.msra.mxu0 %v4083
        %5346 = vmatpush.bf16.msra.mxu0 %v4082
        %5347 = vmatpush.bf16.msra.mxu0 %v4081
        %5348 = vmatpush.bf16.msra.mxu0 %v4080
        %5349 = vmatpush.bf16.msra.mxu0 %v4079
        %5350 = vmatpush.bf16.msra.mxu0 %v4078
        %5351 = vmatpush.bf16.msra.mxu0 %v4077
        %5352 = vmatmul.bf16.gmra.mxu0 %v1456
        %v5353 = vpop.f32.mrf.mxu0
        %v5354 = vadd.f32 %v5341, %v5353
        %v5355 = vpop.f32.mrf.mxu0
        %5356 = vdwg.mxu0
        %5357 = vmatpush.bf16.msra.mxu0 %v4092
        %5358 = vmatpush.bf16.msra.mxu0 %v4091
        %5359 = vmatpush.bf16.msra.mxu0 %v4090
        %5360 = vmatpush.bf16.msra.mxu0 %v4089
        %5361 = vmatpush.bf16.msra.mxu0 %v4088
        %5362 = vmatpush.bf16.msra.mxu0 %v4087
        %5363 = vmatpush.bf16.msra.mxu0 %v4086
        %5364 = vmatpush.bf16.msra.mxu0 %v4085
        %5365 = vmatmul.bf16.gmra.mxu0 %v1459
        %v5366 = vpop.f32.mrf.mxu0
        %v5367 = vadd.f32 %v5354, %v5366
        %v5368 = vpop.f32.mrf.mxu0
        %5369 = vdwg.mxu0
        %5370 = vmatpush.bf16.msra.mxu0 %v4100
        %5371 = vmatpush.bf16.msra.mxu0 %v4099
        %5372 = vmatpush.bf16.msra.mxu0 %v4098
        %5373 = vmatpush.bf16.msra.mxu0 %v4097
        %5374 = vmatpush.bf16.msra.mxu0 %v4096
        %5375 = vmatpush.bf16.msra.mxu0 %v4095
        %5376 = vmatpush.bf16.msra.mxu0 %v4094
        %5377 = vmatpush.bf16.msra.mxu0 %v4093
        %5378 = vmatmul.bf16.gmra.mxu0 %v1460
        %v5379 = vpop.f32.mrf.mxu0
        %v5380 = vadd.f32 %v5367, %v5379
        %v5381 = vpop.f32.mrf.mxu0
        %5382 = vdwg.mxu0
        %5383 = vmatpush.bf16.msra.mxu0 %v4108
        %5384 = vmatpush.bf16.msra.mxu0 %v4107
        %5385 = vmatpush.bf16.msra.mxu0 %v4106
        %5386 = vmatpush.bf16.msra.mxu0 %v4105
        %5387 = vmatpush.bf16.msra.mxu0 %v4104
        %5388 = vmatpush.bf16.msra.mxu0 %v4103
        %5389 = vmatpush.bf16.msra.mxu0 %v4102
        %5390 = vmatpush.bf16.msra.mxu0 %v4101
        %5391 = vmatmul.bf16.gmra.mxu0 %v1461
        %v5392 = vpop.f32.mrf.mxu0
        %v5393 = vadd.f32 %v5380, %v5392
        %v5394 = vpop.f32.mrf.mxu0
        %5395 = vdwg.mxu0
        %5396 = vmatpush.bf16.msra.mxu0 %v4116
        %5397 = vmatpush.bf16.msra.mxu0 %v4115
        %5398 = vmatpush.bf16.msra.mxu0 %v4114
        %5399 = vmatpush.bf16.msra.mxu0 %v4113
        %5400 = vmatpush.bf16.msra.mxu0 %v4112
        %5401 = vmatpush.bf16.msra.mxu0 %v4111
        %5402 = vmatpush.bf16.msra.mxu0 %v4110
        %5403 = vmatpush.bf16.msra.mxu0 %v4109
        %5404 = vmatmul.bf16.gmra.mxu0 %v1462
        %v5405 = vpop.f32.mrf.mxu0
        %v5406 = vadd.f32 %v5393, %v5405
        %v5407 = vpop.f32.mrf.mxu0
        %5408 = vdwg.mxu0
        %5409 = vmatpush.bf16.msra.mxu0 %v4124
        %5410 = vmatpush.bf16.msra.mxu0 %v4123
        %5411 = vmatpush.bf16.msra.mxu0 %v4122
        %5412 = vmatpush.bf16.msra.mxu0 %v4121
        %5413 = vmatpush.bf16.msra.mxu0 %v4120
        %5414 = vmatpush.bf16.msra.mxu0 %v4119
        %5415 = vmatpush.bf16.msra.mxu0 %v4118
        %5416 = vmatpush.bf16.msra.mxu0 %v4117
        %5417 = vmatmul.bf16.gmra.mxu0 %v1463
        %v5418 = vpop.f32.mrf.mxu0
        %v5419 = vadd.f32 %v5406, %v5418
        %v5420 = vpop.f32.mrf.mxu0
        %5421 = vdwg.mxu0
        %5422 = vmatpush.bf16.msra.mxu0 %v4132
        %5423 = vmatpush.bf16.msra.mxu0 %v4131
        %5424 = vmatpush.bf16.msra.mxu0 %v4130
        %5425 = vmatpush.bf16.msra.mxu0 %v4129
        %5426 = vmatpush.bf16.msra.mxu0 %v4128
        %5427 = vmatpush.bf16.msra.mxu0 %v4127
        %5428 = vmatpush.bf16.msra.mxu0 %v4126
        %5429 = vmatpush.bf16.msra.mxu0 %v4125
        %5430 = vmatmul.bf16.gmra.mxu0 %v1464
        %v5431 = vpop.f32.mrf.mxu0
        %v5432 = vadd.f32 %v5419, %v5431
        %v5433 = vpop.f32.mrf.mxu0
        %5434 = vdwg.mxu0
        %5435 = vmatpush.bf16.msra.mxu0 %v4140
        %5436 = vmatpush.bf16.msra.mxu0 %v4139
        %5437 = vmatpush.bf16.msra.mxu0 %v4138
        %5438 = vmatpush.bf16.msra.mxu0 %v4137
        %5439 = vmatpush.bf16.msra.mxu0 %v4136
        %5440 = vmatpush.bf16.msra.mxu0 %v4135
        %5441 = vmatpush.bf16.msra.mxu0 %v4134
        %5442 = vmatpush.bf16.msra.mxu0 %v4133
        %5443 = vmatmul.bf16.gmra.mxu0 %v1465
        %v5444 = vpop.f32.mrf.mxu0
        %v5445 = vadd.f32 %v5432, %v5444
        %v5446 = vpop.f32.mrf.mxu0
        %5447 = vdwg.mxu0
        %5448 = vmatpush.bf16.msra.mxu0 %v4148
        %5449 = vmatpush.bf16.msra.mxu0 %v4147
        %5450 = vmatpush.bf16.msra.mxu0 %v4146
        %5451 = vmatpush.bf16.msra.mxu0 %v4145
        %5452 = vmatpush.bf16.msra.mxu0 %v4144
        %5453 = vmatpush.bf16.msra.mxu0 %v4143
        %5454 = vmatpush.bf16.msra.mxu0 %v4142
        %5455 = vmatpush.bf16.msra.mxu0 %v4141
        %5456 = vmatmul.bf16.gmra.mxu0 %v1466
        %v5457 = vpop.f32.mrf.mxu0
        %v5458 = vadd.f32 %v5445, %v5457
        %v5459 = vpop.f32.mrf.mxu0
        %5460 = vdwg.mxu0
        %5461 = vmatpush.bf16.msra.mxu0 %v4156
        %5462 = vmatpush.bf16.msra.mxu0 %v4155
        %5463 = vmatpush.bf16.msra.mxu0 %v4154
        %5464 = vmatpush.bf16.msra.mxu0 %v4153
        %5465 = vmatpush.bf16.msra.mxu0 %v4152
        %5466 = vmatpush.bf16.msra.mxu0 %v4151
        %5467 = vmatpush.bf16.msra.mxu0 %v4150
        %5468 = vmatpush.bf16.msra.mxu0 %v4149
        %5469 = vmatmul.bf16.gmra.mxu0 %v1469
        %v5470 = vpop.f32.mrf.mxu0
        %v5471 = vadd.f32 %v5458, %v5470
        %v5472 = vpop.f32.mrf.mxu0
        %5473 = vdwg.mxu0
        %5474 = vmatpush.bf16.msra.mxu0 %v4164
        %5475 = vmatpush.bf16.msra.mxu0 %v4163
        %5476 = vmatpush.bf16.msra.mxu0 %v4162
        %5477 = vmatpush.bf16.msra.mxu0 %v4161
        %5478 = vmatpush.bf16.msra.mxu0 %v4160
        %5479 = vmatpush.bf16.msra.mxu0 %v4159
        %5480 = vmatpush.bf16.msra.mxu0 %v4158
        %5481 = vmatpush.bf16.msra.mxu0 %v4157
        %5482 = vmatmul.bf16.gmra.mxu0 %v1470
        %v5483 = vpop.f32.mrf.mxu0
        %v5484 = vadd.f32 %v5471, %v5483
        %v5485 = vpop.f32.mrf.mxu0
        %5486 = vdwg.mxu0
        %5487 = vmatpush.bf16.msra.mxu0 %v4172
        %5488 = vmatpush.bf16.msra.mxu0 %v4171
        %5489 = vmatpush.bf16.msra.mxu0 %v4170
        %5490 = vmatpush.bf16.msra.mxu0 %v4169
        %5491 = vmatpush.bf16.msra.mxu0 %v4168
        %5492 = vmatpush.bf16.msra.mxu0 %v4167
        %5493 = vmatpush.bf16.msra.mxu0 %v4166
        %5494 = vmatpush.bf16.msra.mxu0 %v4165
        %5495 = vmatmul.bf16.gmra.mxu0 %v1471
        %v5496 = vpop.f32.mrf.mxu0
        %v5497 = vadd.f32 %v5484, %v5496
        %v5498 = vpop.f32.mrf.mxu0
        %5499 = vdwg.mxu0
        %5500 = vmatpush.bf16.msra.mxu0 %v4180
        %5501 = vmatpush.bf16.msra.mxu0 %v4179
        %5502 = vmatpush.bf16.msra.mxu0 %v4178
        %5503 = vmatpush.bf16.msra.mxu0 %v4177
        %5504 = vmatpush.bf16.msra.mxu0 %v4176
        %5505 = vmatpush.bf16.msra.mxu0 %v4175
        %5506 = vmatpush.bf16.msra.mxu0 %v4174
        %5507 = vmatpush.bf16.msra.mxu0 %v4173
        %5508 = vmatmul.bf16.gmra.mxu0 %v1472
        %v5509 = vpop.f32.mrf.mxu0
        %v5510 = vadd.f32 %v5497, %v5509
        %v5511 = vpop.f32.mrf.mxu0
        %5512 = vdwg.mxu0
        %5513 = vmatpush.bf16.msra.mxu0 %v4188
        %5514 = vmatpush.bf16.msra.mxu0 %v4187
        %5515 = vmatpush.bf16.msra.mxu0 %v4186
        %5516 = vmatpush.bf16.msra.mxu0 %v4185
        %5517 = vmatpush.bf16.msra.mxu0 %v4184
        %5518 = vmatpush.bf16.msra.mxu0 %v4183
        %5519 = vmatpush.bf16.msra.mxu0 %v4182
        %5520 = vmatpush.bf16.msra.mxu0 %v4181
        %5521 = vmatmul.bf16.gmra.mxu0 %v1473
        %v5522 = vpop.f32.mrf.mxu0
        %v5523 = vadd.f32 %v5510, %v5522
        %v5524 = vpop.f32.mrf.mxu0
        %5525 = vdwg.mxu0
        %5526 = vmatpush.bf16.msra.mxu0 %v4196
        %5527 = vmatpush.bf16.msra.mxu0 %v4195
        %5528 = vmatpush.bf16.msra.mxu0 %v4194
        %5529 = vmatpush.bf16.msra.mxu0 %v4193
        %5530 = vmatpush.bf16.msra.mxu0 %v4192
        %5531 = vmatpush.bf16.msra.mxu0 %v4191
        %5532 = vmatpush.bf16.msra.mxu0 %v4190
        %5533 = vmatpush.bf16.msra.mxu0 %v4189
        %5534 = vmatmul.bf16.gmra.mxu0 %v1474
        %v5535 = vpop.f32.mrf.mxu0
        %v5536 = vadd.f32 %v5523, %v5535
        %v5537 = vpop.f32.mrf.mxu0
        %5538 = vdwg.mxu0
        %5539 = vmatpush.bf16.msra.mxu0 %v4204
        %5540 = vmatpush.bf16.msra.mxu0 %v4203
        %5541 = vmatpush.bf16.msra.mxu0 %v4202
        %5542 = vmatpush.bf16.msra.mxu0 %v4201
        %5543 = vmatpush.bf16.msra.mxu0 %v4200
        %5544 = vmatpush.bf16.msra.mxu0 %v4199
        %5545 = vmatpush.bf16.msra.mxu0 %v4198
        %5546 = vmatpush.bf16.msra.mxu0 %v4197
        %5547 = vmatmul.bf16.gmra.mxu0 %v1475
        %v5548 = vpop.f32.mrf.mxu0
        %v5549 = vadd.f32 %v5536, %v5548
        %v5550 = vpop.f32.mrf.mxu0
        %5551 = vdwg.mxu0
        %5552 = vmatpush.bf16.msra.mxu0 %v4212
        %5553 = vmatpush.bf16.msra.mxu0 %v4211
        %5554 = vmatpush.bf16.msra.mxu0 %v4210
        %5555 = vmatpush.bf16.msra.mxu0 %v4209
        %5556 = vmatpush.bf16.msra.mxu0 %v4208
        %5557 = vmatpush.bf16.msra.mxu0 %v4207
        %5558 = vmatpush.bf16.msra.mxu0 %v4206
        %5559 = vmatpush.bf16.msra.mxu0 %v4205
        %5560 = vmatmul.bf16.gmra.mxu0 %v1476
        %v5561 = vpop.f32.mrf.mxu0
        %v5562 = vadd.f32 %v5549, %v5561
        %v5563 = vpop.f32.mrf.mxu0
        %5564 = vdwg.mxu0
        %5565 = vmatpush.bf16.msra.mxu0 %v4220
        %5566 = vmatpush.bf16.msra.mxu0 %v4219
        %5567 = vmatpush.bf16.msra.mxu0 %v4218
        %5568 = vmatpush.bf16.msra.mxu0 %v4217
        %5569 = vmatpush.bf16.msra.mxu0 %v4216
        %5570 = vmatpush.bf16.msra.mxu0 %v4215
        %5571 = vmatpush.bf16.msra.mxu0 %v4214
        %5572 = vmatpush.bf16.msra.mxu0 %v4213
        %5573 = vmatmul.bf16.gmra.mxu0 %v1479
        %v5574 = vpop.f32.mrf.mxu0
        %v5575 = vadd.f32 %v5562, %v5574
        %v5576 = vpop.f32.mrf.mxu0
        %5577 = vdwg.mxu0
        %5578 = vmatpush.bf16.msra.mxu0 %v4228
        %5579 = vmatpush.bf16.msra.mxu0 %v4227
        %5580 = vmatpush.bf16.msra.mxu0 %v4226
        %5581 = vmatpush.bf16.msra.mxu0 %v4225
        %5582 = vmatpush.bf16.msra.mxu0 %v4224
        %5583 = vmatpush.bf16.msra.mxu0 %v4223
        %5584 = vmatpush.bf16.msra.mxu0 %v4222
        %5585 = vmatpush.bf16.msra.mxu0 %v4221
        %5586 = vmatmul.bf16.gmra.mxu0 %v1480
        %v5587 = vpop.f32.mrf.mxu0
        %v5588 = vadd.f32 %v5575, %v5587
        %v5589 = vpop.f32.mrf.mxu0
        %5590 = vdwg.mxu0
        %5591 = vmatpush.bf16.msra.mxu0 %v4236
        %5592 = vmatpush.bf16.msra.mxu0 %v4235
        %5593 = vmatpush.bf16.msra.mxu0 %v4234
        %5594 = vmatpush.bf16.msra.mxu0 %v4233
        %5595 = vmatpush.bf16.msra.mxu0 %v4232
        %5596 = vmatpush.bf16.msra.mxu0 %v4231
        %5597 = vmatpush.bf16.msra.mxu0 %v4230
        %5598 = vmatpush.bf16.msra.mxu0 %v4229
        %5599 = vmatmul.bf16.gmra.mxu0 %v1481
        %v5600 = vpop.f32.mrf.mxu0
        %v5601 = vadd.f32 %v5588, %v5600
        %v5602 = vpop.f32.mrf.mxu0
        %5603 = vdwg.mxu0
        %5604 = vmatpush.bf16.msra.mxu0 %v4244
        %5605 = vmatpush.bf16.msra.mxu0 %v4243
        %5606 = vmatpush.bf16.msra.mxu0 %v4242
        %5607 = vmatpush.bf16.msra.mxu0 %v4241
        %5608 = vmatpush.bf16.msra.mxu0 %v4240
        %5609 = vmatpush.bf16.msra.mxu0 %v4239
        %5610 = vmatpush.bf16.msra.mxu0 %v4238
        %5611 = vmatpush.bf16.msra.mxu0 %v4237
        %5612 = vmatmul.bf16.gmra.mxu0 %v1482
        %v5613 = vpop.f32.mrf.mxu0
        %v5614 = vadd.f32 %v5601, %v5613
        %v5615 = vpop.f32.mrf.mxu0
        %5616 = vdwg.mxu0
        %5617 = vmatpush.bf16.msra.mxu0 %v4252
        %5618 = vmatpush.bf16.msra.mxu0 %v4251
        %5619 = vmatpush.bf16.msra.mxu0 %v4250
        %5620 = vmatpush.bf16.msra.mxu0 %v4249
        %5621 = vmatpush.bf16.msra.mxu0 %v4248
        %5622 = vmatpush.bf16.msra.mxu0 %v4247
        %5623 = vmatpush.bf16.msra.mxu0 %v4246
        %5624 = vmatpush.bf16.msra.mxu0 %v4245
        %5625 = vmatmul.bf16.gmra.mxu0 %v1483
        %v5626 = vpop.f32.mrf.mxu0
        %v5627 = vadd.f32 %v5614, %v5626
        %v5628 = vpop.f32.mrf.mxu0
        %5629 = vdwg.mxu0
        %5630 = vmatpush.bf16.msra.mxu0 %v4260
        %5631 = vmatpush.bf16.msra.mxu0 %v4259
        %5632 = vmatpush.bf16.msra.mxu0 %v4258
        %5633 = vmatpush.bf16.msra.mxu0 %v4257
        %5634 = vmatpush.bf16.msra.mxu0 %v4256
        %5635 = vmatpush.bf16.msra.mxu0 %v4255
        %5636 = vmatpush.bf16.msra.mxu0 %v4254
        %5637 = vmatpush.bf16.msra.mxu0 %v4253
        %5638 = vmatmul.bf16.gmra.mxu0 %v1484
        %v5639 = vpop.f32.mrf.mxu0
        %v5640 = vadd.f32 %v5627, %v5639
        %v5641 = vpop.f32.mrf.mxu0
        %5642 = vdwg.mxu0
        %5643 = vmatpush.bf16.msra.mxu0 %v4268
        %5644 = vmatpush.bf16.msra.mxu0 %v4267
        %5645 = vmatpush.bf16.msra.mxu0 %v4266
        %5646 = vmatpush.bf16.msra.mxu0 %v4265
        %5647 = vmatpush.bf16.msra.mxu0 %v4264
        %5648 = vmatpush.bf16.msra.mxu0 %v4263
        %5649 = vmatpush.bf16.msra.mxu0 %v4262
        %5650 = vmatpush.bf16.msra.mxu0 %v4261
        %5651 = vmatmul.bf16.gmra.mxu0 %v1485
        %v5652 = vpop.f32.mrf.mxu0
        %v5653 = vadd.f32 %v5640, %v5652
        %v5654 = vpop.f32.mrf.mxu0
        %5655 = vdwg.mxu0
        %5656 = vmatpush.bf16.msra.mxu0 %v4276
        %5657 = vmatpush.bf16.msra.mxu0 %v4275
        %5658 = vmatpush.bf16.msra.mxu0 %v4274
        %5659 = vmatpush.bf16.msra.mxu0 %v4273
        %5660 = vmatpush.bf16.msra.mxu0 %v4272
        %5661 = vmatpush.bf16.msra.mxu0 %v4271
        %5662 = vmatpush.bf16.msra.mxu0 %v4270
        %5663 = vmatpush.bf16.msra.mxu0 %v4269
        %5664 = vmatmul.bf16.gmra.mxu0 %v1486
        %v5665 = vpop.f32.mrf.mxu0
        %v5666 = vadd.f32 %v5653, %v5665
        %v5667 = vpop.f32.mrf.mxu0
        %5668 = vdwg.mxu0
        %5669 = vmatpush.bf16.msra.mxu0 %v4284
        %5670 = vmatpush.bf16.msra.mxu0 %v4283
        %5671 = vmatpush.bf16.msra.mxu0 %v4282
        %5672 = vmatpush.bf16.msra.mxu0 %v4281
        %5673 = vmatpush.bf16.msra.mxu0 %v4280
        %5674 = vmatpush.bf16.msra.mxu0 %v4279
        %5675 = vmatpush.bf16.msra.mxu0 %v4278
        %5676 = vmatpush.bf16.msra.mxu0 %v4277
        %5677 = vmatmul.bf16.gmra.mxu0 %v1489
        %v5678 = vpop.f32.mrf.mxu0
        %v5679 = vadd.f32 %v5666, %v5678
        %v5680 = vpop.f32.mrf.mxu0
        %5681 = vdwg.mxu0
        %5682 = vmatpush.bf16.msra.mxu0 %v4292
        %5683 = vmatpush.bf16.msra.mxu0 %v4291
        %5684 = vmatpush.bf16.msra.mxu0 %v4290
        %5685 = vmatpush.bf16.msra.mxu0 %v4289
        %5686 = vmatpush.bf16.msra.mxu0 %v4288
        %5687 = vmatpush.bf16.msra.mxu0 %v4287
        %5688 = vmatpush.bf16.msra.mxu0 %v4286
        %5689 = vmatpush.bf16.msra.mxu0 %v4285
        %5690 = vmatmul.bf16.gmra.mxu0 %v1490
        %v5691 = vpop.f32.mrf.mxu0
        %v5692 = vadd.f32 %v5679, %v5691
        %v5693 = vpop.f32.mrf.mxu0
        %5694 = vdwg.mxu0
        %5695 = vmatpush.bf16.msra.mxu0 %v4300
        %5696 = vmatpush.bf16.msra.mxu0 %v4299
        %5697 = vmatpush.bf16.msra.mxu0 %v4298
        %5698 = vmatpush.bf16.msra.mxu0 %v4297
        %5699 = vmatpush.bf16.msra.mxu0 %v4296
        %5700 = vmatpush.bf16.msra.mxu0 %v4295
        %5701 = vmatpush.bf16.msra.mxu0 %v4294
        %5702 = vmatpush.bf16.msra.mxu0 %v4293
        %5703 = vmatmul.bf16.gmra.mxu0 %v1491
        %v5704 = vpop.f32.mrf.mxu0
        %v5705 = vadd.f32 %v5692, %v5704
        %v5706 = vpop.f32.mrf.mxu0
        %5707 = vdwg.mxu0
        %5708 = vmatpush.bf16.msra.mxu0 %v4308
        %5709 = vmatpush.bf16.msra.mxu0 %v4307
        %5710 = vmatpush.bf16.msra.mxu0 %v4306
        %5711 = vmatpush.bf16.msra.mxu0 %v4305
        %5712 = vmatpush.bf16.msra.mxu0 %v4304
        %5713 = vmatpush.bf16.msra.mxu0 %v4303
        %5714 = vmatpush.bf16.msra.mxu0 %v4302
        %5715 = vmatpush.bf16.msra.mxu0 %v4301
        %5716 = vmatmul.bf16.gmra.mxu0 %v1492
        %v5717 = vpop.f32.mrf.mxu0
        %v5718 = vadd.f32 %v5705, %v5717
        %v5719 = vpop.f32.mrf.mxu0
        %5720 = vdwg.mxu0
        %5721 = vmatpush.bf16.msra.mxu0 %v4316
        %5722 = vmatpush.bf16.msra.mxu0 %v4315
        %5723 = vmatpush.bf16.msra.mxu0 %v4314
        %5724 = vmatpush.bf16.msra.mxu0 %v4313
        %5725 = vmatpush.bf16.msra.mxu0 %v4312
        %5726 = vmatpush.bf16.msra.mxu0 %v4311
        %5727 = vmatpush.bf16.msra.mxu0 %v4310
        %5728 = vmatpush.bf16.msra.mxu0 %v4309
        %5729 = vmatmul.bf16.gmra.mxu0 %v1493
        %v5730 = vpop.f32.mrf.mxu0
        %v5731 = vadd.f32 %v5718, %v5730
        %v5732 = vpop.f32.mrf.mxu0
        %5733 = vdwg.mxu0
        %5734 = vmatpush.bf16.msra.mxu0 %v4324
        %5735 = vmatpush.bf16.msra.mxu0 %v4323
        %5736 = vmatpush.bf16.msra.mxu0 %v4322
        %5737 = vmatpush.bf16.msra.mxu0 %v4321
        %5738 = vmatpush.bf16.msra.mxu0 %v4320
        %5739 = vmatpush.bf16.msra.mxu0 %v4319
        %5740 = vmatpush.bf16.msra.mxu0 %v4318
        %5741 = vmatpush.bf16.msra.mxu0 %v4317
        %5742 = vmatmul.bf16.gmra.mxu0 %v1494
        %v5743 = vpop.f32.mrf.mxu0
        %v5744 = vadd.f32 %v5731, %v5743
        %v5745 = vpop.f32.mrf.mxu0
        %5746 = vdwg.mxu0
        %5747 = vmatpush.bf16.msra.mxu0 %v4332
        %5748 = vmatpush.bf16.msra.mxu0 %v4331
        %5749 = vmatpush.bf16.msra.mxu0 %v4330
        %5750 = vmatpush.bf16.msra.mxu0 %v4329
        %5751 = vmatpush.bf16.msra.mxu0 %v4328
        %5752 = vmatpush.bf16.msra.mxu0 %v4327
        %5753 = vmatpush.bf16.msra.mxu0 %v4326
        %5754 = vmatpush.bf16.msra.mxu0 %v4325
        %5755 = vmatmul.bf16.gmra.mxu0 %v1495
        %v5756 = vpop.f32.mrf.mxu0
        %v5757 = vadd.f32 %v5744, %v5756
        %v5758 = vpop.f32.mrf.mxu0
        %5759 = vdwg.mxu0
        %5760 = vmatpush.bf16.msra.mxu0 %v4340
        %5761 = vmatpush.bf16.msra.mxu0 %v4339
        %5762 = vmatpush.bf16.msra.mxu0 %v4338
        %5763 = vmatpush.bf16.msra.mxu0 %v4337
        %5764 = vmatpush.bf16.msra.mxu0 %v4336
        %5765 = vmatpush.bf16.msra.mxu0 %v4335
        %5766 = vmatpush.bf16.msra.mxu0 %v4334
        %5767 = vmatpush.bf16.msra.mxu0 %v4333
        %5768 = vmatmul.bf16.gmra.mxu0 %v1496
        %v5769 = vpop.f32.mrf.mxu0
        %v5770 = vadd.f32 %v5757, %v5769
        %v5771 = vpop.f32.mrf.mxu0
        %5772 = vdwg.mxu0
        %5773 = vmatpush.bf16.msra.mxu0 %v4348
        %5774 = vmatpush.bf16.msra.mxu0 %v4347
        %5775 = vmatpush.bf16.msra.mxu0 %v4346
        %5776 = vmatpush.bf16.msra.mxu0 %v4345
        %5777 = vmatpush.bf16.msra.mxu0 %v4344
        %5778 = vmatpush.bf16.msra.mxu0 %v4343
        %5779 = vmatpush.bf16.msra.mxu0 %v4342
        %5780 = vmatpush.bf16.msra.mxu0 %v4341
        %5781 = vmatmul.bf16.gmra.mxu0 %v1499
        %v5782 = vpop.f32.mrf.mxu0
        %v5783 = vadd.f32 %v5770, %v5782
        %v5784 = vpop.f32.mrf.mxu0
        %5785 = vdwg.mxu0
        %5786 = vmatpush.bf16.msra.mxu0 %v4356
        %5787 = vmatpush.bf16.msra.mxu0 %v4355
        %5788 = vmatpush.bf16.msra.mxu0 %v4354
        %5789 = vmatpush.bf16.msra.mxu0 %v4353
        %5790 = vmatpush.bf16.msra.mxu0 %v4352
        %5791 = vmatpush.bf16.msra.mxu0 %v4351
        %5792 = vmatpush.bf16.msra.mxu0 %v4350
        %5793 = vmatpush.bf16.msra.mxu0 %v4349
        %5794 = vmatmul.bf16.gmra.mxu0 %v1500
        %v5795 = vpop.f32.mrf.mxu0
        %v5796 = vadd.f32 %v5783, %v5795
        %v5797 = vpop.f32.mrf.mxu0
        %5798 = vdwg.mxu0
        %5799 = vmatpush.bf16.msra.mxu0 %v4364
        %5800 = vmatpush.bf16.msra.mxu0 %v4363
        %5801 = vmatpush.bf16.msra.mxu0 %v4362
        %5802 = vmatpush.bf16.msra.mxu0 %v4361
        %5803 = vmatpush.bf16.msra.mxu0 %v4360
        %5804 = vmatpush.bf16.msra.mxu0 %v4359
        %5805 = vmatpush.bf16.msra.mxu0 %v4358
        %5806 = vmatpush.bf16.msra.mxu0 %v4357
        %5807 = vmatmul.bf16.gmra.mxu0 %v1501
        %v5808 = vpop.f32.mrf.mxu0
        %v5809 = vadd.f32 %v5796, %v5808
        %v5810 = vpop.f32.mrf.mxu0
        %5811 = vdwg.mxu0
        %5812 = vmatpush.bf16.msra.mxu0 %v4372
        %5813 = vmatpush.bf16.msra.mxu0 %v4371
        %5814 = vmatpush.bf16.msra.mxu0 %v4370
        %5815 = vmatpush.bf16.msra.mxu0 %v4369
        %5816 = vmatpush.bf16.msra.mxu0 %v4368
        %5817 = vmatpush.bf16.msra.mxu0 %v4367
        %5818 = vmatpush.bf16.msra.mxu0 %v4366
        %5819 = vmatpush.bf16.msra.mxu0 %v4365
        %5820 = vmatmul.bf16.gmra.mxu0 %v1502
        %v5821 = vpop.f32.mrf.mxu0
        %v5822 = vadd.f32 %v5809, %v5821
        %v5823 = vpop.f32.mrf.mxu0
        %5824 = vdwg.mxu0
        %5825 = vmatpush.bf16.msra.mxu0 %v4380
        %5826 = vmatpush.bf16.msra.mxu0 %v4379
        %5827 = vmatpush.bf16.msra.mxu0 %v4378
        %5828 = vmatpush.bf16.msra.mxu0 %v4377
        %5829 = vmatpush.bf16.msra.mxu0 %v4376
        %5830 = vmatpush.bf16.msra.mxu0 %v4375
        %5831 = vmatpush.bf16.msra.mxu0 %v4374
        %5832 = vmatpush.bf16.msra.mxu0 %v4373
        %5833 = vmatmul.bf16.gmra.mxu0 %v1503
        %v5834 = vpop.f32.mrf.mxu0
        %v5835 = vadd.f32 %v5822, %v5834
        %v5836 = vpop.f32.mrf.mxu0
        %5837 = vdwg.mxu0
        %5838 = vmatpush.bf16.msra.mxu0 %v4388
        %5839 = vmatpush.bf16.msra.mxu0 %v4387
        %5840 = vmatpush.bf16.msra.mxu0 %v4386
        %5841 = vmatpush.bf16.msra.mxu0 %v4385
        %5842 = vmatpush.bf16.msra.mxu0 %v4384
        %5843 = vmatpush.bf16.msra.mxu0 %v4383
        %5844 = vmatpush.bf16.msra.mxu0 %v4382
        %5845 = vmatpush.bf16.msra.mxu0 %v4381
        %5846 = vmatmul.bf16.gmra.mxu0 %v1504
        %v5847 = vpop.f32.mrf.mxu0
        %v5848 = vadd.f32 %v5835, %v5847
        %v5849 = vpop.f32.mrf.mxu0
        %5850 = vdwg.mxu0
        %5851 = vmatpush.bf16.msra.mxu0 %v4396
        %5852 = vmatpush.bf16.msra.mxu0 %v4395
        %5853 = vmatpush.bf16.msra.mxu0 %v4394
        %5854 = vmatpush.bf16.msra.mxu0 %v4393
        %5855 = vmatpush.bf16.msra.mxu0 %v4392
        %5856 = vmatpush.bf16.msra.mxu0 %v4391
        %5857 = vmatpush.bf16.msra.mxu0 %v4390
        %5858 = vmatpush.bf16.msra.mxu0 %v4389
        %5859 = vmatmul.bf16.gmra.mxu0 %v1505
        %v5860 = vpop.f32.mrf.mxu0
        %v5861 = vadd.f32 %v5848, %v5860
        %v5862 = vpop.f32.mrf.mxu0
        %5863 = vdwg.mxu0
        %5864 = vmatpush.bf16.msra.mxu0 %v4404
        %5865 = vmatpush.bf16.msra.mxu0 %v4403
        %5866 = vmatpush.bf16.msra.mxu0 %v4402
        %5867 = vmatpush.bf16.msra.mxu0 %v4401
        %5868 = vmatpush.bf16.msra.mxu0 %v4400
        %5869 = vmatpush.bf16.msra.mxu0 %v4399
        %5870 = vmatpush.bf16.msra.mxu0 %v4398
        %5871 = vmatpush.bf16.msra.mxu0 %v4397
        %5872 = vmatmul.bf16.gmra.mxu0 %v1506
        %v5873 = vpop.f32.mrf.mxu0
        %v5874 = vadd.f32 %v5861, %v5873
        %v5875 = vpop.f32.mrf.mxu0
        %5876 = vdwg.mxu0
        %5877 = vmatpush.bf16.msra.mxu0 %v4412
        %5878 = vmatpush.bf16.msra.mxu0 %v4411
        %5879 = vmatpush.bf16.msra.mxu0 %v4410
        %5880 = vmatpush.bf16.msra.mxu0 %v4409
        %5881 = vmatpush.bf16.msra.mxu0 %v4408
        %5882 = vmatpush.bf16.msra.mxu0 %v4407
        %5883 = vmatpush.bf16.msra.mxu0 %v4406
        %5884 = vmatpush.bf16.msra.mxu0 %v4405
        %5885 = vmatmul.bf16.gmra.mxu0 %v1509
        %v5886 = vpop.f32.mrf.mxu0
        %v5887 = vadd.f32 %v5874, %v5886
        %v5888 = vpop.f32.mrf.mxu0
        %5889 = vdwg.mxu0
        %5890 = vmatpush.bf16.msra.mxu0 %v4420
        %5891 = vmatpush.bf16.msra.mxu0 %v4419
        %5892 = vmatpush.bf16.msra.mxu0 %v4418
        %5893 = vmatpush.bf16.msra.mxu0 %v4417
        %5894 = vmatpush.bf16.msra.mxu0 %v4416
        %5895 = vmatpush.bf16.msra.mxu0 %v4415
        %5896 = vmatpush.bf16.msra.mxu0 %v4414
        %5897 = vmatpush.bf16.msra.mxu0 %v4413
        %5898 = vmatmul.bf16.gmra.mxu0 %v1510
        %v5899 = vpop.f32.mrf.mxu0
        %v5900 = vadd.f32 %v5887, %v5899
        %v5901 = vpop.f32.mrf.mxu0
        %5902 = vdwg.mxu0
        %5903 = vmatpush.bf16.msra.mxu0 %v4428
        %5904 = vmatpush.bf16.msra.mxu0 %v4427
        %5905 = vmatpush.bf16.msra.mxu0 %v4426
        %5906 = vmatpush.bf16.msra.mxu0 %v4425
        %5907 = vmatpush.bf16.msra.mxu0 %v4424
        %5908 = vmatpush.bf16.msra.mxu0 %v4423
        %5909 = vmatpush.bf16.msra.mxu0 %v4422
        %5910 = vmatpush.bf16.msra.mxu0 %v4421
        %5911 = vmatmul.bf16.gmra.mxu0 %v1511
        %v5912 = vpop.f32.mrf.mxu0
        %v5913 = vadd.f32 %v5900, %v5912
        %v5914 = vpop.f32.mrf.mxu0
        %5915 = vdwg.mxu0
        %5916 = vmatpush.bf16.msra.mxu0 %v4436
        %5917 = vmatpush.bf16.msra.mxu0 %v4435
        %5918 = vmatpush.bf16.msra.mxu0 %v4434
        %5919 = vmatpush.bf16.msra.mxu0 %v4433
        %5920 = vmatpush.bf16.msra.mxu0 %v4432
        %5921 = vmatpush.bf16.msra.mxu0 %v4431
        %5922 = vmatpush.bf16.msra.mxu0 %v4430
        %5923 = vmatpush.bf16.msra.mxu0 %v4429
        %5924 = vmatmul.bf16.gmra.mxu0 %v1512
        %v5925 = vpop.f32.mrf.mxu0
        %v5926 = vadd.f32 %v5913, %v5925
        %v5927 = vpop.f32.mrf.mxu0
        %5928 = vdwg.mxu0
        %5929 = vmatpush.bf16.msra.mxu0 %v4444
        %5930 = vmatpush.bf16.msra.mxu0 %v4443
        %5931 = vmatpush.bf16.msra.mxu0 %v4442
        %5932 = vmatpush.bf16.msra.mxu0 %v4441
        %5933 = vmatpush.bf16.msra.mxu0 %v4440
        %5934 = vmatpush.bf16.msra.mxu0 %v4439
        %5935 = vmatpush.bf16.msra.mxu0 %v4438
        %5936 = vmatpush.bf16.msra.mxu0 %v4437
        %5937 = vmatmul.bf16.gmra.mxu0 %v1513
        %v5938 = vpop.f32.mrf.mxu0
        %v5939 = vadd.f32 %v5926, %v5938
        %v5940 = vpop.f32.mrf.mxu0
        %5941 = vdwg.mxu0
        %5942 = vmatpush.bf16.msra.mxu0 %v4452
        %5943 = vmatpush.bf16.msra.mxu0 %v4451
        %5944 = vmatpush.bf16.msra.mxu0 %v4450
        %5945 = vmatpush.bf16.msra.mxu0 %v4449
        %5946 = vmatpush.bf16.msra.mxu0 %v4448
        %5947 = vmatpush.bf16.msra.mxu0 %v4447
        %5948 = vmatpush.bf16.msra.mxu0 %v4446
        %5949 = vmatpush.bf16.msra.mxu0 %v4445
        %5950 = vmatmul.bf16.gmra.mxu0 %v1514
        %v5951 = vpop.f32.mrf.mxu0
        %v5952 = vadd.f32 %v5939, %v5951
        %v5953 = vpop.f32.mrf.mxu0
        %5954 = vdwg.mxu0
        %5955 = vmatpush.bf16.msra.mxu0 %v4460
        %5956 = vmatpush.bf16.msra.mxu0 %v4459
        %5957 = vmatpush.bf16.msra.mxu0 %v4458
        %5958 = vmatpush.bf16.msra.mxu0 %v4457
        %5959 = vmatpush.bf16.msra.mxu0 %v4456
        %5960 = vmatpush.bf16.msra.mxu0 %v4455
        %5961 = vmatpush.bf16.msra.mxu0 %v4454
        %5962 = vmatpush.bf16.msra.mxu0 %v4453
        %5963 = vmatmul.bf16.gmra.mxu0 %v1515
        %v5964 = vpop.f32.mrf.mxu0
        %v5965 = vadd.f32 %v5952, %v5964
        %v5966 = vpop.f32.mrf.mxu0
        %5967 = vdwg.mxu0
        %5968 = vmatpush.bf16.msra.mxu0 %v4468
        %5969 = vmatpush.bf16.msra.mxu0 %v4467
        %5970 = vmatpush.bf16.msra.mxu0 %v4466
        %5971 = vmatpush.bf16.msra.mxu0 %v4465
        %5972 = vmatpush.bf16.msra.mxu0 %v4464
        %5973 = vmatpush.bf16.msra.mxu0 %v4463
        %5974 = vmatpush.bf16.msra.mxu0 %v4462
        %5975 = vmatpush.bf16.msra.mxu0 %v4461
        %5976 = vmatmul.bf16.gmra.mxu0 %v1516
        %v5977 = vpop.f32.mrf.mxu0
        %v5978 = vadd.f32 %v5965, %v5977
        %v5979 = vpop.f32.mrf.mxu0
        %5980 = vdwg.mxu0
        %v5981 = vadd.f32 %v265, %v5978
        %vm5982 = vcmask 680960
        %5983 = vst.msk [vmem:[#allocation2] sm:$0x3] %vm5982, %v5981
        %p5984 = scmp.eq.s32.totalorder %s21, 1
        // Predicated region
        $region45: #{baseline_net_forward.3} parent=39 // pred_check
          %p5985 = pneg %p5984
        $region46: #{baseline_net_forward.3} parent=39 // pred_check_branch
          %5987 = sbr.rel (%p5985) target = $region48
        $region47: #{baseline_net_forward.3} parent=39 // pred_region
          %v5988 = vld [vmem:[#allocation2] sm:$0x3]
          %v5989 = vld [vmem:[%s2] sm:$0x1]
          %v5991 = vperm.slane %v5989, 0
          %v5993 = vadd.f32 %v5988, %v5991
          %5994 = vst.msk [vmem:[#allocation4] sm:$0x3] %vm5982, %v5993
          %v5995 = vmax.f32 %v5993, 0.0
          %v5996 = vld [vmem:[%s3] sm:$0x1]
          %v5998 = vperm.slane %v5996, 0
          %v6000 = vmul.f32 %v5995, %v5998
          %v6001 = vsel %vm5982, %v6000, 0.0
          %6002 = vadd.xlane.f32.xlu0 %v6001
          %v6003 = vpop.xlane.xlu0 %6002
          %v6004 = vld [vmem:[#allocation3] sm:$0x1]
          %v6006 = vperm.slane %v6004, 0
          %v6008 = vadd.f32 %v6003, %v6006
          %v6009 = vsub.f32 0.0, %v6008
          %v6010 = vmul.f32 %v6009, 1.442695
          %v6011 = vpow.pop %v6010
          %v6012 = vadd.f32 %v6011, 1.0
          %v6013 = vrcp.pop %v6012
          %v6014 = vmul.f32 %v6012, %v6013
          %v6015 = vsub.f32 1.0, %v6014
          %v6016 = vmul.f32 %v6013, %v6015
          %v6017 = vadd.f32 %v6013, %v6016
          %vm6018 = vweird.f32 %v6012
          %vm6019 = vweird.f32 %v6013
          %vm6020 = vmor %vm6018, %vm6019
          %v6021 = vsel %vm6020, %v6013, %v6017
          %v6022 = vand.u32 2147483647, %v6012
          %vm6023 = vcmp.eq.f32.partialorder %v6022, 8.507059e+37
          %v6024 = vand.u32 %v6012, 2147483648
          %v6025 = vor.u32 1.1754944e-38, %v6024
          %v6026 = vsel %vm6023, %v6025, %v6021
          %v6027 = vmul.f32 1.0, %v6026
          %vm6028 = vcmask 1024
          %6029 = vst.msk [vmem:[%s6] sm:$0x3] %vm6028, %v6027
        $region48: #{baseline_net_forward.3} parent=39 // pred_fallthru
          _
        // Predicated region
        $region49: #{baseline_net_forward.3} parent=39 // pred_check
          %p6030 = pneg %p149
        $region50: #{baseline_net_forward.3} parent=39 // pred_check_branch
          %6032 = sbr.rel (%p6030) target = $region52
        $region51: #{baseline_net_forward.3} parent=39 // pred_region
          %6034 = vsyncadd [#allocation5], 0
          %s6036 = sshll.u32 [#allocation4], 4
          %s6037 = int_to_ptr.vmem [resolvable:$true] %s6036
          %s6038 = sshll.u32 %s5, 4
          %s6039 = int_to_ptr.hbm [resolvable:$true] %s6038
          %6041 = dma.vmem_to_hbm [thread:$0]  %s6037, 32, %s6039, [#allocation5]
        $region52: #{baseline_net_forward.3} parent=39 // pred_fallthru
          _
        // Predicated region
        $region53: #{baseline_net_forward.3} parent=39 // pred_check
          %p6042 = pneg %p170
        $region54: #{baseline_net_forward.3} parent=39 // pred_check_branch
          %6044 = sbr.rel (%p6042) target = $region56
        $region55: #{baseline_net_forward.3} parent=39 // pred_region
          _
        $region56: #{baseline_net_forward.3} parent=39 // pred_fallthru
          _
        // Predicated region
        $region57: #{baseline_net_forward.3} parent=39 // pred_check
          %p6045 = pneg %p149
        $region58: #{baseline_net_forward.3} parent=39 // pred_check_branch
          %6047 = sbr.rel (%p6045) target = $region60
        $region59: #{baseline_net_forward.3} parent=39 // pred_region
          %6049 = dma.done [#allocation5], 32
        $region60: #{baseline_net_forward.3} parent=39 // pred_fallthru
          _
        // Predicated region
        $region61: #{baseline_net_forward.3} parent=39 // pred_check
          %p6050 = pneg %p170
        $region62: #{baseline_net_forward.3} parent=39 // pred_check_branch
          %6052 = sbr.rel (%p6050) target = $region64
        $region63: #{baseline_net_forward.3} parent=39 // pred_region
          _
        $region64: #{baseline_net_forward.3} parent=39 // pred_fallthru
          _
      $region40: #{baseline_net_forward.3} parent=5 // pred_fallthru
        _
      %p6053 = scmp.le.s32.totalorder 2, %s16
      // Predicated region
      $region65: #{baseline_net_forward.3} parent=5 // pred_check
        %p6054 = pneg %p6053
      $region66: #{baseline_net_forward.3} parent=5 // pred_check_branch
        %6056 = sbr.rel (%p6054) target = $region68
      $region67: #{baseline_net_forward.3} parent=5 // pred_region
        %s6057 = ssub.s32 %s16, 2
      $region68: #{baseline_net_forward.3} parent=5 // pred_fallthru
        _
    $region6: #{baseline_net_forward.3} parent=1 // loop_footer
      %s20 = sadd.s32 1, %s16
    $region7: #{baseline_net_forward.3} parent=1 // loop_footer_branch
      %15 = sbr.rel target = $region3
    $region8: #{baseline_net_forward.3} parent=1 // loop_exit
      _
    %6058 = vsyncpa [#allocation5], 1
    %s6059 = scalar_lea.sflag [#allocation5], 1
    %6060 = vsyncpa %s6059, 1

</llo_original>
